<compile_context>
chip_gen: v5e
topology: v5e:2x2
jax: 0.10.0
libtpu: 0.0.40
codegen_flags: <defaults>
</compile_context>

<pallas_src>
import jax
import jax.numpy as jnp
import numpy as np
from jax.experimental import pallas as pl
from jax.experimental.pallas import tpu as pltpu


def mlp_kernel(x_ref, w1_ref, b1_ref, w2_ref, b2_ref,
               w3_ref, b3_ref, w4_ref, b4_ref, o_ref):
    # bf16 operands on the MXU, f32 accumulation; bias-add + ReLU in f32 on
    # the VPU.  All intermediates stay in vregs/VMEM.
    h = jnp.dot(x_ref[...], w1_ref[...], preferred_element_type=jnp.float32)
    h = jnp.maximum(h + b1_ref[...], 0.0)

    h = jnp.dot(h.astype(jnp.bfloat16), w2_ref[...],
                preferred_element_type=jnp.float32)
    h = jnp.maximum(h + b2_ref[...], 0.0)

    h = jnp.dot(h.astype(jnp.bfloat16), w3_ref[...],
                preferred_element_type=jnp.float32)
    h = jnp.maximum(h + b3_ref[...], 0.0)

    h = jnp.dot(h.astype(jnp.bfloat16), w4_ref[...],
                preferred_element_type=jnp.float32)
    h = jnp.maximum(h + b4_ref[...], 0.0)

    o_ref[...] = h.astype(o_ref.dtype)


def _pad_axis(a, axis, target):
    pad = target - a.shape[axis]
    if pad == 0:
        return a
    widths = [(0, 0)] * a.ndim
    widths[axis] = (0, pad)
    return jnp.pad(a, widths)


def learner_forward(x, params, *, tb=256):
    """x: (B, input_dim) float32.  params: [(W, b)] * 4 with W as (in, out)."""
    B, D = x.shape
    (w1, b1), (w2, b2), (w3, b3), (w4, b4) = params
    out_dim = w4.shape[1]                          # 1000
    out_pad = ((out_dim + 127) // 128) * 128       # 1024: lane-dense output
    b_pad = ((B + tb - 1) // tb) * tb              # batch padded to tile

    # Zero-pad batch rows and fc4 output columns; ReLU(0 + 0) == 0 so the
    # padded columns are benign and both paddings are sliced away below.
    x_p = _pad_axis(x, 0, b_pad).astype(jnp.bfloat16)
    w1b = w1.astype(jnp.bfloat16)
    w2b = w2.astype(jnp.bfloat16)
    w3b = w3.astype(jnp.bfloat16)
    w4b = _pad_axis(w4, 1, out_pad).astype(jnp.bfloat16)
    b4p = _pad_axis(b4, 1, out_pad)                # biases stay f32

    def act_spec(feat):
        # tile over batch only; feature dim kept whole (full-array last dim)
        return pl.BlockSpec((tb, feat), lambda i: (i, 0))

    def whole_spec(shape):
        # weights / biases fully resident in VMEM, identical for every tile
        # (small enough — ~1.6 MiB bf16 total — that double-buffering is fine
        # even on v7x's 64 MiB VMEM).
        return pl.BlockSpec(shape, lambda i: (0, 0))

    h1, h2, h3 = w1.shape[1], w2.shape[1], w3.shape[1]
    flops = 2 * b_pad * (D * h1 + h1 * h2 + h2 * h3 + h3 * out_pad)
    bytes_accessed = (
        x_p.size * 2
        + (w1b.size + w2b.size + w3b.size + w4b.size) * 2
        + (b1.size + b2.size + b3.size + b4p.size) * 4
        + b_pad * out_pad * 4
    )

    out = pl.pallas_call(
        mlp_kernel,
        out_shape=jax.ShapeDtypeStruct((b_pad, out_pad), jnp.float32),
        grid_spec=pltpu.PrefetchScalarGridSpec(
            num_scalar_prefetch=0,
            grid=(b_pad // tb,),
            in_specs=[
                act_spec(D),
                whole_spec(w1b.shape), whole_spec(b1.shape),
                whole_spec(w2b.shape), whole_spec(b2.shape),
                whole_spec(w3b.shape), whole_spec(b3.shape),
                whole_spec(w4b.shape), whole_spec(b4p.shape),
            ],
            out_specs=act_spec(out_pad),
        ),
        compiler_params=pltpu.CompilerParams(
            dimension_semantics=("parallel",),
            vmem_limit_bytes=32 * 1024 * 1024,
        ),
        cost_estimate=pl.CostEstimate(
            flops=flops, transcendentals=0, bytes_accessed=bytes_accessed),
    )(x_p, w1b, b1, w2b, b2, w3b, b3, w4b, b4p)

    return out[:B, :out_dim]


def init_linear(key, fan_in, fan_out):
    # PyTorch nn.Linear default init: U(-1/sqrt(fan_in), 1/sqrt(fan_in))
    kw, kb = jax.random.split(key)
    bound = 1.0 / np.sqrt(fan_in)
    w = jax.random.uniform(kw, (fan_in, fan_out), jnp.float32, -bound, bound)
    b = jax.random.uniform(kb, (1, fan_out), jnp.float32, -bound, bound)
    return w, b


def reference_forward_f32(x, params):
    # Exact PyTorch-module semantics (f32 everywhere).
    h = x
    for w, b in params:
        h = jnp.maximum(jnp.dot(h, w) + b, 0.0)
    return h


def reference_forward_bf16(x, params):
    # Emulates the kernel's numerics: bf16 matmul operands, f32 accumulation,
    # f32 bias/ReLU.
    h = x
    for w, b in params:
        h = jnp.dot(h.astype(jnp.bfloat16), w.astype(jnp.bfloat16),
                    preferred_element_type=jnp.float32)
        h = jnp.maximum(h + b, 0.0)
    return h


if __name__ == "__main__":
    input_dim = 32
    batch = 8

    key = jax.random.PRNGKey(0)
    kx, k1, k2, k3, k4 = jax.random.split(key, 5)

    params = [
        init_linear(k1, input_dim, 512),
        init_linear(k2, 512, 256),
        init_linear(k3, 256, 512),
        init_linear(k4, 512, 1000),
    ]
    x = jax.random.normal(kx, (batch, input_dim), jnp.float32)

    out = jax.block_until_ready(learner_forward(x, params))
    assert out.shape == (batch, 1000) and out.dtype == jnp.float32

    # Tight check against a reference that uses the same bf16-operand /
    # f32-accumulate numerics as the kernel.
    ref_bf16 = jax.block_until_ready(reference_forward_bf16(x, params))
    np.testing.assert_allclose(np.asarray(out), np.asarray(ref_bf16),
                               rtol=2e-3, atol=2e-3)

    # Looser sanity check against the exact f32 PyTorch-equivalent forward.
    ref_f32 = jax.block_until_ready(reference_forward_f32(x, params))
    np.testing.assert_allclose(np.asarray(out), np.asarray(ref_f32),
                               rtol=5e-2, atol=5e-2)

    print("KERNEL_OK")
</pallas_src>

<mosaic_0001>
module attributes {stable_mosaic.version = 11 : i64} {
  func.func @mlp_kernel(%arg0: i32, %arg1: memref<256x32xbf16, #tpu.memory_space<vmem>>, %arg2: memref<32x512xbf16, #tpu.memory_space<vmem>>, %arg3: memref<1x512xf32, #tpu.memory_space<vmem>>, %arg4: memref<512x256xbf16, #tpu.memory_space<vmem>>, %arg5: memref<1x256xf32, #tpu.memory_space<vmem>>, %arg6: memref<256x512xbf16, #tpu.memory_space<vmem>>, %arg7: memref<1x512xf32, #tpu.memory_space<vmem>>, %arg8: memref<512x1024xbf16, #tpu.memory_space<vmem>>, %arg9: memref<1x1024xf32, #tpu.memory_space<vmem>>, %arg10: memref<256x1024xf32, #tpu.memory_space<vmem>>) attributes {dimension_semantics = [#tpu.dimension_semantics<parallel>], iteration_bounds = array<i64: 1>, scalar_prefetch = 0 : i64, scratch_operands = 0 : i64, tpu.core_type = #tpu.core_type<tc>, window_params = [{transform_indices = @transform_0, window_bounds = array<i64: 256, 32>}, {pipeline_mode = #tpu.pipeline_mode<synchronous>, transform_indices = @transform_1, window_bounds = array<i64: 32, 512>}, {pipeline_mode = #tpu.pipeline_mode<synchronous>, transform_indices = @transform_2, window_bounds = array<i64: 1, 512>}, {pipeline_mode = #tpu.pipeline_mode<synchronous>, transform_indices = @transform_3, window_bounds = array<i64: 512, 256>}, {pipeline_mode = #tpu.pipeline_mode<synchronous>, transform_indices = @transform_4, window_bounds = array<i64: 1, 256>}, {pipeline_mode = #tpu.pipeline_mode<synchronous>, transform_indices = @transform_5, window_bounds = array<i64: 256, 512>}, {pipeline_mode = #tpu.pipeline_mode<synchronous>, transform_indices = @transform_6, window_bounds = array<i64: 1, 512>}, {pipeline_mode = #tpu.pipeline_mode<synchronous>, transform_indices = @transform_7, window_bounds = array<i64: 512, 1024>}, {pipeline_mode = #tpu.pipeline_mode<synchronous>, transform_indices = @transform_8, window_bounds = array<i64: 1, 1024>}, {transform_indices = @transform_9, window_bounds = array<i64: 256, 1024>}]} {
    %c0 = arith.constant 0 : index
    %c0_0 = arith.constant 0 : index
    %0 = vector.load %arg1[%c0, %c0_0] : memref<256x32xbf16, #tpu.memory_space<vmem>>, vector<256x32xbf16>
    %c0_1 = arith.constant 0 : index
    %c0_2 = arith.constant 0 : index
    %1 = vector.load %arg2[%c0_1, %c0_2] : memref<32x512xbf16, #tpu.memory_space<vmem>>, vector<32x512xbf16>
    %cst = arith.constant dense<0.000000e+00> : vector<256x512xf32>
    %2 = tpu.matmul %0, %1, %cst {dimension_numbers = #tpu.dot_dimension_numbers<[1], [0], [0], [1], [0, 0, 1, 1], [], []>} : vector<256x32xbf16>, vector<32x512xbf16>, vector<256x512xf32> -> vector<256x512xf32>
    %c0_3 = arith.constant 0 : index
    %c0_4 = arith.constant 0 : index
    %3 = vector.load %arg3[%c0_3, %c0_4] : memref<1x512xf32, #tpu.memory_space<vmem>>, vector<1x512xf32>
    %4 = vector.broadcast %3 : vector<1x512xf32> to vector<256x512xf32>
    %5 = arith.addf %2, %4 : vector<256x512xf32>
    %cst_5 = arith.constant 0.000000e+00 : f32
    %6 = vector.broadcast %cst_5 : f32 to vector<256x512xf32>
    %7 = arith.maximumf %5, %6 : vector<256x512xf32>
    %8 = arith.truncf %7 : vector<256x512xf32> to vector<256x512xbf16>
    %c0_6 = arith.constant 0 : index
    %c0_7 = arith.constant 0 : index
    %9 = vector.load %arg4[%c0_6, %c0_7] : memref<512x256xbf16, #tpu.memory_space<vmem>>, vector<512x256xbf16>
    %cst_8 = arith.constant dense<0.000000e+00> : vector<256x256xf32>
    %10 = tpu.matmul %8, %9, %cst_8 {dimension_numbers = #tpu.dot_dimension_numbers<[1], [0], [0], [1], [0, 0, 1, 1], [], []>} : vector<256x512xbf16>, vector<512x256xbf16>, vector<256x256xf32> -> vector<256x256xf32>
    %c0_9 = arith.constant 0 : index
    %c0_10 = arith.constant 0 : index
    %11 = vector.load %arg5[%c0_9, %c0_10] : memref<1x256xf32, #tpu.memory_space<vmem>>, vector<1x256xf32>
    %12 = vector.broadcast %11 : vector<1x256xf32> to vector<256x256xf32>
    %13 = arith.addf %10, %12 : vector<256x256xf32>
    %cst_11 = arith.constant 0.000000e+00 : f32
    %14 = vector.broadcast %cst_11 : f32 to vector<256x256xf32>
    %15 = arith.maximumf %13, %14 : vector<256x256xf32>
    %16 = arith.truncf %15 : vector<256x256xf32> to vector<256x256xbf16>
    %c0_12 = arith.constant 0 : index
    %c0_13 = arith.constant 0 : index
    %17 = vector.load %arg6[%c0_12, %c0_13] : memref<256x512xbf16, #tpu.memory_space<vmem>>, vector<256x512xbf16>
    %cst_14 = arith.constant dense<0.000000e+00> : vector<256x512xf32>
    %18 = tpu.matmul %16, %17, %cst_14 {dimension_numbers = #tpu.dot_dimension_numbers<[1], [0], [0], [1], [0, 0, 1, 1], [], []>} : vector<256x256xbf16>, vector<256x512xbf16>, vector<256x512xf32> -> vector<256x512xf32>
    %c0_15 = arith.constant 0 : index
    %c0_16 = arith.constant 0 : index
    %19 = vector.load %arg7[%c0_15, %c0_16] : memref<1x512xf32, #tpu.memory_space<vmem>>, vector<1x512xf32>
    %20 = vector.broadcast %19 : vector<1x512xf32> to vector<256x512xf32>
    %21 = arith.addf %18, %20 : vector<256x512xf32>
    %cst_17 = arith.constant 0.000000e+00 : f32
    %22 = vector.broadcast %cst_17 : f32 to vector<256x512xf32>
    %23 = arith.maximumf %21, %22 : vector<256x512xf32>
    %24 = arith.truncf %23 : vector<256x512xf32> to vector<256x512xbf16>
    %c0_18 = arith.constant 0 : index
    %c0_19 = arith.constant 0 : index
    %25 = vector.load %arg8[%c0_18, %c0_19] : memref<512x1024xbf16, #tpu.memory_space<vmem>>, vector<512x1024xbf16>
    %cst_20 = arith.constant dense<0.000000e+00> : vector<256x1024xf32>
    %26 = tpu.matmul %24, %25, %cst_20 {dimension_numbers = #tpu.dot_dimension_numbers<[1], [0], [0], [1], [0, 0, 1, 1], [], []>} : vector<256x512xbf16>, vector<512x1024xbf16>, vector<256x1024xf32> -> vector<256x1024xf32>
    %c0_21 = arith.constant 0 : index
    %c0_22 = arith.constant 0 : index
    %27 = vector.load %arg9[%c0_21, %c0_22] : memref<1x1024xf32, #tpu.memory_space<vmem>>, vector<1x1024xf32>
    %28 = vector.broadcast %27 : vector<1x1024xf32> to vector<256x1024xf32>
    %29 = arith.addf %26, %28 : vector<256x1024xf32>
    %cst_23 = arith.constant 0.000000e+00 : f32
    %30 = vector.broadcast %cst_23 : f32 to vector<256x1024xf32>
    %31 = arith.maximumf %29, %30 : vector<256x1024xf32>
    %c0_24 = arith.constant 0 : index
    %c0_25 = arith.constant 0 : index
    %32 = vector.load %arg10[%c0_24, %c0_25] : memref<256x1024xf32, #tpu.memory_space<vmem>>, vector<256x1024xf32>
    tpu.vector_store %arg10[%c0_24, %c0_25], %31 {strides = array<i32>} : memref<256x1024xf32, #tpu.memory_space<vmem>>, vector<256x1024xf32>,
    return
  }
  func.func @transform_0(%arg0: i32) -> (i32, i32) {
    %c0_i32 = arith.constant 0 : i32
    %c0_i32_0 = arith.constant 0 : i32
    return %arg0, %c0_i32 : i32, i32
  }
  func.func @transform_1(%arg0: i32) -> (i32, i32) {
    %c0_i32 = arith.constant 0 : i32
    %c0_i32_0 = arith.constant 0 : i32
    %c0_i32_1 = arith.constant 0 : i32
    return %c0_i32, %c0_i32_0 : i32, i32
  }
  func.func @transform_2(%arg0: i32) -> (i32, i32) {
    %c0_i32 = arith.constant 0 : i32
    %c0_i32_0 = arith.constant 0 : i32
    %c0_i32_1 = arith.constant 0 : i32
    return %c0_i32, %c0_i32_0 : i32, i32
  }
  func.func @transform_3(%arg0: i32) -> (i32, i32) {
    %c0_i32 = arith.constant 0 : i32
    %c0_i32_0 = arith.constant 0 : i32
    %c0_i32_1 = arith.constant 0 : i32
    return %c0_i32, %c0_i32_0 : i32, i32
  }
  func.func @transform_4(%arg0: i32) -> (i32, i32) {
    %c0_i32 = arith.constant 0 : i32
    %c0_i32_0 = arith.constant 0 : i32
    %c0_i32_1 = arith.constant 0 : i32
    return %c0_i32, %c0_i32_0 : i32, i32
  }
  func.func @transform_5(%arg0: i32) -> (i32, i32) {
    %c0_i32 = arith.constant 0 : i32
    %c0_i32_0 = arith.constant 0 : i32
    %c0_i32_1 = arith.constant 0 : i32
    return %c0_i32, %c0_i32_0 : i32, i32
  }
  func.func @transform_6(%arg0: i32) -> (i32, i32) {
    %c0_i32 = arith.constant 0 : i32
    %c0_i32_0 = arith.constant 0 : i32
    %c0_i32_1 = arith.constant 0 : i32
    return %c0_i32, %c0_i32_0 : i32, i32
  }
  func.func @transform_7(%arg0: i32) -> (i32, i32) {
    %c0_i32 = arith.constant 0 : i32
    %c0_i32_0 = arith.constant 0 : i32
    %c0_i32_1 = arith.constant 0 : i32
    return %c0_i32, %c0_i32_0 : i32, i32
  }
  func.func @transform_8(%arg0: i32) -> (i32, i32) {
    %c0_i32 = arith.constant 0 : i32
    %c0_i32_0 = arith.constant 0 : i32
    %c0_i32_1 = arith.constant 0 : i32
    return %c0_i32, %c0_i32_0 : i32, i32
  }
  func.func @transform_9(%arg0: i32) -> (i32, i32) {
    %c0_i32 = arith.constant 0 : i32
    %c0_i32_0 = arith.constant 0 : i32
    return %arg0, %c0_i32 : i32, i32
  }
}

</mosaic_0001>

<llo_original>
// kernel: tpu_custom_call.1
$region0: #{tpu_custom_call.1}
  #allocation0 [shape = 'u32[]', space=smem, size = 0x4, offset = 0x4, fixed_abs, tag = 'smem constant byte address 0x4 - core index']
  #allocation1 [shape = 'u32[72,128]{1,0:T(1,128)}', space=vmem, size = 0x9000, scoped, tag = 'internal scratch']
  %s0 = inlined_call_operand.vmem [shape: bf16[256,32], index: 0, kind: input, shape index: {}]
  %s1 = inlined_call_operand.vmem [shape: bf16[32,512], index: 1, kind: input, shape index: {}]
  %s2 = inlined_call_operand.vmem [shape: f32[1,512], index: 2, kind: input, shape index: {}]
  %s3 = inlined_call_operand.hbm [shape: bf16[512,256], index: 3, kind: input, shape index: {}]
  %s4 = inlined_call_operand.vmem [shape: f32[1,256], index: 4, kind: input, shape index: {}]
  %s5 = inlined_call_operand.hbm [shape: bf16[256,512], index: 5, kind: input, shape index: {}]
  %s6 = inlined_call_operand.vmem [shape: f32[1,512], index: 6, kind: input, shape index: {}]
  %s7 = inlined_call_operand.hbm [shape: bf16[512,1024], index: 7, kind: input, shape index: {}]
  %s8 = inlined_call_operand.vmem [shape: f32[1,1024], index: 8, kind: input, shape index: {}]
  %s9 = inlined_call_operand.hbm [shape: f32[256,1024], index: 9, kind: output, shape index: {}]
  %s10 = sld [smem:[#allocation0]]
  $region58: #{tpu_custom_call.1} parent=0
    _
  %s12 = ssub.s32 1, %s10
  %s13 = scalar_select 0, %s12, %s10
  $region1: #{tpu_custom_call.1} parent=0
    #allocation2 [shape = 'u8[262144]{0}', space=vmem, size = 0x40000, scoped, tag = 'input window, operand 3, single buffered']
    #allocation3 [shape = 's32[1]{0}', space=sflag, size = 0x4, scoped, tag = 'scoped memory for tpu_custom_call.1']
    #allocation4 [shape = 's32[1]{0}', space=sflag, size = 0x4, scoped, tag = 'scoped memory for tpu_custom_call.1']
    #allocation5 [shape = 'u8[262144]{0}', space=vmem, size = 0x40000, scoped, tag = 'input window, operand 5, single buffered']
    #allocation6 [shape = 's32[1]{0}', space=sflag, size = 0x4, scoped, tag = 'scoped memory for tpu_custom_call.1']
    #allocation7 [shape = 'u8[1048576]{0}', space=vmem, size = 0x100000, scoped, tag = 'input window, operand 7, single buffered']
    #allocation8 [shape = 'u8[1048576]{0}', space=vmem, size = 0x100000, scoped, tag = 'output window, operand 0, single buffered']
    %14 = vsyncpa [#allocation3], 0
    %15 = vsyncpa [#allocation6], 0
    %16 = vsyncpa [#allocation4], 0
    // Predicated region
    $region2: #{tpu_custom_call.1} parent=1 // pred_check
      _
    $region3: #{tpu_custom_call.1} parent=1 // pred_check_branch
      %18 = sbr.rel (0) target = $region5
    $region4: #{tpu_custom_call.1} parent=1 // pred_region
      _
    $region5: #{tpu_custom_call.1} parent=1 // pred_fallthru
      _
    // Predicated region
    $region6: #{tpu_custom_call.1} parent=1 // pred_check
      _
    $region7: #{tpu_custom_call.1} parent=1 // pred_check_branch
      %20 = sbr.rel (0) target = $region9
    $region8: #{tpu_custom_call.1} parent=1 // pred_region
      _
    $region9: #{tpu_custom_call.1} parent=1 // pred_fallthru
      _
    // Predicated region
    $region10: #{tpu_custom_call.1} parent=1 // pred_check
      _
    $region11: #{tpu_custom_call.1} parent=1 // pred_check_branch
      %22 = sbr.rel (0) target = $region13
    $region12: #{tpu_custom_call.1} parent=1 // pred_region
      _
    $region13: #{tpu_custom_call.1} parent=1 // pred_fallthru
      _
    // Predicated region
    $region14: #{tpu_custom_call.1} parent=1 // pred_check
      _
    $region15: #{tpu_custom_call.1} parent=1 // pred_check_branch
      %24 = sbr.rel (0) target = $region17
    $region16: #{tpu_custom_call.1} parent=1 // pred_region
      %26 = vsyncadd [#allocation3], 0
      %s27 = sshll.u32 %s3, 4
      %s28 = int_to_ptr.hbm [resolvable:$true] %s27
      %s29 = sshll.u32 [#allocation2], 4
      %s30 = int_to_ptr.vmem [resolvable:$true] %s29
      %35 = dma.hbm_to_vmem [thread:$0]  %s28, 8192, %s30, [#allocation3], 128, 128, 8
    $region17: #{tpu_custom_call.1} parent=1 // pred_fallthru
      _
    // Predicated region
    $region18: #{tpu_custom_call.1} parent=1 // pred_check
      _
    $region19: #{tpu_custom_call.1} parent=1 // pred_check_branch
      %37 = sbr.rel (0) target = $region21
    $region20: #{tpu_custom_call.1} parent=1 // pred_region
      _
    $region21: #{tpu_custom_call.1} parent=1 // pred_fallthru
      _
    // Predicated region
    $region22: #{tpu_custom_call.1} parent=1 // pred_check
      _
    $region23: #{tpu_custom_call.1} parent=1 // pred_check_branch
      %39 = sbr.rel (0) target = $region25
    $region24: #{tpu_custom_call.1} parent=1 // pred_region
      %41 = vsyncadd [#allocation6], 0
      %s42 = sshll.u32 %s5, 4
      %s43 = int_to_ptr.hbm [resolvable:$true] %s42
      %s44 = sshll.u32 [#allocation5], 4
      %s45 = int_to_ptr.vmem [resolvable:$true] %s44
      %50 = dma.hbm_to_vmem [thread:$0]  %s43, 8192, %s45, [#allocation6], 256, 256, 16
    $region25: #{tpu_custom_call.1} parent=1 // pred_fallthru
      _
    // Predicated region
    $region26: #{tpu_custom_call.1} parent=1 // pred_check
      _
    $region27: #{tpu_custom_call.1} parent=1 // pred_check_branch
      %52 = sbr.rel (0) target = $region29
    $region28: #{tpu_custom_call.1} parent=1 // pred_region
      _
    $region29: #{tpu_custom_call.1} parent=1 // pred_fallthru
      _
    // Predicated region
    $region30: #{tpu_custom_call.1} parent=1 // pred_check
      _
    $region31: #{tpu_custom_call.1} parent=1 // pred_check_branch
      %54 = sbr.rel (0) target = $region33
    $region32: #{tpu_custom_call.1} parent=1 // pred_region
      %56 = vsyncadd [#allocation6], 0
      %s57 = sshll.u32 %s7, 4
      %s58 = int_to_ptr.hbm [resolvable:$true] %s57
      %s59 = sshll.u32 [#allocation7], 4
      %s60 = int_to_ptr.vmem [resolvable:$true] %s59
      %65 = dma.hbm_to_vmem [thread:$0]  %s58, 32768, %s60, [#allocation6], 512, 512, 32
    $region33: #{tpu_custom_call.1} parent=1 // pred_fallthru
      _
    // Predicated region
    $region34: #{tpu_custom_call.1} parent=1 // pred_check
      _
    $region35: #{tpu_custom_call.1} parent=1 // pred_check_branch
      %67 = sbr.rel (0) target = $region37
    $region36: #{tpu_custom_call.1} parent=1 // pred_region
      _
    $region37: #{tpu_custom_call.1} parent=1 // pred_fallthru
      _
    // Predicated region
    $region38: #{tpu_custom_call.1} parent=1 // pred_check
      _
    $region39: #{tpu_custom_call.1} parent=1 // pred_check_branch
      %69 = sbr.rel (0) target = $region41
    $region40: #{tpu_custom_call.1} parent=1 // pred_region
      %71 = dma.done [#allocation3], 8192
    $region41: #{tpu_custom_call.1} parent=1 // pred_fallthru
      _
    // Predicated region
    $region42: #{tpu_custom_call.1} parent=1 // pred_check
      _
    $region43: #{tpu_custom_call.1} parent=1 // pred_check_branch
      %73 = sbr.rel (0) target = $region45
    $region44: #{tpu_custom_call.1} parent=1 // pred_region
      %75 = dma.done [#allocation6], 8192
    $region45: #{tpu_custom_call.1} parent=1 // pred_fallthru
      _
    // Predicated region
    $region46: #{tpu_custom_call.1} parent=1 // pred_check
      _
    $region47: #{tpu_custom_call.1} parent=1 // pred_check_branch
      %77 = sbr.rel (0) target = $region49
    $region48: #{tpu_custom_call.1} parent=1 // pred_region
      %79 = dma.done [#allocation6], 32768
    $region49: #{tpu_custom_call.1} parent=1 // pred_fallthru
      _
    %v81 = vld [vmem:[%s0] sm:$0xf]
    %v82 = vld [vmem:[%s0 + $0x4] sm:$0xf]
    %v83 = vld [vmem:[%s0 + $0x8] sm:$0xf]
    %v84 = vld [vmem:[%s0 + $0xc] sm:$0xf]
    %v85 = vld [vmem:[%s0 + $0x10] sm:$0xf]
    %v86 = vld [vmem:[%s0 + $0x14] sm:$0xf]
    %v87 = vld [vmem:[%s0 + $0x18] sm:$0xf]
    %v88 = vld [vmem:[%s0 + $0x1c] sm:$0xf]
    %v89 = vld [vmem:[%s0 + $0x20] sm:$0xf]
    %v90 = vld [vmem:[%s0 + $0x24] sm:$0xf]
    %v91 = vld [vmem:[%s0 + $0x28] sm:$0xf]
    %v92 = vld [vmem:[%s0 + $0x2c] sm:$0xf]
    %v93 = vld [vmem:[%s0 + $0x30] sm:$0xf]
    %v94 = vld [vmem:[%s0 + $0x34] sm:$0xf]
    %v95 = vld [vmem:[%s0 + $0x38] sm:$0xf]
    %v96 = vld [vmem:[%s0 + $0x3c] sm:$0xf]
    %v97 = vld [vmem:[%s0 + $0x40] sm:$0xf]
    %v98 = vld [vmem:[%s0 + $0x44] sm:$0xf]
    %v99 = vld [vmem:[%s0 + $0x48] sm:$0xf]
    %v100 = vld [vmem:[%s0 + $0x4c] sm:$0xf]
    %v101 = vld [vmem:[%s0 + $0x50] sm:$0xf]
    %v102 = vld [vmem:[%s0 + $0x54] sm:$0xf]
    %v103 = vld [vmem:[%s0 + $0x58] sm:$0xf]
    %v104 = vld [vmem:[%s0 + $0x5c] sm:$0xf]
    %v105 = vld [vmem:[%s0 + $0x60] sm:$0xf]
    %v106 = vld [vmem:[%s0 + $0x64] sm:$0xf]
    %v107 = vld [vmem:[%s0 + $0x68] sm:$0xf]
    %v108 = vld [vmem:[%s0 + $0x6c] sm:$0xf]
    %v109 = vld [vmem:[%s0 + $0x70] sm:$0xf]
    %v110 = vld [vmem:[%s0 + $0x74] sm:$0xf]
    %v111 = vld [vmem:[%s0 + $0x78] sm:$0xf]
    %v112 = vld [vmem:[%s0 + $0x7c] sm:$0xf]
    %v113 = vld [vmem:[%s1] sm:$0xff]
    %v114 = vld [vmem:[%s1 + $0x8] sm:$0xff]
    %v115 = vld [vmem:[%s1 + $0x10] sm:$0xff]
    %v116 = vld [vmem:[%s1 + $0x18] sm:$0xff]
    %v117 = vld [vmem:[%s1 + $0x20] sm:$0xff]
    %v118 = vld [vmem:[%s1 + $0x28] sm:$0xff]
    %v119 = vld [vmem:[%s1 + $0x30] sm:$0xff]
    %v120 = vld [vmem:[%s1 + $0x38] sm:$0xff]
    %v121 = vld [vmem:[%s2] sm:$0xf]
    %v123 = vperm.slane %v121, 0
    %v124 = vperm.slane %v121, 1
    %v125 = vperm.slane %v121, 2
    %v126 = vperm.slane %v121, 3
    %v163 = vunpack.c.l.b16 %v81
    %v164 = vunpack.c.l.b16 %v82
    %v165 = vunpack.c.l.b16 %v83
    %v166 = vunpack.c.l.b16 %v84
    %v167 = vunpack.c.l.b16 %v85
    %v168 = vunpack.c.l.b16 %v86
    %v169 = vunpack.c.l.b16 %v87
    %v170 = vunpack.c.l.b16 %v88
    %v171 = vunpack.c.l.b16 %v89
    %v172 = vunpack.c.l.b16 %v90
    %v173 = vunpack.c.l.b16 %v91
    %v174 = vunpack.c.l.b16 %v92
    %v175 = vunpack.c.l.b16 %v93
    %v176 = vunpack.c.l.b16 %v94
    %v177 = vunpack.c.l.b16 %v95
    %v178 = vunpack.c.l.b16 %v96
    %v179 = vunpack.c.l.b16 %v97
    %v180 = vunpack.c.l.b16 %v98
    %v181 = vunpack.c.l.b16 %v99
    %v182 = vunpack.c.l.b16 %v100
    %v183 = vunpack.c.l.b16 %v101
    %v184 = vunpack.c.l.b16 %v102
    %v185 = vunpack.c.l.b16 %v103
    %v186 = vunpack.c.l.b16 %v104
    %v187 = vunpack.c.l.b16 %v105
    %v188 = vunpack.c.l.b16 %v106
    %v189 = vunpack.c.l.b16 %v107
    %v190 = vunpack.c.l.b16 %v108
    %v191 = vunpack.c.l.b16 %v109
    %v192 = vunpack.c.l.b16 %v110
    %v193 = vunpack.c.l.b16 %v111
    %v194 = vunpack.c.l.b16 %v112
    %v195 = vpack.c.b16 %v164, %v163
    %v196 = vpack.c.b16 %v166, %v165
    %v197 = vpack.c.b16 %v168, %v167
    %v198 = vpack.c.b16 %v170, %v169
    %v199 = vpack.c.b16 %v172, %v171
    %v200 = vpack.c.b16 %v174, %v173
    %v201 = vpack.c.b16 %v176, %v175
    %v202 = vpack.c.b16 %v178, %v177
    %v203 = vpack.c.b16 %v180, %v179
    %v204 = vpack.c.b16 %v182, %v181
    %v205 = vpack.c.b16 %v184, %v183
    %v206 = vpack.c.b16 %v186, %v185
    %v207 = vpack.c.b16 %v188, %v187
    %v208 = vpack.c.b16 %v190, %v189
    %v209 = vpack.c.b16 %v192, %v191
    %v210 = vpack.c.b16 %v194, %v193
    %v219 = vunpack.c.l.b16 %v113
    %v220 = vunpack.c.h.b16 %v113
    %v221 = vunpack.c.l.b16 %v114
    %v222 = vunpack.c.h.b16 %v114
    %v223 = vunpack.c.l.b16 %v115
    %v224 = vunpack.c.h.b16 %v115
    %v225 = vunpack.c.l.b16 %v116
    %v226 = vunpack.c.h.b16 %v116
    %v227 = vunpack.c.l.b16 %v117
    %v228 = vunpack.c.h.b16 %v117
    %v229 = vunpack.c.l.b16 %v118
    %v230 = vunpack.c.h.b16 %v118
    %v231 = vunpack.c.l.b16 %v119
    %v232 = vunpack.c.h.b16 %v119
    %v233 = vunpack.c.l.b16 %v120
    %v234 = vunpack.c.h.b16 %v120
    %v235 = vpack.c.b16 %v223, %v219
    %v236 = vpack.c.b16 %v224, %v220
    %v237 = vpack.c.b16 %v225, %v221
    %v238 = vpack.c.b16 %v226, %v222
    %v239 = vpack.c.b16 %v231, %v227
    %v240 = vpack.c.b16 %v232, %v228
    %v241 = vpack.c.b16 %v233, %v229
    %v242 = vpack.c.b16 %v234, %v230
    %vm251 = vcmask 261120
    %v253 = vsel %vm251, %v195, 0
    %v256 = vsel %vm251, %v196, 0
    %v259 = vsel %vm251, %v197, 0
    %v262 = vsel %vm251, %v198, 0
    %v265 = vsel %vm251, %v199, 0
    %v268 = vsel %vm251, %v200, 0
    %v271 = vsel %vm251, %v201, 0
    %v274 = vsel %vm251, %v202, 0
    %v277 = vsel %vm251, %v203, 0
    %v280 = vsel %vm251, %v204, 0
    %v283 = vsel %vm251, %v205, 0
    %v286 = vsel %vm251, %v206, 0
    %v289 = vsel %vm251, %v207, 0
    %v292 = vsel %vm251, %v208, 0
    %v295 = vsel %vm251, %v209, 0
    %v298 = vsel %vm251, %v210, 0
    %300 = vmatpush.bf16.msra.mxu0 0
    %301 = vmatpush.bf16.msra.mxu0 0
    %302 = vmatpush.bf16.msra.mxu0 0
    %303 = vmatpush.bf16.msra.mxu0 0
    %304 = vmatpush.bf16.msra.mxu0 0
    %305 = vmatpush.bf16.msra.mxu0 0
    %306 = vmatpush.bf16.msra.mxu0 %v239
    %307 = vmatpush.bf16.msra.mxu0 %v235
    %308 = vmatmul.bf16.gmra.mxu0 %v253
    %v309 = vpop.f32.mrf.mxu0
    %v310 = vadd.f32 %v123, %v309
    %v311 = vpop.f32.mrf.mxu0
    %v312 = vadd.f32 %v123, %v311
    %313 = vmatmul.bf16.gmra.mxu0 %v256
    %v314 = vpop.f32.mrf.mxu0
    %v315 = vadd.f32 %v123, %v314
    %v316 = vpop.f32.mrf.mxu0
    %v317 = vadd.f32 %v123, %v316
    %318 = vmatmul.bf16.gmra.mxu0 %v259
    %v319 = vpop.f32.mrf.mxu0
    %v320 = vadd.f32 %v123, %v319
    %v321 = vpop.f32.mrf.mxu0
    %v322 = vadd.f32 %v123, %v321
    %323 = vmatmul.bf16.gmra.mxu0 %v262
    %v324 = vpop.f32.mrf.mxu0
    %v325 = vadd.f32 %v123, %v324
    %v326 = vpop.f32.mrf.mxu0
    %v327 = vadd.f32 %v123, %v326
    %328 = vmatmul.bf16.gmra.mxu0 %v265
    %v329 = vpop.f32.mrf.mxu0
    %v330 = vadd.f32 %v123, %v329
    %v331 = vpop.f32.mrf.mxu0
    %v332 = vadd.f32 %v123, %v331
    %333 = vmatmul.bf16.gmra.mxu0 %v268
    %v334 = vpop.f32.mrf.mxu0
    %v335 = vadd.f32 %v123, %v334
    %v336 = vpop.f32.mrf.mxu0
    %v337 = vadd.f32 %v123, %v336
    %338 = vmatmul.bf16.gmra.mxu0 %v271
    %v339 = vpop.f32.mrf.mxu0
    %v340 = vadd.f32 %v123, %v339
    %v341 = vpop.f32.mrf.mxu0
    %v342 = vadd.f32 %v123, %v341
    %343 = vmatmul.bf16.gmra.mxu0 %v274
    %v344 = vpop.f32.mrf.mxu0
    %v345 = vadd.f32 %v123, %v344
    %v346 = vpop.f32.mrf.mxu0
    %v347 = vadd.f32 %v123, %v346
    %348 = vmatmul.bf16.gmra.mxu0 %v277
    %v349 = vpop.f32.mrf.mxu0
    %v350 = vadd.f32 %v123, %v349
    %v351 = vpop.f32.mrf.mxu0
    %v352 = vadd.f32 %v123, %v351
    %353 = vmatmul.bf16.gmra.mxu0 %v280
    %v354 = vpop.f32.mrf.mxu0
    %v355 = vadd.f32 %v123, %v354
    %v356 = vpop.f32.mrf.mxu0
    %v357 = vadd.f32 %v123, %v356
    %358 = vmatmul.bf16.gmra.mxu0 %v283
    %v359 = vpop.f32.mrf.mxu0
    %v360 = vadd.f32 %v123, %v359
    %v361 = vpop.f32.mrf.mxu0
    %v362 = vadd.f32 %v123, %v361
    %363 = vmatmul.bf16.gmra.mxu0 %v286
    %v364 = vpop.f32.mrf.mxu0
    %v365 = vadd.f32 %v123, %v364
    %v366 = vpop.f32.mrf.mxu0
    %v367 = vadd.f32 %v123, %v366
    %368 = vmatmul.bf16.gmra.mxu0 %v289
    %v369 = vpop.f32.mrf.mxu0
    %v370 = vadd.f32 %v123, %v369
    %v371 = vpop.f32.mrf.mxu0
    %v372 = vadd.f32 %v123, %v371
    %373 = vmatmul.bf16.gmra.mxu0 %v292
    %v374 = vpop.f32.mrf.mxu0
    %v375 = vadd.f32 %v123, %v374
    %v376 = vpop.f32.mrf.mxu0
    %v377 = vadd.f32 %v123, %v376
    %378 = vmatmul.bf16.gmra.mxu0 %v295
    %v379 = vpop.f32.mrf.mxu0
    %v380 = vadd.f32 %v123, %v379
    %v381 = vpop.f32.mrf.mxu0
    %v382 = vadd.f32 %v123, %v381
    %383 = vmatmul.bf16.gmra.mxu0 %v298
    %v384 = vpop.f32.mrf.mxu0
    %v385 = vadd.f32 %v123, %v384
    %v386 = vpop.f32.mrf.mxu0
    %v387 = vadd.f32 %v123, %v386
    %388 = vdwg.mxu0
    %389 = vmatpush.bf16.msra.mxu0 0
    %390 = vmatpush.bf16.msra.mxu0 0
    %391 = vmatpush.bf16.msra.mxu0 0
    %392 = vmatpush.bf16.msra.mxu0 0
    %393 = vmatpush.bf16.msra.mxu0 0
    %394 = vmatpush.bf16.msra.mxu0 0
    %395 = vmatpush.bf16.msra.mxu0 %v240
    %396 = vmatpush.bf16.msra.mxu0 %v236
    %397 = vmatmul.bf16.gmra.mxu0 %v253
    %v398 = vpop.f32.mrf.mxu0
    %v399 = vadd.f32 %v124, %v398
    %v400 = vpop.f32.mrf.mxu0
    %v401 = vadd.f32 %v124, %v400
    %402 = vmatmul.bf16.gmra.mxu0 %v256
    %v403 = vpop.f32.mrf.mxu0
    %v404 = vadd.f32 %v124, %v403
    %v405 = vpop.f32.mrf.mxu0
    %v406 = vadd.f32 %v124, %v405
    %407 = vmatmul.bf16.gmra.mxu0 %v259
    %v408 = vpop.f32.mrf.mxu0
    %v409 = vadd.f32 %v124, %v408
    %v410 = vpop.f32.mrf.mxu0
    %v411 = vadd.f32 %v124, %v410
    %412 = vmatmul.bf16.gmra.mxu0 %v262
    %v413 = vpop.f32.mrf.mxu0
    %v414 = vadd.f32 %v124, %v413
    %v415 = vpop.f32.mrf.mxu0
    %v416 = vadd.f32 %v124, %v415
    %417 = vmatmul.bf16.gmra.mxu0 %v265
    %v418 = vpop.f32.mrf.mxu0
    %v419 = vadd.f32 %v124, %v418
    %v420 = vpop.f32.mrf.mxu0
    %v421 = vadd.f32 %v124, %v420
    %422 = vmatmul.bf16.gmra.mxu0 %v268
    %v423 = vpop.f32.mrf.mxu0
    %v424 = vadd.f32 %v124, %v423
    %v425 = vpop.f32.mrf.mxu0
    %v426 = vadd.f32 %v124, %v425
    %427 = vmatmul.bf16.gmra.mxu0 %v271
    %v428 = vpop.f32.mrf.mxu0
    %v429 = vadd.f32 %v124, %v428
    %v430 = vpop.f32.mrf.mxu0
    %v431 = vadd.f32 %v124, %v430
    %432 = vmatmul.bf16.gmra.mxu0 %v274
    %v433 = vpop.f32.mrf.mxu0
    %v434 = vadd.f32 %v124, %v433
    %v435 = vpop.f32.mrf.mxu0
    %v436 = vadd.f32 %v124, %v435
    %437 = vmatmul.bf16.gmra.mxu0 %v277
    %v438 = vpop.f32.mrf.mxu0
    %v439 = vadd.f32 %v124, %v438
    %v440 = vpop.f32.mrf.mxu0
    %v441 = vadd.f32 %v124, %v440
    %442 = vmatmul.bf16.gmra.mxu0 %v280
    %v443 = vpop.f32.mrf.mxu0
    %v444 = vadd.f32 %v124, %v443
    %v445 = vpop.f32.mrf.mxu0
    %v446 = vadd.f32 %v124, %v445
    %447 = vmatmul.bf16.gmra.mxu0 %v283
    %v448 = vpop.f32.mrf.mxu0
    %v449 = vadd.f32 %v124, %v448
    %v450 = vpop.f32.mrf.mxu0
    %v451 = vadd.f32 %v124, %v450
    %452 = vmatmul.bf16.gmra.mxu0 %v286
    %v453 = vpop.f32.mrf.mxu0
    %v454 = vadd.f32 %v124, %v453
    %v455 = vpop.f32.mrf.mxu0
    %v456 = vadd.f32 %v124, %v455
    %457 = vmatmul.bf16.gmra.mxu0 %v289
    %v458 = vpop.f32.mrf.mxu0
    %v459 = vadd.f32 %v124, %v458
    %v460 = vpop.f32.mrf.mxu0
    %v461 = vadd.f32 %v124, %v460
    %462 = vmatmul.bf16.gmra.mxu0 %v292
    %v463 = vpop.f32.mrf.mxu0
    %v464 = vadd.f32 %v124, %v463
    %v465 = vpop.f32.mrf.mxu0
    %v466 = vadd.f32 %v124, %v465
    %467 = vmatmul.bf16.gmra.mxu0 %v295
    %v468 = vpop.f32.mrf.mxu0
    %v469 = vadd.f32 %v124, %v468
    %v470 = vpop.f32.mrf.mxu0
    %v471 = vadd.f32 %v124, %v470
    %472 = vmatmul.bf16.gmra.mxu0 %v298
    %v473 = vpop.f32.mrf.mxu0
    %v474 = vadd.f32 %v124, %v473
    %v475 = vpop.f32.mrf.mxu0
    %v476 = vadd.f32 %v124, %v475
    %477 = vdwg.mxu0
    %478 = vmatpush.bf16.msra.mxu0 0
    %479 = vmatpush.bf16.msra.mxu0 0
    %480 = vmatpush.bf16.msra.mxu0 0
    %481 = vmatpush.bf16.msra.mxu0 0
    %482 = vmatpush.bf16.msra.mxu0 0
    %483 = vmatpush.bf16.msra.mxu0 0
    %484 = vmatpush.bf16.msra.mxu0 %v241
    %485 = vmatpush.bf16.msra.mxu0 %v237
    %486 = vmatmul.bf16.gmra.mxu0 %v253
    %v487 = vpop.f32.mrf.mxu0
    %v488 = vadd.f32 %v125, %v487
    %v489 = vpop.f32.mrf.mxu0
    %v490 = vadd.f32 %v125, %v489
    %491 = vmatmul.bf16.gmra.mxu0 %v256
    %v492 = vpop.f32.mrf.mxu0
    %v493 = vadd.f32 %v125, %v492
    %v494 = vpop.f32.mrf.mxu0
    %v495 = vadd.f32 %v125, %v494
    %496 = vmatmul.bf16.gmra.mxu0 %v259
    %v497 = vpop.f32.mrf.mxu0
    %v498 = vadd.f32 %v125, %v497
    %v499 = vpop.f32.mrf.mxu0
    %v500 = vadd.f32 %v125, %v499
    %501 = vmatmul.bf16.gmra.mxu0 %v262
    %v502 = vpop.f32.mrf.mxu0
    %v503 = vadd.f32 %v125, %v502
    %v504 = vpop.f32.mrf.mxu0
    %v505 = vadd.f32 %v125, %v504
    %506 = vmatmul.bf16.gmra.mxu0 %v265
    %v507 = vpop.f32.mrf.mxu0
    %v508 = vadd.f32 %v125, %v507
    %v509 = vpop.f32.mrf.mxu0
    %v510 = vadd.f32 %v125, %v509
    %511 = vmatmul.bf16.gmra.mxu0 %v268
    %v512 = vpop.f32.mrf.mxu0
    %v513 = vadd.f32 %v125, %v512
    %v514 = vpop.f32.mrf.mxu0
    %v515 = vadd.f32 %v125, %v514
    %516 = vmatmul.bf16.gmra.mxu0 %v271
    %v517 = vpop.f32.mrf.mxu0
    %v518 = vadd.f32 %v125, %v517
    %v519 = vpop.f32.mrf.mxu0
    %v520 = vadd.f32 %v125, %v519
    %521 = vmatmul.bf16.gmra.mxu0 %v274
    %v522 = vpop.f32.mrf.mxu0
    %v523 = vadd.f32 %v125, %v522
    %v524 = vpop.f32.mrf.mxu0
    %v525 = vadd.f32 %v125, %v524
    %526 = vmatmul.bf16.gmra.mxu0 %v277
    %v527 = vpop.f32.mrf.mxu0
    %v528 = vadd.f32 %v125, %v527
    %v529 = vpop.f32.mrf.mxu0
    %v530 = vadd.f32 %v125, %v529
    %531 = vmatmul.bf16.gmra.mxu0 %v280
    %v532 = vpop.f32.mrf.mxu0
    %v533 = vadd.f32 %v125, %v532
    %v534 = vpop.f32.mrf.mxu0
    %v535 = vadd.f32 %v125, %v534
    %536 = vmatmul.bf16.gmra.mxu0 %v283
    %v537 = vpop.f32.mrf.mxu0
    %v538 = vadd.f32 %v125, %v537
    %v539 = vpop.f32.mrf.mxu0
    %v540 = vadd.f32 %v125, %v539
    %541 = vmatmul.bf16.gmra.mxu0 %v286
    %v542 = vpop.f32.mrf.mxu0
    %v543 = vadd.f32 %v125, %v542
    %v544 = vpop.f32.mrf.mxu0
    %v545 = vadd.f32 %v125, %v544
    %546 = vmatmul.bf16.gmra.mxu0 %v289
    %v547 = vpop.f32.mrf.mxu0
    %v548 = vadd.f32 %v125, %v547
    %v549 = vpop.f32.mrf.mxu0
    %v550 = vadd.f32 %v125, %v549
    %551 = vmatmul.bf16.gmra.mxu0 %v292
    %v552 = vpop.f32.mrf.mxu0
    %v553 = vadd.f32 %v125, %v552
    %v554 = vpop.f32.mrf.mxu0
    %v555 = vadd.f32 %v125, %v554
    %556 = vmatmul.bf16.gmra.mxu0 %v295
    %v557 = vpop.f32.mrf.mxu0
    %v558 = vadd.f32 %v125, %v557
    %v559 = vpop.f32.mrf.mxu0
    %v560 = vadd.f32 %v125, %v559
    %561 = vmatmul.bf16.gmra.mxu0 %v298
    %v562 = vpop.f32.mrf.mxu0
    %v563 = vadd.f32 %v125, %v562
    %v564 = vpop.f32.mrf.mxu0
    %v565 = vadd.f32 %v125, %v564
    %566 = vdwg.mxu0
    %567 = vmatpush.bf16.msra.mxu0 0
    %568 = vmatpush.bf16.msra.mxu0 0
    %569 = vmatpush.bf16.msra.mxu0 0
    %570 = vmatpush.bf16.msra.mxu0 0
    %571 = vmatpush.bf16.msra.mxu0 0
    %572 = vmatpush.bf16.msra.mxu0 0
    %573 = vmatpush.bf16.msra.mxu0 %v242
    %574 = vmatpush.bf16.msra.mxu0 %v238
    %575 = vmatmul.bf16.gmra.mxu0 %v253
    %v576 = vpop.f32.mrf.mxu0
    %v577 = vadd.f32 %v126, %v576
    %v578 = vpop.f32.mrf.mxu0
    %v579 = vadd.f32 %v126, %v578
    %580 = vmatmul.bf16.gmra.mxu0 %v256
    %v581 = vpop.f32.mrf.mxu0
    %v582 = vadd.f32 %v126, %v581
    %v583 = vpop.f32.mrf.mxu0
    %v584 = vadd.f32 %v126, %v583
    %585 = vmatmul.bf16.gmra.mxu0 %v259
    %v586 = vpop.f32.mrf.mxu0
    %v587 = vadd.f32 %v126, %v586
    %v588 = vpop.f32.mrf.mxu0
    %v589 = vadd.f32 %v126, %v588
    %590 = vmatmul.bf16.gmra.mxu0 %v262
    %v591 = vpop.f32.mrf.mxu0
    %v592 = vadd.f32 %v126, %v591
    %v593 = vpop.f32.mrf.mxu0
    %v594 = vadd.f32 %v126, %v593
    %595 = vmatmul.bf16.gmra.mxu0 %v265
    %v596 = vpop.f32.mrf.mxu0
    %v597 = vadd.f32 %v126, %v596
    %v598 = vpop.f32.mrf.mxu0
    %v599 = vadd.f32 %v126, %v598
    %600 = vmatmul.bf16.gmra.mxu0 %v268
    %v601 = vpop.f32.mrf.mxu0
    %v602 = vadd.f32 %v126, %v601
    %v603 = vpop.f32.mrf.mxu0
    %v604 = vadd.f32 %v126, %v603
    %605 = vmatmul.bf16.gmra.mxu0 %v271
    %v606 = vpop.f32.mrf.mxu0
    %v607 = vadd.f32 %v126, %v606
    %v608 = vpop.f32.mrf.mxu0
    %v609 = vadd.f32 %v126, %v608
    %610 = vmatmul.bf16.gmra.mxu0 %v274
    %v611 = vpop.f32.mrf.mxu0
    %v612 = vadd.f32 %v126, %v611
    %v613 = vpop.f32.mrf.mxu0
    %v614 = vadd.f32 %v126, %v613
    %615 = vmatmul.bf16.gmra.mxu0 %v277
    %v616 = vpop.f32.mrf.mxu0
    %v617 = vadd.f32 %v126, %v616
    %v618 = vpop.f32.mrf.mxu0
    %v619 = vadd.f32 %v126, %v618
    %620 = vmatmul.bf16.gmra.mxu0 %v280
    %v621 = vpop.f32.mrf.mxu0
    %v622 = vadd.f32 %v126, %v621
    %v623 = vpop.f32.mrf.mxu0
    %v624 = vadd.f32 %v126, %v623
    %625 = vmatmul.bf16.gmra.mxu0 %v283
    %v626 = vpop.f32.mrf.mxu0
    %v627 = vadd.f32 %v126, %v626
    %v628 = vpop.f32.mrf.mxu0
    %v629 = vadd.f32 %v126, %v628
    %630 = vmatmul.bf16.gmra.mxu0 %v286
    %v631 = vpop.f32.mrf.mxu0
    %v632 = vadd.f32 %v126, %v631
    %v633 = vpop.f32.mrf.mxu0
    %v634 = vadd.f32 %v126, %v633
    %635 = vmatmul.bf16.gmra.mxu0 %v289
    %v636 = vpop.f32.mrf.mxu0
    %v637 = vadd.f32 %v126, %v636
    %v638 = vpop.f32.mrf.mxu0
    %v639 = vadd.f32 %v126, %v638
    %640 = vmatmul.bf16.gmra.mxu0 %v292
    %v641 = vpop.f32.mrf.mxu0
    %v642 = vadd.f32 %v126, %v641
    %v643 = vpop.f32.mrf.mxu0
    %v644 = vadd.f32 %v126, %v643
    %645 = vmatmul.bf16.gmra.mxu0 %v295
    %v646 = vpop.f32.mrf.mxu0
    %v647 = vadd.f32 %v126, %v646
    %v648 = vpop.f32.mrf.mxu0
    %v649 = vadd.f32 %v126, %v648
    %650 = vmatmul.bf16.gmra.mxu0 %v298
    %v651 = vpop.f32.mrf.mxu0
    %v652 = vadd.f32 %v126, %v651
    %v653 = vpop.f32.mrf.mxu0
    %v654 = vadd.f32 %v126, %v653
    %655 = vdwg.mxu0
    %v656 = vmax.f32 %v310, 0.0
    %v657 = vmax.f32 %v399, 0.0
    %v658 = vmax.f32 %v488, 0.0
    %v659 = vmax.f32 %v577, 0.0
    %v660 = vmax.f32 %v312, 0.0
    %v661 = vmax.f32 %v401, 0.0
    %v662 = vmax.f32 %v490, 0.0
    %v663 = vmax.f32 %v579, 0.0
    %v664 = vmax.f32 %v315, 0.0
    %v665 = vmax.f32 %v404, 0.0
    %v666 = vmax.f32 %v493, 0.0
    %v667 = vmax.f32 %v582, 0.0
    %v668 = vmax.f32 %v317, 0.0
    %v669 = vmax.f32 %v406, 0.0
    %v670 = vmax.f32 %v495, 0.0
    %v671 = vmax.f32 %v584, 0.0
    %v672 = vmax.f32 %v320, 0.0
    %v673 = vmax.f32 %v409, 0.0
    %v674 = vmax.f32 %v498, 0.0
    %v675 = vmax.f32 %v587, 0.0
    %v676 = vmax.f32 %v322, 0.0
    %v677 = vmax.f32 %v411, 0.0
    %v678 = vmax.f32 %v500, 0.0
    %v679 = vmax.f32 %v589, 0.0
    %v680 = vmax.f32 %v325, 0.0
    %v681 = vmax.f32 %v414, 0.0
    %v682 = vmax.f32 %v503, 0.0
    %v683 = vmax.f32 %v592, 0.0
    %v684 = vmax.f32 %v327, 0.0
    %v685 = vmax.f32 %v416, 0.0
    %v686 = vmax.f32 %v505, 0.0
    %v687 = vmax.f32 %v594, 0.0
    %v688 = vmax.f32 %v330, 0.0
    %v689 = vmax.f32 %v419, 0.0
    %v690 = vmax.f32 %v508, 0.0
    %v691 = vmax.f32 %v597, 0.0
    %v692 = vmax.f32 %v332, 0.0
    %v693 = vmax.f32 %v421, 0.0
    %v694 = vmax.f32 %v510, 0.0
    %v695 = vmax.f32 %v599, 0.0
    %v696 = vmax.f32 %v335, 0.0
    %v697 = vmax.f32 %v424, 0.0
    %v698 = vmax.f32 %v513, 0.0
    %v699 = vmax.f32 %v602, 0.0
    %v700 = vmax.f32 %v337, 0.0
    %v701 = vmax.f32 %v426, 0.0
    %v702 = vmax.f32 %v515, 0.0
    %v703 = vmax.f32 %v604, 0.0
    %v704 = vmax.f32 %v340, 0.0
    %v705 = vmax.f32 %v429, 0.0
    %v706 = vmax.f32 %v518, 0.0
    %v707 = vmax.f32 %v607, 0.0
    %v708 = vmax.f32 %v342, 0.0
    %v709 = vmax.f32 %v431, 0.0
    %v710 = vmax.f32 %v520, 0.0
    %v711 = vmax.f32 %v609, 0.0
    %v712 = vmax.f32 %v345, 0.0
    %v713 = vmax.f32 %v434, 0.0
    %v714 = vmax.f32 %v523, 0.0
    %v715 = vmax.f32 %v612, 0.0
    %v716 = vmax.f32 %v347, 0.0
    %v717 = vmax.f32 %v436, 0.0
    %v718 = vmax.f32 %v525, 0.0
    %v719 = vmax.f32 %v614, 0.0
    %v720 = vmax.f32 %v350, 0.0
    %v721 = vmax.f32 %v439, 0.0
    %v722 = vmax.f32 %v528, 0.0
    %v723 = vmax.f32 %v617, 0.0
    %v724 = vmax.f32 %v352, 0.0
    %v725 = vmax.f32 %v441, 0.0
    %v726 = vmax.f32 %v530, 0.0
    %v727 = vmax.f32 %v619, 0.0
    %v728 = vmax.f32 %v355, 0.0
    %v729 = vmax.f32 %v444, 0.0
    %v730 = vmax.f32 %v533, 0.0
    %v731 = vmax.f32 %v622, 0.0
    %v732 = vmax.f32 %v357, 0.0
    %v733 = vmax.f32 %v446, 0.0
    %v734 = vmax.f32 %v535, 0.0
    %v735 = vmax.f32 %v624, 0.0
    %v736 = vmax.f32 %v360, 0.0
    %v737 = vmax.f32 %v449, 0.0
    %v738 = vmax.f32 %v538, 0.0
    %v739 = vmax.f32 %v627, 0.0
    %v740 = vmax.f32 %v362, 0.0
    %v741 = vmax.f32 %v451, 0.0
    %v742 = vmax.f32 %v540, 0.0
    %v743 = vmax.f32 %v629, 0.0
    %v744 = vmax.f32 %v365, 0.0
    %v745 = vmax.f32 %v454, 0.0
    %v746 = vmax.f32 %v543, 0.0
    %v747 = vmax.f32 %v632, 0.0
    %v748 = vmax.f32 %v367, 0.0
    %v749 = vmax.f32 %v456, 0.0
    %v750 = vmax.f32 %v545, 0.0
    %v751 = vmax.f32 %v634, 0.0
    %v752 = vmax.f32 %v370, 0.0
    %v753 = vmax.f32 %v459, 0.0
    %v754 = vmax.f32 %v548, 0.0
    %v755 = vmax.f32 %v637, 0.0
    %v756 = vmax.f32 %v372, 0.0
    %v757 = vmax.f32 %v461, 0.0
    %v758 = vmax.f32 %v550, 0.0
    %v759 = vmax.f32 %v639, 0.0
    %v760 = vmax.f32 %v375, 0.0
    %v761 = vmax.f32 %v464, 0.0
    %v762 = vmax.f32 %v553, 0.0
    %v763 = vmax.f32 %v642, 0.0
    %v764 = vmax.f32 %v377, 0.0
    %v765 = vmax.f32 %v466, 0.0
    %v766 = vmax.f32 %v555, 0.0
    %v767 = vmax.f32 %v644, 0.0
    %v768 = vmax.f32 %v380, 0.0
    %v769 = vmax.f32 %v469, 0.0
    %v770 = vmax.f32 %v558, 0.0
    %v771 = vmax.f32 %v647, 0.0
    %v772 = vmax.f32 %v382, 0.0
    %v773 = vmax.f32 %v471, 0.0
    %v774 = vmax.f32 %v560, 0.0
    %v775 = vmax.f32 %v649, 0.0
    %v776 = vmax.f32 %v385, 0.0
    %v777 = vmax.f32 %v474, 0.0
    %v778 = vmax.f32 %v563, 0.0
    %v779 = vmax.f32 %v652, 0.0
    %v780 = vmax.f32 %v387, 0.0
    %v781 = vmax.f32 %v476, 0.0
    %v782 = vmax.f32 %v565, 0.0
    %v783 = vmax.f32 %v654, 0.0
    %v784 = vpack.c.bf16 %v660, %v656
    %v785 = vpack.c.bf16 %v661, %v657
    %v786 = vpack.c.bf16 %v662, %v658
    %v787 = vpack.c.bf16 %v663, %v659
    %v788 = vpack.c.bf16 %v668, %v664
    %v789 = vpack.c.bf16 %v669, %v665
    %v790 = vpack.c.bf16 %v670, %v666
    %v791 = vpack.c.bf16 %v671, %v667
    %v792 = vpack.c.bf16 %v676, %v672
    %v793 = vpack.c.bf16 %v677, %v673
    %v794 = vpack.c.bf16 %v678, %v674
    %v795 = vpack.c.bf16 %v679, %v675
    %v796 = vpack.c.bf16 %v684, %v680
    %v797 = vpack.c.bf16 %v685, %v681
    %v798 = vpack.c.bf16 %v686, %v682
    %v799 = vpack.c.bf16 %v687, %v683
    %v800 = vpack.c.bf16 %v692, %v688
    %v801 = vpack.c.bf16 %v693, %v689
    %v802 = vpack.c.bf16 %v694, %v690
    %v803 = vpack.c.bf16 %v695, %v691
    %v804 = vpack.c.bf16 %v700, %v696
    %v805 = vpack.c.bf16 %v701, %v697
    %v806 = vpack.c.bf16 %v702, %v698
    %v807 = vpack.c.bf16 %v703, %v699
    %v808 = vpack.c.bf16 %v708, %v704
    %v809 = vpack.c.bf16 %v709, %v705
    %v810 = vpack.c.bf16 %v710, %v706
    %v811 = vpack.c.bf16 %v711, %v707
    %v812 = vpack.c.bf16 %v716, %v712
    %v813 = vpack.c.bf16 %v717, %v713
    %v814 = vpack.c.bf16 %v718, %v714
    %v815 = vpack.c.bf16 %v719, %v715
    %v816 = vpack.c.bf16 %v724, %v720
    %v817 = vpack.c.bf16 %v725, %v721
    %v818 = vpack.c.bf16 %v726, %v722
    %v819 = vpack.c.bf16 %v727, %v723
    %v820 = vpack.c.bf16 %v732, %v728
    %v821 = vpack.c.bf16 %v733, %v729
    %v822 = vpack.c.bf16 %v734, %v730
    %v823 = vpack.c.bf16 %v735, %v731
    %v824 = vpack.c.bf16 %v740, %v736
    %v825 = vpack.c.bf16 %v741, %v737
    %v826 = vpack.c.bf16 %v742, %v738
    %v827 = vpack.c.bf16 %v743, %v739
    %v828 = vpack.c.bf16 %v748, %v744
    %v829 = vpack.c.bf16 %v749, %v745
    %v830 = vpack.c.bf16 %v750, %v746
    %v831 = vpack.c.bf16 %v751, %v747
    %v832 = vpack.c.bf16 %v756, %v752
    %v833 = vpack.c.bf16 %v757, %v753
    %v834 = vpack.c.bf16 %v758, %v754
    %v835 = vpack.c.bf16 %v759, %v755
    %v836 = vpack.c.bf16 %v764, %v760
    %v837 = vpack.c.bf16 %v765, %v761
    %v838 = vpack.c.bf16 %v766, %v762
    %v839 = vpack.c.bf16 %v767, %v763
    %v840 = vpack.c.bf16 %v772, %v768
    %v841 = vpack.c.bf16 %v773, %v769
    %v842 = vpack.c.bf16 %v774, %v770
    %v843 = vpack.c.bf16 %v775, %v771
    %v844 = vpack.c.bf16 %v780, %v776
    %v845 = vpack.c.bf16 %v781, %v777
    %v846 = vpack.c.bf16 %v782, %v778
    %v847 = vpack.c.bf16 %v783, %v779
    %v848 = vld [vmem:[#allocation2] sm:$0xff]
    %v849 = vld [vmem:[#allocation2 + $0x8] sm:$0xff]
    %v850 = vld [vmem:[#allocation2 + $0x10] sm:$0xff]
    %v851 = vld [vmem:[#allocation2 + $0x18] sm:$0xff]
    %v852 = vld [vmem:[#allocation2 + $0x20] sm:$0xff]
    %v853 = vld [vmem:[#allocation2 + $0x28] sm:$0xff]
    %v854 = vld [vmem:[#allocation2 + $0x30] sm:$0xff]
    %v855 = vld [vmem:[#allocation2 + $0x38] sm:$0xff]
    %v856 = vld [vmem:[#allocation2 + $0x40] sm:$0xff]
    %v857 = vld [vmem:[#allocation2 + $0x48] sm:$0xff]
    %v858 = vld [vmem:[#allocation2 + $0x50] sm:$0xff]
    %v859 = vld [vmem:[#allocation2 + $0x58] sm:$0xff]
    %v860 = vld [vmem:[#allocation2 + $0x60] sm:$0xff]
    %v861 = vld [vmem:[#allocation2 + $0x68] sm:$0xff]
    %v862 = vld [vmem:[#allocation2 + $0x70] sm:$0xff]
    %v863 = vld [vmem:[#allocation2 + $0x78] sm:$0xff]
    %v864 = vld [vmem:[#allocation2 + $0x80] sm:$0xff]
    %v865 = vld [vmem:[#allocation2 + $0x88] sm:$0xff]
    %v866 = vld [vmem:[#allocation2 + $0x90] sm:$0xff]
    %v867 = vld [vmem:[#allocation2 + $0x98] sm:$0xff]
    %v868 = vld [vmem:[#allocation2 + $0xa0] sm:$0xff]
    %v869 = vld [vmem:[#allocation2 + $0xa8] sm:$0xff]
    %v870 = vld [vmem:[#allocation2 + $0xb0] sm:$0xff]
    %v871 = vld [vmem:[#allocation2 + $0xb8] sm:$0xff]
    %v872 = vld [vmem:[#allocation2 + $0xc0] sm:$0xff]
    %v873 = vld [vmem:[#allocation2 + $0xc8] sm:$0xff]
    %v874 = vld [vmem:[#allocation2 + $0xd0] sm:$0xff]
    %v875 = vld [vmem:[#allocation2 + $0xd8] sm:$0xff]
    %v876 = vld [vmem:[#allocation2 + $0xe0] sm:$0xff]
    %v877 = vld [vmem:[#allocation2 + $0xe8] sm:$0xff]
    %v878 = vld [vmem:[#allocation2 + $0xf0] sm:$0xff]
    %v879 = vld [vmem:[#allocation2 + $0xf8] sm:$0xff]
    %v880 = vld [vmem:[#allocation2 + $0x100] sm:$0xff]
    %v881 = vld [vmem:[#allocation2 + $0x108] sm:$0xff]
    %v882 = vld [vmem:[#allocation2 + $0x110] sm:$0xff]
    %v883 = vld [vmem:[#allocation2 + $0x118] sm:$0xff]
    %v884 = vld [vmem:[#allocation2 + $0x120] sm:$0xff]
    %v885 = vld [vmem:[#allocation2 + $0x128] sm:$0xff]
    %v886 = vld [vmem:[#allocation2 + $0x130] sm:$0xff]
    %v887 = vld [vmem:[#allocation2 + $0x138] sm:$0xff]
    %v888 = vld [vmem:[#allocation2 + $0x140] sm:$0xff]
    %v889 = vld [vmem:[#allocation2 + $0x148] sm:$0xff]
    %v890 = vld [vmem:[#allocation2 + $0x150] sm:$0xff]
    %v891 = vld [vmem:[#allocation2 + $0x158] sm:$0xff]
    %v892 = vld [vmem:[#allocation2 + $0x160] sm:$0xff]
    %v893 = vld [vmem:[#allocation2 + $0x168] sm:$0xff]
    %v894 = vld [vmem:[#allocation2 + $0x170] sm:$0xff]
    %v895 = vld [vmem:[#allocation2 + $0x178] sm:$0xff]
    %v896 = vld [vmem:[#allocation2 + $0x180] sm:$0xff]
    %v897 = vld [vmem:[#allocation2 + $0x188] sm:$0xff]
    %v898 = vld [vmem:[#allocation2 + $0x190] sm:$0xff]
    %v899 = vld [vmem:[#allocation2 + $0x198] sm:$0xff]
    %v900 = vld [vmem:[#allocation2 + $0x1a0] sm:$0xff]
    %v901 = vld [vmem:[#allocation2 + $0x1a8] sm:$0xff]
    %v902 = vld [vmem:[#allocation2 + $0x1b0] sm:$0xff]
    %v903 = vld [vmem:[#allocation2 + $0x1b8] sm:$0xff]
    %v904 = vld [vmem:[#allocation2 + $0x1c0] sm:$0xff]
    %v905 = vld [vmem:[#allocation2 + $0x1c8] sm:$0xff]
    %v906 = vld [vmem:[#allocation2 + $0x1d0] sm:$0xff]
    %v907 = vld [vmem:[#allocation2 + $0x1d8] sm:$0xff]
    %v908 = vld [vmem:[#allocation2 + $0x1e0] sm:$0xff]
    %v909 = vld [vmem:[#allocation2 + $0x1e8] sm:$0xff]
    %v910 = vld [vmem:[#allocation2 + $0x1f0] sm:$0xff]
    %v911 = vld [vmem:[#allocation2 + $0x1f8] sm:$0xff]
    %v912 = vld [vmem:[%s4] sm:$0x3]
    %v914 = vperm.slane %v912, 0
    %v915 = vperm.slane %v912, 1
    %v982 = vunpack.c.l.b16 %v848
    %v983 = vunpack.c.h.b16 %v848
    %v984 = vunpack.c.l.b16 %v849
    %v985 = vunpack.c.h.b16 %v849
    %v986 = vunpack.c.l.b16 %v850
    %v987 = vunpack.c.h.b16 %v850
    %v988 = vunpack.c.l.b16 %v851
    %v989 = vunpack.c.h.b16 %v851
    %v990 = vunpack.c.l.b16 %v852
    %v991 = vunpack.c.h.b16 %v852
    %v992 = vunpack.c.l.b16 %v853
    %v993 = vunpack.c.h.b16 %v853
    %v994 = vunpack.c.l.b16 %v854
    %v995 = vunpack.c.h.b16 %v854
    %v996 = vunpack.c.l.b16 %v855
    %v997 = vunpack.c.h.b16 %v855
    %v998 = vunpack.c.l.b16 %v856
    %v999 = vunpack.c.h.b16 %v856
    %v1000 = vunpack.c.l.b16 %v857
    %v1001 = vunpack.c.h.b16 %v857
    %v1002 = vunpack.c.l.b16 %v858
    %v1003 = vunpack.c.h.b16 %v858
    %v1004 = vunpack.c.l.b16 %v859
    %v1005 = vunpack.c.h.b16 %v859
    %v1006 = vunpack.c.l.b16 %v860
    %v1007 = vunpack.c.h.b16 %v860
    %v1008 = vunpack.c.l.b16 %v861
    %v1009 = vunpack.c.h.b16 %v861
    %v1010 = vunpack.c.l.b16 %v862
    %v1011 = vunpack.c.h.b16 %v862
    %v1012 = vunpack.c.l.b16 %v863
    %v1013 = vunpack.c.h.b16 %v863
    %v1014 = vunpack.c.l.b16 %v864
    %v1015 = vunpack.c.h.b16 %v864
    %v1016 = vunpack.c.l.b16 %v865
    %v1017 = vunpack.c.h.b16 %v865
    %v1018 = vunpack.c.l.b16 %v866
    %v1019 = vunpack.c.h.b16 %v866
    %v1020 = vunpack.c.l.b16 %v867
    %v1021 = vunpack.c.h.b16 %v867
    %v1022 = vunpack.c.l.b16 %v868
    %v1023 = vunpack.c.h.b16 %v868
    %v1024 = vunpack.c.l.b16 %v869
    %v1025 = vunpack.c.h.b16 %v869
    %v1026 = vunpack.c.l.b16 %v870
    %v1027 = vunpack.c.h.b16 %v870
    %v1028 = vunpack.c.l.b16 %v871
    %v1029 = vunpack.c.h.b16 %v871
    %v1030 = vunpack.c.l.b16 %v872
    %v1031 = vunpack.c.h.b16 %v872
    %v1032 = vunpack.c.l.b16 %v873
    %v1033 = vunpack.c.h.b16 %v873
    %v1034 = vunpack.c.l.b16 %v874
    %v1035 = vunpack.c.h.b16 %v874
    %v1036 = vunpack.c.l.b16 %v875
    %v1037 = vunpack.c.h.b16 %v875
    %v1038 = vunpack.c.l.b16 %v876
    %v1039 = vunpack.c.h.b16 %v876
    %v1040 = vunpack.c.l.b16 %v877
    %v1041 = vunpack.c.h.b16 %v877
    %v1042 = vunpack.c.l.b16 %v878
    %v1043 = vunpack.c.h.b16 %v878
    %v1044 = vunpack.c.l.b16 %v879
    %v1045 = vunpack.c.h.b16 %v879
    %v1046 = vunpack.c.l.b16 %v880
    %v1047 = vunpack.c.h.b16 %v880
    %v1048 = vunpack.c.l.b16 %v881
    %v1049 = vunpack.c.h.b16 %v881
    %v1050 = vunpack.c.l.b16 %v882
    %v1051 = vunpack.c.h.b16 %v882
    %v1052 = vunpack.c.l.b16 %v883
    %v1053 = vunpack.c.h.b16 %v883
    %v1054 = vunpack.c.l.b16 %v884
    %v1055 = vunpack.c.h.b16 %v884
    %v1056 = vunpack.c.l.b16 %v885
    %v1057 = vunpack.c.h.b16 %v885
    %v1058 = vunpack.c.l.b16 %v886
    %v1059 = vunpack.c.h.b16 %v886
    %v1060 = vunpack.c.l.b16 %v887
    %v1061 = vunpack.c.h.b16 %v887
    %v1062 = vunpack.c.l.b16 %v888
    %v1063 = vunpack.c.h.b16 %v888
    %v1064 = vunpack.c.l.b16 %v889
    %v1065 = vunpack.c.h.b16 %v889
    %v1066 = vunpack.c.l.b16 %v890
    %v1067 = vunpack.c.h.b16 %v890
    %v1068 = vunpack.c.l.b16 %v891
    %v1069 = vunpack.c.h.b16 %v891
    %v1070 = vunpack.c.l.b16 %v892
    %v1071 = vunpack.c.h.b16 %v892
    %v1072 = vunpack.c.l.b16 %v893
    %v1073 = vunpack.c.h.b16 %v893
    %v1074 = vunpack.c.l.b16 %v894
    %v1075 = vunpack.c.h.b16 %v894
    %v1076 = vunpack.c.l.b16 %v895
    %v1077 = vunpack.c.h.b16 %v895
    %v1078 = vunpack.c.l.b16 %v896
    %v1079 = vunpack.c.h.b16 %v896
    %v1080 = vunpack.c.l.b16 %v897
    %v1081 = vunpack.c.h.b16 %v897
    %v1082 = vunpack.c.l.b16 %v898
    %v1083 = vunpack.c.h.b16 %v898
    %v1084 = vunpack.c.l.b16 %v899
    %v1085 = vunpack.c.h.b16 %v899
    %v1086 = vunpack.c.l.b16 %v900
    %v1087 = vunpack.c.h.b16 %v900
    %v1088 = vunpack.c.l.b16 %v901
    %v1089 = vunpack.c.h.b16 %v901
    %v1090 = vunpack.c.l.b16 %v902
    %v1091 = vunpack.c.h.b16 %v902
    %v1092 = vunpack.c.l.b16 %v903
    %v1093 = vunpack.c.h.b16 %v903
    %v1094 = vunpack.c.l.b16 %v904
    %v1095 = vunpack.c.h.b16 %v904
    %v1096 = vunpack.c.l.b16 %v905
    %v1097 = vunpack.c.h.b16 %v905
    %v1098 = vunpack.c.l.b16 %v906
    %v1099 = vunpack.c.h.b16 %v906
    %v1100 = vunpack.c.l.b16 %v907
    %v1101 = vunpack.c.h.b16 %v907
    %v1102 = vunpack.c.l.b16 %v908
    %v1103 = vunpack.c.h.b16 %v908
    %v1104 = vunpack.c.l.b16 %v909
    %v1105 = vunpack.c.h.b16 %v909
    %v1106 = vunpack.c.l.b16 %v910
    %v1107 = vunpack.c.h.b16 %v910
    %v1108 = vunpack.c.l.b16 %v911
    %v1109 = vunpack.c.h.b16 %v911
    %v1110 = vpack.c.b16 %v984, %v982
    %v1111 = vpack.c.b16 %v985, %v983
    %v1112 = vpack.c.b16 %v988, %v986
    %v1113 = vpack.c.b16 %v989, %v987
    %v1114 = vpack.c.b16 %v992, %v990
    %v1115 = vpack.c.b16 %v993, %v991
    %v1116 = vpack.c.b16 %v996, %v994
    %v1117 = vpack.c.b16 %v997, %v995
    %v1118 = vpack.c.b16 %v1000, %v998
    %v1119 = vpack.c.b16 %v1001, %v999
    %v1120 = vpack.c.b16 %v1004, %v1002
    %v1121 = vpack.c.b16 %v1005, %v1003
    %v1122 = vpack.c.b16 %v1008, %v1006
    %v1123 = vpack.c.b16 %v1009, %v1007
    %v1124 = vpack.c.b16 %v1012, %v1010
    %v1125 = vpack.c.b16 %v1013, %v1011
    %v1126 = vpack.c.b16 %v1016, %v1014
    %v1127 = vpack.c.b16 %v1017, %v1015
    %v1128 = vpack.c.b16 %v1020, %v1018
    %v1129 = vpack.c.b16 %v1021, %v1019
    %v1130 = vpack.c.b16 %v1024, %v1022
    %v1131 = vpack.c.b16 %v1025, %v1023
    %v1132 = vpack.c.b16 %v1028, %v1026
    %v1133 = vpack.c.b16 %v1029, %v1027
    %v1134 = vpack.c.b16 %v1032, %v1030
    %v1135 = vpack.c.b16 %v1033, %v1031
    %v1136 = vpack.c.b16 %v1036, %v1034
    %v1137 = vpack.c.b16 %v1037, %v1035
    %v1138 = vpack.c.b16 %v1040, %v1038
    %v1139 = vpack.c.b16 %v1041, %v1039
    %v1140 = vpack.c.b16 %v1044, %v1042
    %v1141 = vpack.c.b16 %v1045, %v1043
    %v1142 = vpack.c.b16 %v1048, %v1046
    %v1143 = vpack.c.b16 %v1049, %v1047
    %v1144 = vpack.c.b16 %v1052, %v1050
    %v1145 = vpack.c.b16 %v1053, %v1051
    %v1146 = vpack.c.b16 %v1056, %v1054
    %v1147 = vpack.c.b16 %v1057, %v1055
    %v1148 = vpack.c.b16 %v1060, %v1058
    %v1149 = vpack.c.b16 %v1061, %v1059
    %v1150 = vpack.c.b16 %v1064, %v1062
    %v1151 = vpack.c.b16 %v1065, %v1063
    %v1152 = vpack.c.b16 %v1068, %v1066
    %v1153 = vpack.c.b16 %v1069, %v1067
    %v1154 = vpack.c.b16 %v1072, %v1070
    %v1155 = vpack.c.b16 %v1073, %v1071
    %v1156 = vpack.c.b16 %v1076, %v1074
    %v1157 = vpack.c.b16 %v1077, %v1075
    %v1158 = vpack.c.b16 %v1080, %v1078
    %v1159 = vpack.c.b16 %v1081, %v1079
    %v1160 = vpack.c.b16 %v1084, %v1082
    %v1161 = vpack.c.b16 %v1085, %v1083
    %v1162 = vpack.c.b16 %v1088, %v1086
    %v1163 = vpack.c.b16 %v1089, %v1087
    %v1164 = vpack.c.b16 %v1092, %v1090
    %v1165 = vpack.c.b16 %v1093, %v1091
    %v1166 = vpack.c.b16 %v1096, %v1094
    %v1167 = vpack.c.b16 %v1097, %v1095
    %v1168 = vpack.c.b16 %v1100, %v1098
    %v1169 = vpack.c.b16 %v1101, %v1099
    %v1170 = vpack.c.b16 %v1104, %v1102
    %v1171 = vpack.c.b16 %v1105, %v1103
    %v1172 = vpack.c.b16 %v1108, %v1106
    %v1173 = vpack.c.b16 %v1109, %v1107
    %1238 = vmatpush.bf16.msra.mxu0 %v1124
    %1239 = vmatpush.bf16.msra.mxu0 %v1122
    %1240 = vmatpush.bf16.msra.mxu0 %v1120
    %1241 = vmatpush.bf16.msra.mxu0 %v1118
    %1242 = vmatpush.bf16.msra.mxu0 %v1116
    %1243 = vmatpush.bf16.msra.mxu0 %v1114
    %1244 = vmatpush.bf16.msra.mxu0 %v1112
    %1245 = vmatpush.bf16.msra.mxu0 %v1110
    %1246 = vmatmul.bf16.gmra.mxu0 %v784
    %v1247 = vpop.f32.mrf.mxu0
    %v1248 = vadd.f32 %v914, %v1247
    %v1249 = vpop.f32.mrf.mxu0
    %v1250 = vadd.f32 %v914, %v1249
    %1251 = vmatmul.bf16.gmra.mxu0 %v788
    %v1252 = vpop.f32.mrf.mxu0
    %v1253 = vadd.f32 %v914, %v1252
    %v1254 = vpop.f32.mrf.mxu0
    %v1255 = vadd.f32 %v914, %v1254
    %1256 = vmatmul.bf16.gmra.mxu0 %v792
    %v1257 = vpop.f32.mrf.mxu0
    %v1258 = vadd.f32 %v914, %v1257
    %v1259 = vpop.f32.mrf.mxu0
    %v1260 = vadd.f32 %v914, %v1259
    %1261 = vmatmul.bf16.gmra.mxu0 %v796
    %v1262 = vpop.f32.mrf.mxu0
    %v1263 = vadd.f32 %v914, %v1262
    %v1264 = vpop.f32.mrf.mxu0
    %v1265 = vadd.f32 %v914, %v1264
    %1266 = vmatmul.bf16.gmra.mxu0 %v800
    %v1267 = vpop.f32.mrf.mxu0
    %v1268 = vadd.f32 %v914, %v1267
    %v1269 = vpop.f32.mrf.mxu0
    %v1270 = vadd.f32 %v914, %v1269
    %1271 = vmatmul.bf16.gmra.mxu0 %v804
    %v1272 = vpop.f32.mrf.mxu0
    %v1273 = vadd.f32 %v914, %v1272
    %v1274 = vpop.f32.mrf.mxu0
    %v1275 = vadd.f32 %v914, %v1274
    %1276 = vmatmul.bf16.gmra.mxu0 %v808
    %v1277 = vpop.f32.mrf.mxu0
    %v1278 = vadd.f32 %v914, %v1277
    %v1279 = vpop.f32.mrf.mxu0
    %v1280 = vadd.f32 %v914, %v1279
    %1281 = vmatmul.bf16.gmra.mxu0 %v812
    %v1282 = vpop.f32.mrf.mxu0
    %v1283 = vadd.f32 %v914, %v1282
    %v1284 = vpop.f32.mrf.mxu0
    %v1285 = vadd.f32 %v914, %v1284
    %1286 = vmatmul.bf16.gmra.mxu0 %v816
    %v1287 = vpop.f32.mrf.mxu0
    %v1288 = vadd.f32 %v914, %v1287
    %v1289 = vpop.f32.mrf.mxu0
    %v1290 = vadd.f32 %v914, %v1289
    %1291 = vmatmul.bf16.gmra.mxu0 %v820
    %v1292 = vpop.f32.mrf.mxu0
    %v1293 = vadd.f32 %v914, %v1292
    %v1294 = vpop.f32.mrf.mxu0
    %v1295 = vadd.f32 %v914, %v1294
    %1296 = vmatmul.bf16.gmra.mxu0 %v824
    %v1297 = vpop.f32.mrf.mxu0
    %v1298 = vadd.f32 %v914, %v1297
    %v1299 = vpop.f32.mrf.mxu0
    %v1300 = vadd.f32 %v914, %v1299
    %1301 = vmatmul.bf16.gmra.mxu0 %v828
    %v1302 = vpop.f32.mrf.mxu0
    %v1303 = vadd.f32 %v914, %v1302
    %v1304 = vpop.f32.mrf.mxu0
    %v1305 = vadd.f32 %v914, %v1304
    %1306 = vmatmul.bf16.gmra.mxu0 %v832
    %v1307 = vpop.f32.mrf.mxu0
    %v1308 = vadd.f32 %v914, %v1307
    %v1309 = vpop.f32.mrf.mxu0
    %v1310 = vadd.f32 %v914, %v1309
    %1311 = vmatmul.bf16.gmra.mxu0 %v836
    %v1312 = vpop.f32.mrf.mxu0
    %v1313 = vadd.f32 %v914, %v1312
    %v1314 = vpop.f32.mrf.mxu0
    %v1315 = vadd.f32 %v914, %v1314
    %1316 = vmatmul.bf16.gmra.mxu0 %v840
    %v1317 = vpop.f32.mrf.mxu0
    %v1318 = vadd.f32 %v914, %v1317
    %v1319 = vpop.f32.mrf.mxu0
    %v1320 = vadd.f32 %v914, %v1319
    %1321 = vmatmul.bf16.gmra.mxu0 %v844
    %v1322 = vpop.f32.mrf.mxu0
    %v1323 = vadd.f32 %v914, %v1322
    %v1324 = vpop.f32.mrf.mxu0
    %v1325 = vadd.f32 %v914, %v1324
    %1326 = vdwg.mxu0
    %1327 = vmatpush.bf16.msra.mxu0 %v1140
    %1328 = vmatpush.bf16.msra.mxu0 %v1138
    %1329 = vmatpush.bf16.msra.mxu0 %v1136
    %1330 = vmatpush.bf16.msra.mxu0 %v1134
    %1331 = vmatpush.bf16.msra.mxu0 %v1132
    %1332 = vmatpush.bf16.msra.mxu0 %v1130
    %1333 = vmatpush.bf16.msra.mxu0 %v1128
    %1334 = vmatpush.bf16.msra.mxu0 %v1126
    %1335 = vmatmul.bf16.gmra.mxu0 %v785
    %v1336 = vpop.f32.mrf.mxu0
    %v1337 = vadd.f32 %v1248, %v1336
    %v1338 = vpop.f32.mrf.mxu0
    %v1339 = vadd.f32 %v1250, %v1338
    %1340 = vmatmul.bf16.gmra.mxu0 %v789
    %v1341 = vpop.f32.mrf.mxu0
    %v1342 = vadd.f32 %v1253, %v1341
    %v1343 = vpop.f32.mrf.mxu0
    %v1344 = vadd.f32 %v1255, %v1343
    %1345 = vmatmul.bf16.gmra.mxu0 %v793
    %v1346 = vpop.f32.mrf.mxu0
    %v1347 = vadd.f32 %v1258, %v1346
    %v1348 = vpop.f32.mrf.mxu0
    %v1349 = vadd.f32 %v1260, %v1348
    %1350 = vmatmul.bf16.gmra.mxu0 %v797
    %v1351 = vpop.f32.mrf.mxu0
    %v1352 = vadd.f32 %v1263, %v1351
    %v1353 = vpop.f32.mrf.mxu0
    %v1354 = vadd.f32 %v1265, %v1353
    %1355 = vmatmul.bf16.gmra.mxu0 %v801
    %v1356 = vpop.f32.mrf.mxu0
    %v1357 = vadd.f32 %v1268, %v1356
    %v1358 = vpop.f32.mrf.mxu0
    %v1359 = vadd.f32 %v1270, %v1358
    %1360 = vmatmul.bf16.gmra.mxu0 %v805
    %v1361 = vpop.f32.mrf.mxu0
    %v1362 = vadd.f32 %v1273, %v1361
    %v1363 = vpop.f32.mrf.mxu0
    %v1364 = vadd.f32 %v1275, %v1363
    %1365 = vmatmul.bf16.gmra.mxu0 %v809
    %v1366 = vpop.f32.mrf.mxu0
    %v1367 = vadd.f32 %v1278, %v1366
    %v1368 = vpop.f32.mrf.mxu0
    %v1369 = vadd.f32 %v1280, %v1368
    %1370 = vmatmul.bf16.gmra.mxu0 %v813
    %v1371 = vpop.f32.mrf.mxu0
    %v1372 = vadd.f32 %v1283, %v1371
    %v1373 = vpop.f32.mrf.mxu0
    %v1374 = vadd.f32 %v1285, %v1373
    %1375 = vmatmul.bf16.gmra.mxu0 %v817
    %v1376 = vpop.f32.mrf.mxu0
    %v1377 = vadd.f32 %v1288, %v1376
    %v1378 = vpop.f32.mrf.mxu0
    %v1379 = vadd.f32 %v1290, %v1378
    %1380 = vmatmul.bf16.gmra.mxu0 %v821
    %v1381 = vpop.f32.mrf.mxu0
    %v1382 = vadd.f32 %v1293, %v1381
    %v1383 = vpop.f32.mrf.mxu0
    %v1384 = vadd.f32 %v1295, %v1383
    %1385 = vmatmul.bf16.gmra.mxu0 %v825
    %v1386 = vpop.f32.mrf.mxu0
    %v1387 = vadd.f32 %v1298, %v1386
    %v1388 = vpop.f32.mrf.mxu0
    %v1389 = vadd.f32 %v1300, %v1388
    %1390 = vmatmul.bf16.gmra.mxu0 %v829
    %v1391 = vpop.f32.mrf.mxu0
    %v1392 = vadd.f32 %v1303, %v1391
    %v1393 = vpop.f32.mrf.mxu0
    %v1394 = vadd.f32 %v1305, %v1393
    %1395 = vmatmul.bf16.gmra.mxu0 %v833
    %v1396 = vpop.f32.mrf.mxu0
    %v1397 = vadd.f32 %v1308, %v1396
    %v1398 = vpop.f32.mrf.mxu0
    %v1399 = vadd.f32 %v1310, %v1398
    %1400 = vmatmul.bf16.gmra.mxu0 %v837
    %v1401 = vpop.f32.mrf.mxu0
    %v1402 = vadd.f32 %v1313, %v1401
    %v1403 = vpop.f32.mrf.mxu0
    %v1404 = vadd.f32 %v1315, %v1403
    %1405 = vmatmul.bf16.gmra.mxu0 %v841
    %v1406 = vpop.f32.mrf.mxu0
    %v1407 = vadd.f32 %v1318, %v1406
    %v1408 = vpop.f32.mrf.mxu0
    %v1409 = vadd.f32 %v1320, %v1408
    %1410 = vmatmul.bf16.gmra.mxu0 %v845
    %v1411 = vpop.f32.mrf.mxu0
    %v1412 = vadd.f32 %v1323, %v1411
    %v1413 = vpop.f32.mrf.mxu0
    %v1414 = vadd.f32 %v1325, %v1413
    %1415 = vdwg.mxu0
    %1416 = vmatpush.bf16.msra.mxu0 %v1156
    %1417 = vmatpush.bf16.msra.mxu0 %v1154
    %1418 = vmatpush.bf16.msra.mxu0 %v1152
    %1419 = vmatpush.bf16.msra.mxu0 %v1150
    %1420 = vmatpush.bf16.msra.mxu0 %v1148
    %1421 = vmatpush.bf16.msra.mxu0 %v1146
    %1422 = vmatpush.bf16.msra.mxu0 %v1144
    %1423 = vmatpush.bf16.msra.mxu0 %v1142
    %1424 = vmatmul.bf16.gmra.mxu0 %v786
    %v1425 = vpop.f32.mrf.mxu0
    %v1426 = vadd.f32 %v1337, %v1425
    %v1427 = vpop.f32.mrf.mxu0
    %v1428 = vadd.f32 %v1339, %v1427
    %1429 = vmatmul.bf16.gmra.mxu0 %v790
    %v1430 = vpop.f32.mrf.mxu0
    %v1431 = vadd.f32 %v1342, %v1430
    %v1432 = vpop.f32.mrf.mxu0
    %v1433 = vadd.f32 %v1344, %v1432
    %1434 = vmatmul.bf16.gmra.mxu0 %v794
    %v1435 = vpop.f32.mrf.mxu0
    %v1436 = vadd.f32 %v1347, %v1435
    %v1437 = vpop.f32.mrf.mxu0
    %v1438 = vadd.f32 %v1349, %v1437
    %1439 = vmatmul.bf16.gmra.mxu0 %v798
    %v1440 = vpop.f32.mrf.mxu0
    %v1441 = vadd.f32 %v1352, %v1440
    %v1442 = vpop.f32.mrf.mxu0
    %v1443 = vadd.f32 %v1354, %v1442
    %1444 = vmatmul.bf16.gmra.mxu0 %v802
    %v1445 = vpop.f32.mrf.mxu0
    %v1446 = vadd.f32 %v1357, %v1445
    %v1447 = vpop.f32.mrf.mxu0
    %v1448 = vadd.f32 %v1359, %v1447
    %1449 = vmatmul.bf16.gmra.mxu0 %v806
    %v1450 = vpop.f32.mrf.mxu0
    %v1451 = vadd.f32 %v1362, %v1450
    %v1452 = vpop.f32.mrf.mxu0
    %v1453 = vadd.f32 %v1364, %v1452
    %1454 = vmatmul.bf16.gmra.mxu0 %v810
    %v1455 = vpop.f32.mrf.mxu0
    %v1456 = vadd.f32 %v1367, %v1455
    %v1457 = vpop.f32.mrf.mxu0
    %v1458 = vadd.f32 %v1369, %v1457
    %1459 = vmatmul.bf16.gmra.mxu0 %v814
    %v1460 = vpop.f32.mrf.mxu0
    %v1461 = vadd.f32 %v1372, %v1460
    %v1462 = vpop.f32.mrf.mxu0
    %v1463 = vadd.f32 %v1374, %v1462
    %1464 = vmatmul.bf16.gmra.mxu0 %v818
    %v1465 = vpop.f32.mrf.mxu0
    %v1466 = vadd.f32 %v1377, %v1465
    %v1467 = vpop.f32.mrf.mxu0
    %v1468 = vadd.f32 %v1379, %v1467
    %1469 = vmatmul.bf16.gmra.mxu0 %v822
    %v1470 = vpop.f32.mrf.mxu0
    %v1471 = vadd.f32 %v1382, %v1470
    %v1472 = vpop.f32.mrf.mxu0
    %v1473 = vadd.f32 %v1384, %v1472
    %1474 = vmatmul.bf16.gmra.mxu0 %v826
    %v1475 = vpop.f32.mrf.mxu0
    %v1476 = vadd.f32 %v1387, %v1475
    %v1477 = vpop.f32.mrf.mxu0
    %v1478 = vadd.f32 %v1389, %v1477
    %1479 = vmatmul.bf16.gmra.mxu0 %v830
    %v1480 = vpop.f32.mrf.mxu0
    %v1481 = vadd.f32 %v1392, %v1480
    %v1482 = vpop.f32.mrf.mxu0
    %v1483 = vadd.f32 %v1394, %v1482
    %1484 = vmatmul.bf16.gmra.mxu0 %v834
    %v1485 = vpop.f32.mrf.mxu0
    %v1486 = vadd.f32 %v1397, %v1485
    %v1487 = vpop.f32.mrf.mxu0
    %v1488 = vadd.f32 %v1399, %v1487
    %1489 = vmatmul.bf16.gmra.mxu0 %v838
    %v1490 = vpop.f32.mrf.mxu0
    %v1491 = vadd.f32 %v1402, %v1490
    %v1492 = vpop.f32.mrf.mxu0
    %v1493 = vadd.f32 %v1404, %v1492
    %1494 = vmatmul.bf16.gmra.mxu0 %v842
    %v1495 = vpop.f32.mrf.mxu0
    %v1496 = vadd.f32 %v1407, %v1495
    %v1497 = vpop.f32.mrf.mxu0
    %v1498 = vadd.f32 %v1409, %v1497
    %1499 = vmatmul.bf16.gmra.mxu0 %v846
    %v1500 = vpop.f32.mrf.mxu0
    %v1501 = vadd.f32 %v1412, %v1500
    %v1502 = vpop.f32.mrf.mxu0
    %v1503 = vadd.f32 %v1414, %v1502
    %1504 = vdwg.mxu0
    %1505 = vmatpush.bf16.msra.mxu0 %v1172
    %1506 = vmatpush.bf16.msra.mxu0 %v1170
    %1507 = vmatpush.bf16.msra.mxu0 %v1168
    %1508 = vmatpush.bf16.msra.mxu0 %v1166
    %1509 = vmatpush.bf16.msra.mxu0 %v1164
    %1510 = vmatpush.bf16.msra.mxu0 %v1162
    %1511 = vmatpush.bf16.msra.mxu0 %v1160
    %1512 = vmatpush.bf16.msra.mxu0 %v1158
    %1513 = vmatmul.bf16.gmra.mxu0 %v787
    %v1514 = vpop.f32.mrf.mxu0
    %v1515 = vadd.f32 %v1426, %v1514
    %v1516 = vpop.f32.mrf.mxu0
    %v1517 = vadd.f32 %v1428, %v1516
    %1518 = vmatmul.bf16.gmra.mxu0 %v791
    %v1519 = vpop.f32.mrf.mxu0
    %v1520 = vadd.f32 %v1431, %v1519
    %v1521 = vpop.f32.mrf.mxu0
    %v1522 = vadd.f32 %v1433, %v1521
    %1523 = vmatmul.bf16.gmra.mxu0 %v795
    %v1524 = vpop.f32.mrf.mxu0
    %v1525 = vadd.f32 %v1436, %v1524
    %v1526 = vpop.f32.mrf.mxu0
    %v1527 = vadd.f32 %v1438, %v1526
    %1528 = vmatmul.bf16.gmra.mxu0 %v799
    %v1529 = vpop.f32.mrf.mxu0
    %v1530 = vadd.f32 %v1441, %v1529
    %v1531 = vpop.f32.mrf.mxu0
    %v1532 = vadd.f32 %v1443, %v1531
    %1533 = vmatmul.bf16.gmra.mxu0 %v803
    %v1534 = vpop.f32.mrf.mxu0
    %v1535 = vadd.f32 %v1446, %v1534
    %v1536 = vpop.f32.mrf.mxu0
    %v1537 = vadd.f32 %v1448, %v1536
    %1538 = vmatmul.bf16.gmra.mxu0 %v807
    %v1539 = vpop.f32.mrf.mxu0
    %v1540 = vadd.f32 %v1451, %v1539
    %v1541 = vpop.f32.mrf.mxu0
    %v1542 = vadd.f32 %v1453, %v1541
    %1543 = vmatmul.bf16.gmra.mxu0 %v811
    %v1544 = vpop.f32.mrf.mxu0
    %v1545 = vadd.f32 %v1456, %v1544
    %v1546 = vpop.f32.mrf.mxu0
    %v1547 = vadd.f32 %v1458, %v1546
    %1548 = vmatmul.bf16.gmra.mxu0 %v815
    %v1549 = vpop.f32.mrf.mxu0
    %v1550 = vadd.f32 %v1461, %v1549
    %v1551 = vpop.f32.mrf.mxu0
    %v1552 = vadd.f32 %v1463, %v1551
    %1553 = vmatmul.bf16.gmra.mxu0 %v819
    %v1554 = vpop.f32.mrf.mxu0
    %v1555 = vadd.f32 %v1466, %v1554
    %v1556 = vpop.f32.mrf.mxu0
    %v1557 = vadd.f32 %v1468, %v1556
    %1558 = vmatmul.bf16.gmra.mxu0 %v823
    %v1559 = vpop.f32.mrf.mxu0
    %v1560 = vadd.f32 %v1471, %v1559
    %v1561 = vpop.f32.mrf.mxu0
    %v1562 = vadd.f32 %v1473, %v1561
    %1563 = vmatmul.bf16.gmra.mxu0 %v827
    %v1564 = vpop.f32.mrf.mxu0
    %v1565 = vadd.f32 %v1476, %v1564
    %v1566 = vpop.f32.mrf.mxu0
    %v1567 = vadd.f32 %v1478, %v1566
    %1568 = vmatmul.bf16.gmra.mxu0 %v831
    %v1569 = vpop.f32.mrf.mxu0
    %v1570 = vadd.f32 %v1481, %v1569
    %v1571 = vpop.f32.mrf.mxu0
    %v1572 = vadd.f32 %v1483, %v1571
    %1573 = vmatmul.bf16.gmra.mxu0 %v835
    %v1574 = vpop.f32.mrf.mxu0
    %v1575 = vadd.f32 %v1486, %v1574
    %v1576 = vpop.f32.mrf.mxu0
    %v1577 = vadd.f32 %v1488, %v1576
    %1578 = vmatmul.bf16.gmra.mxu0 %v839
    %v1579 = vpop.f32.mrf.mxu0
    %v1580 = vadd.f32 %v1491, %v1579
    %v1581 = vpop.f32.mrf.mxu0
    %v1582 = vadd.f32 %v1493, %v1581
    %1583 = vmatmul.bf16.gmra.mxu0 %v843
    %v1584 = vpop.f32.mrf.mxu0
    %v1585 = vadd.f32 %v1496, %v1584
    %v1586 = vpop.f32.mrf.mxu0
    %v1587 = vadd.f32 %v1498, %v1586
    %1588 = vmatmul.bf16.gmra.mxu0 %v847
    %v1589 = vpop.f32.mrf.mxu0
    %v1590 = vadd.f32 %v1501, %v1589
    %v1591 = vpop.f32.mrf.mxu0
    %v1592 = vadd.f32 %v1503, %v1591
    %1593 = vdwg.mxu0
    %1594 = vmatpush.bf16.msra.mxu0 %v1125
    %1595 = vmatpush.bf16.msra.mxu0 %v1123
    %1596 = vmatpush.bf16.msra.mxu0 %v1121
    %1597 = vmatpush.bf16.msra.mxu0 %v1119
    %1598 = vmatpush.bf16.msra.mxu0 %v1117
    %1599 = vmatpush.bf16.msra.mxu0 %v1115
    %1600 = vmatpush.bf16.msra.mxu0 %v1113
    %1601 = vmatpush.bf16.msra.mxu0 %v1111
    %1602 = vmatmul.bf16.gmra.mxu0 %v784
    %v1603 = vpop.f32.mrf.mxu0
    %v1604 = vadd.f32 %v915, %v1603
    %v1605 = vpop.f32.mrf.mxu0
    %v1606 = vadd.f32 %v915, %v1605
    %1607 = vmatmul.bf16.gmra.mxu0 %v788
    %v1608 = vpop.f32.mrf.mxu0
    %v1609 = vadd.f32 %v915, %v1608
    %v1610 = vpop.f32.mrf.mxu0
    %v1611 = vadd.f32 %v915, %v1610
    %1612 = vmatmul.bf16.gmra.mxu0 %v792
    %v1613 = vpop.f32.mrf.mxu0
    %v1614 = vadd.f32 %v915, %v1613
    %v1615 = vpop.f32.mrf.mxu0
    %v1616 = vadd.f32 %v915, %v1615
    %1617 = vmatmul.bf16.gmra.mxu0 %v796
    %v1618 = vpop.f32.mrf.mxu0
    %v1619 = vadd.f32 %v915, %v1618
    %v1620 = vpop.f32.mrf.mxu0
    %v1621 = vadd.f32 %v915, %v1620
    %1622 = vmatmul.bf16.gmra.mxu0 %v800
    %v1623 = vpop.f32.mrf.mxu0
    %v1624 = vadd.f32 %v915, %v1623
    %v1625 = vpop.f32.mrf.mxu0
    %v1626 = vadd.f32 %v915, %v1625
    %1627 = vmatmul.bf16.gmra.mxu0 %v804
    %v1628 = vpop.f32.mrf.mxu0
    %v1629 = vadd.f32 %v915, %v1628
    %v1630 = vpop.f32.mrf.mxu0
    %v1631 = vadd.f32 %v915, %v1630
    %1632 = vmatmul.bf16.gmra.mxu0 %v808
    %v1633 = vpop.f32.mrf.mxu0
    %v1634 = vadd.f32 %v915, %v1633
    %v1635 = vpop.f32.mrf.mxu0
    %v1636 = vadd.f32 %v915, %v1635
    %1637 = vmatmul.bf16.gmra.mxu0 %v812
    %v1638 = vpop.f32.mrf.mxu0
    %v1639 = vadd.f32 %v915, %v1638
    %v1640 = vpop.f32.mrf.mxu0
    %v1641 = vadd.f32 %v915, %v1640
    %1642 = vmatmul.bf16.gmra.mxu0 %v816
    %v1643 = vpop.f32.mrf.mxu0
    %v1644 = vadd.f32 %v915, %v1643
    %v1645 = vpop.f32.mrf.mxu0
    %v1646 = vadd.f32 %v915, %v1645
    %1647 = vmatmul.bf16.gmra.mxu0 %v820
    %v1648 = vpop.f32.mrf.mxu0
    %v1649 = vadd.f32 %v915, %v1648
    %v1650 = vpop.f32.mrf.mxu0
    %v1651 = vadd.f32 %v915, %v1650
    %1652 = vmatmul.bf16.gmra.mxu0 %v824
    %v1653 = vpop.f32.mrf.mxu0
    %v1654 = vadd.f32 %v915, %v1653
    %v1655 = vpop.f32.mrf.mxu0
    %v1656 = vadd.f32 %v915, %v1655
    %1657 = vmatmul.bf16.gmra.mxu0 %v828
    %v1658 = vpop.f32.mrf.mxu0
    %v1659 = vadd.f32 %v915, %v1658
    %v1660 = vpop.f32.mrf.mxu0
    %v1661 = vadd.f32 %v915, %v1660
    %1662 = vmatmul.bf16.gmra.mxu0 %v832
    %v1663 = vpop.f32.mrf.mxu0
    %v1664 = vadd.f32 %v915, %v1663
    %v1665 = vpop.f32.mrf.mxu0
    %v1666 = vadd.f32 %v915, %v1665
    %1667 = vmatmul.bf16.gmra.mxu0 %v836
    %v1668 = vpop.f32.mrf.mxu0
    %v1669 = vadd.f32 %v915, %v1668
    %v1670 = vpop.f32.mrf.mxu0
    %v1671 = vadd.f32 %v915, %v1670
    %1672 = vmatmul.bf16.gmra.mxu0 %v840
    %v1673 = vpop.f32.mrf.mxu0
    %v1674 = vadd.f32 %v915, %v1673
    %v1675 = vpop.f32.mrf.mxu0
    %v1676 = vadd.f32 %v915, %v1675
    %1677 = vmatmul.bf16.gmra.mxu0 %v844
    %v1678 = vpop.f32.mrf.mxu0
    %v1679 = vadd.f32 %v915, %v1678
    %v1680 = vpop.f32.mrf.mxu0
    %v1681 = vadd.f32 %v915, %v1680
    %1682 = vdwg.mxu0
    %1683 = vmatpush.bf16.msra.mxu0 %v1141
    %1684 = vmatpush.bf16.msra.mxu0 %v1139
    %1685 = vmatpush.bf16.msra.mxu0 %v1137
    %1686 = vmatpush.bf16.msra.mxu0 %v1135
    %1687 = vmatpush.bf16.msra.mxu0 %v1133
    %1688 = vmatpush.bf16.msra.mxu0 %v1131
    %1689 = vmatpush.bf16.msra.mxu0 %v1129
    %1690 = vmatpush.bf16.msra.mxu0 %v1127
    %1691 = vmatmul.bf16.gmra.mxu0 %v785
    %v1692 = vpop.f32.mrf.mxu0
    %v1693 = vadd.f32 %v1604, %v1692
    %v1694 = vpop.f32.mrf.mxu0
    %v1695 = vadd.f32 %v1606, %v1694
    %1696 = vmatmul.bf16.gmra.mxu0 %v789
    %v1697 = vpop.f32.mrf.mxu0
    %v1698 = vadd.f32 %v1609, %v1697
    %v1699 = vpop.f32.mrf.mxu0
    %v1700 = vadd.f32 %v1611, %v1699
    %1701 = vmatmul.bf16.gmra.mxu0 %v793
    %v1702 = vpop.f32.mrf.mxu0
    %v1703 = vadd.f32 %v1614, %v1702
    %v1704 = vpop.f32.mrf.mxu0
    %v1705 = vadd.f32 %v1616, %v1704
    %1706 = vmatmul.bf16.gmra.mxu0 %v797
    %v1707 = vpop.f32.mrf.mxu0
    %v1708 = vadd.f32 %v1619, %v1707
    %v1709 = vpop.f32.mrf.mxu0
    %v1710 = vadd.f32 %v1621, %v1709
    %1711 = vmatmul.bf16.gmra.mxu0 %v801
    %v1712 = vpop.f32.mrf.mxu0
    %v1713 = vadd.f32 %v1624, %v1712
    %v1714 = vpop.f32.mrf.mxu0
    %v1715 = vadd.f32 %v1626, %v1714
    %1716 = vmatmul.bf16.gmra.mxu0 %v805
    %v1717 = vpop.f32.mrf.mxu0
    %v1718 = vadd.f32 %v1629, %v1717
    %v1719 = vpop.f32.mrf.mxu0
    %v1720 = vadd.f32 %v1631, %v1719
    %1721 = vmatmul.bf16.gmra.mxu0 %v809
    %v1722 = vpop.f32.mrf.mxu0
    %v1723 = vadd.f32 %v1634, %v1722
    %v1724 = vpop.f32.mrf.mxu0
    %v1725 = vadd.f32 %v1636, %v1724
    %1726 = vmatmul.bf16.gmra.mxu0 %v813
    %v1727 = vpop.f32.mrf.mxu0
    %v1728 = vadd.f32 %v1639, %v1727
    %v1729 = vpop.f32.mrf.mxu0
    %v1730 = vadd.f32 %v1641, %v1729
    %1731 = vmatmul.bf16.gmra.mxu0 %v817
    %v1732 = vpop.f32.mrf.mxu0
    %v1733 = vadd.f32 %v1644, %v1732
    %v1734 = vpop.f32.mrf.mxu0
    %v1735 = vadd.f32 %v1646, %v1734
    %1736 = vmatmul.bf16.gmra.mxu0 %v821
    %v1737 = vpop.f32.mrf.mxu0
    %v1738 = vadd.f32 %v1649, %v1737
    %v1739 = vpop.f32.mrf.mxu0
    %v1740 = vadd.f32 %v1651, %v1739
    %1741 = vmatmul.bf16.gmra.mxu0 %v825
    %v1742 = vpop.f32.mrf.mxu0
    %v1743 = vadd.f32 %v1654, %v1742
    %v1744 = vpop.f32.mrf.mxu0
    %v1745 = vadd.f32 %v1656, %v1744
    %1746 = vmatmul.bf16.gmra.mxu0 %v829
    %v1747 = vpop.f32.mrf.mxu0
    %v1748 = vadd.f32 %v1659, %v1747
    %v1749 = vpop.f32.mrf.mxu0
    %v1750 = vadd.f32 %v1661, %v1749
    %1751 = vmatmul.bf16.gmra.mxu0 %v833
    %v1752 = vpop.f32.mrf.mxu0
    %v1753 = vadd.f32 %v1664, %v1752
    %v1754 = vpop.f32.mrf.mxu0
    %v1755 = vadd.f32 %v1666, %v1754
    %1756 = vmatmul.bf16.gmra.mxu0 %v837
    %v1757 = vpop.f32.mrf.mxu0
    %v1758 = vadd.f32 %v1669, %v1757
    %v1759 = vpop.f32.mrf.mxu0
    %v1760 = vadd.f32 %v1671, %v1759
    %1761 = vmatmul.bf16.gmra.mxu0 %v841
    %v1762 = vpop.f32.mrf.mxu0
    %v1763 = vadd.f32 %v1674, %v1762
    %v1764 = vpop.f32.mrf.mxu0
    %v1765 = vadd.f32 %v1676, %v1764
    %1766 = vmatmul.bf16.gmra.mxu0 %v845
    %v1767 = vpop.f32.mrf.mxu0
    %v1768 = vadd.f32 %v1679, %v1767
    %v1769 = vpop.f32.mrf.mxu0
    %v1770 = vadd.f32 %v1681, %v1769
    %1771 = vdwg.mxu0
    %1772 = vmatpush.bf16.msra.mxu0 %v1157
    %1773 = vmatpush.bf16.msra.mxu0 %v1155
    %1774 = vmatpush.bf16.msra.mxu0 %v1153
    %1775 = vmatpush.bf16.msra.mxu0 %v1151
    %1776 = vmatpush.bf16.msra.mxu0 %v1149
    %1777 = vmatpush.bf16.msra.mxu0 %v1147
    %1778 = vmatpush.bf16.msra.mxu0 %v1145
    %1779 = vmatpush.bf16.msra.mxu0 %v1143
    %1780 = vmatmul.bf16.gmra.mxu0 %v786
    %v1781 = vpop.f32.mrf.mxu0
    %v1782 = vadd.f32 %v1693, %v1781
    %v1783 = vpop.f32.mrf.mxu0
    %v1784 = vadd.f32 %v1695, %v1783
    %1785 = vmatmul.bf16.gmra.mxu0 %v790
    %v1786 = vpop.f32.mrf.mxu0
    %v1787 = vadd.f32 %v1698, %v1786
    %v1788 = vpop.f32.mrf.mxu0
    %v1789 = vadd.f32 %v1700, %v1788
    %1790 = vmatmul.bf16.gmra.mxu0 %v794
    %v1791 = vpop.f32.mrf.mxu0
    %v1792 = vadd.f32 %v1703, %v1791
    %v1793 = vpop.f32.mrf.mxu0
    %v1794 = vadd.f32 %v1705, %v1793
    %1795 = vmatmul.bf16.gmra.mxu0 %v798
    %v1796 = vpop.f32.mrf.mxu0
    %v1797 = vadd.f32 %v1708, %v1796
    %v1798 = vpop.f32.mrf.mxu0
    %v1799 = vadd.f32 %v1710, %v1798
    %1800 = vmatmul.bf16.gmra.mxu0 %v802
    %v1801 = vpop.f32.mrf.mxu0
    %v1802 = vadd.f32 %v1713, %v1801
    %v1803 = vpop.f32.mrf.mxu0
    %v1804 = vadd.f32 %v1715, %v1803
    %1805 = vmatmul.bf16.gmra.mxu0 %v806
    %v1806 = vpop.f32.mrf.mxu0
    %v1807 = vadd.f32 %v1718, %v1806
    %v1808 = vpop.f32.mrf.mxu0
    %v1809 = vadd.f32 %v1720, %v1808
    %1810 = vmatmul.bf16.gmra.mxu0 %v810
    %v1811 = vpop.f32.mrf.mxu0
    %v1812 = vadd.f32 %v1723, %v1811
    %v1813 = vpop.f32.mrf.mxu0
    %v1814 = vadd.f32 %v1725, %v1813
    %1815 = vmatmul.bf16.gmra.mxu0 %v814
    %v1816 = vpop.f32.mrf.mxu0
    %v1817 = vadd.f32 %v1728, %v1816
    %v1818 = vpop.f32.mrf.mxu0
    %v1819 = vadd.f32 %v1730, %v1818
    %1820 = vmatmul.bf16.gmra.mxu0 %v818
    %v1821 = vpop.f32.mrf.mxu0
    %v1822 = vadd.f32 %v1733, %v1821
    %v1823 = vpop.f32.mrf.mxu0
    %v1824 = vadd.f32 %v1735, %v1823
    %1825 = vmatmul.bf16.gmra.mxu0 %v822
    %v1826 = vpop.f32.mrf.mxu0
    %v1827 = vadd.f32 %v1738, %v1826
    %v1828 = vpop.f32.mrf.mxu0
    %v1829 = vadd.f32 %v1740, %v1828
    %1830 = vmatmul.bf16.gmra.mxu0 %v826
    %v1831 = vpop.f32.mrf.mxu0
    %v1832 = vadd.f32 %v1743, %v1831
    %v1833 = vpop.f32.mrf.mxu0
    %v1834 = vadd.f32 %v1745, %v1833
    %1835 = vmatmul.bf16.gmra.mxu0 %v830
    %v1836 = vpop.f32.mrf.mxu0
    %v1837 = vadd.f32 %v1748, %v1836
    %v1838 = vpop.f32.mrf.mxu0
    %v1839 = vadd.f32 %v1750, %v1838
    %1840 = vmatmul.bf16.gmra.mxu0 %v834
    %v1841 = vpop.f32.mrf.mxu0
    %v1842 = vadd.f32 %v1753, %v1841
    %v1843 = vpop.f32.mrf.mxu0
    %v1844 = vadd.f32 %v1755, %v1843
    %1845 = vmatmul.bf16.gmra.mxu0 %v838
    %v1846 = vpop.f32.mrf.mxu0
    %v1847 = vadd.f32 %v1758, %v1846
    %v1848 = vpop.f32.mrf.mxu0
    %v1849 = vadd.f32 %v1760, %v1848
    %1850 = vmatmul.bf16.gmra.mxu0 %v842
    %v1851 = vpop.f32.mrf.mxu0
    %v1852 = vadd.f32 %v1763, %v1851
    %v1853 = vpop.f32.mrf.mxu0
    %v1854 = vadd.f32 %v1765, %v1853
    %1855 = vmatmul.bf16.gmra.mxu0 %v846
    %v1856 = vpop.f32.mrf.mxu0
    %v1857 = vadd.f32 %v1768, %v1856
    %v1858 = vpop.f32.mrf.mxu0
    %v1859 = vadd.f32 %v1770, %v1858
    %1860 = vdwg.mxu0
    %1861 = vmatpush.bf16.msra.mxu0 %v1173
    %1862 = vmatpush.bf16.msra.mxu0 %v1171
    %1863 = vmatpush.bf16.msra.mxu0 %v1169
    %1864 = vmatpush.bf16.msra.mxu0 %v1167
    %1865 = vmatpush.bf16.msra.mxu0 %v1165
    %1866 = vmatpush.bf16.msra.mxu0 %v1163
    %1867 = vmatpush.bf16.msra.mxu0 %v1161
    %1868 = vmatpush.bf16.msra.mxu0 %v1159
    %1869 = vmatmul.bf16.gmra.mxu0 %v787
    %v1870 = vpop.f32.mrf.mxu0
    %v1871 = vadd.f32 %v1782, %v1870
    %v1872 = vpop.f32.mrf.mxu0
    %v1873 = vadd.f32 %v1784, %v1872
    %1874 = vmatmul.bf16.gmra.mxu0 %v791
    %v1875 = vpop.f32.mrf.mxu0
    %v1876 = vadd.f32 %v1787, %v1875
    %v1877 = vpop.f32.mrf.mxu0
    %v1878 = vadd.f32 %v1789, %v1877
    %1879 = vmatmul.bf16.gmra.mxu0 %v795
    %v1880 = vpop.f32.mrf.mxu0
    %v1881 = vadd.f32 %v1792, %v1880
    %v1882 = vpop.f32.mrf.mxu0
    %v1883 = vadd.f32 %v1794, %v1882
    %1884 = vmatmul.bf16.gmra.mxu0 %v799
    %v1885 = vpop.f32.mrf.mxu0
    %v1886 = vadd.f32 %v1797, %v1885
    %v1887 = vpop.f32.mrf.mxu0
    %v1888 = vadd.f32 %v1799, %v1887
    %1889 = vmatmul.bf16.gmra.mxu0 %v803
    %v1890 = vpop.f32.mrf.mxu0
    %v1891 = vadd.f32 %v1802, %v1890
    %v1892 = vpop.f32.mrf.mxu0
    %v1893 = vadd.f32 %v1804, %v1892
    %1894 = vmatmul.bf16.gmra.mxu0 %v807
    %v1895 = vpop.f32.mrf.mxu0
    %v1896 = vadd.f32 %v1807, %v1895
    %v1897 = vpop.f32.mrf.mxu0
    %v1898 = vadd.f32 %v1809, %v1897
    %1899 = vmatmul.bf16.gmra.mxu0 %v811
    %v1900 = vpop.f32.mrf.mxu0
    %v1901 = vadd.f32 %v1812, %v1900
    %v1902 = vpop.f32.mrf.mxu0
    %v1903 = vadd.f32 %v1814, %v1902
    %1904 = vmatmul.bf16.gmra.mxu0 %v815
    %v1905 = vpop.f32.mrf.mxu0
    %v1906 = vadd.f32 %v1817, %v1905
    %v1907 = vpop.f32.mrf.mxu0
    %v1908 = vadd.f32 %v1819, %v1907
    %1909 = vmatmul.bf16.gmra.mxu0 %v819
    %v1910 = vpop.f32.mrf.mxu0
    %v1911 = vadd.f32 %v1822, %v1910
    %v1912 = vpop.f32.mrf.mxu0
    %v1913 = vadd.f32 %v1824, %v1912
    %1914 = vmatmul.bf16.gmra.mxu0 %v823
    %v1915 = vpop.f32.mrf.mxu0
    %v1916 = vadd.f32 %v1827, %v1915
    %v1917 = vpop.f32.mrf.mxu0
    %v1918 = vadd.f32 %v1829, %v1917
    %1919 = vmatmul.bf16.gmra.mxu0 %v827
    %v1920 = vpop.f32.mrf.mxu0
    %v1921 = vadd.f32 %v1832, %v1920
    %v1922 = vpop.f32.mrf.mxu0
    %v1923 = vadd.f32 %v1834, %v1922
    %1924 = vmatmul.bf16.gmra.mxu0 %v831
    %v1925 = vpop.f32.mrf.mxu0
    %v1926 = vadd.f32 %v1837, %v1925
    %v1927 = vpop.f32.mrf.mxu0
    %v1928 = vadd.f32 %v1839, %v1927
    %1929 = vmatmul.bf16.gmra.mxu0 %v835
    %v1930 = vpop.f32.mrf.mxu0
    %v1931 = vadd.f32 %v1842, %v1930
    %v1932 = vpop.f32.mrf.mxu0
    %v1933 = vadd.f32 %v1844, %v1932
    %1934 = vmatmul.bf16.gmra.mxu0 %v839
    %v1935 = vpop.f32.mrf.mxu0
    %v1936 = vadd.f32 %v1847, %v1935
    %v1937 = vpop.f32.mrf.mxu0
    %v1938 = vadd.f32 %v1849, %v1937
    %1939 = vmatmul.bf16.gmra.mxu0 %v843
    %v1940 = vpop.f32.mrf.mxu0
    %v1941 = vadd.f32 %v1852, %v1940
    %v1942 = vpop.f32.mrf.mxu0
    %v1943 = vadd.f32 %v1854, %v1942
    %1944 = vmatmul.bf16.gmra.mxu0 %v847
    %v1945 = vpop.f32.mrf.mxu0
    %v1946 = vadd.f32 %v1857, %v1945
    %v1947 = vpop.f32.mrf.mxu0
    %v1948 = vadd.f32 %v1859, %v1947
    %1949 = vdwg.mxu0
    %v1950 = vmax.f32 %v1515, 0.0
    %v1951 = vmax.f32 %v1871, 0.0
    %v1952 = vmax.f32 %v1517, 0.0
    %v1953 = vmax.f32 %v1873, 0.0
    %v1954 = vmax.f32 %v1520, 0.0
    %v1955 = vmax.f32 %v1876, 0.0
    %v1956 = vmax.f32 %v1522, 0.0
    %v1957 = vmax.f32 %v1878, 0.0
    %v1958 = vmax.f32 %v1525, 0.0
    %v1959 = vmax.f32 %v1881, 0.0
    %v1960 = vmax.f32 %v1527, 0.0
    %v1961 = vmax.f32 %v1883, 0.0
    %v1962 = vmax.f32 %v1530, 0.0
    %v1963 = vmax.f32 %v1886, 0.0
    %v1964 = vmax.f32 %v1532, 0.0
    %v1965 = vmax.f32 %v1888, 0.0
    %v1966 = vmax.f32 %v1535, 0.0
    %v1967 = vmax.f32 %v1891, 0.0
    %v1968 = vmax.f32 %v1537, 0.0
    %v1969 = vmax.f32 %v1893, 0.0
    %v1970 = vmax.f32 %v1540, 0.0
    %v1971 = vmax.f32 %v1896, 0.0
    %v1972 = vmax.f32 %v1542, 0.0
    %v1973 = vmax.f32 %v1898, 0.0
    %v1974 = vmax.f32 %v1545, 0.0
    %v1975 = vmax.f32 %v1901, 0.0
    %v1976 = vmax.f32 %v1547, 0.0
    %v1977 = vmax.f32 %v1903, 0.0
    %v1978 = vmax.f32 %v1550, 0.0
    %v1979 = vmax.f32 %v1906, 0.0
    %v1980 = vmax.f32 %v1552, 0.0
    %v1981 = vmax.f32 %v1908, 0.0
    %v1982 = vmax.f32 %v1555, 0.0
    %v1983 = vmax.f32 %v1911, 0.0
    %v1984 = vmax.f32 %v1557, 0.0
    %v1985 = vmax.f32 %v1913, 0.0
    %v1986 = vmax.f32 %v1560, 0.0
    %v1987 = vmax.f32 %v1916, 0.0
    %v1988 = vmax.f32 %v1562, 0.0
    %v1989 = vmax.f32 %v1918, 0.0
    %v1990 = vmax.f32 %v1565, 0.0
    %v1991 = vmax.f32 %v1921, 0.0
    %v1992 = vmax.f32 %v1567, 0.0
    %v1993 = vmax.f32 %v1923, 0.0
    %v1994 = vmax.f32 %v1570, 0.0
    %v1995 = vmax.f32 %v1926, 0.0
    %v1996 = vmax.f32 %v1572, 0.0
    %v1997 = vmax.f32 %v1928, 0.0
    %v1998 = vmax.f32 %v1575, 0.0
    %v1999 = vmax.f32 %v1931, 0.0
    %v2000 = vmax.f32 %v1577, 0.0
    %v2001 = vmax.f32 %v1933, 0.0
    %v2002 = vmax.f32 %v1580, 0.0
    %v2003 = vmax.f32 %v1936, 0.0
    %v2004 = vmax.f32 %v1582, 0.0
    %v2005 = vmax.f32 %v1938, 0.0
    %v2006 = vmax.f32 %v1585, 0.0
    %v2007 = vmax.f32 %v1941, 0.0
    %v2008 = vmax.f32 %v1587, 0.0
    %v2009 = vmax.f32 %v1943, 0.0
    %v2010 = vmax.f32 %v1590, 0.0
    %v2011 = vmax.f32 %v1946, 0.0
    %v2012 = vmax.f32 %v1592, 0.0
    %v2013 = vmax.f32 %v1948, 0.0
    %v2014 = vpack.c.bf16 %v1952, %v1950
    %v2015 = vpack.c.bf16 %v1953, %v1951
    %v2016 = vpack.c.bf16 %v1956, %v1954
    %v2017 = vpack.c.bf16 %v1957, %v1955
    %v2018 = vpack.c.bf16 %v1960, %v1958
    %v2019 = vpack.c.bf16 %v1961, %v1959
    %v2020 = vpack.c.bf16 %v1964, %v1962
    %v2021 = vpack.c.bf16 %v1965, %v1963
    %v2022 = vpack.c.bf16 %v1968, %v1966
    %v2023 = vpack.c.bf16 %v1969, %v1967
    %v2024 = vpack.c.bf16 %v1972, %v1970
    %v2025 = vpack.c.bf16 %v1973, %v1971
    %v2026 = vpack.c.bf16 %v1976, %v1974
    %v2027 = vpack.c.bf16 %v1977, %v1975
    %v2028 = vpack.c.bf16 %v1980, %v1978
    %v2029 = vpack.c.bf16 %v1981, %v1979
    %v2030 = vpack.c.bf16 %v1984, %v1982
    %v2031 = vpack.c.bf16 %v1985, %v1983
    %v2032 = vpack.c.bf16 %v1988, %v1986
    %v2033 = vpack.c.bf16 %v1989, %v1987
    %v2034 = vpack.c.bf16 %v1992, %v1990
    %v2035 = vpack.c.bf16 %v1993, %v1991
    %v2036 = vpack.c.bf16 %v1996, %v1994
    %v2037 = vpack.c.bf16 %v1997, %v1995
    %v2038 = vpack.c.bf16 %v2000, %v1998
    %v2039 = vpack.c.bf16 %v2001, %v1999
    %v2040 = vpack.c.bf16 %v2004, %v2002
    %v2041 = vpack.c.bf16 %v2005, %v2003
    %v2042 = vpack.c.bf16 %v2008, %v2006
    %v2043 = vpack.c.bf16 %v2009, %v2007
    %v2044 = vpack.c.bf16 %v2012, %v2010
    %v2045 = vpack.c.bf16 %v2013, %v2011
    %v2046 = vld [vmem:[#allocation5] sm:$0xff]
    %v2047 = vld [vmem:[#allocation5 + $0x8] sm:$0xff]
    %v2048 = vld [vmem:[#allocation5 + $0x10] sm:$0xff]
    %v2049 = vld [vmem:[#allocation5 + $0x18] sm:$0xff]
    %v2050 = vld [vmem:[#allocation5 + $0x20] sm:$0xff]
    %v2051 = vld [vmem:[#allocation5 + $0x28] sm:$0xff]
    %v2052 = vld [vmem:[#allocation5 + $0x30] sm:$0xff]
    %v2053 = vld [vmem:[#allocation5 + $0x38] sm:$0xff]
    %v2054 = vld [vmem:[#allocation5 + $0x40] sm:$0xff]
    %v2055 = vld [vmem:[#allocation5 + $0x48] sm:$0xff]
    %v2056 = vld [vmem:[#allocation5 + $0x50] sm:$0xff]
    %v2057 = vld [vmem:[#allocation5 + $0x58] sm:$0xff]
    %v2058 = vld [vmem:[#allocation5 + $0x60] sm:$0xff]
    %v2059 = vld [vmem:[#allocation5 + $0x68] sm:$0xff]
    %v2060 = vld [vmem:[#allocation5 + $0x70] sm:$0xff]
    %v2061 = vld [vmem:[#allocation5 + $0x78] sm:$0xff]
    %v2062 = vld [vmem:[#allocation5 + $0x80] sm:$0xff]
    %v2063 = vld [vmem:[#allocation5 + $0x88] sm:$0xff]
    %v2064 = vld [vmem:[#allocation5 + $0x90] sm:$0xff]
    %v2065 = vld [vmem:[#allocation5 + $0x98] sm:$0xff]
    %v2066 = vld [vmem:[#allocation5 + $0xa0] sm:$0xff]
    %v2067 = vld [vmem:[#allocation5 + $0xa8] sm:$0xff]
    %v2068 = vld [vmem:[#allocation5 + $0xb0] sm:$0xff]
    %v2069 = vld [vmem:[#allocation5 + $0xb8] sm:$0xff]
    %v2070 = vld [vmem:[#allocation5 + $0xc0] sm:$0xff]
    %v2071 = vld [vmem:[#allocation5 + $0xc8] sm:$0xff]
    %v2072 = vld [vmem:[#allocation5 + $0xd0] sm:$0xff]
    %v2073 = vld [vmem:[#allocation5 + $0xd8] sm:$0xff]
    %v2074 = vld [vmem:[#allocation5 + $0xe0] sm:$0xff]
    %v2075 = vld [vmem:[#allocation5 + $0xe8] sm:$0xff]
    %v2076 = vld [vmem:[#allocation5 + $0xf0] sm:$0xff]
    %v2077 = vld [vmem:[#allocation5 + $0xf8] sm:$0xff]
    %v2078 = vld [vmem:[#allocation5 + $0x100] sm:$0xff]
    %v2079 = vld [vmem:[#allocation5 + $0x108] sm:$0xff]
    %v2080 = vld [vmem:[#allocation5 + $0x110] sm:$0xff]
    %v2081 = vld [vmem:[#allocation5 + $0x118] sm:$0xff]
    %v2082 = vld [vmem:[#allocation5 + $0x120] sm:$0xff]
    %v2083 = vld [vmem:[#allocation5 + $0x128] sm:$0xff]
    %v2084 = vld [vmem:[#allocation5 + $0x130] sm:$0xff]
    %v2085 = vld [vmem:[#allocation5 + $0x138] sm:$0xff]
    %v2086 = vld [vmem:[#allocation5 + $0x140] sm:$0xff]
    %v2087 = vld [vmem:[#allocation5 + $0x148] sm:$0xff]
    %v2088 = vld [vmem:[#allocation5 + $0x150] sm:$0xff]
    %v2089 = vld [vmem:[#allocation5 + $0x158] sm:$0xff]
    %v2090 = vld [vmem:[#allocation5 + $0x160] sm:$0xff]
    %v2091 = vld [vmem:[#allocation5 + $0x168] sm:$0xff]
    %v2092 = vld [vmem:[#allocation5 + $0x170] sm:$0xff]
    %v2093 = vld [vmem:[#allocation5 + $0x178] sm:$0xff]
    %v2094 = vld [vmem:[#allocation5 + $0x180] sm:$0xff]
    %v2095 = vld [vmem:[#allocation5 + $0x188] sm:$0xff]
    %v2096 = vld [vmem:[#allocation5 + $0x190] sm:$0xff]
    %v2097 = vld [vmem:[#allocation5 + $0x198] sm:$0xff]
    %v2098 = vld [vmem:[#allocation5 + $0x1a0] sm:$0xff]
    %v2099 = vld [vmem:[#allocation5 + $0x1a8] sm:$0xff]
    %v2100 = vld [vmem:[#allocation5 + $0x1b0] sm:$0xff]
    %v2101 = vld [vmem:[#allocation5 + $0x1b8] sm:$0xff]
    %v2102 = vld [vmem:[#allocation5 + $0x1c0] sm:$0xff]
    %v2103 = vld [vmem:[#allocation5 + $0x1c8] sm:$0xff]
    %v2104 = vld [vmem:[#allocation5 + $0x1d0] sm:$0xff]
    %v2105 = vld [vmem:[#allocation5 + $0x1d8] sm:$0xff]
    %v2106 = vld [vmem:[#allocation5 + $0x1e0] sm:$0xff]
    %v2107 = vld [vmem:[#allocation5 + $0x1e8] sm:$0xff]
    %v2108 = vld [vmem:[#allocation5 + $0x1f0] sm:$0xff]
    %v2109 = vld [vmem:[#allocation5 + $0x1f8] sm:$0xff]
    %v2110 = vld [vmem:[%s6] sm:$0xf]
    %v2112 = vperm.slane %v2110, 0
    %v2113 = vperm.slane %v2110, 1
    %v2114 = vperm.slane %v2110, 2
    %v2115 = vperm.slane %v2110, 3
    %v2184 = vunpack.c.l.b16 %v2046
    %v2185 = vunpack.c.h.b16 %v2046
    %v2186 = vunpack.c.l.b16 %v2047
    %v2187 = vunpack.c.h.b16 %v2047
    %v2188 = vunpack.c.l.b16 %v2048
    %v2189 = vunpack.c.h.b16 %v2048
    %v2190 = vunpack.c.l.b16 %v2049
    %v2191 = vunpack.c.h.b16 %v2049
    %v2192 = vunpack.c.l.b16 %v2050
    %v2193 = vunpack.c.h.b16 %v2050
    %v2194 = vunpack.c.l.b16 %v2051
    %v2195 = vunpack.c.h.b16 %v2051
    %v2196 = vunpack.c.l.b16 %v2052
    %v2197 = vunpack.c.h.b16 %v2052
    %v2198 = vunpack.c.l.b16 %v2053
    %v2199 = vunpack.c.h.b16 %v2053
    %v2200 = vunpack.c.l.b16 %v2054
    %v2201 = vunpack.c.h.b16 %v2054
    %v2202 = vunpack.c.l.b16 %v2055
    %v2203 = vunpack.c.h.b16 %v2055
    %v2204 = vunpack.c.l.b16 %v2056
    %v2205 = vunpack.c.h.b16 %v2056
    %v2206 = vunpack.c.l.b16 %v2057
    %v2207 = vunpack.c.h.b16 %v2057
    %v2208 = vunpack.c.l.b16 %v2058
    %v2209 = vunpack.c.h.b16 %v2058
    %v2210 = vunpack.c.l.b16 %v2059
    %v2211 = vunpack.c.h.b16 %v2059
    %v2212 = vunpack.c.l.b16 %v2060
    %v2213 = vunpack.c.h.b16 %v2060
    %v2214 = vunpack.c.l.b16 %v2061
    %v2215 = vunpack.c.h.b16 %v2061
    %v2216 = vunpack.c.l.b16 %v2062
    %v2217 = vunpack.c.h.b16 %v2062
    %v2218 = vunpack.c.l.b16 %v2063
    %v2219 = vunpack.c.h.b16 %v2063
    %v2220 = vunpack.c.l.b16 %v2064
    %v2221 = vunpack.c.h.b16 %v2064
    %v2222 = vunpack.c.l.b16 %v2065
    %v2223 = vunpack.c.h.b16 %v2065
    %v2224 = vunpack.c.l.b16 %v2066
    %v2225 = vunpack.c.h.b16 %v2066
    %v2226 = vunpack.c.l.b16 %v2067
    %v2227 = vunpack.c.h.b16 %v2067
    %v2228 = vunpack.c.l.b16 %v2068
    %v2229 = vunpack.c.h.b16 %v2068
    %v2230 = vunpack.c.l.b16 %v2069
    %v2231 = vunpack.c.h.b16 %v2069
    %v2232 = vunpack.c.l.b16 %v2070
    %v2233 = vunpack.c.h.b16 %v2070
    %v2234 = vunpack.c.l.b16 %v2071
    %v2235 = vunpack.c.h.b16 %v2071
    %v2236 = vunpack.c.l.b16 %v2072
    %v2237 = vunpack.c.h.b16 %v2072
    %v2238 = vunpack.c.l.b16 %v2073
    %v2239 = vunpack.c.h.b16 %v2073
    %v2240 = vunpack.c.l.b16 %v2074
    %v2241 = vunpack.c.h.b16 %v2074
    %v2242 = vunpack.c.l.b16 %v2075
    %v2243 = vunpack.c.h.b16 %v2075
    %v2244 = vunpack.c.l.b16 %v2076
    %v2245 = vunpack.c.h.b16 %v2076
    %v2246 = vunpack.c.l.b16 %v2077
    %v2247 = vunpack.c.h.b16 %v2077
    %v2248 = vunpack.c.l.b16 %v2078
    %v2249 = vunpack.c.h.b16 %v2078
    %v2250 = vunpack.c.l.b16 %v2079
    %v2251 = vunpack.c.h.b16 %v2079
    %v2252 = vunpack.c.l.b16 %v2080
    %v2253 = vunpack.c.h.b16 %v2080
    %v2254 = vunpack.c.l.b16 %v2081
    %v2255 = vunpack.c.h.b16 %v2081
    %v2256 = vunpack.c.l.b16 %v2082
    %v2257 = vunpack.c.h.b16 %v2082
    %v2258 = vunpack.c.l.b16 %v2083
    %v2259 = vunpack.c.h.b16 %v2083
    %v2260 = vunpack.c.l.b16 %v2084
    %v2261 = vunpack.c.h.b16 %v2084
    %v2262 = vunpack.c.l.b16 %v2085
    %v2263 = vunpack.c.h.b16 %v2085
    %v2264 = vunpack.c.l.b16 %v2086
    %v2265 = vunpack.c.h.b16 %v2086
    %v2266 = vunpack.c.l.b16 %v2087
    %v2267 = vunpack.c.h.b16 %v2087
    %v2268 = vunpack.c.l.b16 %v2088
    %v2269 = vunpack.c.h.b16 %v2088
    %v2270 = vunpack.c.l.b16 %v2089
    %v2271 = vunpack.c.h.b16 %v2089
    %v2272 = vunpack.c.l.b16 %v2090
    %v2273 = vunpack.c.h.b16 %v2090
    %v2274 = vunpack.c.l.b16 %v2091
    %v2275 = vunpack.c.h.b16 %v2091
    %v2276 = vunpack.c.l.b16 %v2092
    %v2277 = vunpack.c.h.b16 %v2092
    %v2278 = vunpack.c.l.b16 %v2093
    %v2279 = vunpack.c.h.b16 %v2093
    %v2280 = vunpack.c.l.b16 %v2094
    %v2281 = vunpack.c.h.b16 %v2094
    %v2282 = vunpack.c.l.b16 %v2095
    %v2283 = vunpack.c.h.b16 %v2095
    %v2284 = vunpack.c.l.b16 %v2096
    %v2285 = vunpack.c.h.b16 %v2096
    %v2286 = vunpack.c.l.b16 %v2097
    %v2287 = vunpack.c.h.b16 %v2097
    %v2288 = vunpack.c.l.b16 %v2098
    %v2289 = vunpack.c.h.b16 %v2098
    %v2290 = vunpack.c.l.b16 %v2099
    %v2291 = vunpack.c.h.b16 %v2099
    %v2292 = vunpack.c.l.b16 %v2100
    %v2293 = vunpack.c.h.b16 %v2100
    %v2294 = vunpack.c.l.b16 %v2101
    %v2295 = vunpack.c.h.b16 %v2101
    %v2296 = vunpack.c.l.b16 %v2102
    %v2297 = vunpack.c.h.b16 %v2102
    %v2298 = vunpack.c.l.b16 %v2103
    %v2299 = vunpack.c.h.b16 %v2103
    %v2300 = vunpack.c.l.b16 %v2104
    %v2301 = vunpack.c.h.b16 %v2104
    %v2302 = vunpack.c.l.b16 %v2105
    %v2303 = vunpack.c.h.b16 %v2105
    %v2304 = vunpack.c.l.b16 %v2106
    %v2305 = vunpack.c.h.b16 %v2106
    %v2306 = vunpack.c.l.b16 %v2107
    %v2307 = vunpack.c.h.b16 %v2107
    %v2308 = vunpack.c.l.b16 %v2108
    %v2309 = vunpack.c.h.b16 %v2108
    %v2310 = vunpack.c.l.b16 %v2109
    %v2311 = vunpack.c.h.b16 %v2109
    %v2312 = vpack.c.b16 %v2188, %v2184
    %v2313 = vpack.c.b16 %v2189, %v2185
    %v2314 = vpack.c.b16 %v2190, %v2186
    %v2315 = vpack.c.b16 %v2191, %v2187
    %v2316 = vpack.c.b16 %v2196, %v2192
    %v2317 = vpack.c.b16 %v2197, %v2193
    %v2318 = vpack.c.b16 %v2198, %v2194
    %v2319 = vpack.c.b16 %v2199, %v2195
    %v2320 = vpack.c.b16 %v2204, %v2200
    %v2321 = vpack.c.b16 %v2205, %v2201
    %v2322 = vpack.c.b16 %v2206, %v2202
    %v2323 = vpack.c.b16 %v2207, %v2203
    %v2324 = vpack.c.b16 %v2212, %v2208
    %v2325 = vpack.c.b16 %v2213, %v2209
    %v2326 = vpack.c.b16 %v2214, %v2210
    %v2327 = vpack.c.b16 %v2215, %v2211
    %v2328 = vpack.c.b16 %v2220, %v2216
    %v2329 = vpack.c.b16 %v2221, %v2217
    %v2330 = vpack.c.b16 %v2222, %v2218
    %v2331 = vpack.c.b16 %v2223, %v2219
    %v2332 = vpack.c.b16 %v2228, %v2224
    %v2333 = vpack.c.b16 %v2229, %v2225
    %v2334 = vpack.c.b16 %v2230, %v2226
    %v2335 = vpack.c.b16 %v2231, %v2227
    %v2336 = vpack.c.b16 %v2236, %v2232
    %v2337 = vpack.c.b16 %v2237, %v2233
    %v2338 = vpack.c.b16 %v2238, %v2234
    %v2339 = vpack.c.b16 %v2239, %v2235
    %v2340 = vpack.c.b16 %v2244, %v2240
    %v2341 = vpack.c.b16 %v2245, %v2241
    %v2342 = vpack.c.b16 %v2246, %v2242
    %v2343 = vpack.c.b16 %v2247, %v2243
    %v2344 = vpack.c.b16 %v2252, %v2248
    %v2345 = vpack.c.b16 %v2253, %v2249
    %v2346 = vpack.c.b16 %v2254, %v2250
    %v2347 = vpack.c.b16 %v2255, %v2251
    %v2348 = vpack.c.b16 %v2260, %v2256
    %v2349 = vpack.c.b16 %v2261, %v2257
    %v2350 = vpack.c.b16 %v2262, %v2258
    %v2351 = vpack.c.b16 %v2263, %v2259
    %v2352 = vpack.c.b16 %v2268, %v2264
    %v2353 = vpack.c.b16 %v2269, %v2265
    %v2354 = vpack.c.b16 %v2270, %v2266
    %v2355 = vpack.c.b16 %v2271, %v2267
    %v2356 = vpack.c.b16 %v2276, %v2272
    %v2357 = vpack.c.b16 %v2277, %v2273
    %v2358 = vpack.c.b16 %v2278, %v2274
    %v2359 = vpack.c.b16 %v2279, %v2275
    %v2360 = vpack.c.b16 %v2284, %v2280
    %v2361 = vpack.c.b16 %v2285, %v2281
    %v2362 = vpack.c.b16 %v2286, %v2282
    %v2363 = vpack.c.b16 %v2287, %v2283
    %v2364 = vpack.c.b16 %v2292, %v2288
    %v2365 = vpack.c.b16 %v2293, %v2289
    %v2366 = vpack.c.b16 %v2294, %v2290
    %v2367 = vpack.c.b16 %v2295, %v2291
    %v2368 = vpack.c.b16 %v2300, %v2296
    %v2369 = vpack.c.b16 %v2301, %v2297
    %v2370 = vpack.c.b16 %v2302, %v2298
    %v2371 = vpack.c.b16 %v2303, %v2299
    %v2372 = vpack.c.b16 %v2308, %v2304
    %v2373 = vpack.c.b16 %v2309, %v2305
    %v2374 = vpack.c.b16 %v2310, %v2306
    %v2375 = vpack.c.b16 %v2311, %v2307
    %2440 = vmatpush.bf16.msra.mxu0 %v2340
    %2441 = vmatpush.bf16.msra.mxu0 %v2336
    %2442 = vmatpush.bf16.msra.mxu0 %v2332
    %2443 = vmatpush.bf16.msra.mxu0 %v2328
    %2444 = vmatpush.bf16.msra.mxu0 %v2324
    %2445 = vmatpush.bf16.msra.mxu0 %v2320
    %2446 = vmatpush.bf16.msra.mxu0 %v2316
    %2447 = vmatpush.bf16.msra.mxu0 %v2312
    %2448 = vmatmul.bf16.gmra.mxu0 %v2014
    %v2449 = vpop.f32.mrf.mxu0
    %v2450 = vadd.f32 %v2112, %v2449
    %v2451 = vpop.f32.mrf.mxu0
    %v2452 = vadd.f32 %v2112, %v2451
    %2453 = vmatmul.bf16.gmra.mxu0 %v2016
    %v2454 = vpop.f32.mrf.mxu0
    %v2455 = vadd.f32 %v2112, %v2454
    %v2456 = vpop.f32.mrf.mxu0
    %v2457 = vadd.f32 %v2112, %v2456
    %2458 = vmatmul.bf16.gmra.mxu0 %v2018
    %v2459 = vpop.f32.mrf.mxu0
    %v2460 = vadd.f32 %v2112, %v2459
    %v2461 = vpop.f32.mrf.mxu0
    %v2462 = vadd.f32 %v2112, %v2461
    %2463 = vmatmul.bf16.gmra.mxu0 %v2020
    %v2464 = vpop.f32.mrf.mxu0
    %v2465 = vadd.f32 %v2112, %v2464
    %v2466 = vpop.f32.mrf.mxu0
    %v2467 = vadd.f32 %v2112, %v2466
    %2468 = vmatmul.bf16.gmra.mxu0 %v2022
    %v2469 = vpop.f32.mrf.mxu0
    %v2470 = vadd.f32 %v2112, %v2469
    %v2471 = vpop.f32.mrf.mxu0
    %v2472 = vadd.f32 %v2112, %v2471
    %2473 = vmatmul.bf16.gmra.mxu0 %v2024
    %v2474 = vpop.f32.mrf.mxu0
    %v2475 = vadd.f32 %v2112, %v2474
    %v2476 = vpop.f32.mrf.mxu0
    %v2477 = vadd.f32 %v2112, %v2476
    %2478 = vmatmul.bf16.gmra.mxu0 %v2026
    %v2479 = vpop.f32.mrf.mxu0
    %v2480 = vadd.f32 %v2112, %v2479
    %v2481 = vpop.f32.mrf.mxu0
    %v2482 = vadd.f32 %v2112, %v2481
    %2483 = vmatmul.bf16.gmra.mxu0 %v2028
    %v2484 = vpop.f32.mrf.mxu0
    %v2485 = vadd.f32 %v2112, %v2484
    %v2486 = vpop.f32.mrf.mxu0
    %v2487 = vadd.f32 %v2112, %v2486
    %2488 = vmatmul.bf16.gmra.mxu0 %v2030
    %v2489 = vpop.f32.mrf.mxu0
    %v2490 = vadd.f32 %v2112, %v2489
    %v2491 = vpop.f32.mrf.mxu0
    %v2492 = vadd.f32 %v2112, %v2491
    %2493 = vmatmul.bf16.gmra.mxu0 %v2032
    %v2494 = vpop.f32.mrf.mxu0
    %v2495 = vadd.f32 %v2112, %v2494
    %v2496 = vpop.f32.mrf.mxu0
    %v2497 = vadd.f32 %v2112, %v2496
    %2498 = vmatmul.bf16.gmra.mxu0 %v2034
    %v2499 = vpop.f32.mrf.mxu0
    %v2500 = vadd.f32 %v2112, %v2499
    %v2501 = vpop.f32.mrf.mxu0
    %v2502 = vadd.f32 %v2112, %v2501
    %2503 = vmatmul.bf16.gmra.mxu0 %v2036
    %v2504 = vpop.f32.mrf.mxu0
    %v2505 = vadd.f32 %v2112, %v2504
    %v2506 = vpop.f32.mrf.mxu0
    %v2507 = vadd.f32 %v2112, %v2506
    %2508 = vmatmul.bf16.gmra.mxu0 %v2038
    %v2509 = vpop.f32.mrf.mxu0
    %v2510 = vadd.f32 %v2112, %v2509
    %v2511 = vpop.f32.mrf.mxu0
    %v2512 = vadd.f32 %v2112, %v2511
    %2513 = vmatmul.bf16.gmra.mxu0 %v2040
    %v2514 = vpop.f32.mrf.mxu0
    %v2515 = vadd.f32 %v2112, %v2514
    %v2516 = vpop.f32.mrf.mxu0
    %v2517 = vadd.f32 %v2112, %v2516
    %2518 = vmatmul.bf16.gmra.mxu0 %v2042
    %v2519 = vpop.f32.mrf.mxu0
    %v2520 = vadd.f32 %v2112, %v2519
    %v2521 = vpop.f32.mrf.mxu0
    %v2522 = vadd.f32 %v2112, %v2521
    %2523 = vmatmul.bf16.gmra.mxu0 %v2044
    %v2524 = vpop.f32.mrf.mxu0
    %v2525 = vadd.f32 %v2112, %v2524
    %v2526 = vpop.f32.mrf.mxu0
    %v2527 = vadd.f32 %v2112, %v2526
    %2528 = vdwg.mxu0
    %2529 = vmatpush.bf16.msra.mxu0 %v2372
    %2530 = vmatpush.bf16.msra.mxu0 %v2368
    %2531 = vmatpush.bf16.msra.mxu0 %v2364
    %2532 = vmatpush.bf16.msra.mxu0 %v2360
    %2533 = vmatpush.bf16.msra.mxu0 %v2356
    %2534 = vmatpush.bf16.msra.mxu0 %v2352
    %2535 = vmatpush.bf16.msra.mxu0 %v2348
    %2536 = vmatpush.bf16.msra.mxu0 %v2344
    %2537 = vmatmul.bf16.gmra.mxu0 %v2015
    %v2538 = vpop.f32.mrf.mxu0
    %v2539 = vadd.f32 %v2450, %v2538
    %v2540 = vpop.f32.mrf.mxu0
    %v2541 = vadd.f32 %v2452, %v2540
    %2542 = vmatmul.bf16.gmra.mxu0 %v2017
    %v2543 = vpop.f32.mrf.mxu0
    %v2544 = vadd.f32 %v2455, %v2543
    %v2545 = vpop.f32.mrf.mxu0
    %v2546 = vadd.f32 %v2457, %v2545
    %2547 = vmatmul.bf16.gmra.mxu0 %v2019
    %v2548 = vpop.f32.mrf.mxu0
    %v2549 = vadd.f32 %v2460, %v2548
    %v2550 = vpop.f32.mrf.mxu0
    %v2551 = vadd.f32 %v2462, %v2550
    %2552 = vmatmul.bf16.gmra.mxu0 %v2021
    %v2553 = vpop.f32.mrf.mxu0
    %v2554 = vadd.f32 %v2465, %v2553
    %v2555 = vpop.f32.mrf.mxu0
    %v2556 = vadd.f32 %v2467, %v2555
    %2557 = vmatmul.bf16.gmra.mxu0 %v2023
    %v2558 = vpop.f32.mrf.mxu0
    %v2559 = vadd.f32 %v2470, %v2558
    %v2560 = vpop.f32.mrf.mxu0
    %v2561 = vadd.f32 %v2472, %v2560
    %2562 = vmatmul.bf16.gmra.mxu0 %v2025
    %v2563 = vpop.f32.mrf.mxu0
    %v2564 = vadd.f32 %v2475, %v2563
    %v2565 = vpop.f32.mrf.mxu0
    %v2566 = vadd.f32 %v2477, %v2565
    %2567 = vmatmul.bf16.gmra.mxu0 %v2027
    %v2568 = vpop.f32.mrf.mxu0
    %v2569 = vadd.f32 %v2480, %v2568
    %v2570 = vpop.f32.mrf.mxu0
    %v2571 = vadd.f32 %v2482, %v2570
    %2572 = vmatmul.bf16.gmra.mxu0 %v2029
    %v2573 = vpop.f32.mrf.mxu0
    %v2574 = vadd.f32 %v2485, %v2573
    %v2575 = vpop.f32.mrf.mxu0
    %v2576 = vadd.f32 %v2487, %v2575
    %2577 = vmatmul.bf16.gmra.mxu0 %v2031
    %v2578 = vpop.f32.mrf.mxu0
    %v2579 = vadd.f32 %v2490, %v2578
    %v2580 = vpop.f32.mrf.mxu0
    %v2581 = vadd.f32 %v2492, %v2580
    %2582 = vmatmul.bf16.gmra.mxu0 %v2033
    %v2583 = vpop.f32.mrf.mxu0
    %v2584 = vadd.f32 %v2495, %v2583
    %v2585 = vpop.f32.mrf.mxu0
    %v2586 = vadd.f32 %v2497, %v2585
    %2587 = vmatmul.bf16.gmra.mxu0 %v2035
    %v2588 = vpop.f32.mrf.mxu0
    %v2589 = vadd.f32 %v2500, %v2588
    %v2590 = vpop.f32.mrf.mxu0
    %v2591 = vadd.f32 %v2502, %v2590
    %2592 = vmatmul.bf16.gmra.mxu0 %v2037
    %v2593 = vpop.f32.mrf.mxu0
    %v2594 = vadd.f32 %v2505, %v2593
    %v2595 = vpop.f32.mrf.mxu0
    %v2596 = vadd.f32 %v2507, %v2595
    %2597 = vmatmul.bf16.gmra.mxu0 %v2039
    %v2598 = vpop.f32.mrf.mxu0
    %v2599 = vadd.f32 %v2510, %v2598
    %v2600 = vpop.f32.mrf.mxu0
    %v2601 = vadd.f32 %v2512, %v2600
    %2602 = vmatmul.bf16.gmra.mxu0 %v2041
    %v2603 = vpop.f32.mrf.mxu0
    %v2604 = vadd.f32 %v2515, %v2603
    %v2605 = vpop.f32.mrf.mxu0
    %v2606 = vadd.f32 %v2517, %v2605
    %2607 = vmatmul.bf16.gmra.mxu0 %v2043
    %v2608 = vpop.f32.mrf.mxu0
    %v2609 = vadd.f32 %v2520, %v2608
    %v2610 = vpop.f32.mrf.mxu0
    %v2611 = vadd.f32 %v2522, %v2610
    %2612 = vmatmul.bf16.gmra.mxu0 %v2045
    %v2613 = vpop.f32.mrf.mxu0
    %v2614 = vadd.f32 %v2525, %v2613
    %v2615 = vpop.f32.mrf.mxu0
    %v2616 = vadd.f32 %v2527, %v2615
    %2617 = vdwg.mxu0
    %2618 = vmatpush.bf16.msra.mxu0 %v2341
    %2619 = vmatpush.bf16.msra.mxu0 %v2337
    %2620 = vmatpush.bf16.msra.mxu0 %v2333
    %2621 = vmatpush.bf16.msra.mxu0 %v2329
    %2622 = vmatpush.bf16.msra.mxu0 %v2325
    %2623 = vmatpush.bf16.msra.mxu0 %v2321
    %2624 = vmatpush.bf16.msra.mxu0 %v2317
    %2625 = vmatpush.bf16.msra.mxu0 %v2313
    %2626 = vmatmul.bf16.gmra.mxu0 %v2014
    %v2627 = vpop.f32.mrf.mxu0
    %v2628 = vadd.f32 %v2113, %v2627
    %v2629 = vpop.f32.mrf.mxu0
    %v2630 = vadd.f32 %v2113, %v2629
    %2631 = vmatmul.bf16.gmra.mxu0 %v2016
    %v2632 = vpop.f32.mrf.mxu0
    %v2633 = vadd.f32 %v2113, %v2632
    %v2634 = vpop.f32.mrf.mxu0
    %v2635 = vadd.f32 %v2113, %v2634
    %2636 = vmatmul.bf16.gmra.mxu0 %v2018
    %v2637 = vpop.f32.mrf.mxu0
    %v2638 = vadd.f32 %v2113, %v2637
    %v2639 = vpop.f32.mrf.mxu0
    %v2640 = vadd.f32 %v2113, %v2639
    %2641 = vmatmul.bf16.gmra.mxu0 %v2020
    %v2642 = vpop.f32.mrf.mxu0
    %v2643 = vadd.f32 %v2113, %v2642
    %v2644 = vpop.f32.mrf.mxu0
    %v2645 = vadd.f32 %v2113, %v2644
    %2646 = vmatmul.bf16.gmra.mxu0 %v2022
    %v2647 = vpop.f32.mrf.mxu0
    %v2648 = vadd.f32 %v2113, %v2647
    %v2649 = vpop.f32.mrf.mxu0
    %v2650 = vadd.f32 %v2113, %v2649
    %2651 = vmatmul.bf16.gmra.mxu0 %v2024
    %v2652 = vpop.f32.mrf.mxu0
    %v2653 = vadd.f32 %v2113, %v2652
    %v2654 = vpop.f32.mrf.mxu0
    %v2655 = vadd.f32 %v2113, %v2654
    %2656 = vmatmul.bf16.gmra.mxu0 %v2026
    %v2657 = vpop.f32.mrf.mxu0
    %v2658 = vadd.f32 %v2113, %v2657
    %v2659 = vpop.f32.mrf.mxu0
    %v2660 = vadd.f32 %v2113, %v2659
    %2661 = vmatmul.bf16.gmra.mxu0 %v2028
    %v2662 = vpop.f32.mrf.mxu0
    %v2663 = vadd.f32 %v2113, %v2662
    %v2664 = vpop.f32.mrf.mxu0
    %v2665 = vadd.f32 %v2113, %v2664
    %2666 = vmatmul.bf16.gmra.mxu0 %v2030
    %v2667 = vpop.f32.mrf.mxu0
    %v2668 = vadd.f32 %v2113, %v2667
    %v2669 = vpop.f32.mrf.mxu0
    %v2670 = vadd.f32 %v2113, %v2669
    %2671 = vmatmul.bf16.gmra.mxu0 %v2032
    %v2672 = vpop.f32.mrf.mxu0
    %v2673 = vadd.f32 %v2113, %v2672
    %v2674 = vpop.f32.mrf.mxu0
    %v2675 = vadd.f32 %v2113, %v2674
    %2676 = vmatmul.bf16.gmra.mxu0 %v2034
    %v2677 = vpop.f32.mrf.mxu0
    %v2678 = vadd.f32 %v2113, %v2677
    %v2679 = vpop.f32.mrf.mxu0
    %v2680 = vadd.f32 %v2113, %v2679
    %2681 = vmatmul.bf16.gmra.mxu0 %v2036
    %v2682 = vpop.f32.mrf.mxu0
    %v2683 = vadd.f32 %v2113, %v2682
    %v2684 = vpop.f32.mrf.mxu0
    %v2685 = vadd.f32 %v2113, %v2684
    %2686 = vmatmul.bf16.gmra.mxu0 %v2038
    %v2687 = vpop.f32.mrf.mxu0
    %v2688 = vadd.f32 %v2113, %v2687
    %v2689 = vpop.f32.mrf.mxu0
    %v2690 = vadd.f32 %v2113, %v2689
    %2691 = vmatmul.bf16.gmra.mxu0 %v2040
    %v2692 = vpop.f32.mrf.mxu0
    %v2693 = vadd.f32 %v2113, %v2692
    %v2694 = vpop.f32.mrf.mxu0
    %v2695 = vadd.f32 %v2113, %v2694
    %2696 = vmatmul.bf16.gmra.mxu0 %v2042
    %v2697 = vpop.f32.mrf.mxu0
    %v2698 = vadd.f32 %v2113, %v2697
    %v2699 = vpop.f32.mrf.mxu0
    %v2700 = vadd.f32 %v2113, %v2699
    %2701 = vmatmul.bf16.gmra.mxu0 %v2044
    %v2702 = vpop.f32.mrf.mxu0
    %v2703 = vadd.f32 %v2113, %v2702
    %v2704 = vpop.f32.mrf.mxu0
    %v2705 = vadd.f32 %v2113, %v2704
    %2706 = vdwg.mxu0
    %2707 = vmatpush.bf16.msra.mxu0 %v2373
    %2708 = vmatpush.bf16.msra.mxu0 %v2369
    %2709 = vmatpush.bf16.msra.mxu0 %v2365
    %2710 = vmatpush.bf16.msra.mxu0 %v2361
    %2711 = vmatpush.bf16.msra.mxu0 %v2357
    %2712 = vmatpush.bf16.msra.mxu0 %v2353
    %2713 = vmatpush.bf16.msra.mxu0 %v2349
    %2714 = vmatpush.bf16.msra.mxu0 %v2345
    %2715 = vmatmul.bf16.gmra.mxu0 %v2015
    %v2716 = vpop.f32.mrf.mxu0
    %v2717 = vadd.f32 %v2628, %v2716
    %v2718 = vpop.f32.mrf.mxu0
    %v2719 = vadd.f32 %v2630, %v2718
    %2720 = vmatmul.bf16.gmra.mxu0 %v2017
    %v2721 = vpop.f32.mrf.mxu0
    %v2722 = vadd.f32 %v2633, %v2721
    %v2723 = vpop.f32.mrf.mxu0
    %v2724 = vadd.f32 %v2635, %v2723
    %2725 = vmatmul.bf16.gmra.mxu0 %v2019
    %v2726 = vpop.f32.mrf.mxu0
    %v2727 = vadd.f32 %v2638, %v2726
    %v2728 = vpop.f32.mrf.mxu0
    %v2729 = vadd.f32 %v2640, %v2728
    %2730 = vmatmul.bf16.gmra.mxu0 %v2021
    %v2731 = vpop.f32.mrf.mxu0
    %v2732 = vadd.f32 %v2643, %v2731
    %v2733 = vpop.f32.mrf.mxu0
    %v2734 = vadd.f32 %v2645, %v2733
    %2735 = vmatmul.bf16.gmra.mxu0 %v2023
    %v2736 = vpop.f32.mrf.mxu0
    %v2737 = vadd.f32 %v2648, %v2736
    %v2738 = vpop.f32.mrf.mxu0
    %v2739 = vadd.f32 %v2650, %v2738
    %2740 = vmatmul.bf16.gmra.mxu0 %v2025
    %v2741 = vpop.f32.mrf.mxu0
    %v2742 = vadd.f32 %v2653, %v2741
    %v2743 = vpop.f32.mrf.mxu0
    %v2744 = vadd.f32 %v2655, %v2743
    %2745 = vmatmul.bf16.gmra.mxu0 %v2027
    %v2746 = vpop.f32.mrf.mxu0
    %v2747 = vadd.f32 %v2658, %v2746
    %v2748 = vpop.f32.mrf.mxu0
    %v2749 = vadd.f32 %v2660, %v2748
    %2750 = vmatmul.bf16.gmra.mxu0 %v2029
    %v2751 = vpop.f32.mrf.mxu0
    %v2752 = vadd.f32 %v2663, %v2751
    %v2753 = vpop.f32.mrf.mxu0
    %v2754 = vadd.f32 %v2665, %v2753
    %2755 = vmatmul.bf16.gmra.mxu0 %v2031
    %v2756 = vpop.f32.mrf.mxu0
    %v2757 = vadd.f32 %v2668, %v2756
    %v2758 = vpop.f32.mrf.mxu0
    %v2759 = vadd.f32 %v2670, %v2758
    %2760 = vmatmul.bf16.gmra.mxu0 %v2033
    %v2761 = vpop.f32.mrf.mxu0
    %v2762 = vadd.f32 %v2673, %v2761
    %v2763 = vpop.f32.mrf.mxu0
    %v2764 = vadd.f32 %v2675, %v2763
    %2765 = vmatmul.bf16.gmra.mxu0 %v2035
    %v2766 = vpop.f32.mrf.mxu0
    %v2767 = vadd.f32 %v2678, %v2766
    %v2768 = vpop.f32.mrf.mxu0
    %v2769 = vadd.f32 %v2680, %v2768
    %2770 = vmatmul.bf16.gmra.mxu0 %v2037
    %v2771 = vpop.f32.mrf.mxu0
    %v2772 = vadd.f32 %v2683, %v2771
    %v2773 = vpop.f32.mrf.mxu0
    %v2774 = vadd.f32 %v2685, %v2773
    %2775 = vmatmul.bf16.gmra.mxu0 %v2039
    %v2776 = vpop.f32.mrf.mxu0
    %v2777 = vadd.f32 %v2688, %v2776
    %v2778 = vpop.f32.mrf.mxu0
    %v2779 = vadd.f32 %v2690, %v2778
    %2780 = vmatmul.bf16.gmra.mxu0 %v2041
    %v2781 = vpop.f32.mrf.mxu0
    %v2782 = vadd.f32 %v2693, %v2781
    %v2783 = vpop.f32.mrf.mxu0
    %v2784 = vadd.f32 %v2695, %v2783
    %2785 = vmatmul.bf16.gmra.mxu0 %v2043
    %v2786 = vpop.f32.mrf.mxu0
    %v2787 = vadd.f32 %v2698, %v2786
    %v2788 = vpop.f32.mrf.mxu0
    %v2789 = vadd.f32 %v2700, %v2788
    %2790 = vmatmul.bf16.gmra.mxu0 %v2045
    %v2791 = vpop.f32.mrf.mxu0
    %v2792 = vadd.f32 %v2703, %v2791
    %v2793 = vpop.f32.mrf.mxu0
    %v2794 = vadd.f32 %v2705, %v2793
    %2795 = vdwg.mxu0
    %2796 = vmatpush.bf16.msra.mxu0 %v2342
    %2797 = vmatpush.bf16.msra.mxu0 %v2338
    %2798 = vmatpush.bf16.msra.mxu0 %v2334
    %2799 = vmatpush.bf16.msra.mxu0 %v2330
    %2800 = vmatpush.bf16.msra.mxu0 %v2326
    %2801 = vmatpush.bf16.msra.mxu0 %v2322
    %2802 = vmatpush.bf16.msra.mxu0 %v2318
    %2803 = vmatpush.bf16.msra.mxu0 %v2314
    %2804 = vmatmul.bf16.gmra.mxu0 %v2014
    %v2805 = vpop.f32.mrf.mxu0
    %v2806 = vadd.f32 %v2114, %v2805
    %v2807 = vpop.f32.mrf.mxu0
    %v2808 = vadd.f32 %v2114, %v2807
    %2809 = vmatmul.bf16.gmra.mxu0 %v2016
    %v2810 = vpop.f32.mrf.mxu0
    %v2811 = vadd.f32 %v2114, %v2810
    %v2812 = vpop.f32.mrf.mxu0
    %v2813 = vadd.f32 %v2114, %v2812
    %2814 = vmatmul.bf16.gmra.mxu0 %v2018
    %v2815 = vpop.f32.mrf.mxu0
    %v2816 = vadd.f32 %v2114, %v2815
    %v2817 = vpop.f32.mrf.mxu0
    %v2818 = vadd.f32 %v2114, %v2817
    %2819 = vmatmul.bf16.gmra.mxu0 %v2020
    %v2820 = vpop.f32.mrf.mxu0
    %v2821 = vadd.f32 %v2114, %v2820
    %v2822 = vpop.f32.mrf.mxu0
    %v2823 = vadd.f32 %v2114, %v2822
    %2824 = vmatmul.bf16.gmra.mxu0 %v2022
    %v2825 = vpop.f32.mrf.mxu0
    %v2826 = vadd.f32 %v2114, %v2825
    %v2827 = vpop.f32.mrf.mxu0
    %v2828 = vadd.f32 %v2114, %v2827
    %2829 = vmatmul.bf16.gmra.mxu0 %v2024
    %v2830 = vpop.f32.mrf.mxu0
    %v2831 = vadd.f32 %v2114, %v2830
    %v2832 = vpop.f32.mrf.mxu0
    %v2833 = vadd.f32 %v2114, %v2832
    %2834 = vmatmul.bf16.gmra.mxu0 %v2026
    %v2835 = vpop.f32.mrf.mxu0
    %v2836 = vadd.f32 %v2114, %v2835
    %v2837 = vpop.f32.mrf.mxu0
    %v2838 = vadd.f32 %v2114, %v2837
    %2839 = vmatmul.bf16.gmra.mxu0 %v2028
    %v2840 = vpop.f32.mrf.mxu0
    %v2841 = vadd.f32 %v2114, %v2840
    %v2842 = vpop.f32.mrf.mxu0
    %v2843 = vadd.f32 %v2114, %v2842
    %2844 = vmatmul.bf16.gmra.mxu0 %v2030
    %v2845 = vpop.f32.mrf.mxu0
    %v2846 = vadd.f32 %v2114, %v2845
    %v2847 = vpop.f32.mrf.mxu0
    %v2848 = vadd.f32 %v2114, %v2847
    %2849 = vmatmul.bf16.gmra.mxu0 %v2032
    %v2850 = vpop.f32.mrf.mxu0
    %v2851 = vadd.f32 %v2114, %v2850
    %v2852 = vpop.f32.mrf.mxu0
    %v2853 = vadd.f32 %v2114, %v2852
    %2854 = vmatmul.bf16.gmra.mxu0 %v2034
    %v2855 = vpop.f32.mrf.mxu0
    %v2856 = vadd.f32 %v2114, %v2855
    %v2857 = vpop.f32.mrf.mxu0
    %v2858 = vadd.f32 %v2114, %v2857
    %2859 = vmatmul.bf16.gmra.mxu0 %v2036
    %v2860 = vpop.f32.mrf.mxu0
    %v2861 = vadd.f32 %v2114, %v2860
    %v2862 = vpop.f32.mrf.mxu0
    %v2863 = vadd.f32 %v2114, %v2862
    %2864 = vmatmul.bf16.gmra.mxu0 %v2038
    %v2865 = vpop.f32.mrf.mxu0
    %v2866 = vadd.f32 %v2114, %v2865
    %v2867 = vpop.f32.mrf.mxu0
    %v2868 = vadd.f32 %v2114, %v2867
    %2869 = vmatmul.bf16.gmra.mxu0 %v2040
    %v2870 = vpop.f32.mrf.mxu0
    %v2871 = vadd.f32 %v2114, %v2870
    %v2872 = vpop.f32.mrf.mxu0
    %v2873 = vadd.f32 %v2114, %v2872
    %2874 = vmatmul.bf16.gmra.mxu0 %v2042
    %v2875 = vpop.f32.mrf.mxu0
    %v2876 = vadd.f32 %v2114, %v2875
    %v2877 = vpop.f32.mrf.mxu0
    %v2878 = vadd.f32 %v2114, %v2877
    %2879 = vmatmul.bf16.gmra.mxu0 %v2044
    %v2880 = vpop.f32.mrf.mxu0
    %v2881 = vadd.f32 %v2114, %v2880
    %v2882 = vpop.f32.mrf.mxu0
    %v2883 = vadd.f32 %v2114, %v2882
    %2884 = vdwg.mxu0
    %2885 = vmatpush.bf16.msra.mxu0 %v2374
    %2886 = vmatpush.bf16.msra.mxu0 %v2370
    %2887 = vmatpush.bf16.msra.mxu0 %v2366
    %2888 = vmatpush.bf16.msra.mxu0 %v2362
    %2889 = vmatpush.bf16.msra.mxu0 %v2358
    %2890 = vmatpush.bf16.msra.mxu0 %v2354
    %2891 = vmatpush.bf16.msra.mxu0 %v2350
    %2892 = vmatpush.bf16.msra.mxu0 %v2346
    %2893 = vmatmul.bf16.gmra.mxu0 %v2015
    %v2894 = vpop.f32.mrf.mxu0
    %v2895 = vadd.f32 %v2806, %v2894
    %v2896 = vpop.f32.mrf.mxu0
    %v2897 = vadd.f32 %v2808, %v2896
    %2898 = vmatmul.bf16.gmra.mxu0 %v2017
    %v2899 = vpop.f32.mrf.mxu0
    %v2900 = vadd.f32 %v2811, %v2899
    %v2901 = vpop.f32.mrf.mxu0
    %v2902 = vadd.f32 %v2813, %v2901
    %2903 = vmatmul.bf16.gmra.mxu0 %v2019
    %v2904 = vpop.f32.mrf.mxu0
    %v2905 = vadd.f32 %v2816, %v2904
    %v2906 = vpop.f32.mrf.mxu0
    %v2907 = vadd.f32 %v2818, %v2906
    %2908 = vmatmul.bf16.gmra.mxu0 %v2021
    %v2909 = vpop.f32.mrf.mxu0
    %v2910 = vadd.f32 %v2821, %v2909
    %v2911 = vpop.f32.mrf.mxu0
    %v2912 = vadd.f32 %v2823, %v2911
    %2913 = vmatmul.bf16.gmra.mxu0 %v2023
    %v2914 = vpop.f32.mrf.mxu0
    %v2915 = vadd.f32 %v2826, %v2914
    %v2916 = vpop.f32.mrf.mxu0
    %v2917 = vadd.f32 %v2828, %v2916
    %2918 = vmatmul.bf16.gmra.mxu0 %v2025
    %v2919 = vpop.f32.mrf.mxu0
    %v2920 = vadd.f32 %v2831, %v2919
    %v2921 = vpop.f32.mrf.mxu0
    %v2922 = vadd.f32 %v2833, %v2921
    %2923 = vmatmul.bf16.gmra.mxu0 %v2027
    %v2924 = vpop.f32.mrf.mxu0
    %v2925 = vadd.f32 %v2836, %v2924
    %v2926 = vpop.f32.mrf.mxu0
    %v2927 = vadd.f32 %v2838, %v2926
    %2928 = vmatmul.bf16.gmra.mxu0 %v2029
    %v2929 = vpop.f32.mrf.mxu0
    %v2930 = vadd.f32 %v2841, %v2929
    %v2931 = vpop.f32.mrf.mxu0
    %v2932 = vadd.f32 %v2843, %v2931
    %2933 = vmatmul.bf16.gmra.mxu0 %v2031
    %v2934 = vpop.f32.mrf.mxu0
    %v2935 = vadd.f32 %v2846, %v2934
    %v2936 = vpop.f32.mrf.mxu0
    %v2937 = vadd.f32 %v2848, %v2936
    %2938 = vmatmul.bf16.gmra.mxu0 %v2033
    %v2939 = vpop.f32.mrf.mxu0
    %v2940 = vadd.f32 %v2851, %v2939
    %v2941 = vpop.f32.mrf.mxu0
    %v2942 = vadd.f32 %v2853, %v2941
    %2943 = vmatmul.bf16.gmra.mxu0 %v2035
    %v2944 = vpop.f32.mrf.mxu0
    %v2945 = vadd.f32 %v2856, %v2944
    %v2946 = vpop.f32.mrf.mxu0
    %v2947 = vadd.f32 %v2858, %v2946
    %2948 = vmatmul.bf16.gmra.mxu0 %v2037
    %v2949 = vpop.f32.mrf.mxu0
    %v2950 = vadd.f32 %v2861, %v2949
    %v2951 = vpop.f32.mrf.mxu0
    %v2952 = vadd.f32 %v2863, %v2951
    %2953 = vmatmul.bf16.gmra.mxu0 %v2039
    %v2954 = vpop.f32.mrf.mxu0
    %v2955 = vadd.f32 %v2866, %v2954
    %v2956 = vpop.f32.mrf.mxu0
    %v2957 = vadd.f32 %v2868, %v2956
    %2958 = vmatmul.bf16.gmra.mxu0 %v2041
    %v2959 = vpop.f32.mrf.mxu0
    %v2960 = vadd.f32 %v2871, %v2959
    %v2961 = vpop.f32.mrf.mxu0
    %v2962 = vadd.f32 %v2873, %v2961
    %2963 = vmatmul.bf16.gmra.mxu0 %v2043
    %v2964 = vpop.f32.mrf.mxu0
    %v2965 = vadd.f32 %v2876, %v2964
    %v2966 = vpop.f32.mrf.mxu0
    %v2967 = vadd.f32 %v2878, %v2966
    %2968 = vmatmul.bf16.gmra.mxu0 %v2045
    %v2969 = vpop.f32.mrf.mxu0
    %v2970 = vadd.f32 %v2881, %v2969
    %v2971 = vpop.f32.mrf.mxu0
    %v2972 = vadd.f32 %v2883, %v2971
    %2973 = vdwg.mxu0
    %2974 = vmatpush.bf16.msra.mxu0 %v2343
    %2975 = vmatpush.bf16.msra.mxu0 %v2339
    %2976 = vmatpush.bf16.msra.mxu0 %v2335
    %2977 = vmatpush.bf16.msra.mxu0 %v2331
    %2978 = vmatpush.bf16.msra.mxu0 %v2327
    %2979 = vmatpush.bf16.msra.mxu0 %v2323
    %2980 = vmatpush.bf16.msra.mxu0 %v2319
    %2981 = vmatpush.bf16.msra.mxu0 %v2315
    %2982 = vmatmul.bf16.gmra.mxu0 %v2014
    %v2983 = vpop.f32.mrf.mxu0
    %v2984 = vadd.f32 %v2115, %v2983
    %v2985 = vpop.f32.mrf.mxu0
    %v2986 = vadd.f32 %v2115, %v2985
    %2987 = vmatmul.bf16.gmra.mxu0 %v2016
    %v2988 = vpop.f32.mrf.mxu0
    %v2989 = vadd.f32 %v2115, %v2988
    %v2990 = vpop.f32.mrf.mxu0
    %v2991 = vadd.f32 %v2115, %v2990
    %2992 = vmatmul.bf16.gmra.mxu0 %v2018
    %v2993 = vpop.f32.mrf.mxu0
    %v2994 = vadd.f32 %v2115, %v2993
    %v2995 = vpop.f32.mrf.mxu0
    %v2996 = vadd.f32 %v2115, %v2995
    %2997 = vmatmul.bf16.gmra.mxu0 %v2020
    %v2998 = vpop.f32.mrf.mxu0
    %v2999 = vadd.f32 %v2115, %v2998
    %v3000 = vpop.f32.mrf.mxu0
    %v3001 = vadd.f32 %v2115, %v3000
    %3002 = vmatmul.bf16.gmra.mxu0 %v2022
    %v3003 = vpop.f32.mrf.mxu0
    %v3004 = vadd.f32 %v2115, %v3003
    %v3005 = vpop.f32.mrf.mxu0
    %v3006 = vadd.f32 %v2115, %v3005
    %3007 = vmatmul.bf16.gmra.mxu0 %v2024
    %v3008 = vpop.f32.mrf.mxu0
    %v3009 = vadd.f32 %v2115, %v3008
    %v3010 = vpop.f32.mrf.mxu0
    %v3011 = vadd.f32 %v2115, %v3010
    %3012 = vmatmul.bf16.gmra.mxu0 %v2026
    %v3013 = vpop.f32.mrf.mxu0
    %v3014 = vadd.f32 %v2115, %v3013
    %v3015 = vpop.f32.mrf.mxu0
    %v3016 = vadd.f32 %v2115, %v3015
    %3017 = vmatmul.bf16.gmra.mxu0 %v2028
    %v3018 = vpop.f32.mrf.mxu0
    %v3019 = vadd.f32 %v2115, %v3018
    %v3020 = vpop.f32.mrf.mxu0
    %v3021 = vadd.f32 %v2115, %v3020
    %3022 = vmatmul.bf16.gmra.mxu0 %v2030
    %v3023 = vpop.f32.mrf.mxu0
    %v3024 = vadd.f32 %v2115, %v3023
    %v3025 = vpop.f32.mrf.mxu0
    %v3026 = vadd.f32 %v2115, %v3025
    %3027 = vmatmul.bf16.gmra.mxu0 %v2032
    %v3028 = vpop.f32.mrf.mxu0
    %v3029 = vadd.f32 %v2115, %v3028
    %v3030 = vpop.f32.mrf.mxu0
    %v3031 = vadd.f32 %v2115, %v3030
    %3032 = vmatmul.bf16.gmra.mxu0 %v2034
    %v3033 = vpop.f32.mrf.mxu0
    %v3034 = vadd.f32 %v2115, %v3033
    %v3035 = vpop.f32.mrf.mxu0
    %v3036 = vadd.f32 %v2115, %v3035
    %3037 = vmatmul.bf16.gmra.mxu0 %v2036
    %v3038 = vpop.f32.mrf.mxu0
    %v3039 = vadd.f32 %v2115, %v3038
    %v3040 = vpop.f32.mrf.mxu0
    %v3041 = vadd.f32 %v2115, %v3040
    %3042 = vmatmul.bf16.gmra.mxu0 %v2038
    %v3043 = vpop.f32.mrf.mxu0
    %v3044 = vadd.f32 %v2115, %v3043
    %v3045 = vpop.f32.mrf.mxu0
    %v3046 = vadd.f32 %v2115, %v3045
    %3047 = vmatmul.bf16.gmra.mxu0 %v2040
    %v3048 = vpop.f32.mrf.mxu0
    %v3049 = vadd.f32 %v2115, %v3048
    %v3050 = vpop.f32.mrf.mxu0
    %v3051 = vadd.f32 %v2115, %v3050
    %3052 = vmatmul.bf16.gmra.mxu0 %v2042
    %v3053 = vpop.f32.mrf.mxu0
    %v3054 = vadd.f32 %v2115, %v3053
    %v3055 = vpop.f32.mrf.mxu0
    %v3056 = vadd.f32 %v2115, %v3055
    %3057 = vmatmul.bf16.gmra.mxu0 %v2044
    %v3058 = vpop.f32.mrf.mxu0
    %v3059 = vadd.f32 %v2115, %v3058
    %v3060 = vpop.f32.mrf.mxu0
    %v3061 = vadd.f32 %v2115, %v3060
    %3062 = vdwg.mxu0
    %3063 = vmatpush.bf16.msra.mxu0 %v2375
    %3064 = vmatpush.bf16.msra.mxu0 %v2371
    %3065 = vmatpush.bf16.msra.mxu0 %v2367
    %3066 = vmatpush.bf16.msra.mxu0 %v2363
    %3067 = vmatpush.bf16.msra.mxu0 %v2359
    %3068 = vmatpush.bf16.msra.mxu0 %v2355
    %3069 = vmatpush.bf16.msra.mxu0 %v2351
    %3070 = vmatpush.bf16.msra.mxu0 %v2347
    %3071 = vmatmul.bf16.gmra.mxu0 %v2015
    %v3072 = vpop.f32.mrf.mxu0
    %v3073 = vadd.f32 %v2984, %v3072
    %v3074 = vpop.f32.mrf.mxu0
    %v3075 = vadd.f32 %v2986, %v3074
    %3076 = vmatmul.bf16.gmra.mxu0 %v2017
    %v3077 = vpop.f32.mrf.mxu0
    %v3078 = vadd.f32 %v2989, %v3077
    %v3079 = vpop.f32.mrf.mxu0
    %v3080 = vadd.f32 %v2991, %v3079
    %3081 = vmatmul.bf16.gmra.mxu0 %v2019
    %v3082 = vpop.f32.mrf.mxu0
    %v3083 = vadd.f32 %v2994, %v3082
    %v3084 = vpop.f32.mrf.mxu0
    %v3085 = vadd.f32 %v2996, %v3084
    %3086 = vmatmul.bf16.gmra.mxu0 %v2021
    %v3087 = vpop.f32.mrf.mxu0
    %v3088 = vadd.f32 %v2999, %v3087
    %v3089 = vpop.f32.mrf.mxu0
    %v3090 = vadd.f32 %v3001, %v3089
    %3091 = vmatmul.bf16.gmra.mxu0 %v2023
    %v3092 = vpop.f32.mrf.mxu0
    %v3093 = vadd.f32 %v3004, %v3092
    %v3094 = vpop.f32.mrf.mxu0
    %v3095 = vadd.f32 %v3006, %v3094
    %3096 = vmatmul.bf16.gmra.mxu0 %v2025
    %v3097 = vpop.f32.mrf.mxu0
    %v3098 = vadd.f32 %v3009, %v3097
    %v3099 = vpop.f32.mrf.mxu0
    %v3100 = vadd.f32 %v3011, %v3099
    %3101 = vmatmul.bf16.gmra.mxu0 %v2027
    %v3102 = vpop.f32.mrf.mxu0
    %v3103 = vadd.f32 %v3014, %v3102
    %v3104 = vpop.f32.mrf.mxu0
    %v3105 = vadd.f32 %v3016, %v3104
    %3106 = vmatmul.bf16.gmra.mxu0 %v2029
    %v3107 = vpop.f32.mrf.mxu0
    %v3108 = vadd.f32 %v3019, %v3107
    %v3109 = vpop.f32.mrf.mxu0
    %v3110 = vadd.f32 %v3021, %v3109
    %3111 = vmatmul.bf16.gmra.mxu0 %v2031
    %v3112 = vpop.f32.mrf.mxu0
    %v3113 = vadd.f32 %v3024, %v3112
    %v3114 = vpop.f32.mrf.mxu0
    %v3115 = vadd.f32 %v3026, %v3114
    %3116 = vmatmul.bf16.gmra.mxu0 %v2033
    %v3117 = vpop.f32.mrf.mxu0
    %v3118 = vadd.f32 %v3029, %v3117
    %v3119 = vpop.f32.mrf.mxu0
    %v3120 = vadd.f32 %v3031, %v3119
    %3121 = vmatmul.bf16.gmra.mxu0 %v2035
    %v3122 = vpop.f32.mrf.mxu0
    %v3123 = vadd.f32 %v3034, %v3122
    %v3124 = vpop.f32.mrf.mxu0
    %v3125 = vadd.f32 %v3036, %v3124
    %3126 = vmatmul.bf16.gmra.mxu0 %v2037
    %v3127 = vpop.f32.mrf.mxu0
    %v3128 = vadd.f32 %v3039, %v3127
    %v3129 = vpop.f32.mrf.mxu0
    %v3130 = vadd.f32 %v3041, %v3129
    %3131 = vmatmul.bf16.gmra.mxu0 %v2039
    %v3132 = vpop.f32.mrf.mxu0
    %v3133 = vadd.f32 %v3044, %v3132
    %v3134 = vpop.f32.mrf.mxu0
    %v3135 = vadd.f32 %v3046, %v3134
    %3136 = vmatmul.bf16.gmra.mxu0 %v2041
    %v3137 = vpop.f32.mrf.mxu0
    %v3138 = vadd.f32 %v3049, %v3137
    %v3139 = vpop.f32.mrf.mxu0
    %v3140 = vadd.f32 %v3051, %v3139
    %3141 = vmatmul.bf16.gmra.mxu0 %v2043
    %v3142 = vpop.f32.mrf.mxu0
    %v3143 = vadd.f32 %v3054, %v3142
    %v3144 = vpop.f32.mrf.mxu0
    %v3145 = vadd.f32 %v3056, %v3144
    %3146 = vmatmul.bf16.gmra.mxu0 %v2045
    %v3147 = vpop.f32.mrf.mxu0
    %v3148 = vadd.f32 %v3059, %v3147
    %v3149 = vpop.f32.mrf.mxu0
    %v3150 = vadd.f32 %v3061, %v3149
    %3151 = vdwg.mxu0
    %v3152 = vmax.f32 %v2539, 0.0
    %v3153 = vmax.f32 %v2717, 0.0
    %v3154 = vmax.f32 %v2895, 0.0
    %v3155 = vmax.f32 %v3073, 0.0
    %v3156 = vmax.f32 %v2541, 0.0
    %v3157 = vmax.f32 %v2719, 0.0
    %v3158 = vmax.f32 %v2897, 0.0
    %v3159 = vmax.f32 %v3075, 0.0
    %v3160 = vmax.f32 %v2544, 0.0
    %v3161 = vmax.f32 %v2722, 0.0
    %v3162 = vmax.f32 %v2900, 0.0
    %v3163 = vmax.f32 %v3078, 0.0
    %v3164 = vmax.f32 %v2546, 0.0
    %v3165 = vmax.f32 %v2724, 0.0
    %v3166 = vmax.f32 %v2902, 0.0
    %v3167 = vmax.f32 %v3080, 0.0
    %v3168 = vmax.f32 %v2549, 0.0
    %v3169 = vmax.f32 %v2727, 0.0
    %v3170 = vmax.f32 %v2905, 0.0
    %v3171 = vmax.f32 %v3083, 0.0
    %v3172 = vmax.f32 %v2551, 0.0
    %v3173 = vmax.f32 %v2729, 0.0
    %v3174 = vmax.f32 %v2907, 0.0
    %v3175 = vmax.f32 %v3085, 0.0
    %v3176 = vmax.f32 %v2554, 0.0
    %v3177 = vmax.f32 %v2732, 0.0
    %v3178 = vmax.f32 %v2910, 0.0
    %v3179 = vmax.f32 %v3088, 0.0
    %v3180 = vmax.f32 %v2556, 0.0
    %v3181 = vmax.f32 %v2734, 0.0
    %v3182 = vmax.f32 %v2912, 0.0
    %v3183 = vmax.f32 %v3090, 0.0
    %v3184 = vmax.f32 %v2559, 0.0
    %v3185 = vmax.f32 %v2737, 0.0
    %v3186 = vmax.f32 %v2915, 0.0
    %v3187 = vmax.f32 %v3093, 0.0
    %v3188 = vmax.f32 %v2561, 0.0
    %v3189 = vmax.f32 %v2739, 0.0
    %v3190 = vmax.f32 %v2917, 0.0
    %v3191 = vmax.f32 %v3095, 0.0
    %v3192 = vmax.f32 %v2564, 0.0
    %v3193 = vmax.f32 %v2742, 0.0
    %v3194 = vmax.f32 %v2920, 0.0
    %v3195 = vmax.f32 %v3098, 0.0
    %v3196 = vmax.f32 %v2566, 0.0
    %v3197 = vmax.f32 %v2744, 0.0
    %v3198 = vmax.f32 %v2922, 0.0
    %v3199 = vmax.f32 %v3100, 0.0
    %v3200 = vmax.f32 %v2569, 0.0
    %v3201 = vmax.f32 %v2747, 0.0
    %v3202 = vmax.f32 %v2925, 0.0
    %v3203 = vmax.f32 %v3103, 0.0
    %v3204 = vmax.f32 %v2571, 0.0
    %v3205 = vmax.f32 %v2749, 0.0
    %v3206 = vmax.f32 %v2927, 0.0
    %v3207 = vmax.f32 %v3105, 0.0
    %v3208 = vmax.f32 %v2574, 0.0
    %v3209 = vmax.f32 %v2752, 0.0
    %v3210 = vmax.f32 %v2930, 0.0
    %v3211 = vmax.f32 %v3108, 0.0
    %v3212 = vmax.f32 %v2576, 0.0
    %v3213 = vmax.f32 %v2754, 0.0
    %v3214 = vmax.f32 %v2932, 0.0
    %v3215 = vmax.f32 %v3110, 0.0
    %v3216 = vmax.f32 %v2579, 0.0
    %v3217 = vmax.f32 %v2757, 0.0
    %v3218 = vmax.f32 %v2935, 0.0
    %v3219 = vmax.f32 %v3113, 0.0
    %v3220 = vmax.f32 %v2581, 0.0
    %v3221 = vmax.f32 %v2759, 0.0
    %v3222 = vmax.f32 %v2937, 0.0
    %v3223 = vmax.f32 %v3115, 0.0
    %v3224 = vmax.f32 %v2584, 0.0
    %v3225 = vmax.f32 %v2762, 0.0
    %v3226 = vmax.f32 %v2940, 0.0
    %v3227 = vmax.f32 %v3118, 0.0
    %v3228 = vmax.f32 %v2586, 0.0
    %v3229 = vmax.f32 %v2764, 0.0
    %v3230 = vmax.f32 %v2942, 0.0
    %v3231 = vmax.f32 %v3120, 0.0
    %v3232 = vmax.f32 %v2589, 0.0
    %v3233 = vmax.f32 %v2767, 0.0
    %v3234 = vmax.f32 %v2945, 0.0
    %v3235 = vmax.f32 %v3123, 0.0
    %v3236 = vmax.f32 %v2591, 0.0
    %v3237 = vmax.f32 %v2769, 0.0
    %v3238 = vmax.f32 %v2947, 0.0
    %v3239 = vmax.f32 %v3125, 0.0
    %v3240 = vmax.f32 %v2594, 0.0
    %v3241 = vmax.f32 %v2772, 0.0
    %v3242 = vmax.f32 %v2950, 0.0
    %v3243 = vmax.f32 %v3128, 0.0
    %v3244 = vmax.f32 %v2596, 0.0
    %v3245 = vmax.f32 %v2774, 0.0
    %v3246 = vmax.f32 %v2952, 0.0
    %v3247 = vmax.f32 %v3130, 0.0
    %v3248 = vmax.f32 %v2599, 0.0
    %v3249 = vmax.f32 %v2777, 0.0
    %v3250 = vmax.f32 %v2955, 0.0
    %v3251 = vmax.f32 %v3133, 0.0
    %v3252 = vmax.f32 %v2601, 0.0
    %v3253 = vmax.f32 %v2779, 0.0
    %v3254 = vmax.f32 %v2957, 0.0
    %v3255 = vmax.f32 %v3135, 0.0
    %v3256 = vmax.f32 %v2604, 0.0
    %v3257 = vmax.f32 %v2782, 0.0
    %v3258 = vmax.f32 %v2960, 0.0
    %v3259 = vmax.f32 %v3138, 0.0
    %v3260 = vmax.f32 %v2606, 0.0
    %v3261 = vmax.f32 %v2784, 0.0
    %v3262 = vmax.f32 %v2962, 0.0
    %v3263 = vmax.f32 %v3140, 0.0
    %v3264 = vmax.f32 %v2609, 0.0
    %v3265 = vmax.f32 %v2787, 0.0
    %v3266 = vmax.f32 %v2965, 0.0
    %v3267 = vmax.f32 %v3143, 0.0
    %v3268 = vmax.f32 %v2611, 0.0
    %v3269 = vmax.f32 %v2789, 0.0
    %v3270 = vmax.f32 %v2967, 0.0
    %v3271 = vmax.f32 %v3145, 0.0
    %v3272 = vmax.f32 %v2614, 0.0
    %v3273 = vmax.f32 %v2792, 0.0
    %v3274 = vmax.f32 %v2970, 0.0
    %v3275 = vmax.f32 %v3148, 0.0
    %v3276 = vmax.f32 %v2616, 0.0
    %v3277 = vmax.f32 %v2794, 0.0
    %v3278 = vmax.f32 %v2972, 0.0
    %v3279 = vmax.f32 %v3150, 0.0
    %v3280 = vpack.c.bf16 %v3156, %v3152
    %v3281 = vpack.c.bf16 %v3157, %v3153
    %v3282 = vpack.c.bf16 %v3158, %v3154
    %v3283 = vpack.c.bf16 %v3159, %v3155
    %v3284 = vpack.c.bf16 %v3164, %v3160
    %v3285 = vpack.c.bf16 %v3165, %v3161
    %v3286 = vpack.c.bf16 %v3166, %v3162
    %v3287 = vpack.c.bf16 %v3167, %v3163
    %v3288 = vpack.c.bf16 %v3172, %v3168
    %v3289 = vpack.c.bf16 %v3173, %v3169
    %v3290 = vpack.c.bf16 %v3174, %v3170
    %v3291 = vpack.c.bf16 %v3175, %v3171
    %v3292 = vpack.c.bf16 %v3180, %v3176
    %v3293 = vpack.c.bf16 %v3181, %v3177
    %v3294 = vpack.c.bf16 %v3182, %v3178
    %v3295 = vpack.c.bf16 %v3183, %v3179
    %v3296 = vpack.c.bf16 %v3188, %v3184
    %v3297 = vpack.c.bf16 %v3189, %v3185
    %v3298 = vpack.c.bf16 %v3190, %v3186
    %v3299 = vpack.c.bf16 %v3191, %v3187
    %v3300 = vpack.c.bf16 %v3196, %v3192
    %v3301 = vpack.c.bf16 %v3197, %v3193
    %v3302 = vpack.c.bf16 %v3198, %v3194
    %v3303 = vpack.c.bf16 %v3199, %v3195
    %v3304 = vpack.c.bf16 %v3204, %v3200
    %v3305 = vpack.c.bf16 %v3205, %v3201
    %v3306 = vpack.c.bf16 %v3206, %v3202
    %v3307 = vpack.c.bf16 %v3207, %v3203
    %v3308 = vpack.c.bf16 %v3212, %v3208
    %v3309 = vpack.c.bf16 %v3213, %v3209
    %v3310 = vpack.c.bf16 %v3214, %v3210
    %v3311 = vpack.c.bf16 %v3215, %v3211
    %v3312 = vpack.c.bf16 %v3220, %v3216
    %v3313 = vpack.c.bf16 %v3221, %v3217
    %v3314 = vpack.c.bf16 %v3222, %v3218
    %v3315 = vpack.c.bf16 %v3223, %v3219
    %v3316 = vpack.c.bf16 %v3228, %v3224
    %v3317 = vpack.c.bf16 %v3229, %v3225
    %v3318 = vpack.c.bf16 %v3230, %v3226
    %v3319 = vpack.c.bf16 %v3231, %v3227
    %v3320 = vpack.c.bf16 %v3236, %v3232
    %v3321 = vpack.c.bf16 %v3237, %v3233
    %v3322 = vpack.c.bf16 %v3238, %v3234
    %v3323 = vpack.c.bf16 %v3239, %v3235
    %v3324 = vpack.c.bf16 %v3244, %v3240
    %v3325 = vpack.c.bf16 %v3245, %v3241
    %v3326 = vpack.c.bf16 %v3246, %v3242
    %v3327 = vpack.c.bf16 %v3247, %v3243
    %v3328 = vpack.c.bf16 %v3252, %v3248
    %v3329 = vpack.c.bf16 %v3253, %v3249
    %v3330 = vpack.c.bf16 %v3254, %v3250
    %v3331 = vpack.c.bf16 %v3255, %v3251
    %v3332 = vpack.c.bf16 %v3260, %v3256
    %v3333 = vpack.c.bf16 %v3261, %v3257
    %v3334 = vpack.c.bf16 %v3262, %v3258
    %v3335 = vpack.c.bf16 %v3263, %v3259
    %v3336 = vpack.c.bf16 %v3268, %v3264
    %v3337 = vpack.c.bf16 %v3269, %v3265
    %v3338 = vpack.c.bf16 %v3270, %v3266
    %v3339 = vpack.c.bf16 %v3271, %v3267
    %v3340 = vpack.c.bf16 %v3276, %v3272
    %v3341 = vpack.c.bf16 %v3277, %v3273
    %v3342 = vpack.c.bf16 %v3278, %v3274
    %v3343 = vpack.c.bf16 %v3279, %v3275
    %v3344 = vld [vmem:[#allocation7] sm:$0xff]
    %v3345 = vld [vmem:[#allocation7 + $0x8] sm:$0xff]
    %v3346 = vld [vmem:[#allocation7 + $0x10] sm:$0xff]
    %v3347 = vld [vmem:[#allocation7 + $0x18] sm:$0xff]
    %v3348 = vld [vmem:[#allocation7 + $0x20] sm:$0xff]
    %v3349 = vld [vmem:[#allocation7 + $0x28] sm:$0xff]
    %v3350 = vld [vmem:[#allocation7 + $0x30] sm:$0xff]
    %v3351 = vld [vmem:[#allocation7 + $0x38] sm:$0xff]
    %v3352 = vld [vmem:[#allocation7 + $0x40] sm:$0xff]
    %v3353 = vld [vmem:[#allocation7 + $0x48] sm:$0xff]
    %v3354 = vld [vmem:[#allocation7 + $0x50] sm:$0xff]
    %v3355 = vld [vmem:[#allocation7 + $0x58] sm:$0xff]
    %v3356 = vld [vmem:[#allocation7 + $0x60] sm:$0xff]
    %v3357 = vld [vmem:[#allocation7 + $0x68] sm:$0xff]
    %v3358 = vld [vmem:[#allocation7 + $0x70] sm:$0xff]
    %v3359 = vld [vmem:[#allocation7 + $0x78] sm:$0xff]
    %v3360 = vld [vmem:[#allocation7 + $0x80] sm:$0xff]
    %v3361 = vld [vmem:[#allocation7 + $0x88] sm:$0xff]
    %v3362 = vld [vmem:[#allocation7 + $0x90] sm:$0xff]
    %v3363 = vld [vmem:[#allocation7 + $0x98] sm:$0xff]
    %v3364 = vld [vmem:[#allocation7 + $0xa0] sm:$0xff]
    %v3365 = vld [vmem:[#allocation7 + $0xa8] sm:$0xff]
    %v3366 = vld [vmem:[#allocation7 + $0xb0] sm:$0xff]
    %v3367 = vld [vmem:[#allocation7 + $0xb8] sm:$0xff]
    %v3368 = vld [vmem:[#allocation7 + $0xc0] sm:$0xff]
    %v3369 = vld [vmem:[#allocation7 + $0xc8] sm:$0xff]
    %v3370 = vld [vmem:[#allocation7 + $0xd0] sm:$0xff]
    %v3371 = vld [vmem:[#allocation7 + $0xd8] sm:$0xff]
    %v3372 = vld [vmem:[#allocation7 + $0xe0] sm:$0xff]
    %v3373 = vld [vmem:[#allocation7 + $0xe8] sm:$0xff]
    %v3374 = vld [vmem:[#allocation7 + $0xf0] sm:$0xff]
    %v3375 = vld [vmem:[#allocation7 + $0xf8] sm:$0xff]
    %v3376 = vld [vmem:[#allocation7 + $0x100] sm:$0xff]
    %v3377 = vld [vmem:[#allocation7 + $0x108] sm:$0xff]
    %v3378 = vld [vmem:[#allocation7 + $0x110] sm:$0xff]
    %v3379 = vld [vmem:[#allocation7 + $0x118] sm:$0xff]
    %v3380 = vld [vmem:[#allocation7 + $0x120] sm:$0xff]
    %v3381 = vld [vmem:[#allocation7 + $0x128] sm:$0xff]
    %v3382 = vld [vmem:[#allocation7 + $0x130] sm:$0xff]
    %v3383 = vld [vmem:[#allocation7 + $0x138] sm:$0xff]
    %v3384 = vld [vmem:[#allocation7 + $0x140] sm:$0xff]
    %v3385 = vld [vmem:[#allocation7 + $0x148] sm:$0xff]
    %v3386 = vld [vmem:[#allocation7 + $0x150] sm:$0xff]
    %v3387 = vld [vmem:[#allocation7 + $0x158] sm:$0xff]
    %v3388 = vld [vmem:[#allocation7 + $0x160] sm:$0xff]
    %v3389 = vld [vmem:[#allocation7 + $0x168] sm:$0xff]
    %v3390 = vld [vmem:[#allocation7 + $0x170] sm:$0xff]
    %v3391 = vld [vmem:[#allocation7 + $0x178] sm:$0xff]
    %v3392 = vld [vmem:[#allocation7 + $0x180] sm:$0xff]
    %v3393 = vld [vmem:[#allocation7 + $0x188] sm:$0xff]
    %v3394 = vld [vmem:[#allocation7 + $0x190] sm:$0xff]
    %v3395 = vld [vmem:[#allocation7 + $0x198] sm:$0xff]
    %v3396 = vld [vmem:[#allocation7 + $0x1a0] sm:$0xff]
    %v3397 = vld [vmem:[#allocation7 + $0x1a8] sm:$0xff]
    %v3398 = vld [vmem:[#allocation7 + $0x1b0] sm:$0xff]
    %v3399 = vld [vmem:[#allocation7 + $0x1b8] sm:$0xff]
    %v3400 = vld [vmem:[#allocation7 + $0x1c0] sm:$0xff]
    %v3401 = vld [vmem:[#allocation7 + $0x1c8] sm:$0xff]
    %v3402 = vld [vmem:[#allocation7 + $0x1d0] sm:$0xff]
    %v3403 = vld [vmem:[#allocation7 + $0x1d8] sm:$0xff]
    %v3404 = vld [vmem:[#allocation7 + $0x1e0] sm:$0xff]
    %v3405 = vld [vmem:[#allocation7 + $0x1e8] sm:$0xff]
    %v3406 = vld [vmem:[#allocation7 + $0x1f0] sm:$0xff]
    %v3407 = vld [vmem:[#allocation7 + $0x1f8] sm:$0xff]
    %v3408 = vld [vmem:[#allocation7 + $0x200] sm:$0xff]
    %v3409 = vld [vmem:[#allocation7 + $0x208] sm:$0xff]
    %v3410 = vld [vmem:[#allocation7 + $0x210] sm:$0xff]
    %v3411 = vld [vmem:[#allocation7 + $0x218] sm:$0xff]
    %v3412 = vld [vmem:[#allocation7 + $0x220] sm:$0xff]
    %v3413 = vld [vmem:[#allocation7 + $0x228] sm:$0xff]
    %v3414 = vld [vmem:[#allocation7 + $0x230] sm:$0xff]
    %v3415 = vld [vmem:[#allocation7 + $0x238] sm:$0xff]
    %v3416 = vld [vmem:[#allocation7 + $0x240] sm:$0xff]
    %v3417 = vld [vmem:[#allocation7 + $0x248] sm:$0xff]
    %v3418 = vld [vmem:[#allocation7 + $0x250] sm:$0xff]
    %v3419 = vld [vmem:[#allocation7 + $0x258] sm:$0xff]
    %v3420 = vld [vmem:[#allocation7 + $0x260] sm:$0xff]
    %v3421 = vld [vmem:[#allocation7 + $0x268] sm:$0xff]
    %v3422 = vld [vmem:[#allocation7 + $0x270] sm:$0xff]
    %v3423 = vld [vmem:[#allocation7 + $0x278] sm:$0xff]
    %v3424 = vld [vmem:[#allocation7 + $0x280] sm:$0xff]
    %v3425 = vld [vmem:[#allocation7 + $0x288] sm:$0xff]
    %v3426 = vld [vmem:[#allocation7 + $0x290] sm:$0xff]
    %v3427 = vld [vmem:[#allocation7 + $0x298] sm:$0xff]
    %v3428 = vld [vmem:[#allocation7 + $0x2a0] sm:$0xff]
    %v3429 = vld [vmem:[#allocation7 + $0x2a8] sm:$0xff]
    %v3430 = vld [vmem:[#allocation7 + $0x2b0] sm:$0xff]
    %v3431 = vld [vmem:[#allocation7 + $0x2b8] sm:$0xff]
    %v3432 = vld [vmem:[#allocation7 + $0x2c0] sm:$0xff]
    %v3433 = vld [vmem:[#allocation7 + $0x2c8] sm:$0xff]
    %v3434 = vld [vmem:[#allocation7 + $0x2d0] sm:$0xff]
    %v3435 = vld [vmem:[#allocation7 + $0x2d8] sm:$0xff]
    %v3436 = vld [vmem:[#allocation7 + $0x2e0] sm:$0xff]
    %v3437 = vld [vmem:[#allocation7 + $0x2e8] sm:$0xff]
    %v3438 = vld [vmem:[#allocation7 + $0x2f0] sm:$0xff]
    %v3439 = vld [vmem:[#allocation7 + $0x2f8] sm:$0xff]
    %v3440 = vld [vmem:[#allocation7 + $0x300] sm:$0xff]
    %v3441 = vld [vmem:[#allocation7 + $0x308] sm:$0xff]
    %v3442 = vld [vmem:[#allocation7 + $0x310] sm:$0xff]
    %v3443 = vld [vmem:[#allocation7 + $0x318] sm:$0xff]
    %v3444 = vld [vmem:[#allocation7 + $0x320] sm:$0xff]
    %v3445 = vld [vmem:[#allocation7 + $0x328] sm:$0xff]
    %v3446 = vld [vmem:[#allocation7 + $0x330] sm:$0xff]
    %v3447 = vld [vmem:[#allocation7 + $0x338] sm:$0xff]
    %v3448 = vld [vmem:[#allocation7 + $0x340] sm:$0xff]
    %v3449 = vld [vmem:[#allocation7 + $0x348] sm:$0xff]
    %v3450 = vld [vmem:[#allocation7 + $0x350] sm:$0xff]
    %v3451 = vld [vmem:[#allocation7 + $0x358] sm:$0xff]
    %v3452 = vld [vmem:[#allocation7 + $0x360] sm:$0xff]
    %v3453 = vld [vmem:[#allocation7 + $0x368] sm:$0xff]
    %v3454 = vld [vmem:[#allocation7 + $0x370] sm:$0xff]
    %v3455 = vld [vmem:[#allocation7 + $0x378] sm:$0xff]
    %v3456 = vld [vmem:[#allocation7 + $0x380] sm:$0xff]
    %v3457 = vld [vmem:[#allocation7 + $0x388] sm:$0xff]
    %v3458 = vld [vmem:[#allocation7 + $0x390] sm:$0xff]
    %v3459 = vld [vmem:[#allocation7 + $0x398] sm:$0xff]
    %v3460 = vld [vmem:[#allocation7 + $0x3a0] sm:$0xff]
    %v3461 = vld [vmem:[#allocation7 + $0x3a8] sm:$0xff]
    %v3462 = vld [vmem:[#allocation7 + $0x3b0] sm:$0xff]
    %v3463 = vld [vmem:[#allocation7 + $0x3b8] sm:$0xff]
    %v3464 = vld [vmem:[#allocation7 + $0x3c0] sm:$0xff]
    %v3465 = vld [vmem:[#allocation7 + $0x3c8] sm:$0xff]
    %v3466 = vld [vmem:[#allocation7 + $0x3d0] sm:$0xff]
    %v3467 = vld [vmem:[#allocation7 + $0x3d8] sm:$0xff]
    %v3468 = vld [vmem:[#allocation7 + $0x3e0] sm:$0xff]
    %v3469 = vld [vmem:[#allocation7 + $0x3e8] sm:$0xff]
    %v3470 = vld [vmem:[#allocation7 + $0x3f0] sm:$0xff]
    %v3471 = vld [vmem:[#allocation7 + $0x3f8] sm:$0xff]
    %v3472 = vld [vmem:[#allocation7 + $0x400] sm:$0xff]
    %v3473 = vld [vmem:[#allocation7 + $0x408] sm:$0xff]
    %v3474 = vld [vmem:[#allocation7 + $0x410] sm:$0xff]
    %v3475 = vld [vmem:[#allocation7 + $0x418] sm:$0xff]
    %v3476 = vld [vmem:[#allocation7 + $0x420] sm:$0xff]
    %v3477 = vld [vmem:[#allocation7 + $0x428] sm:$0xff]
    %v3478 = vld [vmem:[#allocation7 + $0x430] sm:$0xff]
    %v3479 = vld [vmem:[#allocation7 + $0x438] sm:$0xff]
    %v3480 = vld [vmem:[#allocation7 + $0x440] sm:$0xff]
    %v3481 = vld [vmem:[#allocation7 + $0x448] sm:$0xff]
    %v3482 = vld [vmem:[#allocation7 + $0x450] sm:$0xff]
    %v3483 = vld [vmem:[#allocation7 + $0x458] sm:$0xff]
    %v3484 = vld [vmem:[#allocation7 + $0x460] sm:$0xff]
    %v3485 = vld [vmem:[#allocation7 + $0x468] sm:$0xff]
    %v3486 = vld [vmem:[#allocation7 + $0x470] sm:$0xff]
    %v3487 = vld [vmem:[#allocation7 + $0x478] sm:$0xff]
    %v3488 = vld [vmem:[#allocation7 + $0x480] sm:$0xff]
    %v3489 = vld [vmem:[#allocation7 + $0x488] sm:$0xff]
    %v3490 = vld [vmem:[#allocation7 + $0x490] sm:$0xff]
    %v3491 = vld [vmem:[#allocation7 + $0x498] sm:$0xff]
    %v3492 = vld [vmem:[#allocation7 + $0x4a0] sm:$0xff]
    %v3493 = vld [vmem:[#allocation7 + $0x4a8] sm:$0xff]
    %v3494 = vld [vmem:[#allocation7 + $0x4b0] sm:$0xff]
    %v3495 = vld [vmem:[#allocation7 + $0x4b8] sm:$0xff]
    %v3496 = vld [vmem:[#allocation7 + $0x4c0] sm:$0xff]
    %v3497 = vld [vmem:[#allocation7 + $0x4c8] sm:$0xff]
    %v3498 = vld [vmem:[#allocation7 + $0x4d0] sm:$0xff]
    %v3499 = vld [vmem:[#allocation7 + $0x4d8] sm:$0xff]
    %v3500 = vld [vmem:[#allocation7 + $0x4e0] sm:$0xff]
    %v3501 = vld [vmem:[#allocation7 + $0x4e8] sm:$0xff]
    %v3502 = vld [vmem:[#allocation7 + $0x4f0] sm:$0xff]
    %v3503 = vld [vmem:[#allocation7 + $0x4f8] sm:$0xff]
    %v3504 = vld [vmem:[#allocation7 + $0x500] sm:$0xff]
    %v3505 = vld [vmem:[#allocation7 + $0x508] sm:$0xff]
    %v3506 = vld [vmem:[#allocation7 + $0x510] sm:$0xff]
    %v3507 = vld [vmem:[#allocation7 + $0x518] sm:$0xff]
    %v3508 = vld [vmem:[#allocation7 + $0x520] sm:$0xff]
    %v3509 = vld [vmem:[#allocation7 + $0x528] sm:$0xff]
    %v3510 = vld [vmem:[#allocation7 + $0x530] sm:$0xff]
    %v3511 = vld [vmem:[#allocation7 + $0x538] sm:$0xff]
    %v3512 = vld [vmem:[#allocation7 + $0x540] sm:$0xff]
    %v3513 = vld [vmem:[#allocation7 + $0x548] sm:$0xff]
    %v3514 = vld [vmem:[#allocation7 + $0x550] sm:$0xff]
    %v3515 = vld [vmem:[#allocation7 + $0x558] sm:$0xff]
    %v3516 = vld [vmem:[#allocation7 + $0x560] sm:$0xff]
    %v3517 = vld [vmem:[#allocation7 + $0x568] sm:$0xff]
    %v3518 = vld [vmem:[#allocation7 + $0x570] sm:$0xff]
    %v3519 = vld [vmem:[#allocation7 + $0x578] sm:$0xff]
    %v3520 = vld [vmem:[#allocation7 + $0x580] sm:$0xff]
    %v3521 = vld [vmem:[#allocation7 + $0x588] sm:$0xff]
    %v3522 = vld [vmem:[#allocation7 + $0x590] sm:$0xff]
    %v3523 = vld [vmem:[#allocation7 + $0x598] sm:$0xff]
    %v3524 = vld [vmem:[#allocation7 + $0x5a0] sm:$0xff]
    %v3525 = vld [vmem:[#allocation7 + $0x5a8] sm:$0xff]
    %v3526 = vld [vmem:[#allocation7 + $0x5b0] sm:$0xff]
    %v3527 = vld [vmem:[#allocation7 + $0x5b8] sm:$0xff]
    %v3528 = vld [vmem:[#allocation7 + $0x5c0] sm:$0xff]
    %v3529 = vld [vmem:[#allocation7 + $0x5c8] sm:$0xff]
    %v3530 = vld [vmem:[#allocation7 + $0x5d0] sm:$0xff]
    %v3531 = vld [vmem:[#allocation7 + $0x5d8] sm:$0xff]
    %v3532 = vld [vmem:[#allocation7 + $0x5e0] sm:$0xff]
    %v3533 = vld [vmem:[#allocation7 + $0x5e8] sm:$0xff]
    %v3534 = vld [vmem:[#allocation7 + $0x5f0] sm:$0xff]
    %v3535 = vld [vmem:[#allocation7 + $0x5f8] sm:$0xff]
    %v3536 = vld [vmem:[#allocation7 + $0x600] sm:$0xff]
    %v3537 = vld [vmem:[#allocation7 + $0x608] sm:$0xff]
    %v3538 = vld [vmem:[#allocation7 + $0x610] sm:$0xff]
    %v3539 = vld [vmem:[#allocation7 + $0x618] sm:$0xff]
    %v3540 = vld [vmem:[#allocation7 + $0x620] sm:$0xff]
    %v3541 = vld [vmem:[#allocation7 + $0x628] sm:$0xff]
    %v3542 = vld [vmem:[#allocation7 + $0x630] sm:$0xff]
    %v3543 = vld [vmem:[#allocation7 + $0x638] sm:$0xff]
    %v3544 = vld [vmem:[#allocation7 + $0x640] sm:$0xff]
    %v3545 = vld [vmem:[#allocation7 + $0x648] sm:$0xff]
    %v3546 = vld [vmem:[#allocation7 + $0x650] sm:$0xff]
    %v3547 = vld [vmem:[#allocation7 + $0x658] sm:$0xff]
    %v3548 = vld [vmem:[#allocation7 + $0x660] sm:$0xff]
    %v3549 = vld [vmem:[#allocation7 + $0x668] sm:$0xff]
    %v3550 = vld [vmem:[#allocation7 + $0x670] sm:$0xff]
    %v3551 = vld [vmem:[#allocation7 + $0x678] sm:$0xff]
    %v3552 = vld [vmem:[#allocation7 + $0x680] sm:$0xff]
    %v3553 = vld [vmem:[#allocation7 + $0x688] sm:$0xff]
    %v3554 = vld [vmem:[#allocation7 + $0x690] sm:$0xff]
    %v3555 = vld [vmem:[#allocation7 + $0x698] sm:$0xff]
    %v3556 = vld [vmem:[#allocation7 + $0x6a0] sm:$0xff]
    %v3557 = vld [vmem:[#allocation7 + $0x6a8] sm:$0xff]
    %v3558 = vld [vmem:[#allocation7 + $0x6b0] sm:$0xff]
    %v3559 = vld [vmem:[#allocation7 + $0x6b8] sm:$0xff]
    %v3560 = vld [vmem:[#allocation7 + $0x6c0] sm:$0xff]
    %v3561 = vld [vmem:[#allocation7 + $0x6c8] sm:$0xff]
    %v3562 = vld [vmem:[#allocation7 + $0x6d0] sm:$0xff]
    %v3563 = vld [vmem:[#allocation7 + $0x6d8] sm:$0xff]
    %v3564 = vld [vmem:[#allocation7 + $0x6e0] sm:$0xff]
    %v3565 = vld [vmem:[#allocation7 + $0x6e8] sm:$0xff]
    %v3566 = vld [vmem:[#allocation7 + $0x6f0] sm:$0xff]
    %v3567 = vld [vmem:[#allocation7 + $0x6f8] sm:$0xff]
    %v3568 = vld [vmem:[#allocation7 + $0x700] sm:$0xff]
    %v3569 = vld [vmem:[#allocation7 + $0x708] sm:$0xff]
    %v3570 = vld [vmem:[#allocation7 + $0x710] sm:$0xff]
    %v3571 = vld [vmem:[#allocation7 + $0x718] sm:$0xff]
    %v3572 = vld [vmem:[#allocation7 + $0x720] sm:$0xff]
    %v3573 = vld [vmem:[#allocation7 + $0x728] sm:$0xff]
    %v3574 = vld [vmem:[#allocation7 + $0x730] sm:$0xff]
    %v3575 = vld [vmem:[#allocation7 + $0x738] sm:$0xff]
    %v3576 = vld [vmem:[#allocation7 + $0x740] sm:$0xff]
    %v3577 = vld [vmem:[#allocation7 + $0x748] sm:$0xff]
    %v3578 = vld [vmem:[#allocation7 + $0x750] sm:$0xff]
    %v3579 = vld [vmem:[#allocation7 + $0x758] sm:$0xff]
    %v3580 = vld [vmem:[#allocation7 + $0x760] sm:$0xff]
    %v3581 = vld [vmem:[#allocation7 + $0x768] sm:$0xff]
    %v3582 = vld [vmem:[#allocation7 + $0x770] sm:$0xff]
    %v3583 = vld [vmem:[#allocation7 + $0x778] sm:$0xff]
    %v3584 = vld [vmem:[#allocation7 + $0x780] sm:$0xff]
    %v3585 = vld [vmem:[#allocation7 + $0x788] sm:$0xff]
    %v3586 = vld [vmem:[#allocation7 + $0x790] sm:$0xff]
    %v3587 = vld [vmem:[#allocation7 + $0x798] sm:$0xff]
    %v3588 = vld [vmem:[#allocation7 + $0x7a0] sm:$0xff]
    %v3589 = vld [vmem:[#allocation7 + $0x7a8] sm:$0xff]
    %v3590 = vld [vmem:[#allocation7 + $0x7b0] sm:$0xff]
    %v3591 = vld [vmem:[#allocation7 + $0x7b8] sm:$0xff]
    %v3592 = vld [vmem:[#allocation7 + $0x7c0] sm:$0xff]
    %v3593 = vld [vmem:[#allocation7 + $0x7c8] sm:$0xff]
    %v3594 = vld [vmem:[#allocation7 + $0x7d0] sm:$0xff]
    %v3595 = vld [vmem:[#allocation7 + $0x7d8] sm:$0xff]
    %v3596 = vld [vmem:[#allocation7 + $0x7e0] sm:$0xff]
    %v3597 = vld [vmem:[#allocation7 + $0x7e8] sm:$0xff]
    %v3598 = vld [vmem:[#allocation7 + $0x7f0] sm:$0xff]
    %v3599 = vld [vmem:[#allocation7 + $0x7f8] sm:$0xff]
    %v3600 = vld [vmem:[%s8] sm:$0xff]
    %v3602 = vperm.slane %v3600, 0
    %v3603 = vperm.slane %v3600, 1
    %v3604 = vperm.slane %v3600, 2
    %v3605 = vperm.slane %v3600, 3
    %v3606 = vperm.slane %v3600, 4
    %v3607 = vperm.slane %v3600, 5
    %v3608 = vperm.slane %v3600, 6
    %v3609 = vperm.slane %v3600, 7
    %v3874 = vunpack.c.l.b16 %v3344
    %v3875 = vunpack.c.h.b16 %v3344
    %v3876 = vunpack.c.l.b16 %v3345
    %v3877 = vunpack.c.h.b16 %v3345
    %v3878 = vunpack.c.l.b16 %v3346
    %v3879 = vunpack.c.h.b16 %v3346
    %v3880 = vunpack.c.l.b16 %v3347
    %v3881 = vunpack.c.h.b16 %v3347
    %v3882 = vunpack.c.l.b16 %v3348
    %v3883 = vunpack.c.h.b16 %v3348
    %v3884 = vunpack.c.l.b16 %v3349
    %v3885 = vunpack.c.h.b16 %v3349
    %v3886 = vunpack.c.l.b16 %v3350
    %v3887 = vunpack.c.h.b16 %v3350
    %v3888 = vunpack.c.l.b16 %v3351
    %v3889 = vunpack.c.h.b16 %v3351
    %v3890 = vunpack.c.l.b16 %v3352
    %v3891 = vunpack.c.h.b16 %v3352
    %v3892 = vunpack.c.l.b16 %v3353
    %v3893 = vunpack.c.h.b16 %v3353
    %v3894 = vunpack.c.l.b16 %v3354
    %v3895 = vunpack.c.h.b16 %v3354
    %v3896 = vunpack.c.l.b16 %v3355
    %v3897 = vunpack.c.h.b16 %v3355
    %v3898 = vunpack.c.l.b16 %v3356
    %v3899 = vunpack.c.h.b16 %v3356
    %v3900 = vunpack.c.l.b16 %v3357
    %v3901 = vunpack.c.h.b16 %v3357
    %v3902 = vunpack.c.l.b16 %v3358
    %v3903 = vunpack.c.h.b16 %v3358
    %v3904 = vunpack.c.l.b16 %v3359
    %v3905 = vunpack.c.h.b16 %v3359
    %v3906 = vunpack.c.l.b16 %v3360
    %v3907 = vunpack.c.h.b16 %v3360
    %v3908 = vunpack.c.l.b16 %v3361
    %v3909 = vunpack.c.h.b16 %v3361
    %v3910 = vunpack.c.l.b16 %v3362
    %v3911 = vunpack.c.h.b16 %v3362
    %v3912 = vunpack.c.l.b16 %v3363
    %v3913 = vunpack.c.h.b16 %v3363
    %v3914 = vunpack.c.l.b16 %v3364
    %v3915 = vunpack.c.h.b16 %v3364
    %v3916 = vunpack.c.l.b16 %v3365
    %v3917 = vunpack.c.h.b16 %v3365
    %v3918 = vunpack.c.l.b16 %v3366
    %v3919 = vunpack.c.h.b16 %v3366
    %v3920 = vunpack.c.l.b16 %v3367
    %v3921 = vunpack.c.h.b16 %v3367
    %v3922 = vunpack.c.l.b16 %v3368
    %v3923 = vunpack.c.h.b16 %v3368
    %v3924 = vunpack.c.l.b16 %v3369
    %v3925 = vunpack.c.h.b16 %v3369
    %v3926 = vunpack.c.l.b16 %v3370
    %v3927 = vunpack.c.h.b16 %v3370
    %v3928 = vunpack.c.l.b16 %v3371
    %v3929 = vunpack.c.h.b16 %v3371
    %v3930 = vunpack.c.l.b16 %v3372
    %v3931 = vunpack.c.h.b16 %v3372
    %v3932 = vunpack.c.l.b16 %v3373
    %v3933 = vunpack.c.h.b16 %v3373
    %v3934 = vunpack.c.l.b16 %v3374
    %v3935 = vunpack.c.h.b16 %v3374
    %v3936 = vunpack.c.l.b16 %v3375
    %v3937 = vunpack.c.h.b16 %v3375
    %v3938 = vunpack.c.l.b16 %v3376
    %v3939 = vunpack.c.h.b16 %v3376
    %v3940 = vunpack.c.l.b16 %v3377
    %v3941 = vunpack.c.h.b16 %v3377
    %v3942 = vunpack.c.l.b16 %v3378
    %v3943 = vunpack.c.h.b16 %v3378
    %v3944 = vunpack.c.l.b16 %v3379
    %v3945 = vunpack.c.h.b16 %v3379
    %v3946 = vunpack.c.l.b16 %v3380
    %v3947 = vunpack.c.h.b16 %v3380
    %v3948 = vunpack.c.l.b16 %v3381
    %v3949 = vunpack.c.h.b16 %v3381
    %v3950 = vunpack.c.l.b16 %v3382
    %v3951 = vunpack.c.h.b16 %v3382
    %v3952 = vunpack.c.l.b16 %v3383
    %v3953 = vunpack.c.h.b16 %v3383
    %v3954 = vunpack.c.l.b16 %v3384
    %v3955 = vunpack.c.h.b16 %v3384
    %v3956 = vunpack.c.l.b16 %v3385
    %v3957 = vunpack.c.h.b16 %v3385
    %v3958 = vunpack.c.l.b16 %v3386
    %v3959 = vunpack.c.h.b16 %v3386
    %v3960 = vunpack.c.l.b16 %v3387
    %v3961 = vunpack.c.h.b16 %v3387
    %v3962 = vunpack.c.l.b16 %v3388
    %v3963 = vunpack.c.h.b16 %v3388
    %v3964 = vunpack.c.l.b16 %v3389
    %v3965 = vunpack.c.h.b16 %v3389
    %v3966 = vunpack.c.l.b16 %v3390
    %v3967 = vunpack.c.h.b16 %v3390
    %v3968 = vunpack.c.l.b16 %v3391
    %v3969 = vunpack.c.h.b16 %v3391
    %v3970 = vunpack.c.l.b16 %v3392
    %v3971 = vunpack.c.h.b16 %v3392
    %v3972 = vunpack.c.l.b16 %v3393
    %v3973 = vunpack.c.h.b16 %v3393
    %v3974 = vunpack.c.l.b16 %v3394
    %v3975 = vunpack.c.h.b16 %v3394
    %v3976 = vunpack.c.l.b16 %v3395
    %v3977 = vunpack.c.h.b16 %v3395
    %v3978 = vunpack.c.l.b16 %v3396
    %v3979 = vunpack.c.h.b16 %v3396
    %v3980 = vunpack.c.l.b16 %v3397
    %v3981 = vunpack.c.h.b16 %v3397
    %v3982 = vunpack.c.l.b16 %v3398
    %v3983 = vunpack.c.h.b16 %v3398
    %v3984 = vunpack.c.l.b16 %v3399
    %v3985 = vunpack.c.h.b16 %v3399
    %v3986 = vunpack.c.l.b16 %v3400
    %v3987 = vunpack.c.h.b16 %v3400
    %v3988 = vunpack.c.l.b16 %v3401
    %v3989 = vunpack.c.h.b16 %v3401
    %v3990 = vunpack.c.l.b16 %v3402
    %v3991 = vunpack.c.h.b16 %v3402
    %v3992 = vunpack.c.l.b16 %v3403
    %v3993 = vunpack.c.h.b16 %v3403
    %v3994 = vunpack.c.l.b16 %v3404
    %v3995 = vunpack.c.h.b16 %v3404
    %v3996 = vunpack.c.l.b16 %v3405
    %v3997 = vunpack.c.h.b16 %v3405
    %v3998 = vunpack.c.l.b16 %v3406
    %v3999 = vunpack.c.h.b16 %v3406
    %v4000 = vunpack.c.l.b16 %v3407
    %v4001 = vunpack.c.h.b16 %v3407
    %v4002 = vunpack.c.l.b16 %v3408
    %v4003 = vunpack.c.h.b16 %v3408
    %v4004 = vunpack.c.l.b16 %v3409
    %v4005 = vunpack.c.h.b16 %v3409
    %v4006 = vunpack.c.l.b16 %v3410
    %v4007 = vunpack.c.h.b16 %v3410
    %v4008 = vunpack.c.l.b16 %v3411
    %v4009 = vunpack.c.h.b16 %v3411
    %v4010 = vunpack.c.l.b16 %v3412
    %v4011 = vunpack.c.h.b16 %v3412
    %v4012 = vunpack.c.l.b16 %v3413
    %v4013 = vunpack.c.h.b16 %v3413
    %v4014 = vunpack.c.l.b16 %v3414
    %v4015 = vunpack.c.h.b16 %v3414
    %v4016 = vunpack.c.l.b16 %v3415
    %v4017 = vunpack.c.h.b16 %v3415
    %v4018 = vunpack.c.l.b16 %v3416
    %v4019 = vunpack.c.h.b16 %v3416
    %v4020 = vunpack.c.l.b16 %v3417
    %v4021 = vunpack.c.h.b16 %v3417
    %v4022 = vunpack.c.l.b16 %v3418
    %v4023 = vunpack.c.h.b16 %v3418
    %v4024 = vunpack.c.l.b16 %v3419
    %v4025 = vunpack.c.h.b16 %v3419
    %v4026 = vunpack.c.l.b16 %v3420
    %v4027 = vunpack.c.h.b16 %v3420
    %v4028 = vunpack.c.l.b16 %v3421
    %v4029 = vunpack.c.h.b16 %v3421
    %v4030 = vunpack.c.l.b16 %v3422
    %v4031 = vunpack.c.h.b16 %v3422
    %v4032 = vunpack.c.l.b16 %v3423
    %v4033 = vunpack.c.h.b16 %v3423
    %v4034 = vunpack.c.l.b16 %v3424
    %v4035 = vunpack.c.h.b16 %v3424
    %v4036 = vunpack.c.l.b16 %v3425
    %v4037 = vunpack.c.h.b16 %v3425
    %v4038 = vunpack.c.l.b16 %v3426
    %v4039 = vunpack.c.h.b16 %v3426
    %v4040 = vunpack.c.l.b16 %v3427
    %v4041 = vunpack.c.h.b16 %v3427
    %v4042 = vunpack.c.l.b16 %v3428
    %v4043 = vunpack.c.h.b16 %v3428
    %v4044 = vunpack.c.l.b16 %v3429
    %v4045 = vunpack.c.h.b16 %v3429
    %v4046 = vunpack.c.l.b16 %v3430
    %v4047 = vunpack.c.h.b16 %v3430
    %v4048 = vunpack.c.l.b16 %v3431
    %v4049 = vunpack.c.h.b16 %v3431
    %v4050 = vunpack.c.l.b16 %v3432
    %v4051 = vunpack.c.h.b16 %v3432
    %v4052 = vunpack.c.l.b16 %v3433
    %v4053 = vunpack.c.h.b16 %v3433
    %v4054 = vunpack.c.l.b16 %v3434
    %v4055 = vunpack.c.h.b16 %v3434
    %v4056 = vunpack.c.l.b16 %v3435
    %v4057 = vunpack.c.h.b16 %v3435
    %v4058 = vunpack.c.l.b16 %v3436
    %v4059 = vunpack.c.h.b16 %v3436
    %v4060 = vunpack.c.l.b16 %v3437
    %v4061 = vunpack.c.h.b16 %v3437
    %v4062 = vunpack.c.l.b16 %v3438
    %v4063 = vunpack.c.h.b16 %v3438
    %v4064 = vunpack.c.l.b16 %v3439
    %v4065 = vunpack.c.h.b16 %v3439
    %v4066 = vunpack.c.l.b16 %v3440
    %v4067 = vunpack.c.h.b16 %v3440
    %v4068 = vunpack.c.l.b16 %v3441
    %v4069 = vunpack.c.h.b16 %v3441
    %v4070 = vunpack.c.l.b16 %v3442
    %v4071 = vunpack.c.h.b16 %v3442
    %v4072 = vunpack.c.l.b16 %v3443
    %v4073 = vunpack.c.h.b16 %v3443
    %v4074 = vunpack.c.l.b16 %v3444
    %v4075 = vunpack.c.h.b16 %v3444
    %v4076 = vunpack.c.l.b16 %v3445
    %v4077 = vunpack.c.h.b16 %v3445
    %v4078 = vunpack.c.l.b16 %v3446
    %v4079 = vunpack.c.h.b16 %v3446
    %v4080 = vunpack.c.l.b16 %v3447
    %v4081 = vunpack.c.h.b16 %v3447
    %v4082 = vunpack.c.l.b16 %v3448
    %v4083 = vunpack.c.h.b16 %v3448
    %v4084 = vunpack.c.l.b16 %v3449
    %v4085 = vunpack.c.h.b16 %v3449
    %v4086 = vunpack.c.l.b16 %v3450
    %v4087 = vunpack.c.h.b16 %v3450
    %v4088 = vunpack.c.l.b16 %v3451
    %v4089 = vunpack.c.h.b16 %v3451
    %v4090 = vunpack.c.l.b16 %v3452
    %v4091 = vunpack.c.h.b16 %v3452
    %v4092 = vunpack.c.l.b16 %v3453
    %v4093 = vunpack.c.h.b16 %v3453
    %v4094 = vunpack.c.l.b16 %v3454
    %v4095 = vunpack.c.h.b16 %v3454
    %v4096 = vunpack.c.l.b16 %v3455
    %v4097 = vunpack.c.h.b16 %v3455
    %v4098 = vunpack.c.l.b16 %v3456
    %v4099 = vunpack.c.h.b16 %v3456
    %v4100 = vunpack.c.l.b16 %v3457
    %v4101 = vunpack.c.h.b16 %v3457
    %v4102 = vunpack.c.l.b16 %v3458
    %v4103 = vunpack.c.h.b16 %v3458
    %v4104 = vunpack.c.l.b16 %v3459
    %v4105 = vunpack.c.h.b16 %v3459
    %v4106 = vunpack.c.l.b16 %v3460
    %v4107 = vunpack.c.h.b16 %v3460
    %v4108 = vunpack.c.l.b16 %v3461
    %v4109 = vunpack.c.h.b16 %v3461
    %v4110 = vunpack.c.l.b16 %v3462
    %v4111 = vunpack.c.h.b16 %v3462
    %v4112 = vunpack.c.l.b16 %v3463
    %v4113 = vunpack.c.h.b16 %v3463
    %v4114 = vunpack.c.l.b16 %v3464
    %v4115 = vunpack.c.h.b16 %v3464
    %v4116 = vunpack.c.l.b16 %v3465
    %v4117 = vunpack.c.h.b16 %v3465
    %v4118 = vunpack.c.l.b16 %v3466
    %v4119 = vunpack.c.h.b16 %v3466
    %v4120 = vunpack.c.l.b16 %v3467
    %v4121 = vunpack.c.h.b16 %v3467
    %v4122 = vunpack.c.l.b16 %v3468
    %v4123 = vunpack.c.h.b16 %v3468
    %v4124 = vunpack.c.l.b16 %v3469
    %v4125 = vunpack.c.h.b16 %v3469
    %v4126 = vunpack.c.l.b16 %v3470
    %v4127 = vunpack.c.h.b16 %v3470
    %v4128 = vunpack.c.l.b16 %v3471
    %v4129 = vunpack.c.h.b16 %v3471
    %v4130 = vunpack.c.l.b16 %v3472
    %v4131 = vunpack.c.h.b16 %v3472
    %v4132 = vunpack.c.l.b16 %v3473
    %v4133 = vunpack.c.h.b16 %v3473
    %v4134 = vunpack.c.l.b16 %v3474
    %v4135 = vunpack.c.h.b16 %v3474
    %v4136 = vunpack.c.l.b16 %v3475
    %v4137 = vunpack.c.h.b16 %v3475
    %v4138 = vunpack.c.l.b16 %v3476
    %v4139 = vunpack.c.h.b16 %v3476
    %v4140 = vunpack.c.l.b16 %v3477
    %v4141 = vunpack.c.h.b16 %v3477
    %v4142 = vunpack.c.l.b16 %v3478
    %v4143 = vunpack.c.h.b16 %v3478
    %v4144 = vunpack.c.l.b16 %v3479
    %v4145 = vunpack.c.h.b16 %v3479
    %v4146 = vunpack.c.l.b16 %v3480
    %v4147 = vunpack.c.h.b16 %v3480
    %v4148 = vunpack.c.l.b16 %v3481
    %v4149 = vunpack.c.h.b16 %v3481
    %v4150 = vunpack.c.l.b16 %v3482
    %v4151 = vunpack.c.h.b16 %v3482
    %v4152 = vunpack.c.l.b16 %v3483
    %v4153 = vunpack.c.h.b16 %v3483
    %v4154 = vunpack.c.l.b16 %v3484
    %v4155 = vunpack.c.h.b16 %v3484
    %v4156 = vunpack.c.l.b16 %v3485
    %v4157 = vunpack.c.h.b16 %v3485
    %v4158 = vunpack.c.l.b16 %v3486
    %v4159 = vunpack.c.h.b16 %v3486
    %v4160 = vunpack.c.l.b16 %v3487
    %v4161 = vunpack.c.h.b16 %v3487
    %v4162 = vunpack.c.l.b16 %v3488
    %v4163 = vunpack.c.h.b16 %v3488
    %v4164 = vunpack.c.l.b16 %v3489
    %v4165 = vunpack.c.h.b16 %v3489
    %v4166 = vunpack.c.l.b16 %v3490
    %v4167 = vunpack.c.h.b16 %v3490
    %v4168 = vunpack.c.l.b16 %v3491
    %v4169 = vunpack.c.h.b16 %v3491
    %v4170 = vunpack.c.l.b16 %v3492
    %v4171 = vunpack.c.h.b16 %v3492
    %v4172 = vunpack.c.l.b16 %v3493
    %v4173 = vunpack.c.h.b16 %v3493
    %v4174 = vunpack.c.l.b16 %v3494
    %v4175 = vunpack.c.h.b16 %v3494
    %v4176 = vunpack.c.l.b16 %v3495
    %v4177 = vunpack.c.h.b16 %v3495
    %v4178 = vunpack.c.l.b16 %v3496
    %v4179 = vunpack.c.h.b16 %v3496
    %v4180 = vunpack.c.l.b16 %v3497
    %v4181 = vunpack.c.h.b16 %v3497
    %v4182 = vunpack.c.l.b16 %v3498
    %v4183 = vunpack.c.h.b16 %v3498
    %v4184 = vunpack.c.l.b16 %v3499
    %v4185 = vunpack.c.h.b16 %v3499
    %v4186 = vunpack.c.l.b16 %v3500
    %v4187 = vunpack.c.h.b16 %v3500
    %v4188 = vunpack.c.l.b16 %v3501
    %v4189 = vunpack.c.h.b16 %v3501
    %v4190 = vunpack.c.l.b16 %v3502
    %v4191 = vunpack.c.h.b16 %v3502
    %v4192 = vunpack.c.l.b16 %v3503
    %v4193 = vunpack.c.h.b16 %v3503
    %v4194 = vunpack.c.l.b16 %v3504
    %v4195 = vunpack.c.h.b16 %v3504
    %v4196 = vunpack.c.l.b16 %v3505
    %v4197 = vunpack.c.h.b16 %v3505
    %v4198 = vunpack.c.l.b16 %v3506
    %v4199 = vunpack.c.h.b16 %v3506
    %v4200 = vunpack.c.l.b16 %v3507
    %v4201 = vunpack.c.h.b16 %v3507
    %v4202 = vunpack.c.l.b16 %v3508
    %v4203 = vunpack.c.h.b16 %v3508
    %v4204 = vunpack.c.l.b16 %v3509
    %v4205 = vunpack.c.h.b16 %v3509
    %v4206 = vunpack.c.l.b16 %v3510
    %v4207 = vunpack.c.h.b16 %v3510
    %v4208 = vunpack.c.l.b16 %v3511
    %v4209 = vunpack.c.h.b16 %v3511
    %v4210 = vunpack.c.l.b16 %v3512
    %v4211 = vunpack.c.h.b16 %v3512
    %v4212 = vunpack.c.l.b16 %v3513
    %v4213 = vunpack.c.h.b16 %v3513
    %v4214 = vunpack.c.l.b16 %v3514
    %v4215 = vunpack.c.h.b16 %v3514
    %v4216 = vunpack.c.l.b16 %v3515
    %v4217 = vunpack.c.h.b16 %v3515
    %v4218 = vunpack.c.l.b16 %v3516
    %v4219 = vunpack.c.h.b16 %v3516
    %v4220 = vunpack.c.l.b16 %v3517
    %v4221 = vunpack.c.h.b16 %v3517
    %v4222 = vunpack.c.l.b16 %v3518
    %v4223 = vunpack.c.h.b16 %v3518
    %v4224 = vunpack.c.l.b16 %v3519
    %v4225 = vunpack.c.h.b16 %v3519
    %v4226 = vunpack.c.l.b16 %v3520
    %v4227 = vunpack.c.h.b16 %v3520
    %v4228 = vunpack.c.l.b16 %v3521
    %v4229 = vunpack.c.h.b16 %v3521
    %v4230 = vunpack.c.l.b16 %v3522
    %v4231 = vunpack.c.h.b16 %v3522
    %v4232 = vunpack.c.l.b16 %v3523
    %v4233 = vunpack.c.h.b16 %v3523
    %v4234 = vunpack.c.l.b16 %v3524
    %v4235 = vunpack.c.h.b16 %v3524
    %v4236 = vunpack.c.l.b16 %v3525
    %v4237 = vunpack.c.h.b16 %v3525
    %v4238 = vunpack.c.l.b16 %v3526
    %v4239 = vunpack.c.h.b16 %v3526
    %v4240 = vunpack.c.l.b16 %v3527
    %v4241 = vunpack.c.h.b16 %v3527
    %v4242 = vunpack.c.l.b16 %v3528
    %v4243 = vunpack.c.h.b16 %v3528
    %v4244 = vunpack.c.l.b16 %v3529
    %v4245 = vunpack.c.h.b16 %v3529
    %v4246 = vunpack.c.l.b16 %v3530
    %v4247 = vunpack.c.h.b16 %v3530
    %v4248 = vunpack.c.l.b16 %v3531
    %v4249 = vunpack.c.h.b16 %v3531
    %v4250 = vunpack.c.l.b16 %v3532
    %v4251 = vunpack.c.h.b16 %v3532
    %v4252 = vunpack.c.l.b16 %v3533
    %v4253 = vunpack.c.h.b16 %v3533
    %v4254 = vunpack.c.l.b16 %v3534
    %v4255 = vunpack.c.h.b16 %v3534
    %v4256 = vunpack.c.l.b16 %v3535
    %v4257 = vunpack.c.h.b16 %v3535
    %v4258 = vunpack.c.l.b16 %v3536
    %v4259 = vunpack.c.h.b16 %v3536
    %v4260 = vunpack.c.l.b16 %v3537
    %v4261 = vunpack.c.h.b16 %v3537
    %v4262 = vunpack.c.l.b16 %v3538
    %v4263 = vunpack.c.h.b16 %v3538
    %v4264 = vunpack.c.l.b16 %v3539
    %v4265 = vunpack.c.h.b16 %v3539
    %v4266 = vunpack.c.l.b16 %v3540
    %v4267 = vunpack.c.h.b16 %v3540
    %v4268 = vunpack.c.l.b16 %v3541
    %v4269 = vunpack.c.h.b16 %v3541
    %v4270 = vunpack.c.l.b16 %v3542
    %v4271 = vunpack.c.h.b16 %v3542
    %v4272 = vunpack.c.l.b16 %v3543
    %v4273 = vunpack.c.h.b16 %v3543
    %v4274 = vunpack.c.l.b16 %v3544
    %v4275 = vunpack.c.h.b16 %v3544
    %v4276 = vunpack.c.l.b16 %v3545
    %v4277 = vunpack.c.h.b16 %v3545
    %v4278 = vunpack.c.l.b16 %v3546
    %v4279 = vunpack.c.h.b16 %v3546
    %v4280 = vunpack.c.l.b16 %v3547
    %v4281 = vunpack.c.h.b16 %v3547
    %v4282 = vunpack.c.l.b16 %v3548
    %v4283 = vunpack.c.h.b16 %v3548
    %v4284 = vunpack.c.l.b16 %v3549
    %v4285 = vunpack.c.h.b16 %v3549
    %v4286 = vunpack.c.l.b16 %v3550
    %v4287 = vunpack.c.h.b16 %v3550
    %v4288 = vunpack.c.l.b16 %v3551
    %v4289 = vunpack.c.h.b16 %v3551
    %v4290 = vunpack.c.l.b16 %v3552
    %v4291 = vunpack.c.h.b16 %v3552
    %v4292 = vunpack.c.l.b16 %v3553
    %v4293 = vunpack.c.h.b16 %v3553
    %v4294 = vunpack.c.l.b16 %v3554
    %v4295 = vunpack.c.h.b16 %v3554
    %v4296 = vunpack.c.l.b16 %v3555
    %v4297 = vunpack.c.h.b16 %v3555
    %v4298 = vunpack.c.l.b16 %v3556
    %v4299 = vunpack.c.h.b16 %v3556
    %v4300 = vunpack.c.l.b16 %v3557
    %v4301 = vunpack.c.h.b16 %v3557
    %v4302 = vunpack.c.l.b16 %v3558
    %v4303 = vunpack.c.h.b16 %v3558
    %v4304 = vunpack.c.l.b16 %v3559
    %v4305 = vunpack.c.h.b16 %v3559
    %v4306 = vunpack.c.l.b16 %v3560
    %v4307 = vunpack.c.h.b16 %v3560
    %v4308 = vunpack.c.l.b16 %v3561
    %v4309 = vunpack.c.h.b16 %v3561
    %v4310 = vunpack.c.l.b16 %v3562
    %v4311 = vunpack.c.h.b16 %v3562
    %v4312 = vunpack.c.l.b16 %v3563
    %v4313 = vunpack.c.h.b16 %v3563
    %v4314 = vunpack.c.l.b16 %v3564
    %v4315 = vunpack.c.h.b16 %v3564
    %v4316 = vunpack.c.l.b16 %v3565
    %v4317 = vunpack.c.h.b16 %v3565
    %v4318 = vunpack.c.l.b16 %v3566
    %v4319 = vunpack.c.h.b16 %v3566
    %v4320 = vunpack.c.l.b16 %v3567
    %v4321 = vunpack.c.h.b16 %v3567
    %v4322 = vunpack.c.l.b16 %v3568
    %v4323 = vunpack.c.h.b16 %v3568
    %v4324 = vunpack.c.l.b16 %v3569
    %v4325 = vunpack.c.h.b16 %v3569
    %v4326 = vunpack.c.l.b16 %v3570
    %v4327 = vunpack.c.h.b16 %v3570
    %v4328 = vunpack.c.l.b16 %v3571
    %v4329 = vunpack.c.h.b16 %v3571
    %v4330 = vunpack.c.l.b16 %v3572
    %v4331 = vunpack.c.h.b16 %v3572
    %v4332 = vunpack.c.l.b16 %v3573
    %v4333 = vunpack.c.h.b16 %v3573
    %v4334 = vunpack.c.l.b16 %v3574
    %v4335 = vunpack.c.h.b16 %v3574
    %v4336 = vunpack.c.l.b16 %v3575
    %v4337 = vunpack.c.h.b16 %v3575
    %v4338 = vunpack.c.l.b16 %v3576
    %v4339 = vunpack.c.h.b16 %v3576
    %v4340 = vunpack.c.l.b16 %v3577
    %v4341 = vunpack.c.h.b16 %v3577
    %v4342 = vunpack.c.l.b16 %v3578
    %v4343 = vunpack.c.h.b16 %v3578
    %v4344 = vunpack.c.l.b16 %v3579
    %v4345 = vunpack.c.h.b16 %v3579
    %v4346 = vunpack.c.l.b16 %v3580
    %v4347 = vunpack.c.h.b16 %v3580
    %v4348 = vunpack.c.l.b16 %v3581
    %v4349 = vunpack.c.h.b16 %v3581
    %v4350 = vunpack.c.l.b16 %v3582
    %v4351 = vunpack.c.h.b16 %v3582
    %v4352 = vunpack.c.l.b16 %v3583
    %v4353 = vunpack.c.h.b16 %v3583
    %v4354 = vunpack.c.l.b16 %v3584
    %v4355 = vunpack.c.h.b16 %v3584
    %v4356 = vunpack.c.l.b16 %v3585
    %v4357 = vunpack.c.h.b16 %v3585
    %v4358 = vunpack.c.l.b16 %v3586
    %v4359 = vunpack.c.h.b16 %v3586
    %v4360 = vunpack.c.l.b16 %v3587
    %v4361 = vunpack.c.h.b16 %v3587
    %v4362 = vunpack.c.l.b16 %v3588
    %v4363 = vunpack.c.h.b16 %v3588
    %v4364 = vunpack.c.l.b16 %v3589
    %v4365 = vunpack.c.h.b16 %v3589
    %v4366 = vunpack.c.l.b16 %v3590
    %v4367 = vunpack.c.h.b16 %v3590
    %v4368 = vunpack.c.l.b16 %v3591
    %v4369 = vunpack.c.h.b16 %v3591
    %v4370 = vunpack.c.l.b16 %v3592
    %v4371 = vunpack.c.h.b16 %v3592
    %v4372 = vunpack.c.l.b16 %v3593
    %v4373 = vunpack.c.h.b16 %v3593
    %v4374 = vunpack.c.l.b16 %v3594
    %v4375 = vunpack.c.h.b16 %v3594
    %v4376 = vunpack.c.l.b16 %v3595
    %v4377 = vunpack.c.h.b16 %v3595
    %v4378 = vunpack.c.l.b16 %v3596
    %v4379 = vunpack.c.h.b16 %v3596
    %v4380 = vunpack.c.l.b16 %v3597
    %v4381 = vunpack.c.h.b16 %v3597
    %v4382 = vunpack.c.l.b16 %v3598
    %v4383 = vunpack.c.h.b16 %v3598
    %v4384 = vunpack.c.l.b16 %v3599
    %v4385 = vunpack.c.h.b16 %v3599
    %v4386 = vpack.c.b16 %v3882, %v3874
    %v4387 = vpack.c.b16 %v3883, %v3875
    %v4388 = vpack.c.b16 %v3884, %v3876
    %v4389 = vpack.c.b16 %v3885, %v3877
    %v4390 = vpack.c.b16 %v3886, %v3878
    %v4391 = vpack.c.b16 %v3887, %v3879
    %v4392 = vpack.c.b16 %v3888, %v3880
    %v4393 = vpack.c.b16 %v3889, %v3881
    %v4394 = vpack.c.b16 %v3898, %v3890
    %v4395 = vpack.c.b16 %v3899, %v3891
    %v4396 = vpack.c.b16 %v3900, %v3892
    %v4397 = vpack.c.b16 %v3901, %v3893
    %v4398 = vpack.c.b16 %v3902, %v3894
    %v4399 = vpack.c.b16 %v3903, %v3895
    %v4400 = vpack.c.b16 %v3904, %v3896
    %v4401 = vpack.c.b16 %v3905, %v3897
    %v4402 = vpack.c.b16 %v3914, %v3906
    %v4403 = vpack.c.b16 %v3915, %v3907
    %v4404 = vpack.c.b16 %v3916, %v3908
    %v4405 = vpack.c.b16 %v3917, %v3909
    %v4406 = vpack.c.b16 %v3918, %v3910
    %v4407 = vpack.c.b16 %v3919, %v3911
    %v4408 = vpack.c.b16 %v3920, %v3912
    %v4409 = vpack.c.b16 %v3921, %v3913
    %v4410 = vpack.c.b16 %v3930, %v3922
    %v4411 = vpack.c.b16 %v3931, %v3923
    %v4412 = vpack.c.b16 %v3932, %v3924
    %v4413 = vpack.c.b16 %v3933, %v3925
    %v4414 = vpack.c.b16 %v3934, %v3926
    %v4415 = vpack.c.b16 %v3935, %v3927
    %v4416 = vpack.c.b16 %v3936, %v3928
    %v4417 = vpack.c.b16 %v3937, %v3929
    %v4418 = vpack.c.b16 %v3946, %v3938
    %v4419 = vpack.c.b16 %v3947, %v3939
    %v4420 = vpack.c.b16 %v3948, %v3940
    %v4421 = vpack.c.b16 %v3949, %v3941
    %v4422 = vpack.c.b16 %v3950, %v3942
    %v4423 = vpack.c.b16 %v3951, %v3943
    %v4424 = vpack.c.b16 %v3952, %v3944
    %v4425 = vpack.c.b16 %v3953, %v3945
    %v4426 = vpack.c.b16 %v3962, %v3954
    %v4427 = vpack.c.b16 %v3963, %v3955
    %v4428 = vpack.c.b16 %v3964, %v3956
    %v4429 = vpack.c.b16 %v3965, %v3957
    %v4430 = vpack.c.b16 %v3966, %v3958
    %v4431 = vpack.c.b16 %v3967, %v3959
    %v4432 = vpack.c.b16 %v3968, %v3960
    %v4433 = vpack.c.b16 %v3969, %v3961
    %v4434 = vpack.c.b16 %v3978, %v3970
    %v4435 = vpack.c.b16 %v3979, %v3971
    %v4436 = vpack.c.b16 %v3980, %v3972
    %v4437 = vpack.c.b16 %v3981, %v3973
    %v4438 = vpack.c.b16 %v3982, %v3974
    %v4439 = vpack.c.b16 %v3983, %v3975
    %v4440 = vpack.c.b16 %v3984, %v3976
    %v4441 = vpack.c.b16 %v3985, %v3977
    %v4442 = vpack.c.b16 %v3994, %v3986
    %v4443 = vpack.c.b16 %v3995, %v3987
    %v4444 = vpack.c.b16 %v3996, %v3988
    %v4445 = vpack.c.b16 %v3997, %v3989
    %v4446 = vpack.c.b16 %v3998, %v3990
    %v4447 = vpack.c.b16 %v3999, %v3991
    %v4448 = vpack.c.b16 %v4000, %v3992
    %v4449 = vpack.c.b16 %v4001, %v3993
    %v4450 = vpack.c.b16 %v4010, %v4002
    %v4451 = vpack.c.b16 %v4011, %v4003
    %v4452 = vpack.c.b16 %v4012, %v4004
    %v4453 = vpack.c.b16 %v4013, %v4005
    %v4454 = vpack.c.b16 %v4014, %v4006
    %v4455 = vpack.c.b16 %v4015, %v4007
    %v4456 = vpack.c.b16 %v4016, %v4008
    %v4457 = vpack.c.b16 %v4017, %v4009
    %v4458 = vpack.c.b16 %v4026, %v4018
    %v4459 = vpack.c.b16 %v4027, %v4019
    %v4460 = vpack.c.b16 %v4028, %v4020
    %v4461 = vpack.c.b16 %v4029, %v4021
    %v4462 = vpack.c.b16 %v4030, %v4022
    %v4463 = vpack.c.b16 %v4031, %v4023
    %v4464 = vpack.c.b16 %v4032, %v4024
    %v4465 = vpack.c.b16 %v4033, %v4025
    %v4466 = vpack.c.b16 %v4042, %v4034
    %v4467 = vpack.c.b16 %v4043, %v4035
    %v4468 = vpack.c.b16 %v4044, %v4036
    %v4469 = vpack.c.b16 %v4045, %v4037
    %v4470 = vpack.c.b16 %v4046, %v4038
    %v4471 = vpack.c.b16 %v4047, %v4039
    %v4472 = vpack.c.b16 %v4048, %v4040
    %v4473 = vpack.c.b16 %v4049, %v4041
    %v4474 = vpack.c.b16 %v4058, %v4050
    %v4475 = vpack.c.b16 %v4059, %v4051
    %v4476 = vpack.c.b16 %v4060, %v4052
    %v4477 = vpack.c.b16 %v4061, %v4053
    %v4478 = vpack.c.b16 %v4062, %v4054
    %v4479 = vpack.c.b16 %v4063, %v4055
    %v4480 = vpack.c.b16 %v4064, %v4056
    %v4481 = vpack.c.b16 %v4065, %v4057
    %v4482 = vpack.c.b16 %v4074, %v4066
    %v4483 = vpack.c.b16 %v4075, %v4067
    %v4484 = vpack.c.b16 %v4076, %v4068
    %v4485 = vpack.c.b16 %v4077, %v4069
    %v4486 = vpack.c.b16 %v4078, %v4070
    %v4487 = vpack.c.b16 %v4079, %v4071
    %v4488 = vpack.c.b16 %v4080, %v4072
    %v4489 = vpack.c.b16 %v4081, %v4073
    %v4490 = vpack.c.b16 %v4090, %v4082
    %v4491 = vpack.c.b16 %v4091, %v4083
    %v4492 = vpack.c.b16 %v4092, %v4084
    %v4493 = vpack.c.b16 %v4093, %v4085
    %v4494 = vpack.c.b16 %v4094, %v4086
    %v4495 = vpack.c.b16 %v4095, %v4087
    %v4496 = vpack.c.b16 %v4096, %v4088
    %v4497 = vpack.c.b16 %v4097, %v4089
    %v4498 = vpack.c.b16 %v4106, %v4098
    %v4499 = vpack.c.b16 %v4107, %v4099
    %v4500 = vpack.c.b16 %v4108, %v4100
    %v4501 = vpack.c.b16 %v4109, %v4101
    %v4502 = vpack.c.b16 %v4110, %v4102
    %v4503 = vpack.c.b16 %v4111, %v4103
    %v4504 = vpack.c.b16 %v4112, %v4104
    %v4505 = vpack.c.b16 %v4113, %v4105
    %v4506 = vpack.c.b16 %v4122, %v4114
    %v4507 = vpack.c.b16 %v4123, %v4115
    %v4508 = vpack.c.b16 %v4124, %v4116
    %v4509 = vpack.c.b16 %v4125, %v4117
    %v4510 = vpack.c.b16 %v4126, %v4118
    %v4511 = vpack.c.b16 %v4127, %v4119
    %v4512 = vpack.c.b16 %v4128, %v4120
    %v4513 = vpack.c.b16 %v4129, %v4121
    %v4514 = vpack.c.b16 %v4138, %v4130
    %v4515 = vpack.c.b16 %v4139, %v4131
    %v4516 = vpack.c.b16 %v4140, %v4132
    %v4517 = vpack.c.b16 %v4141, %v4133
    %v4518 = vpack.c.b16 %v4142, %v4134
    %v4519 = vpack.c.b16 %v4143, %v4135
    %v4520 = vpack.c.b16 %v4144, %v4136
    %v4521 = vpack.c.b16 %v4145, %v4137
    %v4522 = vpack.c.b16 %v4154, %v4146
    %v4523 = vpack.c.b16 %v4155, %v4147
    %v4524 = vpack.c.b16 %v4156, %v4148
    %v4525 = vpack.c.b16 %v4157, %v4149
    %v4526 = vpack.c.b16 %v4158, %v4150
    %v4527 = vpack.c.b16 %v4159, %v4151
    %v4528 = vpack.c.b16 %v4160, %v4152
    %v4529 = vpack.c.b16 %v4161, %v4153
    %v4530 = vpack.c.b16 %v4170, %v4162
    %v4531 = vpack.c.b16 %v4171, %v4163
    %v4532 = vpack.c.b16 %v4172, %v4164
    %v4533 = vpack.c.b16 %v4173, %v4165
    %v4534 = vpack.c.b16 %v4174, %v4166
    %v4535 = vpack.c.b16 %v4175, %v4167
    %v4536 = vpack.c.b16 %v4176, %v4168
    %v4537 = vpack.c.b16 %v4177, %v4169
    %v4538 = vpack.c.b16 %v4186, %v4178
    %v4539 = vpack.c.b16 %v4187, %v4179
    %v4540 = vpack.c.b16 %v4188, %v4180
    %v4541 = vpack.c.b16 %v4189, %v4181
    %v4542 = vpack.c.b16 %v4190, %v4182
    %v4543 = vpack.c.b16 %v4191, %v4183
    %v4544 = vpack.c.b16 %v4192, %v4184
    %v4545 = vpack.c.b16 %v4193, %v4185
    %v4546 = vpack.c.b16 %v4202, %v4194
    %v4547 = vpack.c.b16 %v4203, %v4195
    %v4548 = vpack.c.b16 %v4204, %v4196
    %v4549 = vpack.c.b16 %v4205, %v4197
    %v4550 = vpack.c.b16 %v4206, %v4198
    %v4551 = vpack.c.b16 %v4207, %v4199
    %v4552 = vpack.c.b16 %v4208, %v4200
    %v4553 = vpack.c.b16 %v4209, %v4201
    %v4554 = vpack.c.b16 %v4218, %v4210
    %v4555 = vpack.c.b16 %v4219, %v4211
    %v4556 = vpack.c.b16 %v4220, %v4212
    %v4557 = vpack.c.b16 %v4221, %v4213
    %v4558 = vpack.c.b16 %v4222, %v4214
    %v4559 = vpack.c.b16 %v4223, %v4215
    %v4560 = vpack.c.b16 %v4224, %v4216
    %v4561 = vpack.c.b16 %v4225, %v4217
    %v4562 = vpack.c.b16 %v4234, %v4226
    %v4563 = vpack.c.b16 %v4235, %v4227
    %v4564 = vpack.c.b16 %v4236, %v4228
    %v4565 = vpack.c.b16 %v4237, %v4229
    %v4566 = vpack.c.b16 %v4238, %v4230
    %v4567 = vpack.c.b16 %v4239, %v4231
    %v4568 = vpack.c.b16 %v4240, %v4232
    %v4569 = vpack.c.b16 %v4241, %v4233
    %v4570 = vpack.c.b16 %v4250, %v4242
    %v4571 = vpack.c.b16 %v4251, %v4243
    %v4572 = vpack.c.b16 %v4252, %v4244
    %v4573 = vpack.c.b16 %v4253, %v4245
    %v4574 = vpack.c.b16 %v4254, %v4246
    %v4575 = vpack.c.b16 %v4255, %v4247
    %v4576 = vpack.c.b16 %v4256, %v4248
    %v4577 = vpack.c.b16 %v4257, %v4249
    %v4578 = vpack.c.b16 %v4266, %v4258
    %v4579 = vpack.c.b16 %v4267, %v4259
    %v4580 = vpack.c.b16 %v4268, %v4260
    %v4581 = vpack.c.b16 %v4269, %v4261
    %v4582 = vpack.c.b16 %v4270, %v4262
    %v4583 = vpack.c.b16 %v4271, %v4263
    %v4584 = vpack.c.b16 %v4272, %v4264
    %v4585 = vpack.c.b16 %v4273, %v4265
    %v4586 = vpack.c.b16 %v4282, %v4274
    %v4587 = vpack.c.b16 %v4283, %v4275
    %v4588 = vpack.c.b16 %v4284, %v4276
    %v4589 = vpack.c.b16 %v4285, %v4277
    %v4590 = vpack.c.b16 %v4286, %v4278
    %v4591 = vpack.c.b16 %v4287, %v4279
    %v4592 = vpack.c.b16 %v4288, %v4280
    %v4593 = vpack.c.b16 %v4289, %v4281
    %v4594 = vpack.c.b16 %v4298, %v4290
    %v4595 = vpack.c.b16 %v4299, %v4291
    %v4596 = vpack.c.b16 %v4300, %v4292
    %v4597 = vpack.c.b16 %v4301, %v4293
    %v4598 = vpack.c.b16 %v4302, %v4294
    %v4599 = vpack.c.b16 %v4303, %v4295
    %v4600 = vpack.c.b16 %v4304, %v4296
    %v4601 = vpack.c.b16 %v4305, %v4297
    %v4602 = vpack.c.b16 %v4314, %v4306
    %v4603 = vpack.c.b16 %v4315, %v4307
    %v4604 = vpack.c.b16 %v4316, %v4308
    %v4605 = vpack.c.b16 %v4317, %v4309
    %v4606 = vpack.c.b16 %v4318, %v4310
    %v4607 = vpack.c.b16 %v4319, %v4311
    %v4608 = vpack.c.b16 %v4320, %v4312
    %v4609 = vpack.c.b16 %v4321, %v4313
    %v4610 = vpack.c.b16 %v4330, %v4322
    %v4611 = vpack.c.b16 %v4331, %v4323
    %v4612 = vpack.c.b16 %v4332, %v4324
    %v4613 = vpack.c.b16 %v4333, %v4325
    %v4614 = vpack.c.b16 %v4334, %v4326
    %v4615 = vpack.c.b16 %v4335, %v4327
    %v4616 = vpack.c.b16 %v4336, %v4328
    %v4617 = vpack.c.b16 %v4337, %v4329
    %v4618 = vpack.c.b16 %v4346, %v4338
    %v4619 = vpack.c.b16 %v4347, %v4339
    %v4620 = vpack.c.b16 %v4348, %v4340
    %v4621 = vpack.c.b16 %v4349, %v4341
    %v4622 = vpack.c.b16 %v4350, %v4342
    %v4623 = vpack.c.b16 %v4351, %v4343
    %v4624 = vpack.c.b16 %v4352, %v4344
    %v4625 = vpack.c.b16 %v4353, %v4345
    %v4626 = vpack.c.b16 %v4362, %v4354
    %v4627 = vpack.c.b16 %v4363, %v4355
    %v4628 = vpack.c.b16 %v4364, %v4356
    %v4629 = vpack.c.b16 %v4365, %v4357
    %v4630 = vpack.c.b16 %v4366, %v4358
    %v4631 = vpack.c.b16 %v4367, %v4359
    %v4632 = vpack.c.b16 %v4368, %v4360
    %v4633 = vpack.c.b16 %v4369, %v4361
    %v4634 = vpack.c.b16 %v4378, %v4370
    %v4635 = vpack.c.b16 %v4379, %v4371
    %v4636 = vpack.c.b16 %v4380, %v4372
    %v4637 = vpack.c.b16 %v4381, %v4373
    %v4638 = vpack.c.b16 %v4382, %v4374
    %v4639 = vpack.c.b16 %v4383, %v4375
    %v4640 = vpack.c.b16 %v4384, %v4376
    %v4641 = vpack.c.b16 %v4385, %v4377
    %4898 = vmatpush.bf16.msra.mxu0 %v4442
    %4899 = vmatpush.bf16.msra.mxu0 %v4434
    %4900 = vmatpush.bf16.msra.mxu0 %v4426
    %4901 = vmatpush.bf16.msra.mxu0 %v4418
    %4902 = vmatpush.bf16.msra.mxu0 %v4410
    %4903 = vmatpush.bf16.msra.mxu0 %v4402
    %4904 = vmatpush.bf16.msra.mxu0 %v4394
    %4905 = vmatpush.bf16.msra.mxu0 %v4386
    %4906 = vmatmul.bf16.gmra.mxu0 %v3280
    %v4907 = vpop.f32.mrf.mxu0
    %v4908 = vadd.f32 %v3602, %v4907
    %v4909 = vpop.f32.mrf.mxu0
    %v4910 = vadd.f32 %v3602, %v4909
    %4911 = vmatmul.bf16.gmra.mxu0 %v3284
    %v4912 = vpop.f32.mrf.mxu0
    %v4913 = vadd.f32 %v3602, %v4912
    %v4914 = vpop.f32.mrf.mxu0
    %v4915 = vadd.f32 %v3602, %v4914
    %4916 = vmatmul.bf16.gmra.mxu0 %v3288
    %v4917 = vpop.f32.mrf.mxu0
    %v4918 = vadd.f32 %v3602, %v4917
    %v4919 = vpop.f32.mrf.mxu0
    %v4920 = vadd.f32 %v3602, %v4919
    %4921 = vmatmul.bf16.gmra.mxu0 %v3292
    %v4922 = vpop.f32.mrf.mxu0
    %v4923 = vadd.f32 %v3602, %v4922
    %v4924 = vpop.f32.mrf.mxu0
    %v4925 = vadd.f32 %v3602, %v4924
    %4926 = vmatmul.bf16.gmra.mxu0 %v3296
    %v4927 = vpop.f32.mrf.mxu0
    %v4928 = vadd.f32 %v3602, %v4927
    %v4929 = vpop.f32.mrf.mxu0
    %v4930 = vadd.f32 %v3602, %v4929
    %4931 = vmatmul.bf16.gmra.mxu0 %v3300
    %v4932 = vpop.f32.mrf.mxu0
    %v4933 = vadd.f32 %v3602, %v4932
    %v4934 = vpop.f32.mrf.mxu0
    %v4935 = vadd.f32 %v3602, %v4934
    %4936 = vmatmul.bf16.gmra.mxu0 %v3304
    %v4937 = vpop.f32.mrf.mxu0
    %v4938 = vadd.f32 %v3602, %v4937
    %v4939 = vpop.f32.mrf.mxu0
    %v4940 = vadd.f32 %v3602, %v4939
    %4941 = vmatmul.bf16.gmra.mxu0 %v3308
    %v4942 = vpop.f32.mrf.mxu0
    %v4943 = vadd.f32 %v3602, %v4942
    %v4944 = vpop.f32.mrf.mxu0
    %v4945 = vadd.f32 %v3602, %v4944
    %4946 = vmatmul.bf16.gmra.mxu0 %v3312
    %v4947 = vpop.f32.mrf.mxu0
    %v4948 = vadd.f32 %v3602, %v4947
    %v4949 = vpop.f32.mrf.mxu0
    %v4950 = vadd.f32 %v3602, %v4949
    %4951 = vmatmul.bf16.gmra.mxu0 %v3316
    %v4952 = vpop.f32.mrf.mxu0
    %v4953 = vadd.f32 %v3602, %v4952
    %v4954 = vpop.f32.mrf.mxu0
    %v4955 = vadd.f32 %v3602, %v4954
    %4956 = vmatmul.bf16.gmra.mxu0 %v3320
    %v4957 = vpop.f32.mrf.mxu0
    %v4958 = vadd.f32 %v3602, %v4957
    %v4959 = vpop.f32.mrf.mxu0
    %v4960 = vadd.f32 %v3602, %v4959
    %4961 = vmatmul.bf16.gmra.mxu0 %v3324
    %v4962 = vpop.f32.mrf.mxu0
    %v4963 = vadd.f32 %v3602, %v4962
    %v4964 = vpop.f32.mrf.mxu0
    %v4965 = vadd.f32 %v3602, %v4964
    %4966 = vmatmul.bf16.gmra.mxu0 %v3328
    %v4967 = vpop.f32.mrf.mxu0
    %v4968 = vadd.f32 %v3602, %v4967
    %v4969 = vpop.f32.mrf.mxu0
    %v4970 = vadd.f32 %v3602, %v4969
    %4971 = vmatmul.bf16.gmra.mxu0 %v3332
    %v4972 = vpop.f32.mrf.mxu0
    %v4973 = vadd.f32 %v3602, %v4972
    %v4974 = vpop.f32.mrf.mxu0
    %v4975 = vadd.f32 %v3602, %v4974
    %4976 = vmatmul.bf16.gmra.mxu0 %v3336
    %v4977 = vpop.f32.mrf.mxu0
    %v4978 = vadd.f32 %v3602, %v4977
    %v4979 = vpop.f32.mrf.mxu0
    %v4980 = vadd.f32 %v3602, %v4979
    %4981 = vmatmul.bf16.gmra.mxu0 %v3340
    %v4982 = vpop.f32.mrf.mxu0
    %v4983 = vadd.f32 %v3602, %v4982
    %v4984 = vpop.f32.mrf.mxu0
    %v4985 = vadd.f32 %v3602, %v4984
    %4986 = vdwg.mxu0
    %4987 = vmatpush.bf16.msra.mxu0 %v4506
    %4988 = vmatpush.bf16.msra.mxu0 %v4498
    %4989 = vmatpush.bf16.msra.mxu0 %v4490
    %4990 = vmatpush.bf16.msra.mxu0 %v4482
    %4991 = vmatpush.bf16.msra.mxu0 %v4474
    %4992 = vmatpush.bf16.msra.mxu0 %v4466
    %4993 = vmatpush.bf16.msra.mxu0 %v4458
    %4994 = vmatpush.bf16.msra.mxu0 %v4450
    %4995 = vmatmul.bf16.gmra.mxu0 %v3281
    %v4996 = vpop.f32.mrf.mxu0
    %v4997 = vadd.f32 %v4908, %v4996
    %v4998 = vpop.f32.mrf.mxu0
    %v4999 = vadd.f32 %v4910, %v4998
    %5000 = vmatmul.bf16.gmra.mxu0 %v3285
    %v5001 = vpop.f32.mrf.mxu0
    %v5002 = vadd.f32 %v4913, %v5001
    %v5003 = vpop.f32.mrf.mxu0
    %v5004 = vadd.f32 %v4915, %v5003
    %5005 = vmatmul.bf16.gmra.mxu0 %v3289
    %v5006 = vpop.f32.mrf.mxu0
    %v5007 = vadd.f32 %v4918, %v5006
    %v5008 = vpop.f32.mrf.mxu0
    %v5009 = vadd.f32 %v4920, %v5008
    %5010 = vmatmul.bf16.gmra.mxu0 %v3293
    %v5011 = vpop.f32.mrf.mxu0
    %v5012 = vadd.f32 %v4923, %v5011
    %v5013 = vpop.f32.mrf.mxu0
    %v5014 = vadd.f32 %v4925, %v5013
    %5015 = vmatmul.bf16.gmra.mxu0 %v3297
    %v5016 = vpop.f32.mrf.mxu0
    %v5017 = vadd.f32 %v4928, %v5016
    %v5018 = vpop.f32.mrf.mxu0
    %v5019 = vadd.f32 %v4930, %v5018
    %5020 = vmatmul.bf16.gmra.mxu0 %v3301
    %v5021 = vpop.f32.mrf.mxu0
    %v5022 = vadd.f32 %v4933, %v5021
    %v5023 = vpop.f32.mrf.mxu0
    %v5024 = vadd.f32 %v4935, %v5023
    %5025 = vmatmul.bf16.gmra.mxu0 %v3305
    %v5026 = vpop.f32.mrf.mxu0
    %v5027 = vadd.f32 %v4938, %v5026
    %v5028 = vpop.f32.mrf.mxu0
    %v5029 = vadd.f32 %v4940, %v5028
    %5030 = vmatmul.bf16.gmra.mxu0 %v3309
    %v5031 = vpop.f32.mrf.mxu0
    %v5032 = vadd.f32 %v4943, %v5031
    %v5033 = vpop.f32.mrf.mxu0
    %v5034 = vadd.f32 %v4945, %v5033
    %5035 = vmatmul.bf16.gmra.mxu0 %v3313
    %v5036 = vpop.f32.mrf.mxu0
    %v5037 = vadd.f32 %v4948, %v5036
    %v5038 = vpop.f32.mrf.mxu0
    %v5039 = vadd.f32 %v4950, %v5038
    %5040 = vmatmul.bf16.gmra.mxu0 %v3317
    %v5041 = vpop.f32.mrf.mxu0
    %v5042 = vadd.f32 %v4953, %v5041
    %v5043 = vpop.f32.mrf.mxu0
    %v5044 = vadd.f32 %v4955, %v5043
    %5045 = vmatmul.bf16.gmra.mxu0 %v3321
    %v5046 = vpop.f32.mrf.mxu0
    %v5047 = vadd.f32 %v4958, %v5046
    %v5048 = vpop.f32.mrf.mxu0
    %v5049 = vadd.f32 %v4960, %v5048
    %5050 = vmatmul.bf16.gmra.mxu0 %v3325
    %v5051 = vpop.f32.mrf.mxu0
    %v5052 = vadd.f32 %v4963, %v5051
    %v5053 = vpop.f32.mrf.mxu0
    %v5054 = vadd.f32 %v4965, %v5053
    %5055 = vmatmul.bf16.gmra.mxu0 %v3329
    %v5056 = vpop.f32.mrf.mxu0
    %v5057 = vadd.f32 %v4968, %v5056
    %v5058 = vpop.f32.mrf.mxu0
    %v5059 = vadd.f32 %v4970, %v5058
    %5060 = vmatmul.bf16.gmra.mxu0 %v3333
    %v5061 = vpop.f32.mrf.mxu0
    %v5062 = vadd.f32 %v4973, %v5061
    %v5063 = vpop.f32.mrf.mxu0
    %v5064 = vadd.f32 %v4975, %v5063
    %5065 = vmatmul.bf16.gmra.mxu0 %v3337
    %v5066 = vpop.f32.mrf.mxu0
    %v5067 = vadd.f32 %v4978, %v5066
    %v5068 = vpop.f32.mrf.mxu0
    %v5069 = vadd.f32 %v4980, %v5068
    %5070 = vmatmul.bf16.gmra.mxu0 %v3341
    %v5071 = vpop.f32.mrf.mxu0
    %v5072 = vadd.f32 %v4983, %v5071
    %v5073 = vpop.f32.mrf.mxu0
    %v5074 = vadd.f32 %v4985, %v5073
    %5075 = vdwg.mxu0
    %5076 = vmatpush.bf16.msra.mxu0 %v4570
    %5077 = vmatpush.bf16.msra.mxu0 %v4562
    %5078 = vmatpush.bf16.msra.mxu0 %v4554
    %5079 = vmatpush.bf16.msra.mxu0 %v4546
    %5080 = vmatpush.bf16.msra.mxu0 %v4538
    %5081 = vmatpush.bf16.msra.mxu0 %v4530
    %5082 = vmatpush.bf16.msra.mxu0 %v4522
    %5083 = vmatpush.bf16.msra.mxu0 %v4514
    %5084 = vmatmul.bf16.gmra.mxu0 %v3282
    %v5085 = vpop.f32.mrf.mxu0
    %v5086 = vadd.f32 %v4997, %v5085
    %v5087 = vpop.f32.mrf.mxu0
    %v5088 = vadd.f32 %v4999, %v5087
    %5089 = vmatmul.bf16.gmra.mxu0 %v3286
    %v5090 = vpop.f32.mrf.mxu0
    %v5091 = vadd.f32 %v5002, %v5090
    %v5092 = vpop.f32.mrf.mxu0
    %v5093 = vadd.f32 %v5004, %v5092
    %5094 = vmatmul.bf16.gmra.mxu0 %v3290
    %v5095 = vpop.f32.mrf.mxu0
    %v5096 = vadd.f32 %v5007, %v5095
    %v5097 = vpop.f32.mrf.mxu0
    %v5098 = vadd.f32 %v5009, %v5097
    %5099 = vmatmul.bf16.gmra.mxu0 %v3294
    %v5100 = vpop.f32.mrf.mxu0
    %v5101 = vadd.f32 %v5012, %v5100
    %v5102 = vpop.f32.mrf.mxu0
    %v5103 = vadd.f32 %v5014, %v5102
    %5104 = vmatmul.bf16.gmra.mxu0 %v3298
    %v5105 = vpop.f32.mrf.mxu0
    %v5106 = vadd.f32 %v5017, %v5105
    %v5107 = vpop.f32.mrf.mxu0
    %v5108 = vadd.f32 %v5019, %v5107
    %5109 = vmatmul.bf16.gmra.mxu0 %v3302
    %v5110 = vpop.f32.mrf.mxu0
    %v5111 = vadd.f32 %v5022, %v5110
    %v5112 = vpop.f32.mrf.mxu0
    %v5113 = vadd.f32 %v5024, %v5112
    %5114 = vmatmul.bf16.gmra.mxu0 %v3306
    %v5115 = vpop.f32.mrf.mxu0
    %v5116 = vadd.f32 %v5027, %v5115
    %v5117 = vpop.f32.mrf.mxu0
    %v5118 = vadd.f32 %v5029, %v5117
    %5119 = vmatmul.bf16.gmra.mxu0 %v3310
    %v5120 = vpop.f32.mrf.mxu0
    %v5121 = vadd.f32 %v5032, %v5120
    %v5122 = vpop.f32.mrf.mxu0
    %v5123 = vadd.f32 %v5034, %v5122
    %5124 = vmatmul.bf16.gmra.mxu0 %v3314
    %v5125 = vpop.f32.mrf.mxu0
    %v5126 = vadd.f32 %v5037, %v5125
    %v5127 = vpop.f32.mrf.mxu0
    %v5128 = vadd.f32 %v5039, %v5127
    %5129 = vmatmul.bf16.gmra.mxu0 %v3318
    %v5130 = vpop.f32.mrf.mxu0
    %v5131 = vadd.f32 %v5042, %v5130
    %v5132 = vpop.f32.mrf.mxu0
    %v5133 = vadd.f32 %v5044, %v5132
    %5134 = vmatmul.bf16.gmra.mxu0 %v3322
    %v5135 = vpop.f32.mrf.mxu0
    %v5136 = vadd.f32 %v5047, %v5135
    %v5137 = vpop.f32.mrf.mxu0
    %v5138 = vadd.f32 %v5049, %v5137
    %5139 = vmatmul.bf16.gmra.mxu0 %v3326
    %v5140 = vpop.f32.mrf.mxu0
    %v5141 = vadd.f32 %v5052, %v5140
    %v5142 = vpop.f32.mrf.mxu0
    %v5143 = vadd.f32 %v5054, %v5142
    %5144 = vmatmul.bf16.gmra.mxu0 %v3330
    %v5145 = vpop.f32.mrf.mxu0
    %v5146 = vadd.f32 %v5057, %v5145
    %v5147 = vpop.f32.mrf.mxu0
    %v5148 = vadd.f32 %v5059, %v5147
    %5149 = vmatmul.bf16.gmra.mxu0 %v3334
    %v5150 = vpop.f32.mrf.mxu0
    %v5151 = vadd.f32 %v5062, %v5150
    %v5152 = vpop.f32.mrf.mxu0
    %v5153 = vadd.f32 %v5064, %v5152
    %5154 = vmatmul.bf16.gmra.mxu0 %v3338
    %v5155 = vpop.f32.mrf.mxu0
    %v5156 = vadd.f32 %v5067, %v5155
    %v5157 = vpop.f32.mrf.mxu0
    %v5158 = vadd.f32 %v5069, %v5157
    %5159 = vmatmul.bf16.gmra.mxu0 %v3342
    %v5160 = vpop.f32.mrf.mxu0
    %v5161 = vadd.f32 %v5072, %v5160
    %v5162 = vpop.f32.mrf.mxu0
    %v5163 = vadd.f32 %v5074, %v5162
    %5164 = vdwg.mxu0
    %5165 = vmatpush.bf16.msra.mxu0 %v4634
    %5166 = vmatpush.bf16.msra.mxu0 %v4626
    %5167 = vmatpush.bf16.msra.mxu0 %v4618
    %5168 = vmatpush.bf16.msra.mxu0 %v4610
    %5169 = vmatpush.bf16.msra.mxu0 %v4602
    %5170 = vmatpush.bf16.msra.mxu0 %v4594
    %5171 = vmatpush.bf16.msra.mxu0 %v4586
    %5172 = vmatpush.bf16.msra.mxu0 %v4578
    %5173 = vmatmul.bf16.gmra.mxu0 %v3283
    %v5174 = vpop.f32.mrf.mxu0
    %v5175 = vadd.f32 %v5086, %v5174
    %v5176 = vpop.f32.mrf.mxu0
    %v5177 = vadd.f32 %v5088, %v5176
    %5178 = vmatmul.bf16.gmra.mxu0 %v3287
    %v5179 = vpop.f32.mrf.mxu0
    %v5180 = vadd.f32 %v5091, %v5179
    %v5181 = vpop.f32.mrf.mxu0
    %v5182 = vadd.f32 %v5093, %v5181
    %5183 = vmatmul.bf16.gmra.mxu0 %v3291
    %v5184 = vpop.f32.mrf.mxu0
    %v5185 = vadd.f32 %v5096, %v5184
    %v5186 = vpop.f32.mrf.mxu0
    %v5187 = vadd.f32 %v5098, %v5186
    %5188 = vmatmul.bf16.gmra.mxu0 %v3295
    %v5189 = vpop.f32.mrf.mxu0
    %v5190 = vadd.f32 %v5101, %v5189
    %v5191 = vpop.f32.mrf.mxu0
    %v5192 = vadd.f32 %v5103, %v5191
    %5193 = vmatmul.bf16.gmra.mxu0 %v3299
    %v5194 = vpop.f32.mrf.mxu0
    %v5195 = vadd.f32 %v5106, %v5194
    %v5196 = vpop.f32.mrf.mxu0
    %v5197 = vadd.f32 %v5108, %v5196
    %5198 = vmatmul.bf16.gmra.mxu0 %v3303
    %v5199 = vpop.f32.mrf.mxu0
    %v5200 = vadd.f32 %v5111, %v5199
    %v5201 = vpop.f32.mrf.mxu0
    %v5202 = vadd.f32 %v5113, %v5201
    %5203 = vmatmul.bf16.gmra.mxu0 %v3307
    %v5204 = vpop.f32.mrf.mxu0
    %v5205 = vadd.f32 %v5116, %v5204
    %v5206 = vpop.f32.mrf.mxu0
    %v5207 = vadd.f32 %v5118, %v5206
    %5208 = vmatmul.bf16.gmra.mxu0 %v3311
    %v5209 = vpop.f32.mrf.mxu0
    %v5210 = vadd.f32 %v5121, %v5209
    %v5211 = vpop.f32.mrf.mxu0
    %v5212 = vadd.f32 %v5123, %v5211
    %5213 = vmatmul.bf16.gmra.mxu0 %v3315
    %v5214 = vpop.f32.mrf.mxu0
    %v5215 = vadd.f32 %v5126, %v5214
    %v5216 = vpop.f32.mrf.mxu0
    %v5217 = vadd.f32 %v5128, %v5216
    %5218 = vmatmul.bf16.gmra.mxu0 %v3319
    %v5219 = vpop.f32.mrf.mxu0
    %v5220 = vadd.f32 %v5131, %v5219
    %v5221 = vpop.f32.mrf.mxu0
    %v5222 = vadd.f32 %v5133, %v5221
    %5223 = vmatmul.bf16.gmra.mxu0 %v3323
    %v5224 = vpop.f32.mrf.mxu0
    %v5225 = vadd.f32 %v5136, %v5224
    %v5226 = vpop.f32.mrf.mxu0
    %v5227 = vadd.f32 %v5138, %v5226
    %5228 = vmatmul.bf16.gmra.mxu0 %v3327
    %v5229 = vpop.f32.mrf.mxu0
    %v5230 = vadd.f32 %v5141, %v5229
    %v5231 = vpop.f32.mrf.mxu0
    %v5232 = vadd.f32 %v5143, %v5231
    %5233 = vmatmul.bf16.gmra.mxu0 %v3331
    %v5234 = vpop.f32.mrf.mxu0
    %v5235 = vadd.f32 %v5146, %v5234
    %v5236 = vpop.f32.mrf.mxu0
    %v5237 = vadd.f32 %v5148, %v5236
    %5238 = vmatmul.bf16.gmra.mxu0 %v3335
    %v5239 = vpop.f32.mrf.mxu0
    %v5240 = vadd.f32 %v5151, %v5239
    %v5241 = vpop.f32.mrf.mxu0
    %v5242 = vadd.f32 %v5153, %v5241
    %5243 = vmatmul.bf16.gmra.mxu0 %v3339
    %v5244 = vpop.f32.mrf.mxu0
    %v5245 = vadd.f32 %v5156, %v5244
    %v5246 = vpop.f32.mrf.mxu0
    %v5247 = vadd.f32 %v5158, %v5246
    %5248 = vmatmul.bf16.gmra.mxu0 %v3343
    %v5249 = vpop.f32.mrf.mxu0
    %v5250 = vadd.f32 %v5161, %v5249
    %v5251 = vpop.f32.mrf.mxu0
    %v5252 = vadd.f32 %v5163, %v5251
    %5253 = vdwg.mxu0
    %5254 = vmatpush.bf16.msra.mxu0 %v4443
    %5255 = vmatpush.bf16.msra.mxu0 %v4435
    %5256 = vmatpush.bf16.msra.mxu0 %v4427
    %5257 = vmatpush.bf16.msra.mxu0 %v4419
    %5258 = vmatpush.bf16.msra.mxu0 %v4411
    %5259 = vmatpush.bf16.msra.mxu0 %v4403
    %5260 = vmatpush.bf16.msra.mxu0 %v4395
    %5261 = vmatpush.bf16.msra.mxu0 %v4387
    %5262 = vmatmul.bf16.gmra.mxu0 %v3280
    %v5263 = vpop.f32.mrf.mxu0
    %v5264 = vadd.f32 %v3603, %v5263
    %v5265 = vpop.f32.mrf.mxu0
    %v5266 = vadd.f32 %v3603, %v5265
    %5267 = vmatmul.bf16.gmra.mxu0 %v3284
    %v5268 = vpop.f32.mrf.mxu0
    %v5269 = vadd.f32 %v3603, %v5268
    %v5270 = vpop.f32.mrf.mxu0
    %v5271 = vadd.f32 %v3603, %v5270
    %5272 = vmatmul.bf16.gmra.mxu0 %v3288
    %v5273 = vpop.f32.mrf.mxu0
    %v5274 = vadd.f32 %v3603, %v5273
    %v5275 = vpop.f32.mrf.mxu0
    %v5276 = vadd.f32 %v3603, %v5275
    %5277 = vmatmul.bf16.gmra.mxu0 %v3292
    %v5278 = vpop.f32.mrf.mxu0
    %v5279 = vadd.f32 %v3603, %v5278
    %v5280 = vpop.f32.mrf.mxu0
    %v5281 = vadd.f32 %v3603, %v5280
    %5282 = vmatmul.bf16.gmra.mxu0 %v3296
    %v5283 = vpop.f32.mrf.mxu0
    %v5284 = vadd.f32 %v3603, %v5283
    %v5285 = vpop.f32.mrf.mxu0
    %v5286 = vadd.f32 %v3603, %v5285
    %5287 = vmatmul.bf16.gmra.mxu0 %v3300
    %v5288 = vpop.f32.mrf.mxu0
    %v5289 = vadd.f32 %v3603, %v5288
    %v5290 = vpop.f32.mrf.mxu0
    %v5291 = vadd.f32 %v3603, %v5290
    %5292 = vmatmul.bf16.gmra.mxu0 %v3304
    %v5293 = vpop.f32.mrf.mxu0
    %v5294 = vadd.f32 %v3603, %v5293
    %v5295 = vpop.f32.mrf.mxu0
    %v5296 = vadd.f32 %v3603, %v5295
    %5297 = vmatmul.bf16.gmra.mxu0 %v3308
    %v5298 = vpop.f32.mrf.mxu0
    %v5299 = vadd.f32 %v3603, %v5298
    %v5300 = vpop.f32.mrf.mxu0
    %v5301 = vadd.f32 %v3603, %v5300
    %5302 = vmatmul.bf16.gmra.mxu0 %v3312
    %v5303 = vpop.f32.mrf.mxu0
    %v5304 = vadd.f32 %v3603, %v5303
    %v5305 = vpop.f32.mrf.mxu0
    %v5306 = vadd.f32 %v3603, %v5305
    %5307 = vmatmul.bf16.gmra.mxu0 %v3316
    %v5308 = vpop.f32.mrf.mxu0
    %v5309 = vadd.f32 %v3603, %v5308
    %v5310 = vpop.f32.mrf.mxu0
    %v5311 = vadd.f32 %v3603, %v5310
    %5312 = vmatmul.bf16.gmra.mxu0 %v3320
    %v5313 = vpop.f32.mrf.mxu0
    %v5314 = vadd.f32 %v3603, %v5313
    %v5315 = vpop.f32.mrf.mxu0
    %v5316 = vadd.f32 %v3603, %v5315
    %5317 = vmatmul.bf16.gmra.mxu0 %v3324
    %v5318 = vpop.f32.mrf.mxu0
    %v5319 = vadd.f32 %v3603, %v5318
    %v5320 = vpop.f32.mrf.mxu0
    %v5321 = vadd.f32 %v3603, %v5320
    %5322 = vmatmul.bf16.gmra.mxu0 %v3328
    %v5323 = vpop.f32.mrf.mxu0
    %v5324 = vadd.f32 %v3603, %v5323
    %v5325 = vpop.f32.mrf.mxu0
    %v5326 = vadd.f32 %v3603, %v5325
    %5327 = vmatmul.bf16.gmra.mxu0 %v3332
    %v5328 = vpop.f32.mrf.mxu0
    %v5329 = vadd.f32 %v3603, %v5328
    %v5330 = vpop.f32.mrf.mxu0
    %v5331 = vadd.f32 %v3603, %v5330
    %5332 = vmatmul.bf16.gmra.mxu0 %v3336
    %v5333 = vpop.f32.mrf.mxu0
    %v5334 = vadd.f32 %v3603, %v5333
    %v5335 = vpop.f32.mrf.mxu0
    %v5336 = vadd.f32 %v3603, %v5335
    %5337 = vmatmul.bf16.gmra.mxu0 %v3340
    %v5338 = vpop.f32.mrf.mxu0
    %v5339 = vadd.f32 %v3603, %v5338
    %v5340 = vpop.f32.mrf.mxu0
    %v5341 = vadd.f32 %v3603, %v5340
    %5342 = vdwg.mxu0
    %5343 = vmatpush.bf16.msra.mxu0 %v4507
    %5344 = vmatpush.bf16.msra.mxu0 %v4499
    %5345 = vmatpush.bf16.msra.mxu0 %v4491
    %5346 = vmatpush.bf16.msra.mxu0 %v4483
    %5347 = vmatpush.bf16.msra.mxu0 %v4475
    %5348 = vmatpush.bf16.msra.mxu0 %v4467
    %5349 = vmatpush.bf16.msra.mxu0 %v4459
    %5350 = vmatpush.bf16.msra.mxu0 %v4451
    %5351 = vmatmul.bf16.gmra.mxu0 %v3281
    %v5352 = vpop.f32.mrf.mxu0
    %v5353 = vadd.f32 %v5264, %v5352
    %v5354 = vpop.f32.mrf.mxu0
    %v5355 = vadd.f32 %v5266, %v5354
    %5356 = vmatmul.bf16.gmra.mxu0 %v3285
    %v5357 = vpop.f32.mrf.mxu0
    %v5358 = vadd.f32 %v5269, %v5357
    %v5359 = vpop.f32.mrf.mxu0
    %v5360 = vadd.f32 %v5271, %v5359
    %5361 = vmatmul.bf16.gmra.mxu0 %v3289
    %v5362 = vpop.f32.mrf.mxu0
    %v5363 = vadd.f32 %v5274, %v5362
    %v5364 = vpop.f32.mrf.mxu0
    %v5365 = vadd.f32 %v5276, %v5364
    %5366 = vmatmul.bf16.gmra.mxu0 %v3293
    %v5367 = vpop.f32.mrf.mxu0
    %v5368 = vadd.f32 %v5279, %v5367
    %v5369 = vpop.f32.mrf.mxu0
    %v5370 = vadd.f32 %v5281, %v5369
    %5371 = vmatmul.bf16.gmra.mxu0 %v3297
    %v5372 = vpop.f32.mrf.mxu0
    %v5373 = vadd.f32 %v5284, %v5372
    %v5374 = vpop.f32.mrf.mxu0
    %v5375 = vadd.f32 %v5286, %v5374
    %5376 = vmatmul.bf16.gmra.mxu0 %v3301
    %v5377 = vpop.f32.mrf.mxu0
    %v5378 = vadd.f32 %v5289, %v5377
    %v5379 = vpop.f32.mrf.mxu0
    %v5380 = vadd.f32 %v5291, %v5379
    %5381 = vmatmul.bf16.gmra.mxu0 %v3305
    %v5382 = vpop.f32.mrf.mxu0
    %v5383 = vadd.f32 %v5294, %v5382
    %v5384 = vpop.f32.mrf.mxu0
    %v5385 = vadd.f32 %v5296, %v5384
    %5386 = vmatmul.bf16.gmra.mxu0 %v3309
    %v5387 = vpop.f32.mrf.mxu0
    %v5388 = vadd.f32 %v5299, %v5387
    %v5389 = vpop.f32.mrf.mxu0
    %v5390 = vadd.f32 %v5301, %v5389
    %5391 = vmatmul.bf16.gmra.mxu0 %v3313
    %v5392 = vpop.f32.mrf.mxu0
    %v5393 = vadd.f32 %v5304, %v5392
    %v5394 = vpop.f32.mrf.mxu0
    %v5395 = vadd.f32 %v5306, %v5394
    %5396 = vmatmul.bf16.gmra.mxu0 %v3317
    %v5397 = vpop.f32.mrf.mxu0
    %v5398 = vadd.f32 %v5309, %v5397
    %v5399 = vpop.f32.mrf.mxu0
    %v5400 = vadd.f32 %v5311, %v5399
    %5401 = vmatmul.bf16.gmra.mxu0 %v3321
    %v5402 = vpop.f32.mrf.mxu0
    %v5403 = vadd.f32 %v5314, %v5402
    %v5404 = vpop.f32.mrf.mxu0
    %v5405 = vadd.f32 %v5316, %v5404
    %5406 = vmatmul.bf16.gmra.mxu0 %v3325
    %v5407 = vpop.f32.mrf.mxu0
    %v5408 = vadd.f32 %v5319, %v5407
    %v5409 = vpop.f32.mrf.mxu0
    %v5410 = vadd.f32 %v5321, %v5409
    %5411 = vmatmul.bf16.gmra.mxu0 %v3329
    %v5412 = vpop.f32.mrf.mxu0
    %v5413 = vadd.f32 %v5324, %v5412
    %v5414 = vpop.f32.mrf.mxu0
    %v5415 = vadd.f32 %v5326, %v5414
    %5416 = vmatmul.bf16.gmra.mxu0 %v3333
    %v5417 = vpop.f32.mrf.mxu0
    %v5418 = vadd.f32 %v5329, %v5417
    %v5419 = vpop.f32.mrf.mxu0
    %v5420 = vadd.f32 %v5331, %v5419
    %5421 = vmatmul.bf16.gmra.mxu0 %v3337
    %v5422 = vpop.f32.mrf.mxu0
    %v5423 = vadd.f32 %v5334, %v5422
    %v5424 = vpop.f32.mrf.mxu0
    %v5425 = vadd.f32 %v5336, %v5424
    %5426 = vmatmul.bf16.gmra.mxu0 %v3341
    %v5427 = vpop.f32.mrf.mxu0
    %v5428 = vadd.f32 %v5339, %v5427
    %v5429 = vpop.f32.mrf.mxu0
    %v5430 = vadd.f32 %v5341, %v5429
    %5431 = vdwg.mxu0
    %5432 = vmatpush.bf16.msra.mxu0 %v4571
    %5433 = vmatpush.bf16.msra.mxu0 %v4563
    %5434 = vmatpush.bf16.msra.mxu0 %v4555
    %5435 = vmatpush.bf16.msra.mxu0 %v4547
    %5436 = vmatpush.bf16.msra.mxu0 %v4539
    %5437 = vmatpush.bf16.msra.mxu0 %v4531
    %5438 = vmatpush.bf16.msra.mxu0 %v4523
    %5439 = vmatpush.bf16.msra.mxu0 %v4515
    %5440 = vmatmul.bf16.gmra.mxu0 %v3282
    %v5441 = vpop.f32.mrf.mxu0
    %v5442 = vadd.f32 %v5353, %v5441
    %v5443 = vpop.f32.mrf.mxu0
    %v5444 = vadd.f32 %v5355, %v5443
    %5445 = vmatmul.bf16.gmra.mxu0 %v3286
    %v5446 = vpop.f32.mrf.mxu0
    %v5447 = vadd.f32 %v5358, %v5446
    %v5448 = vpop.f32.mrf.mxu0
    %v5449 = vadd.f32 %v5360, %v5448
    %5450 = vmatmul.bf16.gmra.mxu0 %v3290
    %v5451 = vpop.f32.mrf.mxu0
    %v5452 = vadd.f32 %v5363, %v5451
    %v5453 = vpop.f32.mrf.mxu0
    %v5454 = vadd.f32 %v5365, %v5453
    %5455 = vmatmul.bf16.gmra.mxu0 %v3294
    %v5456 = vpop.f32.mrf.mxu0
    %v5457 = vadd.f32 %v5368, %v5456
    %v5458 = vpop.f32.mrf.mxu0
    %v5459 = vadd.f32 %v5370, %v5458
    %5460 = vmatmul.bf16.gmra.mxu0 %v3298
    %v5461 = vpop.f32.mrf.mxu0
    %v5462 = vadd.f32 %v5373, %v5461
    %v5463 = vpop.f32.mrf.mxu0
    %v5464 = vadd.f32 %v5375, %v5463
    %5465 = vmatmul.bf16.gmra.mxu0 %v3302
    %v5466 = vpop.f32.mrf.mxu0
    %v5467 = vadd.f32 %v5378, %v5466
    %v5468 = vpop.f32.mrf.mxu0
    %v5469 = vadd.f32 %v5380, %v5468
    %5470 = vmatmul.bf16.gmra.mxu0 %v3306
    %v5471 = vpop.f32.mrf.mxu0
    %v5472 = vadd.f32 %v5383, %v5471
    %v5473 = vpop.f32.mrf.mxu0
    %v5474 = vadd.f32 %v5385, %v5473
    %5475 = vmatmul.bf16.gmra.mxu0 %v3310
    %v5476 = vpop.f32.mrf.mxu0
    %v5477 = vadd.f32 %v5388, %v5476
    %v5478 = vpop.f32.mrf.mxu0
    %v5479 = vadd.f32 %v5390, %v5478
    %5480 = vmatmul.bf16.gmra.mxu0 %v3314
    %v5481 = vpop.f32.mrf.mxu0
    %v5482 = vadd.f32 %v5393, %v5481
    %v5483 = vpop.f32.mrf.mxu0
    %v5484 = vadd.f32 %v5395, %v5483
    %5485 = vmatmul.bf16.gmra.mxu0 %v3318
    %v5486 = vpop.f32.mrf.mxu0
    %v5487 = vadd.f32 %v5398, %v5486
    %v5488 = vpop.f32.mrf.mxu0
    %v5489 = vadd.f32 %v5400, %v5488
    %5490 = vmatmul.bf16.gmra.mxu0 %v3322
    %v5491 = vpop.f32.mrf.mxu0
    %v5492 = vadd.f32 %v5403, %v5491
    %v5493 = vpop.f32.mrf.mxu0
    %v5494 = vadd.f32 %v5405, %v5493
    %5495 = vmatmul.bf16.gmra.mxu0 %v3326
    %v5496 = vpop.f32.mrf.mxu0
    %v5497 = vadd.f32 %v5408, %v5496
    %v5498 = vpop.f32.mrf.mxu0
    %v5499 = vadd.f32 %v5410, %v5498
    %5500 = vmatmul.bf16.gmra.mxu0 %v3330
    %v5501 = vpop.f32.mrf.mxu0
    %v5502 = vadd.f32 %v5413, %v5501
    %v5503 = vpop.f32.mrf.mxu0
    %v5504 = vadd.f32 %v5415, %v5503
    %5505 = vmatmul.bf16.gmra.mxu0 %v3334
    %v5506 = vpop.f32.mrf.mxu0
    %v5507 = vadd.f32 %v5418, %v5506
    %v5508 = vpop.f32.mrf.mxu0
    %v5509 = vadd.f32 %v5420, %v5508
    %5510 = vmatmul.bf16.gmra.mxu0 %v3338
    %v5511 = vpop.f32.mrf.mxu0
    %v5512 = vadd.f32 %v5423, %v5511
    %v5513 = vpop.f32.mrf.mxu0
    %v5514 = vadd.f32 %v5425, %v5513
    %5515 = vmatmul.bf16.gmra.mxu0 %v3342
    %v5516 = vpop.f32.mrf.mxu0
    %v5517 = vadd.f32 %v5428, %v5516
    %v5518 = vpop.f32.mrf.mxu0
    %v5519 = vadd.f32 %v5430, %v5518
    %5520 = vdwg.mxu0
    %5521 = vmatpush.bf16.msra.mxu0 %v4635
    %5522 = vmatpush.bf16.msra.mxu0 %v4627
    %5523 = vmatpush.bf16.msra.mxu0 %v4619
    %5524 = vmatpush.bf16.msra.mxu0 %v4611
    %5525 = vmatpush.bf16.msra.mxu0 %v4603
    %5526 = vmatpush.bf16.msra.mxu0 %v4595
    %5527 = vmatpush.bf16.msra.mxu0 %v4587
    %5528 = vmatpush.bf16.msra.mxu0 %v4579
    %5529 = vmatmul.bf16.gmra.mxu0 %v3283
    %v5530 = vpop.f32.mrf.mxu0
    %v5531 = vadd.f32 %v5442, %v5530
    %v5532 = vpop.f32.mrf.mxu0
    %v5533 = vadd.f32 %v5444, %v5532
    %5534 = vmatmul.bf16.gmra.mxu0 %v3287
    %v5535 = vpop.f32.mrf.mxu0
    %v5536 = vadd.f32 %v5447, %v5535
    %v5537 = vpop.f32.mrf.mxu0
    %v5538 = vadd.f32 %v5449, %v5537
    %5539 = vmatmul.bf16.gmra.mxu0 %v3291
    %v5540 = vpop.f32.mrf.mxu0
    %v5541 = vadd.f32 %v5452, %v5540
    %v5542 = vpop.f32.mrf.mxu0
    %v5543 = vadd.f32 %v5454, %v5542
    %5544 = vmatmul.bf16.gmra.mxu0 %v3295
    %v5545 = vpop.f32.mrf.mxu0
    %v5546 = vadd.f32 %v5457, %v5545
    %v5547 = vpop.f32.mrf.mxu0
    %v5548 = vadd.f32 %v5459, %v5547
    %5549 = vmatmul.bf16.gmra.mxu0 %v3299
    %v5550 = vpop.f32.mrf.mxu0
    %v5551 = vadd.f32 %v5462, %v5550
    %v5552 = vpop.f32.mrf.mxu0
    %v5553 = vadd.f32 %v5464, %v5552
    %5554 = vmatmul.bf16.gmra.mxu0 %v3303
    %v5555 = vpop.f32.mrf.mxu0
    %v5556 = vadd.f32 %v5467, %v5555
    %v5557 = vpop.f32.mrf.mxu0
    %v5558 = vadd.f32 %v5469, %v5557
    %5559 = vmatmul.bf16.gmra.mxu0 %v3307
    %v5560 = vpop.f32.mrf.mxu0
    %v5561 = vadd.f32 %v5472, %v5560
    %v5562 = vpop.f32.mrf.mxu0
    %v5563 = vadd.f32 %v5474, %v5562
    %5564 = vmatmul.bf16.gmra.mxu0 %v3311
    %v5565 = vpop.f32.mrf.mxu0
    %v5566 = vadd.f32 %v5477, %v5565
    %v5567 = vpop.f32.mrf.mxu0
    %v5568 = vadd.f32 %v5479, %v5567
    %5569 = vmatmul.bf16.gmra.mxu0 %v3315
    %v5570 = vpop.f32.mrf.mxu0
    %v5571 = vadd.f32 %v5482, %v5570
    %v5572 = vpop.f32.mrf.mxu0
    %v5573 = vadd.f32 %v5484, %v5572
    %5574 = vmatmul.bf16.gmra.mxu0 %v3319
    %v5575 = vpop.f32.mrf.mxu0
    %v5576 = vadd.f32 %v5487, %v5575
    %v5577 = vpop.f32.mrf.mxu0
    %v5578 = vadd.f32 %v5489, %v5577
    %5579 = vmatmul.bf16.gmra.mxu0 %v3323
    %v5580 = vpop.f32.mrf.mxu0
    %v5581 = vadd.f32 %v5492, %v5580
    %v5582 = vpop.f32.mrf.mxu0
    %v5583 = vadd.f32 %v5494, %v5582
    %5584 = vmatmul.bf16.gmra.mxu0 %v3327
    %v5585 = vpop.f32.mrf.mxu0
    %v5586 = vadd.f32 %v5497, %v5585
    %v5587 = vpop.f32.mrf.mxu0
    %v5588 = vadd.f32 %v5499, %v5587
    %5589 = vmatmul.bf16.gmra.mxu0 %v3331
    %v5590 = vpop.f32.mrf.mxu0
    %v5591 = vadd.f32 %v5502, %v5590
    %v5592 = vpop.f32.mrf.mxu0
    %v5593 = vadd.f32 %v5504, %v5592
    %5594 = vmatmul.bf16.gmra.mxu0 %v3335
    %v5595 = vpop.f32.mrf.mxu0
    %v5596 = vadd.f32 %v5507, %v5595
    %v5597 = vpop.f32.mrf.mxu0
    %v5598 = vadd.f32 %v5509, %v5597
    %5599 = vmatmul.bf16.gmra.mxu0 %v3339
    %v5600 = vpop.f32.mrf.mxu0
    %v5601 = vadd.f32 %v5512, %v5600
    %v5602 = vpop.f32.mrf.mxu0
    %v5603 = vadd.f32 %v5514, %v5602
    %5604 = vmatmul.bf16.gmra.mxu0 %v3343
    %v5605 = vpop.f32.mrf.mxu0
    %v5606 = vadd.f32 %v5517, %v5605
    %v5607 = vpop.f32.mrf.mxu0
    %v5608 = vadd.f32 %v5519, %v5607
    %5609 = vdwg.mxu0
    %5610 = vmatpush.bf16.msra.mxu0 %v4444
    %5611 = vmatpush.bf16.msra.mxu0 %v4436
    %5612 = vmatpush.bf16.msra.mxu0 %v4428
    %5613 = vmatpush.bf16.msra.mxu0 %v4420
    %5614 = vmatpush.bf16.msra.mxu0 %v4412
    %5615 = vmatpush.bf16.msra.mxu0 %v4404
    %5616 = vmatpush.bf16.msra.mxu0 %v4396
    %5617 = vmatpush.bf16.msra.mxu0 %v4388
    %5618 = vmatmul.bf16.gmra.mxu0 %v3280
    %v5619 = vpop.f32.mrf.mxu0
    %v5620 = vadd.f32 %v3604, %v5619
    %v5621 = vpop.f32.mrf.mxu0
    %v5622 = vadd.f32 %v3604, %v5621
    %5623 = vmatmul.bf16.gmra.mxu0 %v3284
    %v5624 = vpop.f32.mrf.mxu0
    %v5625 = vadd.f32 %v3604, %v5624
    %v5626 = vpop.f32.mrf.mxu0
    %v5627 = vadd.f32 %v3604, %v5626
    %5628 = vmatmul.bf16.gmra.mxu0 %v3288
    %v5629 = vpop.f32.mrf.mxu0
    %v5630 = vadd.f32 %v3604, %v5629
    %v5631 = vpop.f32.mrf.mxu0
    %v5632 = vadd.f32 %v3604, %v5631
    %5633 = vmatmul.bf16.gmra.mxu0 %v3292
    %v5634 = vpop.f32.mrf.mxu0
    %v5635 = vadd.f32 %v3604, %v5634
    %v5636 = vpop.f32.mrf.mxu0
    %v5637 = vadd.f32 %v3604, %v5636
    %5638 = vmatmul.bf16.gmra.mxu0 %v3296
    %v5639 = vpop.f32.mrf.mxu0
    %v5640 = vadd.f32 %v3604, %v5639
    %v5641 = vpop.f32.mrf.mxu0
    %v5642 = vadd.f32 %v3604, %v5641
    %5643 = vmatmul.bf16.gmra.mxu0 %v3300
    %v5644 = vpop.f32.mrf.mxu0
    %v5645 = vadd.f32 %v3604, %v5644
    %v5646 = vpop.f32.mrf.mxu0
    %v5647 = vadd.f32 %v3604, %v5646
    %5648 = vmatmul.bf16.gmra.mxu0 %v3304
    %v5649 = vpop.f32.mrf.mxu0
    %v5650 = vadd.f32 %v3604, %v5649
    %v5651 = vpop.f32.mrf.mxu0
    %v5652 = vadd.f32 %v3604, %v5651
    %5653 = vmatmul.bf16.gmra.mxu0 %v3308
    %v5654 = vpop.f32.mrf.mxu0
    %v5655 = vadd.f32 %v3604, %v5654
    %v5656 = vpop.f32.mrf.mxu0
    %v5657 = vadd.f32 %v3604, %v5656
    %5658 = vmatmul.bf16.gmra.mxu0 %v3312
    %v5659 = vpop.f32.mrf.mxu0
    %v5660 = vadd.f32 %v3604, %v5659
    %v5661 = vpop.f32.mrf.mxu0
    %v5662 = vadd.f32 %v3604, %v5661
    %5663 = vmatmul.bf16.gmra.mxu0 %v3316
    %v5664 = vpop.f32.mrf.mxu0
    %v5665 = vadd.f32 %v3604, %v5664
    %v5666 = vpop.f32.mrf.mxu0
    %v5667 = vadd.f32 %v3604, %v5666
    %5668 = vmatmul.bf16.gmra.mxu0 %v3320
    %v5669 = vpop.f32.mrf.mxu0
    %v5670 = vadd.f32 %v3604, %v5669
    %v5671 = vpop.f32.mrf.mxu0
    %v5672 = vadd.f32 %v3604, %v5671
    %5673 = vmatmul.bf16.gmra.mxu0 %v3324
    %v5674 = vpop.f32.mrf.mxu0
    %v5675 = vadd.f32 %v3604, %v5674
    %v5676 = vpop.f32.mrf.mxu0
    %v5677 = vadd.f32 %v3604, %v5676
    %5678 = vmatmul.bf16.gmra.mxu0 %v3328
    %v5679 = vpop.f32.mrf.mxu0
    %v5680 = vadd.f32 %v3604, %v5679
    %v5681 = vpop.f32.mrf.mxu0
    %v5682 = vadd.f32 %v3604, %v5681
    %5683 = vmatmul.bf16.gmra.mxu0 %v3332
    %v5684 = vpop.f32.mrf.mxu0
    %v5685 = vadd.f32 %v3604, %v5684
    %v5686 = vpop.f32.mrf.mxu0
    %v5687 = vadd.f32 %v3604, %v5686
    %5688 = vmatmul.bf16.gmra.mxu0 %v3336
    %v5689 = vpop.f32.mrf.mxu0
    %v5690 = vadd.f32 %v3604, %v5689
    %v5691 = vpop.f32.mrf.mxu0
    %v5692 = vadd.f32 %v3604, %v5691
    %5693 = vmatmul.bf16.gmra.mxu0 %v3340
    %v5694 = vpop.f32.mrf.mxu0
    %v5695 = vadd.f32 %v3604, %v5694
    %v5696 = vpop.f32.mrf.mxu0
    %v5697 = vadd.f32 %v3604, %v5696
    %5698 = vdwg.mxu0
    %5699 = vmatpush.bf16.msra.mxu0 %v4508
    %5700 = vmatpush.bf16.msra.mxu0 %v4500
    %5701 = vmatpush.bf16.msra.mxu0 %v4492
    %5702 = vmatpush.bf16.msra.mxu0 %v4484
    %5703 = vmatpush.bf16.msra.mxu0 %v4476
    %5704 = vmatpush.bf16.msra.mxu0 %v4468
    %5705 = vmatpush.bf16.msra.mxu0 %v4460
    %5706 = vmatpush.bf16.msra.mxu0 %v4452
    %5707 = vmatmul.bf16.gmra.mxu0 %v3281
    %v5708 = vpop.f32.mrf.mxu0
    %v5709 = vadd.f32 %v5620, %v5708
    %v5710 = vpop.f32.mrf.mxu0
    %v5711 = vadd.f32 %v5622, %v5710
    %5712 = vmatmul.bf16.gmra.mxu0 %v3285
    %v5713 = vpop.f32.mrf.mxu0
    %v5714 = vadd.f32 %v5625, %v5713
    %v5715 = vpop.f32.mrf.mxu0
    %v5716 = vadd.f32 %v5627, %v5715
    %5717 = vmatmul.bf16.gmra.mxu0 %v3289
    %v5718 = vpop.f32.mrf.mxu0
    %v5719 = vadd.f32 %v5630, %v5718
    %v5720 = vpop.f32.mrf.mxu0
    %v5721 = vadd.f32 %v5632, %v5720
    %5722 = vmatmul.bf16.gmra.mxu0 %v3293
    %v5723 = vpop.f32.mrf.mxu0
    %v5724 = vadd.f32 %v5635, %v5723
    %v5725 = vpop.f32.mrf.mxu0
    %v5726 = vadd.f32 %v5637, %v5725
    %5727 = vmatmul.bf16.gmra.mxu0 %v3297
    %v5728 = vpop.f32.mrf.mxu0
    %v5729 = vadd.f32 %v5640, %v5728
    %v5730 = vpop.f32.mrf.mxu0
    %v5731 = vadd.f32 %v5642, %v5730
    %5732 = vmatmul.bf16.gmra.mxu0 %v3301
    %v5733 = vpop.f32.mrf.mxu0
    %v5734 = vadd.f32 %v5645, %v5733
    %v5735 = vpop.f32.mrf.mxu0
    %v5736 = vadd.f32 %v5647, %v5735
    %5737 = vmatmul.bf16.gmra.mxu0 %v3305
    %v5738 = vpop.f32.mrf.mxu0
    %v5739 = vadd.f32 %v5650, %v5738
    %v5740 = vpop.f32.mrf.mxu0
    %v5741 = vadd.f32 %v5652, %v5740
    %5742 = vmatmul.bf16.gmra.mxu0 %v3309
    %v5743 = vpop.f32.mrf.mxu0
    %v5744 = vadd.f32 %v5655, %v5743
    %v5745 = vpop.f32.mrf.mxu0
    %v5746 = vadd.f32 %v5657, %v5745
    %5747 = vmatmul.bf16.gmra.mxu0 %v3313
    %v5748 = vpop.f32.mrf.mxu0
    %v5749 = vadd.f32 %v5660, %v5748
    %v5750 = vpop.f32.mrf.mxu0
    %v5751 = vadd.f32 %v5662, %v5750
    %5752 = vmatmul.bf16.gmra.mxu0 %v3317
    %v5753 = vpop.f32.mrf.mxu0
    %v5754 = vadd.f32 %v5665, %v5753
    %v5755 = vpop.f32.mrf.mxu0
    %v5756 = vadd.f32 %v5667, %v5755
    %5757 = vmatmul.bf16.gmra.mxu0 %v3321
    %v5758 = vpop.f32.mrf.mxu0
    %v5759 = vadd.f32 %v5670, %v5758
    %v5760 = vpop.f32.mrf.mxu0
    %v5761 = vadd.f32 %v5672, %v5760
    %5762 = vmatmul.bf16.gmra.mxu0 %v3325
    %v5763 = vpop.f32.mrf.mxu0
    %v5764 = vadd.f32 %v5675, %v5763
    %v5765 = vpop.f32.mrf.mxu0
    %v5766 = vadd.f32 %v5677, %v5765
    %5767 = vmatmul.bf16.gmra.mxu0 %v3329
    %v5768 = vpop.f32.mrf.mxu0
    %v5769 = vadd.f32 %v5680, %v5768
    %v5770 = vpop.f32.mrf.mxu0
    %v5771 = vadd.f32 %v5682, %v5770
    %5772 = vmatmul.bf16.gmra.mxu0 %v3333
    %v5773 = vpop.f32.mrf.mxu0
    %v5774 = vadd.f32 %v5685, %v5773
    %v5775 = vpop.f32.mrf.mxu0
    %v5776 = vadd.f32 %v5687, %v5775
    %5777 = vmatmul.bf16.gmra.mxu0 %v3337
    %v5778 = vpop.f32.mrf.mxu0
    %v5779 = vadd.f32 %v5690, %v5778
    %v5780 = vpop.f32.mrf.mxu0
    %v5781 = vadd.f32 %v5692, %v5780
    %5782 = vmatmul.bf16.gmra.mxu0 %v3341
    %v5783 = vpop.f32.mrf.mxu0
    %v5784 = vadd.f32 %v5695, %v5783
    %v5785 = vpop.f32.mrf.mxu0
    %v5786 = vadd.f32 %v5697, %v5785
    %5787 = vdwg.mxu0
    %5788 = vmatpush.bf16.msra.mxu0 %v4572
    %5789 = vmatpush.bf16.msra.mxu0 %v4564
    %5790 = vmatpush.bf16.msra.mxu0 %v4556
    %5791 = vmatpush.bf16.msra.mxu0 %v4548
    %5792 = vmatpush.bf16.msra.mxu0 %v4540
    %5793 = vmatpush.bf16.msra.mxu0 %v4532
    %5794 = vmatpush.bf16.msra.mxu0 %v4524
    %5795 = vmatpush.bf16.msra.mxu0 %v4516
    %5796 = vmatmul.bf16.gmra.mxu0 %v3282
    %v5797 = vpop.f32.mrf.mxu0
    %v5798 = vadd.f32 %v5709, %v5797
    %v5799 = vpop.f32.mrf.mxu0
    %v5800 = vadd.f32 %v5711, %v5799
    %5801 = vmatmul.bf16.gmra.mxu0 %v3286
    %v5802 = vpop.f32.mrf.mxu0
    %v5803 = vadd.f32 %v5714, %v5802
    %v5804 = vpop.f32.mrf.mxu0
    %v5805 = vadd.f32 %v5716, %v5804
    %5806 = vmatmul.bf16.gmra.mxu0 %v3290
    %v5807 = vpop.f32.mrf.mxu0
    %v5808 = vadd.f32 %v5719, %v5807
    %v5809 = vpop.f32.mrf.mxu0
    %v5810 = vadd.f32 %v5721, %v5809
    %5811 = vmatmul.bf16.gmra.mxu0 %v3294
    %v5812 = vpop.f32.mrf.mxu0
    %v5813 = vadd.f32 %v5724, %v5812
    %v5814 = vpop.f32.mrf.mxu0
    %v5815 = vadd.f32 %v5726, %v5814
    %5816 = vmatmul.bf16.gmra.mxu0 %v3298
    %v5817 = vpop.f32.mrf.mxu0
    %v5818 = vadd.f32 %v5729, %v5817
    %v5819 = vpop.f32.mrf.mxu0
    %v5820 = vadd.f32 %v5731, %v5819
    %5821 = vmatmul.bf16.gmra.mxu0 %v3302
    %v5822 = vpop.f32.mrf.mxu0
    %v5823 = vadd.f32 %v5734, %v5822
    %v5824 = vpop.f32.mrf.mxu0
    %v5825 = vadd.f32 %v5736, %v5824
    %5826 = vmatmul.bf16.gmra.mxu0 %v3306
    %v5827 = vpop.f32.mrf.mxu0
    %v5828 = vadd.f32 %v5739, %v5827
    %v5829 = vpop.f32.mrf.mxu0
    %v5830 = vadd.f32 %v5741, %v5829
    %5831 = vmatmul.bf16.gmra.mxu0 %v3310
    %v5832 = vpop.f32.mrf.mxu0
    %v5833 = vadd.f32 %v5744, %v5832
    %v5834 = vpop.f32.mrf.mxu0
    %v5835 = vadd.f32 %v5746, %v5834
    %5836 = vmatmul.bf16.gmra.mxu0 %v3314
    %v5837 = vpop.f32.mrf.mxu0
    %v5838 = vadd.f32 %v5749, %v5837
    %v5839 = vpop.f32.mrf.mxu0
    %v5840 = vadd.f32 %v5751, %v5839
    %5841 = vmatmul.bf16.gmra.mxu0 %v3318
    %v5842 = vpop.f32.mrf.mxu0
    %v5843 = vadd.f32 %v5754, %v5842
    %v5844 = vpop.f32.mrf.mxu0
    %v5845 = vadd.f32 %v5756, %v5844
    %5846 = vmatmul.bf16.gmra.mxu0 %v3322
    %v5847 = vpop.f32.mrf.mxu0
    %v5848 = vadd.f32 %v5759, %v5847
    %v5849 = vpop.f32.mrf.mxu0
    %v5850 = vadd.f32 %v5761, %v5849
    %5851 = vmatmul.bf16.gmra.mxu0 %v3326
    %v5852 = vpop.f32.mrf.mxu0
    %v5853 = vadd.f32 %v5764, %v5852
    %v5854 = vpop.f32.mrf.mxu0
    %v5855 = vadd.f32 %v5766, %v5854
    %5856 = vmatmul.bf16.gmra.mxu0 %v3330
    %v5857 = vpop.f32.mrf.mxu0
    %v5858 = vadd.f32 %v5769, %v5857
    %v5859 = vpop.f32.mrf.mxu0
    %v5860 = vadd.f32 %v5771, %v5859
    %5861 = vmatmul.bf16.gmra.mxu0 %v3334
    %v5862 = vpop.f32.mrf.mxu0
    %v5863 = vadd.f32 %v5774, %v5862
    %v5864 = vpop.f32.mrf.mxu0
    %v5865 = vadd.f32 %v5776, %v5864
    %5866 = vmatmul.bf16.gmra.mxu0 %v3338
    %v5867 = vpop.f32.mrf.mxu0
    %v5868 = vadd.f32 %v5779, %v5867
    %v5869 = vpop.f32.mrf.mxu0
    %v5870 = vadd.f32 %v5781, %v5869
    %5871 = vmatmul.bf16.gmra.mxu0 %v3342
    %v5872 = vpop.f32.mrf.mxu0
    %v5873 = vadd.f32 %v5784, %v5872
    %v5874 = vpop.f32.mrf.mxu0
    %v5875 = vadd.f32 %v5786, %v5874
    %5876 = vdwg.mxu0
    %5877 = vmatpush.bf16.msra.mxu0 %v4636
    %5878 = vmatpush.bf16.msra.mxu0 %v4628
    %5879 = vmatpush.bf16.msra.mxu0 %v4620
    %5880 = vmatpush.bf16.msra.mxu0 %v4612
    %5881 = vmatpush.bf16.msra.mxu0 %v4604
    %5882 = vmatpush.bf16.msra.mxu0 %v4596
    %5883 = vmatpush.bf16.msra.mxu0 %v4588
    %5884 = vmatpush.bf16.msra.mxu0 %v4580
    %5885 = vmatmul.bf16.gmra.mxu0 %v3283
    %v5886 = vpop.f32.mrf.mxu0
    %v5887 = vadd.f32 %v5798, %v5886
    %v5888 = vpop.f32.mrf.mxu0
    %v5889 = vadd.f32 %v5800, %v5888
    %5890 = vmatmul.bf16.gmra.mxu0 %v3287
    %v5891 = vpop.f32.mrf.mxu0
    %v5892 = vadd.f32 %v5803, %v5891
    %v5893 = vpop.f32.mrf.mxu0
    %v5894 = vadd.f32 %v5805, %v5893
    %5895 = vmatmul.bf16.gmra.mxu0 %v3291
    %v5896 = vpop.f32.mrf.mxu0
    %v5897 = vadd.f32 %v5808, %v5896
    %v5898 = vpop.f32.mrf.mxu0
    %v5899 = vadd.f32 %v5810, %v5898
    %5900 = vmatmul.bf16.gmra.mxu0 %v3295
    %v5901 = vpop.f32.mrf.mxu0
    %v5902 = vadd.f32 %v5813, %v5901
    %v5903 = vpop.f32.mrf.mxu0
    %v5904 = vadd.f32 %v5815, %v5903
    %5905 = vmatmul.bf16.gmra.mxu0 %v3299
    %v5906 = vpop.f32.mrf.mxu0
    %v5907 = vadd.f32 %v5818, %v5906
    %v5908 = vpop.f32.mrf.mxu0
    %v5909 = vadd.f32 %v5820, %v5908
    %5910 = vmatmul.bf16.gmra.mxu0 %v3303
    %v5911 = vpop.f32.mrf.mxu0
    %v5912 = vadd.f32 %v5823, %v5911
    %v5913 = vpop.f32.mrf.mxu0
    %v5914 = vadd.f32 %v5825, %v5913
    %5915 = vmatmul.bf16.gmra.mxu0 %v3307
    %v5916 = vpop.f32.mrf.mxu0
    %v5917 = vadd.f32 %v5828, %v5916
    %v5918 = vpop.f32.mrf.mxu0
    %v5919 = vadd.f32 %v5830, %v5918
    %5920 = vmatmul.bf16.gmra.mxu0 %v3311
    %v5921 = vpop.f32.mrf.mxu0
    %v5922 = vadd.f32 %v5833, %v5921
    %v5923 = vpop.f32.mrf.mxu0
    %v5924 = vadd.f32 %v5835, %v5923
    %5925 = vmatmul.bf16.gmra.mxu0 %v3315
    %v5926 = vpop.f32.mrf.mxu0
    %v5927 = vadd.f32 %v5838, %v5926
    %v5928 = vpop.f32.mrf.mxu0
    %v5929 = vadd.f32 %v5840, %v5928
    %5930 = vmatmul.bf16.gmra.mxu0 %v3319
    %v5931 = vpop.f32.mrf.mxu0
    %v5932 = vadd.f32 %v5843, %v5931
    %v5933 = vpop.f32.mrf.mxu0
    %v5934 = vadd.f32 %v5845, %v5933
    %5935 = vmatmul.bf16.gmra.mxu0 %v3323
    %v5936 = vpop.f32.mrf.mxu0
    %v5937 = vadd.f32 %v5848, %v5936
    %v5938 = vpop.f32.mrf.mxu0
    %v5939 = vadd.f32 %v5850, %v5938
    %5940 = vmatmul.bf16.gmra.mxu0 %v3327
    %v5941 = vpop.f32.mrf.mxu0
    %v5942 = vadd.f32 %v5853, %v5941
    %v5943 = vpop.f32.mrf.mxu0
    %v5944 = vadd.f32 %v5855, %v5943
    %5945 = vmatmul.bf16.gmra.mxu0 %v3331
    %v5946 = vpop.f32.mrf.mxu0
    %v5947 = vadd.f32 %v5858, %v5946
    %v5948 = vpop.f32.mrf.mxu0
    %v5949 = vadd.f32 %v5860, %v5948
    %5950 = vmatmul.bf16.gmra.mxu0 %v3335
    %v5951 = vpop.f32.mrf.mxu0
    %v5952 = vadd.f32 %v5863, %v5951
    %v5953 = vpop.f32.mrf.mxu0
    %v5954 = vadd.f32 %v5865, %v5953
    %5955 = vmatmul.bf16.gmra.mxu0 %v3339
    %v5956 = vpop.f32.mrf.mxu0
    %v5957 = vadd.f32 %v5868, %v5956
    %v5958 = vpop.f32.mrf.mxu0
    %v5959 = vadd.f32 %v5870, %v5958
    %5960 = vmatmul.bf16.gmra.mxu0 %v3343
    %v5961 = vpop.f32.mrf.mxu0
    %v5962 = vadd.f32 %v5873, %v5961
    %v5963 = vpop.f32.mrf.mxu0
    %v5964 = vadd.f32 %v5875, %v5963
    %5965 = vdwg.mxu0
    %5966 = vmatpush.bf16.msra.mxu0 %v4445
    %5967 = vmatpush.bf16.msra.mxu0 %v4437
    %5968 = vmatpush.bf16.msra.mxu0 %v4429
    %5969 = vmatpush.bf16.msra.mxu0 %v4421
    %5970 = vmatpush.bf16.msra.mxu0 %v4413
    %5971 = vmatpush.bf16.msra.mxu0 %v4405
    %5972 = vmatpush.bf16.msra.mxu0 %v4397
    %5973 = vmatpush.bf16.msra.mxu0 %v4389
    %5974 = vmatmul.bf16.gmra.mxu0 %v3280
    %v5975 = vpop.f32.mrf.mxu0
    %v5976 = vadd.f32 %v3605, %v5975
    %v5977 = vpop.f32.mrf.mxu0
    %v5978 = vadd.f32 %v3605, %v5977
    %5979 = vmatmul.bf16.gmra.mxu0 %v3284
    %v5980 = vpop.f32.mrf.mxu0
    %v5981 = vadd.f32 %v3605, %v5980
    %v5982 = vpop.f32.mrf.mxu0
    %v5983 = vadd.f32 %v3605, %v5982
    %5984 = vmatmul.bf16.gmra.mxu0 %v3288
    %v5985 = vpop.f32.mrf.mxu0
    %v5986 = vadd.f32 %v3605, %v5985
    %v5987 = vpop.f32.mrf.mxu0
    %v5988 = vadd.f32 %v3605, %v5987
    %5989 = vmatmul.bf16.gmra.mxu0 %v3292
    %v5990 = vpop.f32.mrf.mxu0
    %v5991 = vadd.f32 %v3605, %v5990
    %v5992 = vpop.f32.mrf.mxu0
    %v5993 = vadd.f32 %v3605, %v5992
    %5994 = vmatmul.bf16.gmra.mxu0 %v3296
    %v5995 = vpop.f32.mrf.mxu0
    %v5996 = vadd.f32 %v3605, %v5995
    %v5997 = vpop.f32.mrf.mxu0
    %v5998 = vadd.f32 %v3605, %v5997
    %5999 = vmatmul.bf16.gmra.mxu0 %v3300
    %v6000 = vpop.f32.mrf.mxu0
    %v6001 = vadd.f32 %v3605, %v6000
    %v6002 = vpop.f32.mrf.mxu0
    %v6003 = vadd.f32 %v3605, %v6002
    %6004 = vmatmul.bf16.gmra.mxu0 %v3304
    %v6005 = vpop.f32.mrf.mxu0
    %v6006 = vadd.f32 %v3605, %v6005
    %v6007 = vpop.f32.mrf.mxu0
    %v6008 = vadd.f32 %v3605, %v6007
    %6009 = vmatmul.bf16.gmra.mxu0 %v3308
    %v6010 = vpop.f32.mrf.mxu0
    %v6011 = vadd.f32 %v3605, %v6010
    %v6012 = vpop.f32.mrf.mxu0
    %v6013 = vadd.f32 %v3605, %v6012
    %6014 = vmatmul.bf16.gmra.mxu0 %v3312
    %v6015 = vpop.f32.mrf.mxu0
    %v6016 = vadd.f32 %v3605, %v6015
    %v6017 = vpop.f32.mrf.mxu0
    %v6018 = vadd.f32 %v3605, %v6017
    %6019 = vmatmul.bf16.gmra.mxu0 %v3316
    %v6020 = vpop.f32.mrf.mxu0
    %v6021 = vadd.f32 %v3605, %v6020
    %v6022 = vpop.f32.mrf.mxu0
    %v6023 = vadd.f32 %v3605, %v6022
    %6024 = vmatmul.bf16.gmra.mxu0 %v3320
    %v6025 = vpop.f32.mrf.mxu0
    %v6026 = vadd.f32 %v3605, %v6025
    %v6027 = vpop.f32.mrf.mxu0
    %v6028 = vadd.f32 %v3605, %v6027
    %6029 = vmatmul.bf16.gmra.mxu0 %v3324
    %v6030 = vpop.f32.mrf.mxu0
    %v6031 = vadd.f32 %v3605, %v6030
    %v6032 = vpop.f32.mrf.mxu0
    %v6033 = vadd.f32 %v3605, %v6032
    %6034 = vmatmul.bf16.gmra.mxu0 %v3328
    %v6035 = vpop.f32.mrf.mxu0
    %v6036 = vadd.f32 %v3605, %v6035
    %v6037 = vpop.f32.mrf.mxu0
    %v6038 = vadd.f32 %v3605, %v6037
    %6039 = vmatmul.bf16.gmra.mxu0 %v3332
    %v6040 = vpop.f32.mrf.mxu0
    %v6041 = vadd.f32 %v3605, %v6040
    %v6042 = vpop.f32.mrf.mxu0
    %v6043 = vadd.f32 %v3605, %v6042
    %6044 = vmatmul.bf16.gmra.mxu0 %v3336
    %v6045 = vpop.f32.mrf.mxu0
    %v6046 = vadd.f32 %v3605, %v6045
    %v6047 = vpop.f32.mrf.mxu0
    %v6048 = vadd.f32 %v3605, %v6047
    %6049 = vmatmul.bf16.gmra.mxu0 %v3340
    %v6050 = vpop.f32.mrf.mxu0
    %v6051 = vadd.f32 %v3605, %v6050
    %v6052 = vpop.f32.mrf.mxu0
    %v6053 = vadd.f32 %v3605, %v6052
    %6054 = vdwg.mxu0
    %6055 = vmatpush.bf16.msra.mxu0 %v4509
    %6056 = vmatpush.bf16.msra.mxu0 %v4501
    %6057 = vmatpush.bf16.msra.mxu0 %v4493
    %6058 = vmatpush.bf16.msra.mxu0 %v4485
    %6059 = vmatpush.bf16.msra.mxu0 %v4477
    %6060 = vmatpush.bf16.msra.mxu0 %v4469
    %6061 = vmatpush.bf16.msra.mxu0 %v4461
    %6062 = vmatpush.bf16.msra.mxu0 %v4453
    %6063 = vmatmul.bf16.gmra.mxu0 %v3281
    %v6064 = vpop.f32.mrf.mxu0
    %v6065 = vadd.f32 %v5976, %v6064
    %v6066 = vpop.f32.mrf.mxu0
    %v6067 = vadd.f32 %v5978, %v6066
    %6068 = vmatmul.bf16.gmra.mxu0 %v3285
    %v6069 = vpop.f32.mrf.mxu0
    %v6070 = vadd.f32 %v5981, %v6069
    %v6071 = vpop.f32.mrf.mxu0
    %v6072 = vadd.f32 %v5983, %v6071
    %6073 = vmatmul.bf16.gmra.mxu0 %v3289
    %v6074 = vpop.f32.mrf.mxu0
    %v6075 = vadd.f32 %v5986, %v6074
    %v6076 = vpop.f32.mrf.mxu0
    %v6077 = vadd.f32 %v5988, %v6076
    %6078 = vmatmul.bf16.gmra.mxu0 %v3293
    %v6079 = vpop.f32.mrf.mxu0
    %v6080 = vadd.f32 %v5991, %v6079
    %v6081 = vpop.f32.mrf.mxu0
    %v6082 = vadd.f32 %v5993, %v6081
    %6083 = vmatmul.bf16.gmra.mxu0 %v3297
    %v6084 = vpop.f32.mrf.mxu0
    %v6085 = vadd.f32 %v5996, %v6084
    %v6086 = vpop.f32.mrf.mxu0
    %v6087 = vadd.f32 %v5998, %v6086
    %6088 = vmatmul.bf16.gmra.mxu0 %v3301
    %v6089 = vpop.f32.mrf.mxu0
    %v6090 = vadd.f32 %v6001, %v6089
    %v6091 = vpop.f32.mrf.mxu0
    %v6092 = vadd.f32 %v6003, %v6091
    %6093 = vmatmul.bf16.gmra.mxu0 %v3305
    %v6094 = vpop.f32.mrf.mxu0
    %v6095 = vadd.f32 %v6006, %v6094
    %v6096 = vpop.f32.mrf.mxu0
    %v6097 = vadd.f32 %v6008, %v6096
    %6098 = vmatmul.bf16.gmra.mxu0 %v3309
    %v6099 = vpop.f32.mrf.mxu0
    %v6100 = vadd.f32 %v6011, %v6099
    %v6101 = vpop.f32.mrf.mxu0
    %v6102 = vadd.f32 %v6013, %v6101
    %6103 = vmatmul.bf16.gmra.mxu0 %v3313
    %v6104 = vpop.f32.mrf.mxu0
    %v6105 = vadd.f32 %v6016, %v6104
    %v6106 = vpop.f32.mrf.mxu0
    %v6107 = vadd.f32 %v6018, %v6106
    %6108 = vmatmul.bf16.gmra.mxu0 %v3317
    %v6109 = vpop.f32.mrf.mxu0
    %v6110 = vadd.f32 %v6021, %v6109
    %v6111 = vpop.f32.mrf.mxu0
    %v6112 = vadd.f32 %v6023, %v6111
    %6113 = vmatmul.bf16.gmra.mxu0 %v3321
    %v6114 = vpop.f32.mrf.mxu0
    %v6115 = vadd.f32 %v6026, %v6114
    %v6116 = vpop.f32.mrf.mxu0
    %v6117 = vadd.f32 %v6028, %v6116
    %6118 = vmatmul.bf16.gmra.mxu0 %v3325
    %v6119 = vpop.f32.mrf.mxu0
    %v6120 = vadd.f32 %v6031, %v6119
    %v6121 = vpop.f32.mrf.mxu0
    %v6122 = vadd.f32 %v6033, %v6121
    %6123 = vmatmul.bf16.gmra.mxu0 %v3329
    %v6124 = vpop.f32.mrf.mxu0
    %v6125 = vadd.f32 %v6036, %v6124
    %v6126 = vpop.f32.mrf.mxu0
    %v6127 = vadd.f32 %v6038, %v6126
    %6128 = vmatmul.bf16.gmra.mxu0 %v3333
    %v6129 = vpop.f32.mrf.mxu0
    %v6130 = vadd.f32 %v6041, %v6129
    %v6131 = vpop.f32.mrf.mxu0
    %v6132 = vadd.f32 %v6043, %v6131
    %6133 = vmatmul.bf16.gmra.mxu0 %v3337
    %v6134 = vpop.f32.mrf.mxu0
    %v6135 = vadd.f32 %v6046, %v6134
    %v6136 = vpop.f32.mrf.mxu0
    %v6137 = vadd.f32 %v6048, %v6136
    %6138 = vmatmul.bf16.gmra.mxu0 %v3341
    %v6139 = vpop.f32.mrf.mxu0
    %v6140 = vadd.f32 %v6051, %v6139
    %v6141 = vpop.f32.mrf.mxu0
    %v6142 = vadd.f32 %v6053, %v6141
    %6143 = vdwg.mxu0
    %6144 = vmatpush.bf16.msra.mxu0 %v4573
    %6145 = vmatpush.bf16.msra.mxu0 %v4565
    %6146 = vmatpush.bf16.msra.mxu0 %v4557
    %6147 = vmatpush.bf16.msra.mxu0 %v4549
    %6148 = vmatpush.bf16.msra.mxu0 %v4541
    %6149 = vmatpush.bf16.msra.mxu0 %v4533
    %6150 = vmatpush.bf16.msra.mxu0 %v4525
    %6151 = vmatpush.bf16.msra.mxu0 %v4517
    %6152 = vmatmul.bf16.gmra.mxu0 %v3282
    %v6153 = vpop.f32.mrf.mxu0
    %v6154 = vadd.f32 %v6065, %v6153
    %v6155 = vpop.f32.mrf.mxu0
    %v6156 = vadd.f32 %v6067, %v6155
    %6157 = vmatmul.bf16.gmra.mxu0 %v3286
    %v6158 = vpop.f32.mrf.mxu0
    %v6159 = vadd.f32 %v6070, %v6158
    %v6160 = vpop.f32.mrf.mxu0
    %v6161 = vadd.f32 %v6072, %v6160
    %6162 = vmatmul.bf16.gmra.mxu0 %v3290
    %v6163 = vpop.f32.mrf.mxu0
    %v6164 = vadd.f32 %v6075, %v6163
    %v6165 = vpop.f32.mrf.mxu0
    %v6166 = vadd.f32 %v6077, %v6165
    %6167 = vmatmul.bf16.gmra.mxu0 %v3294
    %v6168 = vpop.f32.mrf.mxu0
    %v6169 = vadd.f32 %v6080, %v6168
    %v6170 = vpop.f32.mrf.mxu0
    %v6171 = vadd.f32 %v6082, %v6170
    %6172 = vmatmul.bf16.gmra.mxu0 %v3298
    %v6173 = vpop.f32.mrf.mxu0
    %v6174 = vadd.f32 %v6085, %v6173
    %v6175 = vpop.f32.mrf.mxu0
    %v6176 = vadd.f32 %v6087, %v6175
    %6177 = vmatmul.bf16.gmra.mxu0 %v3302
    %v6178 = vpop.f32.mrf.mxu0
    %v6179 = vadd.f32 %v6090, %v6178
    %v6180 = vpop.f32.mrf.mxu0
    %v6181 = vadd.f32 %v6092, %v6180
    %6182 = vmatmul.bf16.gmra.mxu0 %v3306
    %v6183 = vpop.f32.mrf.mxu0
    %v6184 = vadd.f32 %v6095, %v6183
    %v6185 = vpop.f32.mrf.mxu0
    %v6186 = vadd.f32 %v6097, %v6185
    %6187 = vmatmul.bf16.gmra.mxu0 %v3310
    %v6188 = vpop.f32.mrf.mxu0
    %v6189 = vadd.f32 %v6100, %v6188
    %v6190 = vpop.f32.mrf.mxu0
    %v6191 = vadd.f32 %v6102, %v6190
    %6192 = vmatmul.bf16.gmra.mxu0 %v3314
    %v6193 = vpop.f32.mrf.mxu0
    %v6194 = vadd.f32 %v6105, %v6193
    %v6195 = vpop.f32.mrf.mxu0
    %v6196 = vadd.f32 %v6107, %v6195
    %6197 = vmatmul.bf16.gmra.mxu0 %v3318
    %v6198 = vpop.f32.mrf.mxu0
    %v6199 = vadd.f32 %v6110, %v6198
    %v6200 = vpop.f32.mrf.mxu0
    %v6201 = vadd.f32 %v6112, %v6200
    %6202 = vmatmul.bf16.gmra.mxu0 %v3322
    %v6203 = vpop.f32.mrf.mxu0
    %v6204 = vadd.f32 %v6115, %v6203
    %v6205 = vpop.f32.mrf.mxu0
    %v6206 = vadd.f32 %v6117, %v6205
    %6207 = vmatmul.bf16.gmra.mxu0 %v3326
    %v6208 = vpop.f32.mrf.mxu0
    %v6209 = vadd.f32 %v6120, %v6208
    %v6210 = vpop.f32.mrf.mxu0
    %v6211 = vadd.f32 %v6122, %v6210
    %6212 = vmatmul.bf16.gmra.mxu0 %v3330
    %v6213 = vpop.f32.mrf.mxu0
    %v6214 = vadd.f32 %v6125, %v6213
    %v6215 = vpop.f32.mrf.mxu0
    %v6216 = vadd.f32 %v6127, %v6215
    %6217 = vmatmul.bf16.gmra.mxu0 %v3334
    %v6218 = vpop.f32.mrf.mxu0
    %v6219 = vadd.f32 %v6130, %v6218
    %v6220 = vpop.f32.mrf.mxu0
    %v6221 = vadd.f32 %v6132, %v6220
    %6222 = vmatmul.bf16.gmra.mxu0 %v3338
    %v6223 = vpop.f32.mrf.mxu0
    %v6224 = vadd.f32 %v6135, %v6223
    %v6225 = vpop.f32.mrf.mxu0
    %v6226 = vadd.f32 %v6137, %v6225
    %6227 = vmatmul.bf16.gmra.mxu0 %v3342
    %v6228 = vpop.f32.mrf.mxu0
    %v6229 = vadd.f32 %v6140, %v6228
    %v6230 = vpop.f32.mrf.mxu0
    %v6231 = vadd.f32 %v6142, %v6230
    %6232 = vdwg.mxu0
    %6233 = vmatpush.bf16.msra.mxu0 %v4637
    %6234 = vmatpush.bf16.msra.mxu0 %v4629
    %6235 = vmatpush.bf16.msra.mxu0 %v4621
    %6236 = vmatpush.bf16.msra.mxu0 %v4613
    %6237 = vmatpush.bf16.msra.mxu0 %v4605
    %6238 = vmatpush.bf16.msra.mxu0 %v4597
    %6239 = vmatpush.bf16.msra.mxu0 %v4589
    %6240 = vmatpush.bf16.msra.mxu0 %v4581
    %6241 = vmatmul.bf16.gmra.mxu0 %v3283
    %v6242 = vpop.f32.mrf.mxu0
    %v6243 = vadd.f32 %v6154, %v6242
    %v6244 = vpop.f32.mrf.mxu0
    %v6245 = vadd.f32 %v6156, %v6244
    %6246 = vmatmul.bf16.gmra.mxu0 %v3287
    %v6247 = vpop.f32.mrf.mxu0
    %v6248 = vadd.f32 %v6159, %v6247
    %v6249 = vpop.f32.mrf.mxu0
    %v6250 = vadd.f32 %v6161, %v6249
    %6251 = vmatmul.bf16.gmra.mxu0 %v3291
    %v6252 = vpop.f32.mrf.mxu0
    %v6253 = vadd.f32 %v6164, %v6252
    %v6254 = vpop.f32.mrf.mxu0
    %v6255 = vadd.f32 %v6166, %v6254
    %6256 = vmatmul.bf16.gmra.mxu0 %v3295
    %v6257 = vpop.f32.mrf.mxu0
    %v6258 = vadd.f32 %v6169, %v6257
    %v6259 = vpop.f32.mrf.mxu0
    %v6260 = vadd.f32 %v6171, %v6259
    %6261 = vmatmul.bf16.gmra.mxu0 %v3299
    %v6262 = vpop.f32.mrf.mxu0
    %v6263 = vadd.f32 %v6174, %v6262
    %v6264 = vpop.f32.mrf.mxu0
    %v6265 = vadd.f32 %v6176, %v6264
    %6266 = vmatmul.bf16.gmra.mxu0 %v3303
    %v6267 = vpop.f32.mrf.mxu0
    %v6268 = vadd.f32 %v6179, %v6267
    %v6269 = vpop.f32.mrf.mxu0
    %v6270 = vadd.f32 %v6181, %v6269
    %6271 = vmatmul.bf16.gmra.mxu0 %v3307
    %v6272 = vpop.f32.mrf.mxu0
    %v6273 = vadd.f32 %v6184, %v6272
    %v6274 = vpop.f32.mrf.mxu0
    %v6275 = vadd.f32 %v6186, %v6274
    %6276 = vmatmul.bf16.gmra.mxu0 %v3311
    %v6277 = vpop.f32.mrf.mxu0
    %v6278 = vadd.f32 %v6189, %v6277
    %v6279 = vpop.f32.mrf.mxu0
    %v6280 = vadd.f32 %v6191, %v6279
    %6281 = vmatmul.bf16.gmra.mxu0 %v3315
    %v6282 = vpop.f32.mrf.mxu0
    %v6283 = vadd.f32 %v6194, %v6282
    %v6284 = vpop.f32.mrf.mxu0
    %v6285 = vadd.f32 %v6196, %v6284
    %6286 = vmatmul.bf16.gmra.mxu0 %v3319
    %v6287 = vpop.f32.mrf.mxu0
    %v6288 = vadd.f32 %v6199, %v6287
    %v6289 = vpop.f32.mrf.mxu0
    %v6290 = vadd.f32 %v6201, %v6289
    %6291 = vmatmul.bf16.gmra.mxu0 %v3323
    %v6292 = vpop.f32.mrf.mxu0
    %v6293 = vadd.f32 %v6204, %v6292
    %v6294 = vpop.f32.mrf.mxu0
    %v6295 = vadd.f32 %v6206, %v6294
    %6296 = vmatmul.bf16.gmra.mxu0 %v3327
    %v6297 = vpop.f32.mrf.mxu0
    %v6298 = vadd.f32 %v6209, %v6297
    %v6299 = vpop.f32.mrf.mxu0
    %v6300 = vadd.f32 %v6211, %v6299
    %6301 = vmatmul.bf16.gmra.mxu0 %v3331
    %v6302 = vpop.f32.mrf.mxu0
    %v6303 = vadd.f32 %v6214, %v6302
    %v6304 = vpop.f32.mrf.mxu0
    %v6305 = vadd.f32 %v6216, %v6304
    %6306 = vmatmul.bf16.gmra.mxu0 %v3335
    %v6307 = vpop.f32.mrf.mxu0
    %v6308 = vadd.f32 %v6219, %v6307
    %v6309 = vpop.f32.mrf.mxu0
    %v6310 = vadd.f32 %v6221, %v6309
    %6311 = vmatmul.bf16.gmra.mxu0 %v3339
    %v6312 = vpop.f32.mrf.mxu0
    %v6313 = vadd.f32 %v6224, %v6312
    %v6314 = vpop.f32.mrf.mxu0
    %v6315 = vadd.f32 %v6226, %v6314
    %6316 = vmatmul.bf16.gmra.mxu0 %v3343
    %v6317 = vpop.f32.mrf.mxu0
    %v6318 = vadd.f32 %v6229, %v6317
    %v6319 = vpop.f32.mrf.mxu0
    %v6320 = vadd.f32 %v6231, %v6319
    %6321 = vdwg.mxu0
    %6322 = vmatpush.bf16.msra.mxu0 %v4446
    %6323 = vmatpush.bf16.msra.mxu0 %v4438
    %6324 = vmatpush.bf16.msra.mxu0 %v4430
    %6325 = vmatpush.bf16.msra.mxu0 %v4422
    %6326 = vmatpush.bf16.msra.mxu0 %v4414
    %6327 = vmatpush.bf16.msra.mxu0 %v4406
    %6328 = vmatpush.bf16.msra.mxu0 %v4398
    %6329 = vmatpush.bf16.msra.mxu0 %v4390
    %6330 = vmatmul.bf16.gmra.mxu0 %v3280
    %v6331 = vpop.f32.mrf.mxu0
    %v6332 = vadd.f32 %v3606, %v6331
    %v6333 = vpop.f32.mrf.mxu0
    %v6334 = vadd.f32 %v3606, %v6333
    %6335 = vmatmul.bf16.gmra.mxu0 %v3284
    %v6336 = vpop.f32.mrf.mxu0
    %v6337 = vadd.f32 %v3606, %v6336
    %v6338 = vpop.f32.mrf.mxu0
    %v6339 = vadd.f32 %v3606, %v6338
    %6340 = vmatmul.bf16.gmra.mxu0 %v3288
    %v6341 = vpop.f32.mrf.mxu0
    %v6342 = vadd.f32 %v3606, %v6341
    %v6343 = vpop.f32.mrf.mxu0
    %v6344 = vadd.f32 %v3606, %v6343
    %6345 = vmatmul.bf16.gmra.mxu0 %v3292
    %v6346 = vpop.f32.mrf.mxu0
    %v6347 = vadd.f32 %v3606, %v6346
    %v6348 = vpop.f32.mrf.mxu0
    %v6349 = vadd.f32 %v3606, %v6348
    %6350 = vmatmul.bf16.gmra.mxu0 %v3296
    %v6351 = vpop.f32.mrf.mxu0
    %v6352 = vadd.f32 %v3606, %v6351
    %v6353 = vpop.f32.mrf.mxu0
    %v6354 = vadd.f32 %v3606, %v6353
    %6355 = vmatmul.bf16.gmra.mxu0 %v3300
    %v6356 = vpop.f32.mrf.mxu0
    %v6357 = vadd.f32 %v3606, %v6356
    %v6358 = vpop.f32.mrf.mxu0
    %v6359 = vadd.f32 %v3606, %v6358
    %6360 = vmatmul.bf16.gmra.mxu0 %v3304
    %v6361 = vpop.f32.mrf.mxu0
    %v6362 = vadd.f32 %v3606, %v6361
    %v6363 = vpop.f32.mrf.mxu0
    %v6364 = vadd.f32 %v3606, %v6363
    %6365 = vmatmul.bf16.gmra.mxu0 %v3308
    %v6366 = vpop.f32.mrf.mxu0
    %v6367 = vadd.f32 %v3606, %v6366
    %v6368 = vpop.f32.mrf.mxu0
    %v6369 = vadd.f32 %v3606, %v6368
    %6370 = vmatmul.bf16.gmra.mxu0 %v3312
    %v6371 = vpop.f32.mrf.mxu0
    %v6372 = vadd.f32 %v3606, %v6371
    %v6373 = vpop.f32.mrf.mxu0
    %v6374 = vadd.f32 %v3606, %v6373
    %6375 = vmatmul.bf16.gmra.mxu0 %v3316
    %v6376 = vpop.f32.mrf.mxu0
    %v6377 = vadd.f32 %v3606, %v6376
    %v6378 = vpop.f32.mrf.mxu0
    %v6379 = vadd.f32 %v3606, %v6378
    %6380 = vmatmul.bf16.gmra.mxu0 %v3320
    %v6381 = vpop.f32.mrf.mxu0
    %v6382 = vadd.f32 %v3606, %v6381
    %v6383 = vpop.f32.mrf.mxu0
    %v6384 = vadd.f32 %v3606, %v6383
    %6385 = vmatmul.bf16.gmra.mxu0 %v3324
    %v6386 = vpop.f32.mrf.mxu0
    %v6387 = vadd.f32 %v3606, %v6386
    %v6388 = vpop.f32.mrf.mxu0
    %v6389 = vadd.f32 %v3606, %v6388
    %6390 = vmatmul.bf16.gmra.mxu0 %v3328
    %v6391 = vpop.f32.mrf.mxu0
    %v6392 = vadd.f32 %v3606, %v6391
    %v6393 = vpop.f32.mrf.mxu0
    %v6394 = vadd.f32 %v3606, %v6393
    %6395 = vmatmul.bf16.gmra.mxu0 %v3332
    %v6396 = vpop.f32.mrf.mxu0
    %v6397 = vadd.f32 %v3606, %v6396
    %v6398 = vpop.f32.mrf.mxu0
    %v6399 = vadd.f32 %v3606, %v6398
    %6400 = vmatmul.bf16.gmra.mxu0 %v3336
    %v6401 = vpop.f32.mrf.mxu0
    %v6402 = vadd.f32 %v3606, %v6401
    %v6403 = vpop.f32.mrf.mxu0
    %v6404 = vadd.f32 %v3606, %v6403
    %6405 = vmatmul.bf16.gmra.mxu0 %v3340
    %v6406 = vpop.f32.mrf.mxu0
    %v6407 = vadd.f32 %v3606, %v6406
    %v6408 = vpop.f32.mrf.mxu0
    %v6409 = vadd.f32 %v3606, %v6408
    %6410 = vdwg.mxu0
    %6411 = vmatpush.bf16.msra.mxu0 %v4510
    %6412 = vmatpush.bf16.msra.mxu0 %v4502
    %6413 = vmatpush.bf16.msra.mxu0 %v4494
    %6414 = vmatpush.bf16.msra.mxu0 %v4486
    %6415 = vmatpush.bf16.msra.mxu0 %v4478
    %6416 = vmatpush.bf16.msra.mxu0 %v4470
    %6417 = vmatpush.bf16.msra.mxu0 %v4462
    %6418 = vmatpush.bf16.msra.mxu0 %v4454
    %6419 = vmatmul.bf16.gmra.mxu0 %v3281
    %v6420 = vpop.f32.mrf.mxu0
    %v6421 = vadd.f32 %v6332, %v6420
    %v6422 = vpop.f32.mrf.mxu0
    %v6423 = vadd.f32 %v6334, %v6422
    %6424 = vmatmul.bf16.gmra.mxu0 %v3285
    %v6425 = vpop.f32.mrf.mxu0
    %v6426 = vadd.f32 %v6337, %v6425
    %v6427 = vpop.f32.mrf.mxu0
    %v6428 = vadd.f32 %v6339, %v6427
    %6429 = vmatmul.bf16.gmra.mxu0 %v3289
    %v6430 = vpop.f32.mrf.mxu0
    %v6431 = vadd.f32 %v6342, %v6430
    %v6432 = vpop.f32.mrf.mxu0
    %v6433 = vadd.f32 %v6344, %v6432
    %6434 = vmatmul.bf16.gmra.mxu0 %v3293
    %v6435 = vpop.f32.mrf.mxu0
    %v6436 = vadd.f32 %v6347, %v6435
    %v6437 = vpop.f32.mrf.mxu0
    %v6438 = vadd.f32 %v6349, %v6437
    %6439 = vmatmul.bf16.gmra.mxu0 %v3297
    %v6440 = vpop.f32.mrf.mxu0
    %v6441 = vadd.f32 %v6352, %v6440
    %v6442 = vpop.f32.mrf.mxu0
    %v6443 = vadd.f32 %v6354, %v6442
    %6444 = vmatmul.bf16.gmra.mxu0 %v3301
    %v6445 = vpop.f32.mrf.mxu0
    %v6446 = vadd.f32 %v6357, %v6445
    %v6447 = vpop.f32.mrf.mxu0
    %v6448 = vadd.f32 %v6359, %v6447
    %6449 = vmatmul.bf16.gmra.mxu0 %v3305
    %v6450 = vpop.f32.mrf.mxu0
    %v6451 = vadd.f32 %v6362, %v6450
    %v6452 = vpop.f32.mrf.mxu0
    %v6453 = vadd.f32 %v6364, %v6452
    %6454 = vmatmul.bf16.gmra.mxu0 %v3309
    %v6455 = vpop.f32.mrf.mxu0
    %v6456 = vadd.f32 %v6367, %v6455
    %v6457 = vpop.f32.mrf.mxu0
    %v6458 = vadd.f32 %v6369, %v6457
    %6459 = vmatmul.bf16.gmra.mxu0 %v3313
    %v6460 = vpop.f32.mrf.mxu0
    %v6461 = vadd.f32 %v6372, %v6460
    %v6462 = vpop.f32.mrf.mxu0
    %v6463 = vadd.f32 %v6374, %v6462
    %6464 = vmatmul.bf16.gmra.mxu0 %v3317
    %v6465 = vpop.f32.mrf.mxu0
    %v6466 = vadd.f32 %v6377, %v6465
    %v6467 = vpop.f32.mrf.mxu0
    %v6468 = vadd.f32 %v6379, %v6467
    %6469 = vmatmul.bf16.gmra.mxu0 %v3321
    %v6470 = vpop.f32.mrf.mxu0
    %v6471 = vadd.f32 %v6382, %v6470
    %v6472 = vpop.f32.mrf.mxu0
    %v6473 = vadd.f32 %v6384, %v6472
    %6474 = vmatmul.bf16.gmra.mxu0 %v3325
    %v6475 = vpop.f32.mrf.mxu0
    %v6476 = vadd.f32 %v6387, %v6475
    %v6477 = vpop.f32.mrf.mxu0
    %v6478 = vadd.f32 %v6389, %v6477
    %6479 = vmatmul.bf16.gmra.mxu0 %v3329
    %v6480 = vpop.f32.mrf.mxu0
    %v6481 = vadd.f32 %v6392, %v6480
    %v6482 = vpop.f32.mrf.mxu0
    %v6483 = vadd.f32 %v6394, %v6482
    %6484 = vmatmul.bf16.gmra.mxu0 %v3333
    %v6485 = vpop.f32.mrf.mxu0
    %v6486 = vadd.f32 %v6397, %v6485
    %v6487 = vpop.f32.mrf.mxu0
    %v6488 = vadd.f32 %v6399, %v6487
    %6489 = vmatmul.bf16.gmra.mxu0 %v3337
    %v6490 = vpop.f32.mrf.mxu0
    %v6491 = vadd.f32 %v6402, %v6490
    %v6492 = vpop.f32.mrf.mxu0
    %v6493 = vadd.f32 %v6404, %v6492
    %6494 = vmatmul.bf16.gmra.mxu0 %v3341
    %v6495 = vpop.f32.mrf.mxu0
    %v6496 = vadd.f32 %v6407, %v6495
    %v6497 = vpop.f32.mrf.mxu0
    %v6498 = vadd.f32 %v6409, %v6497
    %6499 = vdwg.mxu0
    %6500 = vmatpush.bf16.msra.mxu0 %v4574
    %6501 = vmatpush.bf16.msra.mxu0 %v4566
    %6502 = vmatpush.bf16.msra.mxu0 %v4558
    %6503 = vmatpush.bf16.msra.mxu0 %v4550
    %6504 = vmatpush.bf16.msra.mxu0 %v4542
    %6505 = vmatpush.bf16.msra.mxu0 %v4534
    %6506 = vmatpush.bf16.msra.mxu0 %v4526
    %6507 = vmatpush.bf16.msra.mxu0 %v4518
    %6508 = vmatmul.bf16.gmra.mxu0 %v3282
    %v6509 = vpop.f32.mrf.mxu0
    %v6510 = vadd.f32 %v6421, %v6509
    %v6511 = vpop.f32.mrf.mxu0
    %v6512 = vadd.f32 %v6423, %v6511
    %6513 = vmatmul.bf16.gmra.mxu0 %v3286
    %v6514 = vpop.f32.mrf.mxu0
    %v6515 = vadd.f32 %v6426, %v6514
    %v6516 = vpop.f32.mrf.mxu0
    %v6517 = vadd.f32 %v6428, %v6516
    %6518 = vmatmul.bf16.gmra.mxu0 %v3290
    %v6519 = vpop.f32.mrf.mxu0
    %v6520 = vadd.f32 %v6431, %v6519
    %v6521 = vpop.f32.mrf.mxu0
    %v6522 = vadd.f32 %v6433, %v6521
    %6523 = vmatmul.bf16.gmra.mxu0 %v3294
    %v6524 = vpop.f32.mrf.mxu0
    %v6525 = vadd.f32 %v6436, %v6524
    %v6526 = vpop.f32.mrf.mxu0
    %v6527 = vadd.f32 %v6438, %v6526
    %6528 = vmatmul.bf16.gmra.mxu0 %v3298
    %v6529 = vpop.f32.mrf.mxu0
    %v6530 = vadd.f32 %v6441, %v6529
    %v6531 = vpop.f32.mrf.mxu0
    %v6532 = vadd.f32 %v6443, %v6531
    %6533 = vmatmul.bf16.gmra.mxu0 %v3302
    %v6534 = vpop.f32.mrf.mxu0
    %v6535 = vadd.f32 %v6446, %v6534
    %v6536 = vpop.f32.mrf.mxu0
    %v6537 = vadd.f32 %v6448, %v6536
    %6538 = vmatmul.bf16.gmra.mxu0 %v3306
    %v6539 = vpop.f32.mrf.mxu0
    %v6540 = vadd.f32 %v6451, %v6539
    %v6541 = vpop.f32.mrf.mxu0
    %v6542 = vadd.f32 %v6453, %v6541
    %6543 = vmatmul.bf16.gmra.mxu0 %v3310
    %v6544 = vpop.f32.mrf.mxu0
    %v6545 = vadd.f32 %v6456, %v6544
    %v6546 = vpop.f32.mrf.mxu0
    %v6547 = vadd.f32 %v6458, %v6546
    %6548 = vmatmul.bf16.gmra.mxu0 %v3314
    %v6549 = vpop.f32.mrf.mxu0
    %v6550 = vadd.f32 %v6461, %v6549
    %v6551 = vpop.f32.mrf.mxu0
    %v6552 = vadd.f32 %v6463, %v6551
    %6553 = vmatmul.bf16.gmra.mxu0 %v3318
    %v6554 = vpop.f32.mrf.mxu0
    %v6555 = vadd.f32 %v6466, %v6554
    %v6556 = vpop.f32.mrf.mxu0
    %v6557 = vadd.f32 %v6468, %v6556
    %6558 = vmatmul.bf16.gmra.mxu0 %v3322
    %v6559 = vpop.f32.mrf.mxu0
    %v6560 = vadd.f32 %v6471, %v6559
    %v6561 = vpop.f32.mrf.mxu0
    %v6562 = vadd.f32 %v6473, %v6561
    %6563 = vmatmul.bf16.gmra.mxu0 %v3326
    %v6564 = vpop.f32.mrf.mxu0
    %v6565 = vadd.f32 %v6476, %v6564
    %v6566 = vpop.f32.mrf.mxu0
    %v6567 = vadd.f32 %v6478, %v6566
    %6568 = vmatmul.bf16.gmra.mxu0 %v3330
    %v6569 = vpop.f32.mrf.mxu0
    %v6570 = vadd.f32 %v6481, %v6569
    %v6571 = vpop.f32.mrf.mxu0
    %v6572 = vadd.f32 %v6483, %v6571
    %6573 = vmatmul.bf16.gmra.mxu0 %v3334
    %v6574 = vpop.f32.mrf.mxu0
    %v6575 = vadd.f32 %v6486, %v6574
    %v6576 = vpop.f32.mrf.mxu0
    %v6577 = vadd.f32 %v6488, %v6576
    %6578 = vmatmul.bf16.gmra.mxu0 %v3338
    %v6579 = vpop.f32.mrf.mxu0
    %v6580 = vadd.f32 %v6491, %v6579
    %v6581 = vpop.f32.mrf.mxu0
    %v6582 = vadd.f32 %v6493, %v6581
    %6583 = vmatmul.bf16.gmra.mxu0 %v3342
    %v6584 = vpop.f32.mrf.mxu0
    %v6585 = vadd.f32 %v6496, %v6584
    %v6586 = vpop.f32.mrf.mxu0
    %v6587 = vadd.f32 %v6498, %v6586
    %6588 = vdwg.mxu0
    %6589 = vmatpush.bf16.msra.mxu0 %v4638
    %6590 = vmatpush.bf16.msra.mxu0 %v4630
    %6591 = vmatpush.bf16.msra.mxu0 %v4622
    %6592 = vmatpush.bf16.msra.mxu0 %v4614
    %6593 = vmatpush.bf16.msra.mxu0 %v4606
    %6594 = vmatpush.bf16.msra.mxu0 %v4598
    %6595 = vmatpush.bf16.msra.mxu0 %v4590
    %6596 = vmatpush.bf16.msra.mxu0 %v4582
    %6597 = vmatmul.bf16.gmra.mxu0 %v3283
    %v6598 = vpop.f32.mrf.mxu0
    %v6599 = vadd.f32 %v6510, %v6598
    %v6600 = vpop.f32.mrf.mxu0
    %v6601 = vadd.f32 %v6512, %v6600
    %6602 = vmatmul.bf16.gmra.mxu0 %v3287
    %v6603 = vpop.f32.mrf.mxu0
    %v6604 = vadd.f32 %v6515, %v6603
    %v6605 = vpop.f32.mrf.mxu0
    %v6606 = vadd.f32 %v6517, %v6605
    %6607 = vmatmul.bf16.gmra.mxu0 %v3291
    %v6608 = vpop.f32.mrf.mxu0
    %v6609 = vadd.f32 %v6520, %v6608
    %v6610 = vpop.f32.mrf.mxu0
    %v6611 = vadd.f32 %v6522, %v6610
    %6612 = vmatmul.bf16.gmra.mxu0 %v3295
    %v6613 = vpop.f32.mrf.mxu0
    %v6614 = vadd.f32 %v6525, %v6613
    %v6615 = vpop.f32.mrf.mxu0
    %v6616 = vadd.f32 %v6527, %v6615
    %6617 = vmatmul.bf16.gmra.mxu0 %v3299
    %v6618 = vpop.f32.mrf.mxu0
    %v6619 = vadd.f32 %v6530, %v6618
    %v6620 = vpop.f32.mrf.mxu0
    %v6621 = vadd.f32 %v6532, %v6620
    %6622 = vmatmul.bf16.gmra.mxu0 %v3303
    %v6623 = vpop.f32.mrf.mxu0
    %v6624 = vadd.f32 %v6535, %v6623
    %v6625 = vpop.f32.mrf.mxu0
    %v6626 = vadd.f32 %v6537, %v6625
    %6627 = vmatmul.bf16.gmra.mxu0 %v3307
    %v6628 = vpop.f32.mrf.mxu0
    %v6629 = vadd.f32 %v6540, %v6628
    %v6630 = vpop.f32.mrf.mxu0
    %v6631 = vadd.f32 %v6542, %v6630
    %6632 = vmatmul.bf16.gmra.mxu0 %v3311
    %v6633 = vpop.f32.mrf.mxu0
    %v6634 = vadd.f32 %v6545, %v6633
    %v6635 = vpop.f32.mrf.mxu0
    %v6636 = vadd.f32 %v6547, %v6635
    %6637 = vmatmul.bf16.gmra.mxu0 %v3315
    %v6638 = vpop.f32.mrf.mxu0
    %v6639 = vadd.f32 %v6550, %v6638
    %v6640 = vpop.f32.mrf.mxu0
    %v6641 = vadd.f32 %v6552, %v6640
    %6642 = vmatmul.bf16.gmra.mxu0 %v3319
    %v6643 = vpop.f32.mrf.mxu0
    %v6644 = vadd.f32 %v6555, %v6643
    %v6645 = vpop.f32.mrf.mxu0
    %v6646 = vadd.f32 %v6557, %v6645
    %6647 = vmatmul.bf16.gmra.mxu0 %v3323
    %v6648 = vpop.f32.mrf.mxu0
    %v6649 = vadd.f32 %v6560, %v6648
    %v6650 = vpop.f32.mrf.mxu0
    %v6651 = vadd.f32 %v6562, %v6650
    %6652 = vmatmul.bf16.gmra.mxu0 %v3327
    %v6653 = vpop.f32.mrf.mxu0
    %v6654 = vadd.f32 %v6565, %v6653
    %v6655 = vpop.f32.mrf.mxu0
    %v6656 = vadd.f32 %v6567, %v6655
    %6657 = vmatmul.bf16.gmra.mxu0 %v3331
    %v6658 = vpop.f32.mrf.mxu0
    %v6659 = vadd.f32 %v6570, %v6658
    %v6660 = vpop.f32.mrf.mxu0
    %v6661 = vadd.f32 %v6572, %v6660
    %6662 = vmatmul.bf16.gmra.mxu0 %v3335
    %v6663 = vpop.f32.mrf.mxu0
    %v6664 = vadd.f32 %v6575, %v6663
    %v6665 = vpop.f32.mrf.mxu0
    %v6666 = vadd.f32 %v6577, %v6665
    %6667 = vmatmul.bf16.gmra.mxu0 %v3339
    %v6668 = vpop.f32.mrf.mxu0
    %v6669 = vadd.f32 %v6580, %v6668
    %v6670 = vpop.f32.mrf.mxu0
    %v6671 = vadd.f32 %v6582, %v6670
    %6672 = vmatmul.bf16.gmra.mxu0 %v3343
    %v6673 = vpop.f32.mrf.mxu0
    %v6674 = vadd.f32 %v6585, %v6673
    %v6675 = vpop.f32.mrf.mxu0
    %v6676 = vadd.f32 %v6587, %v6675
    %6677 = vdwg.mxu0
    %6678 = vmatpush.bf16.msra.mxu0 %v4447
    %6679 = vmatpush.bf16.msra.mxu0 %v4439
    %6680 = vmatpush.bf16.msra.mxu0 %v4431
    %6681 = vmatpush.bf16.msra.mxu0 %v4423
    %6682 = vmatpush.bf16.msra.mxu0 %v4415
    %6683 = vmatpush.bf16.msra.mxu0 %v4407
    %6684 = vmatpush.bf16.msra.mxu0 %v4399
    %6685 = vmatpush.bf16.msra.mxu0 %v4391
    %6686 = vmatmul.bf16.gmra.mxu0 %v3280
    %v6687 = vpop.f32.mrf.mxu0
    %v6688 = vadd.f32 %v3607, %v6687
    %v6689 = vpop.f32.mrf.mxu0
    %v6690 = vadd.f32 %v3607, %v6689
    %6691 = vmatmul.bf16.gmra.mxu0 %v3284
    %v6692 = vpop.f32.mrf.mxu0
    %v6693 = vadd.f32 %v3607, %v6692
    %v6694 = vpop.f32.mrf.mxu0
    %v6695 = vadd.f32 %v3607, %v6694
    %6696 = vmatmul.bf16.gmra.mxu0 %v3288
    %v6697 = vpop.f32.mrf.mxu0
    %v6698 = vadd.f32 %v3607, %v6697
    %v6699 = vpop.f32.mrf.mxu0
    %v6700 = vadd.f32 %v3607, %v6699
    %6701 = vmatmul.bf16.gmra.mxu0 %v3292
    %v6702 = vpop.f32.mrf.mxu0
    %v6703 = vadd.f32 %v3607, %v6702
    %v6704 = vpop.f32.mrf.mxu0
    %v6705 = vadd.f32 %v3607, %v6704
    %6706 = vmatmul.bf16.gmra.mxu0 %v3296
    %v6707 = vpop.f32.mrf.mxu0
    %v6708 = vadd.f32 %v3607, %v6707
    %v6709 = vpop.f32.mrf.mxu0
    %v6710 = vadd.f32 %v3607, %v6709
    %6711 = vmatmul.bf16.gmra.mxu0 %v3300
    %v6712 = vpop.f32.mrf.mxu0
    %v6713 = vadd.f32 %v3607, %v6712
    %v6714 = vpop.f32.mrf.mxu0
    %v6715 = vadd.f32 %v3607, %v6714
    %6716 = vmatmul.bf16.gmra.mxu0 %v3304
    %v6717 = vpop.f32.mrf.mxu0
    %v6718 = vadd.f32 %v3607, %v6717
    %v6719 = vpop.f32.mrf.mxu0
    %v6720 = vadd.f32 %v3607, %v6719
    %6721 = vmatmul.bf16.gmra.mxu0 %v3308
    %v6722 = vpop.f32.mrf.mxu0
    %v6723 = vadd.f32 %v3607, %v6722
    %v6724 = vpop.f32.mrf.mxu0
    %v6725 = vadd.f32 %v3607, %v6724
    %6726 = vmatmul.bf16.gmra.mxu0 %v3312
    %v6727 = vpop.f32.mrf.mxu0
    %v6728 = vadd.f32 %v3607, %v6727
    %v6729 = vpop.f32.mrf.mxu0
    %v6730 = vadd.f32 %v3607, %v6729
    %6731 = vmatmul.bf16.gmra.mxu0 %v3316
    %v6732 = vpop.f32.mrf.mxu0
    %v6733 = vadd.f32 %v3607, %v6732
    %v6734 = vpop.f32.mrf.mxu0
    %v6735 = vadd.f32 %v3607, %v6734
    %6736 = vmatmul.bf16.gmra.mxu0 %v3320
    %v6737 = vpop.f32.mrf.mxu0
    %v6738 = vadd.f32 %v3607, %v6737
    %v6739 = vpop.f32.mrf.mxu0
    %v6740 = vadd.f32 %v3607, %v6739
    %6741 = vmatmul.bf16.gmra.mxu0 %v3324
    %v6742 = vpop.f32.mrf.mxu0
    %v6743 = vadd.f32 %v3607, %v6742
    %v6744 = vpop.f32.mrf.mxu0
    %v6745 = vadd.f32 %v3607, %v6744
    %6746 = vmatmul.bf16.gmra.mxu0 %v3328
    %v6747 = vpop.f32.mrf.mxu0
    %v6748 = vadd.f32 %v3607, %v6747
    %v6749 = vpop.f32.mrf.mxu0
    %v6750 = vadd.f32 %v3607, %v6749
    %6751 = vmatmul.bf16.gmra.mxu0 %v3332
    %v6752 = vpop.f32.mrf.mxu0
    %v6753 = vadd.f32 %v3607, %v6752
    %v6754 = vpop.f32.mrf.mxu0
    %v6755 = vadd.f32 %v3607, %v6754
    %6756 = vmatmul.bf16.gmra.mxu0 %v3336
    %v6757 = vpop.f32.mrf.mxu0
    %v6758 = vadd.f32 %v3607, %v6757
    %v6759 = vpop.f32.mrf.mxu0
    %v6760 = vadd.f32 %v3607, %v6759
    %6761 = vmatmul.bf16.gmra.mxu0 %v3340
    %v6762 = vpop.f32.mrf.mxu0
    %v6763 = vadd.f32 %v3607, %v6762
    %v6764 = vpop.f32.mrf.mxu0
    %v6765 = vadd.f32 %v3607, %v6764
    %6766 = vdwg.mxu0
    %6767 = vmatpush.bf16.msra.mxu0 %v4511
    %6768 = vmatpush.bf16.msra.mxu0 %v4503
    %6769 = vmatpush.bf16.msra.mxu0 %v4495
    %6770 = vmatpush.bf16.msra.mxu0 %v4487
    %6771 = vmatpush.bf16.msra.mxu0 %v4479
    %6772 = vmatpush.bf16.msra.mxu0 %v4471
    %6773 = vmatpush.bf16.msra.mxu0 %v4463
    %6774 = vmatpush.bf16.msra.mxu0 %v4455
    %6775 = vmatmul.bf16.gmra.mxu0 %v3281
    %v6776 = vpop.f32.mrf.mxu0
    %v6777 = vadd.f32 %v6688, %v6776
    %v6778 = vpop.f32.mrf.mxu0
    %v6779 = vadd.f32 %v6690, %v6778
    %6780 = vmatmul.bf16.gmra.mxu0 %v3285
    %v6781 = vpop.f32.mrf.mxu0
    %v6782 = vadd.f32 %v6693, %v6781
    %v6783 = vpop.f32.mrf.mxu0
    %v6784 = vadd.f32 %v6695, %v6783
    %6785 = vmatmul.bf16.gmra.mxu0 %v3289
    %v6786 = vpop.f32.mrf.mxu0
    %v6787 = vadd.f32 %v6698, %v6786
    %v6788 = vpop.f32.mrf.mxu0
    %v6789 = vadd.f32 %v6700, %v6788
    %6790 = vmatmul.bf16.gmra.mxu0 %v3293
    %v6791 = vpop.f32.mrf.mxu0
    %v6792 = vadd.f32 %v6703, %v6791
    %v6793 = vpop.f32.mrf.mxu0
    %v6794 = vadd.f32 %v6705, %v6793
    %6795 = vmatmul.bf16.gmra.mxu0 %v3297
    %v6796 = vpop.f32.mrf.mxu0
    %v6797 = vadd.f32 %v6708, %v6796
    %v6798 = vpop.f32.mrf.mxu0
    %v6799 = vadd.f32 %v6710, %v6798
    %6800 = vmatmul.bf16.gmra.mxu0 %v3301
    %v6801 = vpop.f32.mrf.mxu0
    %v6802 = vadd.f32 %v6713, %v6801
    %v6803 = vpop.f32.mrf.mxu0
    %v6804 = vadd.f32 %v6715, %v6803
    %6805 = vmatmul.bf16.gmra.mxu0 %v3305
    %v6806 = vpop.f32.mrf.mxu0
    %v6807 = vadd.f32 %v6718, %v6806
    %v6808 = vpop.f32.mrf.mxu0
    %v6809 = vadd.f32 %v6720, %v6808
    %6810 = vmatmul.bf16.gmra.mxu0 %v3309
    %v6811 = vpop.f32.mrf.mxu0
    %v6812 = vadd.f32 %v6723, %v6811
    %v6813 = vpop.f32.mrf.mxu0
    %v6814 = vadd.f32 %v6725, %v6813
    %6815 = vmatmul.bf16.gmra.mxu0 %v3313
    %v6816 = vpop.f32.mrf.mxu0
    %v6817 = vadd.f32 %v6728, %v6816
    %v6818 = vpop.f32.mrf.mxu0
    %v6819 = vadd.f32 %v6730, %v6818
    %6820 = vmatmul.bf16.gmra.mxu0 %v3317
    %v6821 = vpop.f32.mrf.mxu0
    %v6822 = vadd.f32 %v6733, %v6821
    %v6823 = vpop.f32.mrf.mxu0
    %v6824 = vadd.f32 %v6735, %v6823
    %6825 = vmatmul.bf16.gmra.mxu0 %v3321
    %v6826 = vpop.f32.mrf.mxu0
    %v6827 = vadd.f32 %v6738, %v6826
    %v6828 = vpop.f32.mrf.mxu0
    %v6829 = vadd.f32 %v6740, %v6828
    %6830 = vmatmul.bf16.gmra.mxu0 %v3325
    %v6831 = vpop.f32.mrf.mxu0
    %v6832 = vadd.f32 %v6743, %v6831
    %v6833 = vpop.f32.mrf.mxu0
    %v6834 = vadd.f32 %v6745, %v6833
    %6835 = vmatmul.bf16.gmra.mxu0 %v3329
    %v6836 = vpop.f32.mrf.mxu0
    %v6837 = vadd.f32 %v6748, %v6836
    %v6838 = vpop.f32.mrf.mxu0
    %v6839 = vadd.f32 %v6750, %v6838
    %6840 = vmatmul.bf16.gmra.mxu0 %v3333
    %v6841 = vpop.f32.mrf.mxu0
    %v6842 = vadd.f32 %v6753, %v6841
    %v6843 = vpop.f32.mrf.mxu0
    %v6844 = vadd.f32 %v6755, %v6843
    %6845 = vmatmul.bf16.gmra.mxu0 %v3337
    %v6846 = vpop.f32.mrf.mxu0
    %v6847 = vadd.f32 %v6758, %v6846
    %v6848 = vpop.f32.mrf.mxu0
    %v6849 = vadd.f32 %v6760, %v6848
    %6850 = vmatmul.bf16.gmra.mxu0 %v3341
    %v6851 = vpop.f32.mrf.mxu0
    %v6852 = vadd.f32 %v6763, %v6851
    %v6853 = vpop.f32.mrf.mxu0
    %v6854 = vadd.f32 %v6765, %v6853
    %6855 = vdwg.mxu0
    %6856 = vmatpush.bf16.msra.mxu0 %v4575
    %6857 = vmatpush.bf16.msra.mxu0 %v4567
    %6858 = vmatpush.bf16.msra.mxu0 %v4559
    %6859 = vmatpush.bf16.msra.mxu0 %v4551
    %6860 = vmatpush.bf16.msra.mxu0 %v4543
    %6861 = vmatpush.bf16.msra.mxu0 %v4535
    %6862 = vmatpush.bf16.msra.mxu0 %v4527
    %6863 = vmatpush.bf16.msra.mxu0 %v4519
    %6864 = vmatmul.bf16.gmra.mxu0 %v3282
    %v6865 = vpop.f32.mrf.mxu0
    %v6866 = vadd.f32 %v6777, %v6865
    %v6867 = vpop.f32.mrf.mxu0
    %v6868 = vadd.f32 %v6779, %v6867
    %6869 = vmatmul.bf16.gmra.mxu0 %v3286
    %v6870 = vpop.f32.mrf.mxu0
    %v6871 = vadd.f32 %v6782, %v6870
    %v6872 = vpop.f32.mrf.mxu0
    %v6873 = vadd.f32 %v6784, %v6872
    %6874 = vmatmul.bf16.gmra.mxu0 %v3290
    %v6875 = vpop.f32.mrf.mxu0
    %v6876 = vadd.f32 %v6787, %v6875
    %v6877 = vpop.f32.mrf.mxu0
    %v6878 = vadd.f32 %v6789, %v6877
    %6879 = vmatmul.bf16.gmra.mxu0 %v3294
    %v6880 = vpop.f32.mrf.mxu0
    %v6881 = vadd.f32 %v6792, %v6880
    %v6882 = vpop.f32.mrf.mxu0
    %v6883 = vadd.f32 %v6794, %v6882
    %6884 = vmatmul.bf16.gmra.mxu0 %v3298
    %v6885 = vpop.f32.mrf.mxu0
    %v6886 = vadd.f32 %v6797, %v6885
    %v6887 = vpop.f32.mrf.mxu0
    %v6888 = vadd.f32 %v6799, %v6887
    %6889 = vmatmul.bf16.gmra.mxu0 %v3302
    %v6890 = vpop.f32.mrf.mxu0
    %v6891 = vadd.f32 %v6802, %v6890
    %v6892 = vpop.f32.mrf.mxu0
    %v6893 = vadd.f32 %v6804, %v6892
    %6894 = vmatmul.bf16.gmra.mxu0 %v3306
    %v6895 = vpop.f32.mrf.mxu0
    %v6896 = vadd.f32 %v6807, %v6895
    %v6897 = vpop.f32.mrf.mxu0
    %v6898 = vadd.f32 %v6809, %v6897
    %6899 = vmatmul.bf16.gmra.mxu0 %v3310
    %v6900 = vpop.f32.mrf.mxu0
    %v6901 = vadd.f32 %v6812, %v6900
    %v6902 = vpop.f32.mrf.mxu0
    %v6903 = vadd.f32 %v6814, %v6902
    %6904 = vmatmul.bf16.gmra.mxu0 %v3314
    %v6905 = vpop.f32.mrf.mxu0
    %v6906 = vadd.f32 %v6817, %v6905
    %v6907 = vpop.f32.mrf.mxu0
    %v6908 = vadd.f32 %v6819, %v6907
    %6909 = vmatmul.bf16.gmra.mxu0 %v3318
    %v6910 = vpop.f32.mrf.mxu0
    %v6911 = vadd.f32 %v6822, %v6910
    %v6912 = vpop.f32.mrf.mxu0
    %v6913 = vadd.f32 %v6824, %v6912
    %6914 = vmatmul.bf16.gmra.mxu0 %v3322
    %v6915 = vpop.f32.mrf.mxu0
    %v6916 = vadd.f32 %v6827, %v6915
    %v6917 = vpop.f32.mrf.mxu0
    %v6918 = vadd.f32 %v6829, %v6917
    %6919 = vmatmul.bf16.gmra.mxu0 %v3326
    %v6920 = vpop.f32.mrf.mxu0
    %v6921 = vadd.f32 %v6832, %v6920
    %v6922 = vpop.f32.mrf.mxu0
    %v6923 = vadd.f32 %v6834, %v6922
    %6924 = vmatmul.bf16.gmra.mxu0 %v3330
    %v6925 = vpop.f32.mrf.mxu0
    %v6926 = vadd.f32 %v6837, %v6925
    %v6927 = vpop.f32.mrf.mxu0
    %v6928 = vadd.f32 %v6839, %v6927
    %6929 = vmatmul.bf16.gmra.mxu0 %v3334
    %v6930 = vpop.f32.mrf.mxu0
    %v6931 = vadd.f32 %v6842, %v6930
    %v6932 = vpop.f32.mrf.mxu0
    %v6933 = vadd.f32 %v6844, %v6932
    %6934 = vmatmul.bf16.gmra.mxu0 %v3338
    %v6935 = vpop.f32.mrf.mxu0
    %v6936 = vadd.f32 %v6847, %v6935
    %v6937 = vpop.f32.mrf.mxu0
    %v6938 = vadd.f32 %v6849, %v6937
    %6939 = vmatmul.bf16.gmra.mxu0 %v3342
    %v6940 = vpop.f32.mrf.mxu0
    %v6941 = vadd.f32 %v6852, %v6940
    %v6942 = vpop.f32.mrf.mxu0
    %v6943 = vadd.f32 %v6854, %v6942
    %6944 = vdwg.mxu0
    %6945 = vmatpush.bf16.msra.mxu0 %v4639
    %6946 = vmatpush.bf16.msra.mxu0 %v4631
    %6947 = vmatpush.bf16.msra.mxu0 %v4623
    %6948 = vmatpush.bf16.msra.mxu0 %v4615
    %6949 = vmatpush.bf16.msra.mxu0 %v4607
    %6950 = vmatpush.bf16.msra.mxu0 %v4599
    %6951 = vmatpush.bf16.msra.mxu0 %v4591
    %6952 = vmatpush.bf16.msra.mxu0 %v4583
    %6953 = vmatmul.bf16.gmra.mxu0 %v3283
    %v6954 = vpop.f32.mrf.mxu0
    %v6955 = vadd.f32 %v6866, %v6954
    %v6956 = vpop.f32.mrf.mxu0
    %v6957 = vadd.f32 %v6868, %v6956
    %6958 = vmatmul.bf16.gmra.mxu0 %v3287
    %v6959 = vpop.f32.mrf.mxu0
    %v6960 = vadd.f32 %v6871, %v6959
    %v6961 = vpop.f32.mrf.mxu0
    %v6962 = vadd.f32 %v6873, %v6961
    %6963 = vmatmul.bf16.gmra.mxu0 %v3291
    %v6964 = vpop.f32.mrf.mxu0
    %v6965 = vadd.f32 %v6876, %v6964
    %v6966 = vpop.f32.mrf.mxu0
    %v6967 = vadd.f32 %v6878, %v6966
    %6968 = vmatmul.bf16.gmra.mxu0 %v3295
    %v6969 = vpop.f32.mrf.mxu0
    %v6970 = vadd.f32 %v6881, %v6969
    %v6971 = vpop.f32.mrf.mxu0
    %v6972 = vadd.f32 %v6883, %v6971
    %6973 = vmatmul.bf16.gmra.mxu0 %v3299
    %v6974 = vpop.f32.mrf.mxu0
    %v6975 = vadd.f32 %v6886, %v6974
    %v6976 = vpop.f32.mrf.mxu0
    %v6977 = vadd.f32 %v6888, %v6976
    %6978 = vmatmul.bf16.gmra.mxu0 %v3303
    %v6979 = vpop.f32.mrf.mxu0
    %v6980 = vadd.f32 %v6891, %v6979
    %v6981 = vpop.f32.mrf.mxu0
    %v6982 = vadd.f32 %v6893, %v6981
    %6983 = vmatmul.bf16.gmra.mxu0 %v3307
    %v6984 = vpop.f32.mrf.mxu0
    %v6985 = vadd.f32 %v6896, %v6984
    %v6986 = vpop.f32.mrf.mxu0
    %v6987 = vadd.f32 %v6898, %v6986
    %6988 = vmatmul.bf16.gmra.mxu0 %v3311
    %v6989 = vpop.f32.mrf.mxu0
    %v6990 = vadd.f32 %v6901, %v6989
    %v6991 = vpop.f32.mrf.mxu0
    %v6992 = vadd.f32 %v6903, %v6991
    %6993 = vmatmul.bf16.gmra.mxu0 %v3315
    %v6994 = vpop.f32.mrf.mxu0
    %v6995 = vadd.f32 %v6906, %v6994
    %v6996 = vpop.f32.mrf.mxu0
    %v6997 = vadd.f32 %v6908, %v6996
    %6998 = vmatmul.bf16.gmra.mxu0 %v3319
    %v6999 = vpop.f32.mrf.mxu0
    %v7000 = vadd.f32 %v6911, %v6999
    %v7001 = vpop.f32.mrf.mxu0
    %v7002 = vadd.f32 %v6913, %v7001
    %7003 = vmatmul.bf16.gmra.mxu0 %v3323
    %v7004 = vpop.f32.mrf.mxu0
    %v7005 = vadd.f32 %v6916, %v7004
    %v7006 = vpop.f32.mrf.mxu0
    %v7007 = vadd.f32 %v6918, %v7006
    %7008 = vmatmul.bf16.gmra.mxu0 %v3327
    %v7009 = vpop.f32.mrf.mxu0
    %v7010 = vadd.f32 %v6921, %v7009
    %v7011 = vpop.f32.mrf.mxu0
    %v7012 = vadd.f32 %v6923, %v7011
    %7013 = vmatmul.bf16.gmra.mxu0 %v3331
    %v7014 = vpop.f32.mrf.mxu0
    %v7015 = vadd.f32 %v6926, %v7014
    %v7016 = vpop.f32.mrf.mxu0
    %v7017 = vadd.f32 %v6928, %v7016
    %7018 = vmatmul.bf16.gmra.mxu0 %v3335
    %v7019 = vpop.f32.mrf.mxu0
    %v7020 = vadd.f32 %v6931, %v7019
    %v7021 = vpop.f32.mrf.mxu0
    %v7022 = vadd.f32 %v6933, %v7021
    %7023 = vmatmul.bf16.gmra.mxu0 %v3339
    %v7024 = vpop.f32.mrf.mxu0
    %v7025 = vadd.f32 %v6936, %v7024
    %v7026 = vpop.f32.mrf.mxu0
    %v7027 = vadd.f32 %v6938, %v7026
    %7028 = vmatmul.bf16.gmra.mxu0 %v3343
    %v7029 = vpop.f32.mrf.mxu0
    %v7030 = vadd.f32 %v6941, %v7029
    %v7031 = vpop.f32.mrf.mxu0
    %v7032 = vadd.f32 %v6943, %v7031
    %7033 = vdwg.mxu0
    %7034 = vmatpush.bf16.msra.mxu0 %v4448
    %7035 = vmatpush.bf16.msra.mxu0 %v4440
    %7036 = vmatpush.bf16.msra.mxu0 %v4432
    %7037 = vmatpush.bf16.msra.mxu0 %v4424
    %7038 = vmatpush.bf16.msra.mxu0 %v4416
    %7039 = vmatpush.bf16.msra.mxu0 %v4408
    %7040 = vmatpush.bf16.msra.mxu0 %v4400
    %7041 = vmatpush.bf16.msra.mxu0 %v4392
    %7042 = vmatmul.bf16.gmra.mxu0 %v3280
    %v7043 = vpop.f32.mrf.mxu0
    %v7044 = vadd.f32 %v3608, %v7043
    %v7045 = vpop.f32.mrf.mxu0
    %v7046 = vadd.f32 %v3608, %v7045
    %7047 = vmatmul.bf16.gmra.mxu0 %v3284
    %v7048 = vpop.f32.mrf.mxu0
    %v7049 = vadd.f32 %v3608, %v7048
    %v7050 = vpop.f32.mrf.mxu0
    %v7051 = vadd.f32 %v3608, %v7050
    %7052 = vmatmul.bf16.gmra.mxu0 %v3288
    %v7053 = vpop.f32.mrf.mxu0
    %v7054 = vadd.f32 %v3608, %v7053
    %v7055 = vpop.f32.mrf.mxu0
    %v7056 = vadd.f32 %v3608, %v7055
    %7057 = vmatmul.bf16.gmra.mxu0 %v3292
    %v7058 = vpop.f32.mrf.mxu0
    %v7059 = vadd.f32 %v3608, %v7058
    %v7060 = vpop.f32.mrf.mxu0
    %v7061 = vadd.f32 %v3608, %v7060
    %7062 = vmatmul.bf16.gmra.mxu0 %v3296
    %v7063 = vpop.f32.mrf.mxu0
    %v7064 = vadd.f32 %v3608, %v7063
    %v7065 = vpop.f32.mrf.mxu0
    %v7066 = vadd.f32 %v3608, %v7065
    %7067 = vmatmul.bf16.gmra.mxu0 %v3300
    %v7068 = vpop.f32.mrf.mxu0
    %v7069 = vadd.f32 %v3608, %v7068
    %v7070 = vpop.f32.mrf.mxu0
    %v7071 = vadd.f32 %v3608, %v7070
    %7072 = vmatmul.bf16.gmra.mxu0 %v3304
    %v7073 = vpop.f32.mrf.mxu0
    %v7074 = vadd.f32 %v3608, %v7073
    %v7075 = vpop.f32.mrf.mxu0
    %v7076 = vadd.f32 %v3608, %v7075
    %7077 = vmatmul.bf16.gmra.mxu0 %v3308
    %v7078 = vpop.f32.mrf.mxu0
    %v7079 = vadd.f32 %v3608, %v7078
    %v7080 = vpop.f32.mrf.mxu0
    %v7081 = vadd.f32 %v3608, %v7080
    %7082 = vmatmul.bf16.gmra.mxu0 %v3312
    %v7083 = vpop.f32.mrf.mxu0
    %v7084 = vadd.f32 %v3608, %v7083
    %v7085 = vpop.f32.mrf.mxu0
    %v7086 = vadd.f32 %v3608, %v7085
    %7087 = vmatmul.bf16.gmra.mxu0 %v3316
    %v7088 = vpop.f32.mrf.mxu0
    %v7089 = vadd.f32 %v3608, %v7088
    %v7090 = vpop.f32.mrf.mxu0
    %v7091 = vadd.f32 %v3608, %v7090
    %7092 = vmatmul.bf16.gmra.mxu0 %v3320
    %v7093 = vpop.f32.mrf.mxu0
    %v7094 = vadd.f32 %v3608, %v7093
    %v7095 = vpop.f32.mrf.mxu0
    %v7096 = vadd.f32 %v3608, %v7095
    %7097 = vmatmul.bf16.gmra.mxu0 %v3324
    %v7098 = vpop.f32.mrf.mxu0
    %v7099 = vadd.f32 %v3608, %v7098
    %v7100 = vpop.f32.mrf.mxu0
    %v7101 = vadd.f32 %v3608, %v7100
    %7102 = vmatmul.bf16.gmra.mxu0 %v3328
    %v7103 = vpop.f32.mrf.mxu0
    %v7104 = vadd.f32 %v3608, %v7103
    %v7105 = vpop.f32.mrf.mxu0
    %v7106 = vadd.f32 %v3608, %v7105
    %7107 = vmatmul.bf16.gmra.mxu0 %v3332
    %v7108 = vpop.f32.mrf.mxu0
    %v7109 = vadd.f32 %v3608, %v7108
    %v7110 = vpop.f32.mrf.mxu0
    %v7111 = vadd.f32 %v3608, %v7110
    %7112 = vmatmul.bf16.gmra.mxu0 %v3336
    %v7113 = vpop.f32.mrf.mxu0
    %v7114 = vadd.f32 %v3608, %v7113
    %v7115 = vpop.f32.mrf.mxu0
    %v7116 = vadd.f32 %v3608, %v7115
    %7117 = vmatmul.bf16.gmra.mxu0 %v3340
    %v7118 = vpop.f32.mrf.mxu0
    %v7119 = vadd.f32 %v3608, %v7118
    %v7120 = vpop.f32.mrf.mxu0
    %v7121 = vadd.f32 %v3608, %v7120
    %7122 = vdwg.mxu0
    %7123 = vmatpush.bf16.msra.mxu0 %v4512
    %7124 = vmatpush.bf16.msra.mxu0 %v4504
    %7125 = vmatpush.bf16.msra.mxu0 %v4496
    %7126 = vmatpush.bf16.msra.mxu0 %v4488
    %7127 = vmatpush.bf16.msra.mxu0 %v4480
    %7128 = vmatpush.bf16.msra.mxu0 %v4472
    %7129 = vmatpush.bf16.msra.mxu0 %v4464
    %7130 = vmatpush.bf16.msra.mxu0 %v4456
    %7131 = vmatmul.bf16.gmra.mxu0 %v3281
    %v7132 = vpop.f32.mrf.mxu0
    %v7133 = vadd.f32 %v7044, %v7132
    %v7134 = vpop.f32.mrf.mxu0
    %v7135 = vadd.f32 %v7046, %v7134
    %7136 = vmatmul.bf16.gmra.mxu0 %v3285
    %v7137 = vpop.f32.mrf.mxu0
    %v7138 = vadd.f32 %v7049, %v7137
    %v7139 = vpop.f32.mrf.mxu0
    %v7140 = vadd.f32 %v7051, %v7139
    %7141 = vmatmul.bf16.gmra.mxu0 %v3289
    %v7142 = vpop.f32.mrf.mxu0
    %v7143 = vadd.f32 %v7054, %v7142
    %v7144 = vpop.f32.mrf.mxu0
    %v7145 = vadd.f32 %v7056, %v7144
    %7146 = vmatmul.bf16.gmra.mxu0 %v3293
    %v7147 = vpop.f32.mrf.mxu0
    %v7148 = vadd.f32 %v7059, %v7147
    %v7149 = vpop.f32.mrf.mxu0
    %v7150 = vadd.f32 %v7061, %v7149
    %7151 = vmatmul.bf16.gmra.mxu0 %v3297
    %v7152 = vpop.f32.mrf.mxu0
    %v7153 = vadd.f32 %v7064, %v7152
    %v7154 = vpop.f32.mrf.mxu0
    %v7155 = vadd.f32 %v7066, %v7154
    %7156 = vmatmul.bf16.gmra.mxu0 %v3301
    %v7157 = vpop.f32.mrf.mxu0
    %v7158 = vadd.f32 %v7069, %v7157
    %v7159 = vpop.f32.mrf.mxu0
    %v7160 = vadd.f32 %v7071, %v7159
    %7161 = vmatmul.bf16.gmra.mxu0 %v3305
    %v7162 = vpop.f32.mrf.mxu0
    %v7163 = vadd.f32 %v7074, %v7162
    %v7164 = vpop.f32.mrf.mxu0
    %v7165 = vadd.f32 %v7076, %v7164
    %7166 = vmatmul.bf16.gmra.mxu0 %v3309
    %v7167 = vpop.f32.mrf.mxu0
    %v7168 = vadd.f32 %v7079, %v7167
    %v7169 = vpop.f32.mrf.mxu0
    %v7170 = vadd.f32 %v7081, %v7169
    %7171 = vmatmul.bf16.gmra.mxu0 %v3313
    %v7172 = vpop.f32.mrf.mxu0
    %v7173 = vadd.f32 %v7084, %v7172
    %v7174 = vpop.f32.mrf.mxu0
    %v7175 = vadd.f32 %v7086, %v7174
    %7176 = vmatmul.bf16.gmra.mxu0 %v3317
    %v7177 = vpop.f32.mrf.mxu0
    %v7178 = vadd.f32 %v7089, %v7177
    %v7179 = vpop.f32.mrf.mxu0
    %v7180 = vadd.f32 %v7091, %v7179
    %7181 = vmatmul.bf16.gmra.mxu0 %v3321
    %v7182 = vpop.f32.mrf.mxu0
    %v7183 = vadd.f32 %v7094, %v7182
    %v7184 = vpop.f32.mrf.mxu0
    %v7185 = vadd.f32 %v7096, %v7184
    %7186 = vmatmul.bf16.gmra.mxu0 %v3325
    %v7187 = vpop.f32.mrf.mxu0
    %v7188 = vadd.f32 %v7099, %v7187
    %v7189 = vpop.f32.mrf.mxu0
    %v7190 = vadd.f32 %v7101, %v7189
    %7191 = vmatmul.bf16.gmra.mxu0 %v3329
    %v7192 = vpop.f32.mrf.mxu0
    %v7193 = vadd.f32 %v7104, %v7192
    %v7194 = vpop.f32.mrf.mxu0
    %v7195 = vadd.f32 %v7106, %v7194
    %7196 = vmatmul.bf16.gmra.mxu0 %v3333
    %v7197 = vpop.f32.mrf.mxu0
    %v7198 = vadd.f32 %v7109, %v7197
    %v7199 = vpop.f32.mrf.mxu0
    %v7200 = vadd.f32 %v7111, %v7199
    %7201 = vmatmul.bf16.gmra.mxu0 %v3337
    %v7202 = vpop.f32.mrf.mxu0
    %v7203 = vadd.f32 %v7114, %v7202
    %v7204 = vpop.f32.mrf.mxu0
    %v7205 = vadd.f32 %v7116, %v7204
    %7206 = vmatmul.bf16.gmra.mxu0 %v3341
    %v7207 = vpop.f32.mrf.mxu0
    %v7208 = vadd.f32 %v7119, %v7207
    %v7209 = vpop.f32.mrf.mxu0
    %v7210 = vadd.f32 %v7121, %v7209
    %7211 = vdwg.mxu0
    %7212 = vmatpush.bf16.msra.mxu0 %v4576
    %7213 = vmatpush.bf16.msra.mxu0 %v4568
    %7214 = vmatpush.bf16.msra.mxu0 %v4560
    %7215 = vmatpush.bf16.msra.mxu0 %v4552
    %7216 = vmatpush.bf16.msra.mxu0 %v4544
    %7217 = vmatpush.bf16.msra.mxu0 %v4536
    %7218 = vmatpush.bf16.msra.mxu0 %v4528
    %7219 = vmatpush.bf16.msra.mxu0 %v4520
    %7220 = vmatmul.bf16.gmra.mxu0 %v3282
    %v7221 = vpop.f32.mrf.mxu0
    %v7222 = vadd.f32 %v7133, %v7221
    %v7223 = vpop.f32.mrf.mxu0
    %v7224 = vadd.f32 %v7135, %v7223
    %7225 = vmatmul.bf16.gmra.mxu0 %v3286
    %v7226 = vpop.f32.mrf.mxu0
    %v7227 = vadd.f32 %v7138, %v7226
    %v7228 = vpop.f32.mrf.mxu0
    %v7229 = vadd.f32 %v7140, %v7228
    %7230 = vmatmul.bf16.gmra.mxu0 %v3290
    %v7231 = vpop.f32.mrf.mxu0
    %v7232 = vadd.f32 %v7143, %v7231
    %v7233 = vpop.f32.mrf.mxu0
    %v7234 = vadd.f32 %v7145, %v7233
    %7235 = vmatmul.bf16.gmra.mxu0 %v3294
    %v7236 = vpop.f32.mrf.mxu0
    %v7237 = vadd.f32 %v7148, %v7236
    %v7238 = vpop.f32.mrf.mxu0
    %v7239 = vadd.f32 %v7150, %v7238
    %7240 = vmatmul.bf16.gmra.mxu0 %v3298
    %v7241 = vpop.f32.mrf.mxu0
    %v7242 = vadd.f32 %v7153, %v7241
    %v7243 = vpop.f32.mrf.mxu0
    %v7244 = vadd.f32 %v7155, %v7243
    %7245 = vmatmul.bf16.gmra.mxu0 %v3302
    %v7246 = vpop.f32.mrf.mxu0
    %v7247 = vadd.f32 %v7158, %v7246
    %v7248 = vpop.f32.mrf.mxu0
    %v7249 = vadd.f32 %v7160, %v7248
    %7250 = vmatmul.bf16.gmra.mxu0 %v3306
    %v7251 = vpop.f32.mrf.mxu0
    %v7252 = vadd.f32 %v7163, %v7251
    %v7253 = vpop.f32.mrf.mxu0
    %v7254 = vadd.f32 %v7165, %v7253
    %7255 = vmatmul.bf16.gmra.mxu0 %v3310
    %v7256 = vpop.f32.mrf.mxu0
    %v7257 = vadd.f32 %v7168, %v7256
    %v7258 = vpop.f32.mrf.mxu0
    %v7259 = vadd.f32 %v7170, %v7258
    %7260 = vmatmul.bf16.gmra.mxu0 %v3314
    %v7261 = vpop.f32.mrf.mxu0
    %v7262 = vadd.f32 %v7173, %v7261
    %v7263 = vpop.f32.mrf.mxu0
    %v7264 = vadd.f32 %v7175, %v7263
    %7265 = vmatmul.bf16.gmra.mxu0 %v3318
    %v7266 = vpop.f32.mrf.mxu0
    %v7267 = vadd.f32 %v7178, %v7266
    %v7268 = vpop.f32.mrf.mxu0
    %v7269 = vadd.f32 %v7180, %v7268
    %7270 = vmatmul.bf16.gmra.mxu0 %v3322
    %v7271 = vpop.f32.mrf.mxu0
    %v7272 = vadd.f32 %v7183, %v7271
    %v7273 = vpop.f32.mrf.mxu0
    %v7274 = vadd.f32 %v7185, %v7273
    %7275 = vmatmul.bf16.gmra.mxu0 %v3326
    %v7276 = vpop.f32.mrf.mxu0
    %v7277 = vadd.f32 %v7188, %v7276
    %v7278 = vpop.f32.mrf.mxu0
    %v7279 = vadd.f32 %v7190, %v7278
    %7280 = vmatmul.bf16.gmra.mxu0 %v3330
    %v7281 = vpop.f32.mrf.mxu0
    %v7282 = vadd.f32 %v7193, %v7281
    %v7283 = vpop.f32.mrf.mxu0
    %v7284 = vadd.f32 %v7195, %v7283
    %7285 = vmatmul.bf16.gmra.mxu0 %v3334
    %v7286 = vpop.f32.mrf.mxu0
    %v7287 = vadd.f32 %v7198, %v7286
    %v7288 = vpop.f32.mrf.mxu0
    %v7289 = vadd.f32 %v7200, %v7288
    %7290 = vmatmul.bf16.gmra.mxu0 %v3338
    %v7291 = vpop.f32.mrf.mxu0
    %v7292 = vadd.f32 %v7203, %v7291
    %v7293 = vpop.f32.mrf.mxu0
    %v7294 = vadd.f32 %v7205, %v7293
    %7295 = vmatmul.bf16.gmra.mxu0 %v3342
    %v7296 = vpop.f32.mrf.mxu0
    %v7297 = vadd.f32 %v7208, %v7296
    %v7298 = vpop.f32.mrf.mxu0
    %v7299 = vadd.f32 %v7210, %v7298
    %7300 = vdwg.mxu0
    %7301 = vmatpush.bf16.msra.mxu0 %v4640
    %7302 = vmatpush.bf16.msra.mxu0 %v4632
    %7303 = vmatpush.bf16.msra.mxu0 %v4624
    %7304 = vmatpush.bf16.msra.mxu0 %v4616
    %7305 = vmatpush.bf16.msra.mxu0 %v4608
    %7306 = vmatpush.bf16.msra.mxu0 %v4600
    %7307 = vmatpush.bf16.msra.mxu0 %v4592
    %7308 = vmatpush.bf16.msra.mxu0 %v4584
    %7309 = vmatmul.bf16.gmra.mxu0 %v3283
    %v7310 = vpop.f32.mrf.mxu0
    %v7311 = vadd.f32 %v7222, %v7310
    %v7312 = vpop.f32.mrf.mxu0
    %v7313 = vadd.f32 %v7224, %v7312
    %7314 = vmatmul.bf16.gmra.mxu0 %v3287
    %v7315 = vpop.f32.mrf.mxu0
    %v7316 = vadd.f32 %v7227, %v7315
    %v7317 = vpop.f32.mrf.mxu0
    %v7318 = vadd.f32 %v7229, %v7317
    %7319 = vmatmul.bf16.gmra.mxu0 %v3291
    %v7320 = vpop.f32.mrf.mxu0
    %v7321 = vadd.f32 %v7232, %v7320
    %v7322 = vpop.f32.mrf.mxu0
    %v7323 = vadd.f32 %v7234, %v7322
    %7324 = vmatmul.bf16.gmra.mxu0 %v3295
    %v7325 = vpop.f32.mrf.mxu0
    %v7326 = vadd.f32 %v7237, %v7325
    %v7327 = vpop.f32.mrf.mxu0
    %v7328 = vadd.f32 %v7239, %v7327
    %7329 = vmatmul.bf16.gmra.mxu0 %v3299
    %v7330 = vpop.f32.mrf.mxu0
    %v7331 = vadd.f32 %v7242, %v7330
    %v7332 = vpop.f32.mrf.mxu0
    %v7333 = vadd.f32 %v7244, %v7332
    %7334 = vmatmul.bf16.gmra.mxu0 %v3303
    %v7335 = vpop.f32.mrf.mxu0
    %v7336 = vadd.f32 %v7247, %v7335
    %v7337 = vpop.f32.mrf.mxu0
    %v7338 = vadd.f32 %v7249, %v7337
    %7339 = vmatmul.bf16.gmra.mxu0 %v3307
    %v7340 = vpop.f32.mrf.mxu0
    %v7341 = vadd.f32 %v7252, %v7340
    %v7342 = vpop.f32.mrf.mxu0
    %v7343 = vadd.f32 %v7254, %v7342
    %7344 = vmatmul.bf16.gmra.mxu0 %v3311
    %v7345 = vpop.f32.mrf.mxu0
    %v7346 = vadd.f32 %v7257, %v7345
    %v7347 = vpop.f32.mrf.mxu0
    %v7348 = vadd.f32 %v7259, %v7347
    %7349 = vmatmul.bf16.gmra.mxu0 %v3315
    %v7350 = vpop.f32.mrf.mxu0
    %v7351 = vadd.f32 %v7262, %v7350
    %v7352 = vpop.f32.mrf.mxu0
    %v7353 = vadd.f32 %v7264, %v7352
    %7354 = vmatmul.bf16.gmra.mxu0 %v3319
    %v7355 = vpop.f32.mrf.mxu0
    %v7356 = vadd.f32 %v7267, %v7355
    %v7357 = vpop.f32.mrf.mxu0
    %v7358 = vadd.f32 %v7269, %v7357
    %7359 = vmatmul.bf16.gmra.mxu0 %v3323
    %v7360 = vpop.f32.mrf.mxu0
    %v7361 = vadd.f32 %v7272, %v7360
    %v7362 = vpop.f32.mrf.mxu0
    %v7363 = vadd.f32 %v7274, %v7362
    %7364 = vmatmul.bf16.gmra.mxu0 %v3327
    %v7365 = vpop.f32.mrf.mxu0
    %v7366 = vadd.f32 %v7277, %v7365
    %v7367 = vpop.f32.mrf.mxu0
    %v7368 = vadd.f32 %v7279, %v7367
    %7369 = vmatmul.bf16.gmra.mxu0 %v3331
    %v7370 = vpop.f32.mrf.mxu0
    %v7371 = vadd.f32 %v7282, %v7370
    %v7372 = vpop.f32.mrf.mxu0
    %v7373 = vadd.f32 %v7284, %v7372
    %7374 = vmatmul.bf16.gmra.mxu0 %v3335
    %v7375 = vpop.f32.mrf.mxu0
    %v7376 = vadd.f32 %v7287, %v7375
    %v7377 = vpop.f32.mrf.mxu0
    %v7378 = vadd.f32 %v7289, %v7377
    %7379 = vmatmul.bf16.gmra.mxu0 %v3339
    %v7380 = vpop.f32.mrf.mxu0
    %v7381 = vadd.f32 %v7292, %v7380
    %v7382 = vpop.f32.mrf.mxu0
    %v7383 = vadd.f32 %v7294, %v7382
    %7384 = vmatmul.bf16.gmra.mxu0 %v3343
    %v7385 = vpop.f32.mrf.mxu0
    %v7386 = vadd.f32 %v7297, %v7385
    %v7387 = vpop.f32.mrf.mxu0
    %v7388 = vadd.f32 %v7299, %v7387
    %7389 = vdwg.mxu0
    %7390 = vmatpush.bf16.msra.mxu0 %v4449
    %7391 = vmatpush.bf16.msra.mxu0 %v4441
    %7392 = vmatpush.bf16.msra.mxu0 %v4433
    %7393 = vmatpush.bf16.msra.mxu0 %v4425
    %7394 = vmatpush.bf16.msra.mxu0 %v4417
    %7395 = vmatpush.bf16.msra.mxu0 %v4409
    %7396 = vmatpush.bf16.msra.mxu0 %v4401
    %7397 = vmatpush.bf16.msra.mxu0 %v4393
    %7398 = vmatmul.bf16.gmra.mxu0 %v3280
    %v7399 = vpop.f32.mrf.mxu0
    %v7400 = vadd.f32 %v3609, %v7399
    %v7401 = vpop.f32.mrf.mxu0
    %v7402 = vadd.f32 %v3609, %v7401
    %7403 = vmatmul.bf16.gmra.mxu0 %v3284
    %v7404 = vpop.f32.mrf.mxu0
    %v7405 = vadd.f32 %v3609, %v7404
    %v7406 = vpop.f32.mrf.mxu0
    %v7407 = vadd.f32 %v3609, %v7406
    %7408 = vmatmul.bf16.gmra.mxu0 %v3288
    %v7409 = vpop.f32.mrf.mxu0
    %v7410 = vadd.f32 %v3609, %v7409
    %v7411 = vpop.f32.mrf.mxu0
    %v7412 = vadd.f32 %v3609, %v7411
    %7413 = vmatmul.bf16.gmra.mxu0 %v3292
    %v7414 = vpop.f32.mrf.mxu0
    %v7415 = vadd.f32 %v3609, %v7414
    %v7416 = vpop.f32.mrf.mxu0
    %v7417 = vadd.f32 %v3609, %v7416
    %7418 = vmatmul.bf16.gmra.mxu0 %v3296
    %v7419 = vpop.f32.mrf.mxu0
    %v7420 = vadd.f32 %v3609, %v7419
    %v7421 = vpop.f32.mrf.mxu0
    %v7422 = vadd.f32 %v3609, %v7421
    %7423 = vmatmul.bf16.gmra.mxu0 %v3300
    %v7424 = vpop.f32.mrf.mxu0
    %v7425 = vadd.f32 %v3609, %v7424
    %v7426 = vpop.f32.mrf.mxu0
    %v7427 = vadd.f32 %v3609, %v7426
    %7428 = vmatmul.bf16.gmra.mxu0 %v3304
    %v7429 = vpop.f32.mrf.mxu0
    %v7430 = vadd.f32 %v3609, %v7429
    %v7431 = vpop.f32.mrf.mxu0
    %v7432 = vadd.f32 %v3609, %v7431
    %7433 = vmatmul.bf16.gmra.mxu0 %v3308
    %v7434 = vpop.f32.mrf.mxu0
    %v7435 = vadd.f32 %v3609, %v7434
    %v7436 = vpop.f32.mrf.mxu0
    %v7437 = vadd.f32 %v3609, %v7436
    %7438 = vmatmul.bf16.gmra.mxu0 %v3312
    %v7439 = vpop.f32.mrf.mxu0
    %v7440 = vadd.f32 %v3609, %v7439
    %v7441 = vpop.f32.mrf.mxu0
    %v7442 = vadd.f32 %v3609, %v7441
    %7443 = vmatmul.bf16.gmra.mxu0 %v3316
    %v7444 = vpop.f32.mrf.mxu0
    %v7445 = vadd.f32 %v3609, %v7444
    %v7446 = vpop.f32.mrf.mxu0
    %v7447 = vadd.f32 %v3609, %v7446
    %7448 = vmatmul.bf16.gmra.mxu0 %v3320
    %v7449 = vpop.f32.mrf.mxu0
    %v7450 = vadd.f32 %v3609, %v7449
    %v7451 = vpop.f32.mrf.mxu0
    %v7452 = vadd.f32 %v3609, %v7451
    %7453 = vmatmul.bf16.gmra.mxu0 %v3324
    %v7454 = vpop.f32.mrf.mxu0
    %v7455 = vadd.f32 %v3609, %v7454
    %v7456 = vpop.f32.mrf.mxu0
    %v7457 = vadd.f32 %v3609, %v7456
    %7458 = vmatmul.bf16.gmra.mxu0 %v3328
    %v7459 = vpop.f32.mrf.mxu0
    %v7460 = vadd.f32 %v3609, %v7459
    %v7461 = vpop.f32.mrf.mxu0
    %v7462 = vadd.f32 %v3609, %v7461
    %7463 = vmatmul.bf16.gmra.mxu0 %v3332
    %v7464 = vpop.f32.mrf.mxu0
    %v7465 = vadd.f32 %v3609, %v7464
    %v7466 = vpop.f32.mrf.mxu0
    %v7467 = vadd.f32 %v3609, %v7466
    %7468 = vmatmul.bf16.gmra.mxu0 %v3336
    %v7469 = vpop.f32.mrf.mxu0
    %v7470 = vadd.f32 %v3609, %v7469
    %v7471 = vpop.f32.mrf.mxu0
    %v7472 = vadd.f32 %v3609, %v7471
    %7473 = vmatmul.bf16.gmra.mxu0 %v3340
    %v7474 = vpop.f32.mrf.mxu0
    %v7475 = vadd.f32 %v3609, %v7474
    %v7476 = vpop.f32.mrf.mxu0
    %v7477 = vadd.f32 %v3609, %v7476
    %7478 = vdwg.mxu0
    %7479 = vmatpush.bf16.msra.mxu0 %v4513
    %7480 = vmatpush.bf16.msra.mxu0 %v4505
    %7481 = vmatpush.bf16.msra.mxu0 %v4497
    %7482 = vmatpush.bf16.msra.mxu0 %v4489
    %7483 = vmatpush.bf16.msra.mxu0 %v4481
    %7484 = vmatpush.bf16.msra.mxu0 %v4473
    %7485 = vmatpush.bf16.msra.mxu0 %v4465
    %7486 = vmatpush.bf16.msra.mxu0 %v4457
    %7487 = vmatmul.bf16.gmra.mxu0 %v3281
    %v7488 = vpop.f32.mrf.mxu0
    %v7489 = vadd.f32 %v7400, %v7488
    %v7490 = vpop.f32.mrf.mxu0
    %v7491 = vadd.f32 %v7402, %v7490
    %7492 = vmatmul.bf16.gmra.mxu0 %v3285
    %v7493 = vpop.f32.mrf.mxu0
    %v7494 = vadd.f32 %v7405, %v7493
    %v7495 = vpop.f32.mrf.mxu0
    %v7496 = vadd.f32 %v7407, %v7495
    %7497 = vmatmul.bf16.gmra.mxu0 %v3289
    %v7498 = vpop.f32.mrf.mxu0
    %v7499 = vadd.f32 %v7410, %v7498
    %v7500 = vpop.f32.mrf.mxu0
    %v7501 = vadd.f32 %v7412, %v7500
    %7502 = vmatmul.bf16.gmra.mxu0 %v3293
    %v7503 = vpop.f32.mrf.mxu0
    %v7504 = vadd.f32 %v7415, %v7503
    %v7505 = vpop.f32.mrf.mxu0
    %v7506 = vadd.f32 %v7417, %v7505
    %7507 = vmatmul.bf16.gmra.mxu0 %v3297
    %v7508 = vpop.f32.mrf.mxu0
    %v7509 = vadd.f32 %v7420, %v7508
    %v7510 = vpop.f32.mrf.mxu0
    %v7511 = vadd.f32 %v7422, %v7510
    %7512 = vmatmul.bf16.gmra.mxu0 %v3301
    %v7513 = vpop.f32.mrf.mxu0
    %v7514 = vadd.f32 %v7425, %v7513
    %v7515 = vpop.f32.mrf.mxu0
    %v7516 = vadd.f32 %v7427, %v7515
    %7517 = vmatmul.bf16.gmra.mxu0 %v3305
    %v7518 = vpop.f32.mrf.mxu0
    %v7519 = vadd.f32 %v7430, %v7518
    %v7520 = vpop.f32.mrf.mxu0
    %v7521 = vadd.f32 %v7432, %v7520
    %7522 = vmatmul.bf16.gmra.mxu0 %v3309
    %v7523 = vpop.f32.mrf.mxu0
    %v7524 = vadd.f32 %v7435, %v7523
    %v7525 = vpop.f32.mrf.mxu0
    %v7526 = vadd.f32 %v7437, %v7525
    %7527 = vmatmul.bf16.gmra.mxu0 %v3313
    %v7528 = vpop.f32.mrf.mxu0
    %v7529 = vadd.f32 %v7440, %v7528
    %v7530 = vpop.f32.mrf.mxu0
    %v7531 = vadd.f32 %v7442, %v7530
    %7532 = vmatmul.bf16.gmra.mxu0 %v3317
    %v7533 = vpop.f32.mrf.mxu0
    %v7534 = vadd.f32 %v7445, %v7533
    %v7535 = vpop.f32.mrf.mxu0
    %v7536 = vadd.f32 %v7447, %v7535
    %7537 = vmatmul.bf16.gmra.mxu0 %v3321
    %v7538 = vpop.f32.mrf.mxu0
    %v7539 = vadd.f32 %v7450, %v7538
    %v7540 = vpop.f32.mrf.mxu0
    %v7541 = vadd.f32 %v7452, %v7540
    %7542 = vmatmul.bf16.gmra.mxu0 %v3325
    %v7543 = vpop.f32.mrf.mxu0
    %v7544 = vadd.f32 %v7455, %v7543
    %v7545 = vpop.f32.mrf.mxu0
    %v7546 = vadd.f32 %v7457, %v7545
    %7547 = vmatmul.bf16.gmra.mxu0 %v3329
    %v7548 = vpop.f32.mrf.mxu0
    %v7549 = vadd.f32 %v7460, %v7548
    %v7550 = vpop.f32.mrf.mxu0
    %v7551 = vadd.f32 %v7462, %v7550
    %7552 = vmatmul.bf16.gmra.mxu0 %v3333
    %v7553 = vpop.f32.mrf.mxu0
    %v7554 = vadd.f32 %v7465, %v7553
    %v7555 = vpop.f32.mrf.mxu0
    %v7556 = vadd.f32 %v7467, %v7555
    %7557 = vmatmul.bf16.gmra.mxu0 %v3337
    %v7558 = vpop.f32.mrf.mxu0
    %v7559 = vadd.f32 %v7470, %v7558
    %v7560 = vpop.f32.mrf.mxu0
    %v7561 = vadd.f32 %v7472, %v7560
    %7562 = vmatmul.bf16.gmra.mxu0 %v3341
    %v7563 = vpop.f32.mrf.mxu0
    %v7564 = vadd.f32 %v7475, %v7563
    %v7565 = vpop.f32.mrf.mxu0
    %v7566 = vadd.f32 %v7477, %v7565
    %7567 = vdwg.mxu0
    %7568 = vmatpush.bf16.msra.mxu0 %v4577
    %7569 = vmatpush.bf16.msra.mxu0 %v4569
    %7570 = vmatpush.bf16.msra.mxu0 %v4561
    %7571 = vmatpush.bf16.msra.mxu0 %v4553
    %7572 = vmatpush.bf16.msra.mxu0 %v4545
    %7573 = vmatpush.bf16.msra.mxu0 %v4537
    %7574 = vmatpush.bf16.msra.mxu0 %v4529
    %7575 = vmatpush.bf16.msra.mxu0 %v4521
    %7576 = vmatmul.bf16.gmra.mxu0 %v3282
    %v7577 = vpop.f32.mrf.mxu0
    %v7578 = vadd.f32 %v7489, %v7577
    %v7579 = vpop.f32.mrf.mxu0
    %v7580 = vadd.f32 %v7491, %v7579
    %7581 = vmatmul.bf16.gmra.mxu0 %v3286
    %v7582 = vpop.f32.mrf.mxu0
    %v7583 = vadd.f32 %v7494, %v7582
    %v7584 = vpop.f32.mrf.mxu0
    %v7585 = vadd.f32 %v7496, %v7584
    %7586 = vmatmul.bf16.gmra.mxu0 %v3290
    %v7587 = vpop.f32.mrf.mxu0
    %v7588 = vadd.f32 %v7499, %v7587
    %v7589 = vpop.f32.mrf.mxu0
    %v7590 = vadd.f32 %v7501, %v7589
    %7591 = vmatmul.bf16.gmra.mxu0 %v3294
    %v7592 = vpop.f32.mrf.mxu0
    %v7593 = vadd.f32 %v7504, %v7592
    %v7594 = vpop.f32.mrf.mxu0
    %v7595 = vadd.f32 %v7506, %v7594
    %7596 = vmatmul.bf16.gmra.mxu0 %v3298
    %v7597 = vpop.f32.mrf.mxu0
    %v7598 = vadd.f32 %v7509, %v7597
    %v7599 = vpop.f32.mrf.mxu0
    %v7600 = vadd.f32 %v7511, %v7599
    %7601 = vmatmul.bf16.gmra.mxu0 %v3302
    %v7602 = vpop.f32.mrf.mxu0
    %v7603 = vadd.f32 %v7514, %v7602
    %v7604 = vpop.f32.mrf.mxu0
    %v7605 = vadd.f32 %v7516, %v7604
    %7606 = vmatmul.bf16.gmra.mxu0 %v3306
    %v7607 = vpop.f32.mrf.mxu0
    %v7608 = vadd.f32 %v7519, %v7607
    %v7609 = vpop.f32.mrf.mxu0
    %v7610 = vadd.f32 %v7521, %v7609
    %7611 = vmatmul.bf16.gmra.mxu0 %v3310
    %v7612 = vpop.f32.mrf.mxu0
    %v7613 = vadd.f32 %v7524, %v7612
    %v7614 = vpop.f32.mrf.mxu0
    %v7615 = vadd.f32 %v7526, %v7614
    %7616 = vmatmul.bf16.gmra.mxu0 %v3314
    %v7617 = vpop.f32.mrf.mxu0
    %v7618 = vadd.f32 %v7529, %v7617
    %v7619 = vpop.f32.mrf.mxu0
    %v7620 = vadd.f32 %v7531, %v7619
    %7621 = vmatmul.bf16.gmra.mxu0 %v3318
    %v7622 = vpop.f32.mrf.mxu0
    %v7623 = vadd.f32 %v7534, %v7622
    %v7624 = vpop.f32.mrf.mxu0
    %v7625 = vadd.f32 %v7536, %v7624
    %7626 = vmatmul.bf16.gmra.mxu0 %v3322
    %v7627 = vpop.f32.mrf.mxu0
    %v7628 = vadd.f32 %v7539, %v7627
    %v7629 = vpop.f32.mrf.mxu0
    %v7630 = vadd.f32 %v7541, %v7629
    %7631 = vmatmul.bf16.gmra.mxu0 %v3326
    %v7632 = vpop.f32.mrf.mxu0
    %v7633 = vadd.f32 %v7544, %v7632
    %v7634 = vpop.f32.mrf.mxu0
    %v7635 = vadd.f32 %v7546, %v7634
    %7636 = vmatmul.bf16.gmra.mxu0 %v3330
    %v7637 = vpop.f32.mrf.mxu0
    %v7638 = vadd.f32 %v7549, %v7637
    %v7639 = vpop.f32.mrf.mxu0
    %v7640 = vadd.f32 %v7551, %v7639
    %7641 = vmatmul.bf16.gmra.mxu0 %v3334
    %v7642 = vpop.f32.mrf.mxu0
    %v7643 = vadd.f32 %v7554, %v7642
    %v7644 = vpop.f32.mrf.mxu0
    %v7645 = vadd.f32 %v7556, %v7644
    %7646 = vmatmul.bf16.gmra.mxu0 %v3338
    %v7647 = vpop.f32.mrf.mxu0
    %v7648 = vadd.f32 %v7559, %v7647
    %v7649 = vpop.f32.mrf.mxu0
    %v7650 = vadd.f32 %v7561, %v7649
    %7651 = vmatmul.bf16.gmra.mxu0 %v3342
    %v7652 = vpop.f32.mrf.mxu0
    %v7653 = vadd.f32 %v7564, %v7652
    %v7654 = vpop.f32.mrf.mxu0
    %v7655 = vadd.f32 %v7566, %v7654
    %7656 = vdwg.mxu0
    %7657 = vmatpush.bf16.msra.mxu0 %v4641
    %7658 = vmatpush.bf16.msra.mxu0 %v4633
    %7659 = vmatpush.bf16.msra.mxu0 %v4625
    %7660 = vmatpush.bf16.msra.mxu0 %v4617
    %7661 = vmatpush.bf16.msra.mxu0 %v4609
    %7662 = vmatpush.bf16.msra.mxu0 %v4601
    %7663 = vmatpush.bf16.msra.mxu0 %v4593
    %7664 = vmatpush.bf16.msra.mxu0 %v4585
    %7665 = vmatmul.bf16.gmra.mxu0 %v3283
    %v7666 = vpop.f32.mrf.mxu0
    %v7667 = vadd.f32 %v7578, %v7666
    %v7668 = vpop.f32.mrf.mxu0
    %v7669 = vadd.f32 %v7580, %v7668
    %7670 = vmatmul.bf16.gmra.mxu0 %v3287
    %v7671 = vpop.f32.mrf.mxu0
    %v7672 = vadd.f32 %v7583, %v7671
    %v7673 = vpop.f32.mrf.mxu0
    %v7674 = vadd.f32 %v7585, %v7673
    %7675 = vmatmul.bf16.gmra.mxu0 %v3291
    %v7676 = vpop.f32.mrf.mxu0
    %v7677 = vadd.f32 %v7588, %v7676
    %v7678 = vpop.f32.mrf.mxu0
    %v7679 = vadd.f32 %v7590, %v7678
    %7680 = vmatmul.bf16.gmra.mxu0 %v3295
    %v7681 = vpop.f32.mrf.mxu0
    %v7682 = vadd.f32 %v7593, %v7681
    %v7683 = vpop.f32.mrf.mxu0
    %v7684 = vadd.f32 %v7595, %v7683
    %7685 = vmatmul.bf16.gmra.mxu0 %v3299
    %v7686 = vpop.f32.mrf.mxu0
    %v7687 = vadd.f32 %v7598, %v7686
    %v7688 = vpop.f32.mrf.mxu0
    %v7689 = vadd.f32 %v7600, %v7688
    %7690 = vmatmul.bf16.gmra.mxu0 %v3303
    %v7691 = vpop.f32.mrf.mxu0
    %v7692 = vadd.f32 %v7603, %v7691
    %v7693 = vpop.f32.mrf.mxu0
    %v7694 = vadd.f32 %v7605, %v7693
    %7695 = vmatmul.bf16.gmra.mxu0 %v3307
    %v7696 = vpop.f32.mrf.mxu0
    %v7697 = vadd.f32 %v7608, %v7696
    %v7698 = vpop.f32.mrf.mxu0
    %v7699 = vadd.f32 %v7610, %v7698
    %7700 = vmatmul.bf16.gmra.mxu0 %v3311
    %v7701 = vpop.f32.mrf.mxu0
    %v7702 = vadd.f32 %v7613, %v7701
    %v7703 = vpop.f32.mrf.mxu0
    %v7704 = vadd.f32 %v7615, %v7703
    %7705 = vmatmul.bf16.gmra.mxu0 %v3315
    %v7706 = vpop.f32.mrf.mxu0
    %v7707 = vadd.f32 %v7618, %v7706
    %v7708 = vpop.f32.mrf.mxu0
    %v7709 = vadd.f32 %v7620, %v7708
    %7710 = vmatmul.bf16.gmra.mxu0 %v3319
    %v7711 = vpop.f32.mrf.mxu0
    %v7712 = vadd.f32 %v7623, %v7711
    %v7713 = vpop.f32.mrf.mxu0
    %v7714 = vadd.f32 %v7625, %v7713
    %7715 = vmatmul.bf16.gmra.mxu0 %v3323
    %v7716 = vpop.f32.mrf.mxu0
    %v7717 = vadd.f32 %v7628, %v7716
    %v7718 = vpop.f32.mrf.mxu0
    %v7719 = vadd.f32 %v7630, %v7718
    %7720 = vmatmul.bf16.gmra.mxu0 %v3327
    %v7721 = vpop.f32.mrf.mxu0
    %v7722 = vadd.f32 %v7633, %v7721
    %v7723 = vpop.f32.mrf.mxu0
    %v7724 = vadd.f32 %v7635, %v7723
    %7725 = vmatmul.bf16.gmra.mxu0 %v3331
    %v7726 = vpop.f32.mrf.mxu0
    %v7727 = vadd.f32 %v7638, %v7726
    %v7728 = vpop.f32.mrf.mxu0
    %v7729 = vadd.f32 %v7640, %v7728
    %7730 = vmatmul.bf16.gmra.mxu0 %v3335
    %v7731 = vpop.f32.mrf.mxu0
    %v7732 = vadd.f32 %v7643, %v7731
    %v7733 = vpop.f32.mrf.mxu0
    %v7734 = vadd.f32 %v7645, %v7733
    %7735 = vmatmul.bf16.gmra.mxu0 %v3339
    %v7736 = vpop.f32.mrf.mxu0
    %v7737 = vadd.f32 %v7648, %v7736
    %v7738 = vpop.f32.mrf.mxu0
    %v7739 = vadd.f32 %v7650, %v7738
    %7740 = vmatmul.bf16.gmra.mxu0 %v3343
    %v7741 = vpop.f32.mrf.mxu0
    %v7742 = vadd.f32 %v7653, %v7741
    %v7743 = vpop.f32.mrf.mxu0
    %v7744 = vadd.f32 %v7655, %v7743
    %7745 = vdwg.mxu0
    %v7746 = vmax.f32 %v5175, 0.0
    %v7747 = vmax.f32 %v5531, 0.0
    %v7748 = vmax.f32 %v5887, 0.0
    %v7749 = vmax.f32 %v6243, 0.0
    %v7750 = vmax.f32 %v6599, 0.0
    %v7751 = vmax.f32 %v6955, 0.0
    %v7752 = vmax.f32 %v7311, 0.0
    %v7753 = vmax.f32 %v7667, 0.0
    %v7754 = vmax.f32 %v5177, 0.0
    %v7755 = vmax.f32 %v5533, 0.0
    %v7756 = vmax.f32 %v5889, 0.0
    %v7757 = vmax.f32 %v6245, 0.0
    %v7758 = vmax.f32 %v6601, 0.0
    %v7759 = vmax.f32 %v6957, 0.0
    %v7760 = vmax.f32 %v7313, 0.0
    %v7761 = vmax.f32 %v7669, 0.0
    %v7762 = vmax.f32 %v5180, 0.0
    %v7763 = vmax.f32 %v5536, 0.0
    %v7764 = vmax.f32 %v5892, 0.0
    %v7765 = vmax.f32 %v6248, 0.0
    %v7766 = vmax.f32 %v6604, 0.0
    %v7767 = vmax.f32 %v6960, 0.0
    %v7768 = vmax.f32 %v7316, 0.0
    %v7769 = vmax.f32 %v7672, 0.0
    %v7770 = vmax.f32 %v5182, 0.0
    %v7771 = vmax.f32 %v5538, 0.0
    %v7772 = vmax.f32 %v5894, 0.0
    %v7773 = vmax.f32 %v6250, 0.0
    %v7774 = vmax.f32 %v6606, 0.0
    %v7775 = vmax.f32 %v6962, 0.0
    %v7776 = vmax.f32 %v7318, 0.0
    %v7777 = vmax.f32 %v7674, 0.0
    %v7778 = vmax.f32 %v5185, 0.0
    %v7779 = vmax.f32 %v5541, 0.0
    %v7780 = vmax.f32 %v5897, 0.0
    %v7781 = vmax.f32 %v6253, 0.0
    %v7782 = vmax.f32 %v6609, 0.0
    %v7783 = vmax.f32 %v6965, 0.0
    %v7784 = vmax.f32 %v7321, 0.0
    %v7785 = vmax.f32 %v7677, 0.0
    %v7786 = vmax.f32 %v5187, 0.0
    %v7787 = vmax.f32 %v5543, 0.0
    %v7788 = vmax.f32 %v5899, 0.0
    %v7789 = vmax.f32 %v6255, 0.0
    %v7790 = vmax.f32 %v6611, 0.0
    %v7791 = vmax.f32 %v6967, 0.0
    %v7792 = vmax.f32 %v7323, 0.0
    %v7793 = vmax.f32 %v7679, 0.0
    %v7794 = vmax.f32 %v5190, 0.0
    %v7795 = vmax.f32 %v5546, 0.0
    %v7796 = vmax.f32 %v5902, 0.0
    %v7797 = vmax.f32 %v6258, 0.0
    %v7798 = vmax.f32 %v6614, 0.0
    %v7799 = vmax.f32 %v6970, 0.0
    %v7800 = vmax.f32 %v7326, 0.0
    %v7801 = vmax.f32 %v7682, 0.0
    %v7802 = vmax.f32 %v5192, 0.0
    %v7803 = vmax.f32 %v5548, 0.0
    %v7804 = vmax.f32 %v5904, 0.0
    %v7805 = vmax.f32 %v6260, 0.0
    %v7806 = vmax.f32 %v6616, 0.0
    %v7807 = vmax.f32 %v6972, 0.0
    %v7808 = vmax.f32 %v7328, 0.0
    %v7809 = vmax.f32 %v7684, 0.0
    %v7810 = vmax.f32 %v5195, 0.0
    %v7811 = vmax.f32 %v5551, 0.0
    %v7812 = vmax.f32 %v5907, 0.0
    %v7813 = vmax.f32 %v6263, 0.0
    %v7814 = vmax.f32 %v6619, 0.0
    %v7815 = vmax.f32 %v6975, 0.0
    %v7816 = vmax.f32 %v7331, 0.0
    %v7817 = vmax.f32 %v7687, 0.0
    %v7818 = vmax.f32 %v5197, 0.0
    %v7819 = vmax.f32 %v5553, 0.0
    %v7820 = vmax.f32 %v5909, 0.0
    %v7821 = vmax.f32 %v6265, 0.0
    %v7822 = vmax.f32 %v6621, 0.0
    %v7823 = vmax.f32 %v6977, 0.0
    %v7824 = vmax.f32 %v7333, 0.0
    %v7825 = vmax.f32 %v7689, 0.0
    %v7826 = vmax.f32 %v5200, 0.0
    %v7827 = vmax.f32 %v5556, 0.0
    %v7828 = vmax.f32 %v5912, 0.0
    %v7829 = vmax.f32 %v6268, 0.0
    %v7830 = vmax.f32 %v6624, 0.0
    %v7831 = vmax.f32 %v6980, 0.0
    %v7832 = vmax.f32 %v7336, 0.0
    %v7833 = vmax.f32 %v7692, 0.0
    %v7834 = vmax.f32 %v5202, 0.0
    %v7835 = vmax.f32 %v5558, 0.0
    %v7836 = vmax.f32 %v5914, 0.0
    %v7837 = vmax.f32 %v6270, 0.0
    %v7838 = vmax.f32 %v6626, 0.0
    %v7839 = vmax.f32 %v6982, 0.0
    %v7840 = vmax.f32 %v7338, 0.0
    %v7841 = vmax.f32 %v7694, 0.0
    %v7842 = vmax.f32 %v5205, 0.0
    %v7843 = vmax.f32 %v5561, 0.0
    %v7844 = vmax.f32 %v5917, 0.0
    %v7845 = vmax.f32 %v6273, 0.0
    %v7846 = vmax.f32 %v6629, 0.0
    %v7847 = vmax.f32 %v6985, 0.0
    %v7848 = vmax.f32 %v7341, 0.0
    %v7849 = vmax.f32 %v7697, 0.0
    %v7850 = vmax.f32 %v5207, 0.0
    %v7851 = vmax.f32 %v5563, 0.0
    %v7852 = vmax.f32 %v5919, 0.0
    %v7853 = vmax.f32 %v6275, 0.0
    %v7854 = vmax.f32 %v6631, 0.0
    %v7855 = vmax.f32 %v6987, 0.0
    %v7856 = vmax.f32 %v7343, 0.0
    %v7857 = vmax.f32 %v7699, 0.0
    %v7858 = vmax.f32 %v5210, 0.0
    %v7859 = vmax.f32 %v5566, 0.0
    %v7860 = vmax.f32 %v5922, 0.0
    %v7861 = vmax.f32 %v6278, 0.0
    %v7862 = vmax.f32 %v6634, 0.0
    %v7863 = vmax.f32 %v6990, 0.0
    %v7864 = vmax.f32 %v7346, 0.0
    %v7865 = vmax.f32 %v7702, 0.0
    %v7866 = vmax.f32 %v5212, 0.0
    %v7867 = vmax.f32 %v5568, 0.0
    %v7868 = vmax.f32 %v5924, 0.0
    %v7869 = vmax.f32 %v6280, 0.0
    %v7870 = vmax.f32 %v6636, 0.0
    %v7871 = vmax.f32 %v6992, 0.0
    %v7872 = vmax.f32 %v7348, 0.0
    %v7873 = vmax.f32 %v7704, 0.0
    %v7874 = vmax.f32 %v5215, 0.0
    %v7875 = vmax.f32 %v5571, 0.0
    %v7876 = vmax.f32 %v5927, 0.0
    %v7877 = vmax.f32 %v6283, 0.0
    %v7878 = vmax.f32 %v6639, 0.0
    %v7879 = vmax.f32 %v6995, 0.0
    %v7880 = vmax.f32 %v7351, 0.0
    %v7881 = vmax.f32 %v7707, 0.0
    %v7882 = vmax.f32 %v5217, 0.0
    %v7883 = vmax.f32 %v5573, 0.0
    %v7884 = vmax.f32 %v5929, 0.0
    %v7885 = vmax.f32 %v6285, 0.0
    %v7886 = vmax.f32 %v6641, 0.0
    %v7887 = vmax.f32 %v6997, 0.0
    %v7888 = vmax.f32 %v7353, 0.0
    %v7889 = vmax.f32 %v7709, 0.0
    %v7890 = vmax.f32 %v5220, 0.0
    %v7891 = vmax.f32 %v5576, 0.0
    %v7892 = vmax.f32 %v5932, 0.0
    %v7893 = vmax.f32 %v6288, 0.0
    %v7894 = vmax.f32 %v6644, 0.0
    %v7895 = vmax.f32 %v7000, 0.0
    %v7896 = vmax.f32 %v7356, 0.0
    %v7897 = vmax.f32 %v7712, 0.0
    %v7898 = vmax.f32 %v5222, 0.0
    %v7899 = vmax.f32 %v5578, 0.0
    %v7900 = vmax.f32 %v5934, 0.0
    %v7901 = vmax.f32 %v6290, 0.0
    %v7902 = vmax.f32 %v6646, 0.0
    %v7903 = vmax.f32 %v7002, 0.0
    %v7904 = vmax.f32 %v7358, 0.0
    %v7905 = vmax.f32 %v7714, 0.0
    %v7906 = vmax.f32 %v5225, 0.0
    %v7907 = vmax.f32 %v5581, 0.0
    %v7908 = vmax.f32 %v5937, 0.0
    %v7909 = vmax.f32 %v6293, 0.0
    %v7910 = vmax.f32 %v6649, 0.0
    %v7911 = vmax.f32 %v7005, 0.0
    %v7912 = vmax.f32 %v7361, 0.0
    %v7913 = vmax.f32 %v7717, 0.0
    %v7914 = vmax.f32 %v5227, 0.0
    %v7915 = vmax.f32 %v5583, 0.0
    %v7916 = vmax.f32 %v5939, 0.0
    %v7917 = vmax.f32 %v6295, 0.0
    %v7918 = vmax.f32 %v6651, 0.0
    %v7919 = vmax.f32 %v7007, 0.0
    %v7920 = vmax.f32 %v7363, 0.0
    %v7921 = vmax.f32 %v7719, 0.0
    %v7922 = vmax.f32 %v5230, 0.0
    %v7923 = vmax.f32 %v5586, 0.0
    %v7924 = vmax.f32 %v5942, 0.0
    %v7925 = vmax.f32 %v6298, 0.0
    %v7926 = vmax.f32 %v6654, 0.0
    %v7927 = vmax.f32 %v7010, 0.0
    %v7928 = vmax.f32 %v7366, 0.0
    %v7929 = vmax.f32 %v7722, 0.0
    %v7930 = vmax.f32 %v5232, 0.0
    %v7931 = vmax.f32 %v5588, 0.0
    %v7932 = vmax.f32 %v5944, 0.0
    %v7933 = vmax.f32 %v6300, 0.0
    %v7934 = vmax.f32 %v6656, 0.0
    %v7935 = vmax.f32 %v7012, 0.0
    %v7936 = vmax.f32 %v7368, 0.0
    %v7937 = vmax.f32 %v7724, 0.0
    %v7938 = vmax.f32 %v5235, 0.0
    %v7939 = vmax.f32 %v5591, 0.0
    %v7940 = vmax.f32 %v5947, 0.0
    %v7941 = vmax.f32 %v6303, 0.0
    %v7942 = vmax.f32 %v6659, 0.0
    %v7943 = vmax.f32 %v7015, 0.0
    %v7944 = vmax.f32 %v7371, 0.0
    %v7945 = vmax.f32 %v7727, 0.0
    %v7946 = vmax.f32 %v5237, 0.0
    %v7947 = vmax.f32 %v5593, 0.0
    %v7948 = vmax.f32 %v5949, 0.0
    %v7949 = vmax.f32 %v6305, 0.0
    %v7950 = vmax.f32 %v6661, 0.0
    %v7951 = vmax.f32 %v7017, 0.0
    %v7952 = vmax.f32 %v7373, 0.0
    %v7953 = vmax.f32 %v7729, 0.0
    %v7954 = vmax.f32 %v5240, 0.0
    %v7955 = vmax.f32 %v5596, 0.0
    %v7956 = vmax.f32 %v5952, 0.0
    %v7957 = vmax.f32 %v6308, 0.0
    %v7958 = vmax.f32 %v6664, 0.0
    %v7959 = vmax.f32 %v7020, 0.0
    %v7960 = vmax.f32 %v7376, 0.0
    %v7961 = vmax.f32 %v7732, 0.0
    %v7962 = vmax.f32 %v5242, 0.0
    %v7963 = vmax.f32 %v5598, 0.0
    %v7964 = vmax.f32 %v5954, 0.0
    %v7965 = vmax.f32 %v6310, 0.0
    %v7966 = vmax.f32 %v6666, 0.0
    %v7967 = vmax.f32 %v7022, 0.0
    %v7968 = vmax.f32 %v7378, 0.0
    %v7969 = vmax.f32 %v7734, 0.0
    %v7970 = vmax.f32 %v5245, 0.0
    %v7971 = vmax.f32 %v5601, 0.0
    %v7972 = vmax.f32 %v5957, 0.0
    %v7973 = vmax.f32 %v6313, 0.0
    %v7974 = vmax.f32 %v6669, 0.0
    %v7975 = vmax.f32 %v7025, 0.0
    %v7976 = vmax.f32 %v7381, 0.0
    %v7977 = vmax.f32 %v7737, 0.0
    %v7978 = vmax.f32 %v5247, 0.0
    %v7979 = vmax.f32 %v5603, 0.0
    %v7980 = vmax.f32 %v5959, 0.0
    %v7981 = vmax.f32 %v6315, 0.0
    %v7982 = vmax.f32 %v6671, 0.0
    %v7983 = vmax.f32 %v7027, 0.0
    %v7984 = vmax.f32 %v7383, 0.0
    %v7985 = vmax.f32 %v7739, 0.0
    %v7986 = vmax.f32 %v5250, 0.0
    %v7987 = vmax.f32 %v5606, 0.0
    %v7988 = vmax.f32 %v5962, 0.0
    %v7989 = vmax.f32 %v6318, 0.0
    %v7990 = vmax.f32 %v6674, 0.0
    %v7991 = vmax.f32 %v7030, 0.0
    %v7992 = vmax.f32 %v7386, 0.0
    %v7993 = vmax.f32 %v7742, 0.0
    %v7994 = vmax.f32 %v5252, 0.0
    %v7995 = vmax.f32 %v5608, 0.0
    %v7996 = vmax.f32 %v5964, 0.0
    %v7997 = vmax.f32 %v6320, 0.0
    %v7998 = vmax.f32 %v6676, 0.0
    %v7999 = vmax.f32 %v7032, 0.0
    %v8000 = vmax.f32 %v7388, 0.0
    %v8001 = vmax.f32 %v7744, 0.0
    %8002 = vst [vmem:[#allocation8] sm:$0xff] %v7746
    %8003 = vst [vmem:[#allocation8 + $0x8] sm:$0xff] %v7747
    %8004 = vst [vmem:[#allocation8 + $0x10] sm:$0xff] %v7748
    %8005 = vst [vmem:[#allocation8 + $0x18] sm:$0xff] %v7749
    %8006 = vst [vmem:[#allocation8 + $0x20] sm:$0xff] %v7750
    %8007 = vst [vmem:[#allocation8 + $0x28] sm:$0xff] %v7751
    %8008 = vst [vmem:[#allocation8 + $0x30] sm:$0xff] %v7752
    %8009 = vst [vmem:[#allocation8 + $0x38] sm:$0xff] %v7753
    %8010 = vst [vmem:[#allocation8 + $0x40] sm:$0xff] %v7754
    %8011 = vst [vmem:[#allocation8 + $0x48] sm:$0xff] %v7755
    %8012 = vst [vmem:[#allocation8 + $0x50] sm:$0xff] %v7756
    %8013 = vst [vmem:[#allocation8 + $0x58] sm:$0xff] %v7757
    %8014 = vst [vmem:[#allocation8 + $0x60] sm:$0xff] %v7758
    %8015 = vst [vmem:[#allocation8 + $0x68] sm:$0xff] %v7759
    %8016 = vst [vmem:[#allocation8 + $0x70] sm:$0xff] %v7760
    %8017 = vst [vmem:[#allocation8 + $0x78] sm:$0xff] %v7761
    %8018 = vst [vmem:[#allocation8 + $0x80] sm:$0xff] %v7762
    %8019 = vst [vmem:[#allocation8 + $0x88] sm:$0xff] %v7763
    %8020 = vst [vmem:[#allocation8 + $0x90] sm:$0xff] %v7764
    %8021 = vst [vmem:[#allocation8 + $0x98] sm:$0xff] %v7765
    %8022 = vst [vmem:[#allocation8 + $0xa0] sm:$0xff] %v7766
    %8023 = vst [vmem:[#allocation8 + $0xa8] sm:$0xff] %v7767
    %8024 = vst [vmem:[#allocation8 + $0xb0] sm:$0xff] %v7768
    %8025 = vst [vmem:[#allocation8 + $0xb8] sm:$0xff] %v7769
    %8026 = vst [vmem:[#allocation8 + $0xc0] sm:$0xff] %v7770
    %8027 = vst [vmem:[#allocation8 + $0xc8] sm:$0xff] %v7771
    %8028 = vst [vmem:[#allocation8 + $0xd0] sm:$0xff] %v7772
    %8029 = vst [vmem:[#allocation8 + $0xd8] sm:$0xff] %v7773
    %8030 = vst [vmem:[#allocation8 + $0xe0] sm:$0xff] %v7774
    %8031 = vst [vmem:[#allocation8 + $0xe8] sm:$0xff] %v7775
    %8032 = vst [vmem:[#allocation8 + $0xf0] sm:$0xff] %v7776
    %8033 = vst [vmem:[#allocation8 + $0xf8] sm:$0xff] %v7777
    %8034 = vst [vmem:[#allocation8 + $0x100] sm:$0xff] %v7778
    %8035 = vst [vmem:[#allocation8 + $0x108] sm:$0xff] %v7779
    %8036 = vst [vmem:[#allocation8 + $0x110] sm:$0xff] %v7780
    %8037 = vst [vmem:[#allocation8 + $0x118] sm:$0xff] %v7781
    %8038 = vst [vmem:[#allocation8 + $0x120] sm:$0xff] %v7782
    %8039 = vst [vmem:[#allocation8 + $0x128] sm:$0xff] %v7783
    %8040 = vst [vmem:[#allocation8 + $0x130] sm:$0xff] %v7784
    %8041 = vst [vmem:[#allocation8 + $0x138] sm:$0xff] %v7785
    %8042 = vst [vmem:[#allocation8 + $0x140] sm:$0xff] %v7786
    %8043 = vst [vmem:[#allocation8 + $0x148] sm:$0xff] %v7787
    %8044 = vst [vmem:[#allocation8 + $0x150] sm:$0xff] %v7788
    %8045 = vst [vmem:[#allocation8 + $0x158] sm:$0xff] %v7789
    %8046 = vst [vmem:[#allocation8 + $0x160] sm:$0xff] %v7790
    %8047 = vst [vmem:[#allocation8 + $0x168] sm:$0xff] %v7791
    %8048 = vst [vmem:[#allocation8 + $0x170] sm:$0xff] %v7792
    %8049 = vst [vmem:[#allocation8 + $0x178] sm:$0xff] %v7793
    %8050 = vst [vmem:[#allocation8 + $0x180] sm:$0xff] %v7794
    %8051 = vst [vmem:[#allocation8 + $0x188] sm:$0xff] %v7795
    %8052 = vst [vmem:[#allocation8 + $0x190] sm:$0xff] %v7796
    %8053 = vst [vmem:[#allocation8 + $0x198] sm:$0xff] %v7797
    %8054 = vst [vmem:[#allocation8 + $0x1a0] sm:$0xff] %v7798
    %8055 = vst [vmem:[#allocation8 + $0x1a8] sm:$0xff] %v7799
    %8056 = vst [vmem:[#allocation8 + $0x1b0] sm:$0xff] %v7800
    %8057 = vst [vmem:[#allocation8 + $0x1b8] sm:$0xff] %v7801
    %8058 = vst [vmem:[#allocation8 + $0x1c0] sm:$0xff] %v7802
    %8059 = vst [vmem:[#allocation8 + $0x1c8] sm:$0xff] %v7803
    %8060 = vst [vmem:[#allocation8 + $0x1d0] sm:$0xff] %v7804
    %8061 = vst [vmem:[#allocation8 + $0x1d8] sm:$0xff] %v7805
    %8062 = vst [vmem:[#allocation8 + $0x1e0] sm:$0xff] %v7806
    %8063 = vst [vmem:[#allocation8 + $0x1e8] sm:$0xff] %v7807
    %8064 = vst [vmem:[#allocation8 + $0x1f0] sm:$0xff] %v7808
    %8065 = vst [vmem:[#allocation8 + $0x1f8] sm:$0xff] %v7809
    %8066 = vst [vmem:[#allocation8 + $0x200] sm:$0xff] %v7810
    %8067 = vst [vmem:[#allocation8 + $0x208] sm:$0xff] %v7811
    %8068 = vst [vmem:[#allocation8 + $0x210] sm:$0xff] %v7812
    %8069 = vst [vmem:[#allocation8 + $0x218] sm:$0xff] %v7813
    %8070 = vst [vmem:[#allocation8 + $0x220] sm:$0xff] %v7814
    %8071 = vst [vmem:[#allocation8 + $0x228] sm:$0xff] %v7815
    %8072 = vst [vmem:[#allocation8 + $0x230] sm:$0xff] %v7816
    %8073 = vst [vmem:[#allocation8 + $0x238] sm:$0xff] %v7817
    %8074 = vst [vmem:[#allocation8 + $0x240] sm:$0xff] %v7818
    %8075 = vst [vmem:[#allocation8 + $0x248] sm:$0xff] %v7819
    %8076 = vst [vmem:[#allocation8 + $0x250] sm:$0xff] %v7820
    %8077 = vst [vmem:[#allocation8 + $0x258] sm:$0xff] %v7821
    %8078 = vst [vmem:[#allocation8 + $0x260] sm:$0xff] %v7822
    %8079 = vst [vmem:[#allocation8 + $0x268] sm:$0xff] %v7823
    %8080 = vst [vmem:[#allocation8 + $0x270] sm:$0xff] %v7824
    %8081 = vst [vmem:[#allocation8 + $0x278] sm:$0xff] %v7825
    %8082 = vst [vmem:[#allocation8 + $0x280] sm:$0xff] %v7826
    %8083 = vst [vmem:[#allocation8 + $0x288] sm:$0xff] %v7827
    %8084 = vst [vmem:[#allocation8 + $0x290] sm:$0xff] %v7828
    %8085 = vst [vmem:[#allocation8 + $0x298] sm:$0xff] %v7829
    %8086 = vst [vmem:[#allocation8 + $0x2a0] sm:$0xff] %v7830
    %8087 = vst [vmem:[#allocation8 + $0x2a8] sm:$0xff] %v7831
    %8088 = vst [vmem:[#allocation8 + $0x2b0] sm:$0xff] %v7832
    %8089 = vst [vmem:[#allocation8 + $0x2b8] sm:$0xff] %v7833
    %8090 = vst [vmem:[#allocation8 + $0x2c0] sm:$0xff] %v7834
    %8091 = vst [vmem:[#allocation8 + $0x2c8] sm:$0xff] %v7835
    %8092 = vst [vmem:[#allocation8 + $0x2d0] sm:$0xff] %v7836
    %8093 = vst [vmem:[#allocation8 + $0x2d8] sm:$0xff] %v7837
    %8094 = vst [vmem:[#allocation8 + $0x2e0] sm:$0xff] %v7838
    %8095 = vst [vmem:[#allocation8 + $0x2e8] sm:$0xff] %v7839
    %8096 = vst [vmem:[#allocation8 + $0x2f0] sm:$0xff] %v7840
    %8097 = vst [vmem:[#allocation8 + $0x2f8] sm:$0xff] %v7841
    %8098 = vst [vmem:[#allocation8 + $0x300] sm:$0xff] %v7842
    %8099 = vst [vmem:[#allocation8 + $0x308] sm:$0xff] %v7843
    %8100 = vst [vmem:[#allocation8 + $0x310] sm:$0xff] %v7844
    %8101 = vst [vmem:[#allocation8 + $0x318] sm:$0xff] %v7845
    %8102 = vst [vmem:[#allocation8 + $0x320] sm:$0xff] %v7846
    %8103 = vst [vmem:[#allocation8 + $0x328] sm:$0xff] %v7847
    %8104 = vst [vmem:[#allocation8 + $0x330] sm:$0xff] %v7848
    %8105 = vst [vmem:[#allocation8 + $0x338] sm:$0xff] %v7849
    %8106 = vst [vmem:[#allocation8 + $0x340] sm:$0xff] %v7850
    %8107 = vst [vmem:[#allocation8 + $0x348] sm:$0xff] %v7851
    %8108 = vst [vmem:[#allocation8 + $0x350] sm:$0xff] %v7852
    %8109 = vst [vmem:[#allocation8 + $0x358] sm:$0xff] %v7853
    %8110 = vst [vmem:[#allocation8 + $0x360] sm:$0xff] %v7854
    %8111 = vst [vmem:[#allocation8 + $0x368] sm:$0xff] %v7855
    %8112 = vst [vmem:[#allocation8 + $0x370] sm:$0xff] %v7856
    %8113 = vst [vmem:[#allocation8 + $0x378] sm:$0xff] %v7857
    %8114 = vst [vmem:[#allocation8 + $0x380] sm:$0xff] %v7858
    %8115 = vst [vmem:[#allocation8 + $0x388] sm:$0xff] %v7859
    %8116 = vst [vmem:[#allocation8 + $0x390] sm:$0xff] %v7860
    %8117 = vst [vmem:[#allocation8 + $0x398] sm:$0xff] %v7861
    %8118 = vst [vmem:[#allocation8 + $0x3a0] sm:$0xff] %v7862
    %8119 = vst [vmem:[#allocation8 + $0x3a8] sm:$0xff] %v7863
    %8120 = vst [vmem:[#allocation8 + $0x3b0] sm:$0xff] %v7864
    %8121 = vst [vmem:[#allocation8 + $0x3b8] sm:$0xff] %v7865
    %8122 = vst [vmem:[#allocation8 + $0x3c0] sm:$0xff] %v7866
    %8123 = vst [vmem:[#allocation8 + $0x3c8] sm:$0xff] %v7867
    %8124 = vst [vmem:[#allocation8 + $0x3d0] sm:$0xff] %v7868
    %8125 = vst [vmem:[#allocation8 + $0x3d8] sm:$0xff] %v7869
    %8126 = vst [vmem:[#allocation8 + $0x3e0] sm:$0xff] %v7870
    %8127 = vst [vmem:[#allocation8 + $0x3e8] sm:$0xff] %v7871
    %8128 = vst [vmem:[#allocation8 + $0x3f0] sm:$0xff] %v7872
    %8129 = vst [vmem:[#allocation8 + $0x3f8] sm:$0xff] %v7873
    %8130 = vst [vmem:[#allocation8 + $0x400] sm:$0xff] %v7874
    %8131 = vst [vmem:[#allocation8 + $0x408] sm:$0xff] %v7875
    %8132 = vst [vmem:[#allocation8 + $0x410] sm:$0xff] %v7876
    %8133 = vst [vmem:[#allocation8 + $0x418] sm:$0xff] %v7877
    %8134 = vst [vmem:[#allocation8 + $0x420] sm:$0xff] %v7878
    %8135 = vst [vmem:[#allocation8 + $0x428] sm:$0xff] %v7879
    %8136 = vst [vmem:[#allocation8 + $0x430] sm:$0xff] %v7880
    %8137 = vst [vmem:[#allocation8 + $0x438] sm:$0xff] %v7881
    %8138 = vst [vmem:[#allocation8 + $0x440] sm:$0xff] %v7882
    %8139 = vst [vmem:[#allocation8 + $0x448] sm:$0xff] %v7883
    %8140 = vst [vmem:[#allocation8 + $0x450] sm:$0xff] %v7884
    %8141 = vst [vmem:[#allocation8 + $0x458] sm:$0xff] %v7885
    %8142 = vst [vmem:[#allocation8 + $0x460] sm:$0xff] %v7886
    %8143 = vst [vmem:[#allocation8 + $0x468] sm:$0xff] %v7887
    %8144 = vst [vmem:[#allocation8 + $0x470] sm:$0xff] %v7888
    %8145 = vst [vmem:[#allocation8 + $0x478] sm:$0xff] %v7889
    %8146 = vst [vmem:[#allocation8 + $0x480] sm:$0xff] %v7890
    %8147 = vst [vmem:[#allocation8 + $0x488] sm:$0xff] %v7891
    %8148 = vst [vmem:[#allocation8 + $0x490] sm:$0xff] %v7892
    %8149 = vst [vmem:[#allocation8 + $0x498] sm:$0xff] %v7893
    %8150 = vst [vmem:[#allocation8 + $0x4a0] sm:$0xff] %v7894
    %8151 = vst [vmem:[#allocation8 + $0x4a8] sm:$0xff] %v7895
    %8152 = vst [vmem:[#allocation8 + $0x4b0] sm:$0xff] %v7896
    %8153 = vst [vmem:[#allocation8 + $0x4b8] sm:$0xff] %v7897
    %8154 = vst [vmem:[#allocation8 + $0x4c0] sm:$0xff] %v7898
    %8155 = vst [vmem:[#allocation8 + $0x4c8] sm:$0xff] %v7899
    %8156 = vst [vmem:[#allocation8 + $0x4d0] sm:$0xff] %v7900
    %8157 = vst [vmem:[#allocation8 + $0x4d8] sm:$0xff] %v7901
    %8158 = vst [vmem:[#allocation8 + $0x4e0] sm:$0xff] %v7902
    %8159 = vst [vmem:[#allocation8 + $0x4e8] sm:$0xff] %v7903
    %8160 = vst [vmem:[#allocation8 + $0x4f0] sm:$0xff] %v7904
    %8161 = vst [vmem:[#allocation8 + $0x4f8] sm:$0xff] %v7905
    %8162 = vst [vmem:[#allocation8 + $0x500] sm:$0xff] %v7906
    %8163 = vst [vmem:[#allocation8 + $0x508] sm:$0xff] %v7907
    %8164 = vst [vmem:[#allocation8 + $0x510] sm:$0xff] %v7908
    %8165 = vst [vmem:[#allocation8 + $0x518] sm:$0xff] %v7909
    %8166 = vst [vmem:[#allocation8 + $0x520] sm:$0xff] %v7910
    %8167 = vst [vmem:[#allocation8 + $0x528] sm:$0xff] %v7911
    %8168 = vst [vmem:[#allocation8 + $0x530] sm:$0xff] %v7912
    %8169 = vst [vmem:[#allocation8 + $0x538] sm:$0xff] %v7913
    %8170 = vst [vmem:[#allocation8 + $0x540] sm:$0xff] %v7914
    %8171 = vst [vmem:[#allocation8 + $0x548] sm:$0xff] %v7915
    %8172 = vst [vmem:[#allocation8 + $0x550] sm:$0xff] %v7916
    %8173 = vst [vmem:[#allocation8 + $0x558] sm:$0xff] %v7917
    %8174 = vst [vmem:[#allocation8 + $0x560] sm:$0xff] %v7918
    %8175 = vst [vmem:[#allocation8 + $0x568] sm:$0xff] %v7919
    %8176 = vst [vmem:[#allocation8 + $0x570] sm:$0xff] %v7920
    %8177 = vst [vmem:[#allocation8 + $0x578] sm:$0xff] %v7921
    %8178 = vst [vmem:[#allocation8 + $0x580] sm:$0xff] %v7922
    %8179 = vst [vmem:[#allocation8 + $0x588] sm:$0xff] %v7923
    %8180 = vst [vmem:[#allocation8 + $0x590] sm:$0xff] %v7924
    %8181 = vst [vmem:[#allocation8 + $0x598] sm:$0xff] %v7925
    %8182 = vst [vmem:[#allocation8 + $0x5a0] sm:$0xff] %v7926
    %8183 = vst [vmem:[#allocation8 + $0x5a8] sm:$0xff] %v7927
    %8184 = vst [vmem:[#allocation8 + $0x5b0] sm:$0xff] %v7928
    %8185 = vst [vmem:[#allocation8 + $0x5b8] sm:$0xff] %v7929
    %8186 = vst [vmem:[#allocation8 + $0x5c0] sm:$0xff] %v7930
    %8187 = vst [vmem:[#allocation8 + $0x5c8] sm:$0xff] %v7931
    %8188 = vst [vmem:[#allocation8 + $0x5d0] sm:$0xff] %v7932
    %8189 = vst [vmem:[#allocation8 + $0x5d8] sm:$0xff] %v7933
    %8190 = vst [vmem:[#allocation8 + $0x5e0] sm:$0xff] %v7934
    %8191 = vst [vmem:[#allocation8 + $0x5e8] sm:$0xff] %v7935
    %8192 = vst [vmem:[#allocation8 + $0x5f0] sm:$0xff] %v7936
    %8193 = vst [vmem:[#allocation8 + $0x5f8] sm:$0xff] %v7937
    %8194 = vst [vmem:[#allocation8 + $0x600] sm:$0xff] %v7938
    %8195 = vst [vmem:[#allocation8 + $0x608] sm:$0xff] %v7939
    %8196 = vst [vmem:[#allocation8 + $0x610] sm:$0xff] %v7940
    %8197 = vst [vmem:[#allocation8 + $0x618] sm:$0xff] %v7941
    %8198 = vst [vmem:[#allocation8 + $0x620] sm:$0xff] %v7942
    %8199 = vst [vmem:[#allocation8 + $0x628] sm:$0xff] %v7943
    %8200 = vst [vmem:[#allocation8 + $0x630] sm:$0xff] %v7944
    %8201 = vst [vmem:[#allocation8 + $0x638] sm:$0xff] %v7945
    %8202 = vst [vmem:[#allocation8 + $0x640] sm:$0xff] %v7946
    %8203 = vst [vmem:[#allocation8 + $0x648] sm:$0xff] %v7947
    %8204 = vst [vmem:[#allocation8 + $0x650] sm:$0xff] %v7948
    %8205 = vst [vmem:[#allocation8 + $0x658] sm:$0xff] %v7949
    %8206 = vst [vmem:[#allocation8 + $0x660] sm:$0xff] %v7950
    %8207 = vst [vmem:[#allocation8 + $0x668] sm:$0xff] %v7951
    %8208 = vst [vmem:[#allocation8 + $0x670] sm:$0xff] %v7952
    %8209 = vst [vmem:[#allocation8 + $0x678] sm:$0xff] %v7953
    %8210 = vst [vmem:[#allocation8 + $0x680] sm:$0xff] %v7954
    %8211 = vst [vmem:[#allocation8 + $0x688] sm:$0xff] %v7955
    %8212 = vst [vmem:[#allocation8 + $0x690] sm:$0xff] %v7956
    %8213 = vst [vmem:[#allocation8 + $0x698] sm:$0xff] %v7957
    %8214 = vst [vmem:[#allocation8 + $0x6a0] sm:$0xff] %v7958
    %8215 = vst [vmem:[#allocation8 + $0x6a8] sm:$0xff] %v7959
    %8216 = vst [vmem:[#allocation8 + $0x6b0] sm:$0xff] %v7960
    %8217 = vst [vmem:[#allocation8 + $0x6b8] sm:$0xff] %v7961
    %8218 = vst [vmem:[#allocation8 + $0x6c0] sm:$0xff] %v7962
    %8219 = vst [vmem:[#allocation8 + $0x6c8] sm:$0xff] %v7963
    %8220 = vst [vmem:[#allocation8 + $0x6d0] sm:$0xff] %v7964
    %8221 = vst [vmem:[#allocation8 + $0x6d8] sm:$0xff] %v7965
    %8222 = vst [vmem:[#allocation8 + $0x6e0] sm:$0xff] %v7966
    %8223 = vst [vmem:[#allocation8 + $0x6e8] sm:$0xff] %v7967
    %8224 = vst [vmem:[#allocation8 + $0x6f0] sm:$0xff] %v7968
    %8225 = vst [vmem:[#allocation8 + $0x6f8] sm:$0xff] %v7969
    %8226 = vst [vmem:[#allocation8 + $0x700] sm:$0xff] %v7970
    %8227 = vst [vmem:[#allocation8 + $0x708] sm:$0xff] %v7971
    %8228 = vst [vmem:[#allocation8 + $0x710] sm:$0xff] %v7972
    %8229 = vst [vmem:[#allocation8 + $0x718] sm:$0xff] %v7973
    %8230 = vst [vmem:[#allocation8 + $0x720] sm:$0xff] %v7974
    %8231 = vst [vmem:[#allocation8 + $0x728] sm:$0xff] %v7975
    %8232 = vst [vmem:[#allocation8 + $0x730] sm:$0xff] %v7976
    %8233 = vst [vmem:[#allocation8 + $0x738] sm:$0xff] %v7977
    %8234 = vst [vmem:[#allocation8 + $0x740] sm:$0xff] %v7978
    %8235 = vst [vmem:[#allocation8 + $0x748] sm:$0xff] %v7979
    %8236 = vst [vmem:[#allocation8 + $0x750] sm:$0xff] %v7980
    %8237 = vst [vmem:[#allocation8 + $0x758] sm:$0xff] %v7981
    %8238 = vst [vmem:[#allocation8 + $0x760] sm:$0xff] %v7982
    %8239 = vst [vmem:[#allocation8 + $0x768] sm:$0xff] %v7983
    %8240 = vst [vmem:[#allocation8 + $0x770] sm:$0xff] %v7984
    %8241 = vst [vmem:[#allocation8 + $0x778] sm:$0xff] %v7985
    %8242 = vst [vmem:[#allocation8 + $0x780] sm:$0xff] %v7986
    %8243 = vst [vmem:[#allocation8 + $0x788] sm:$0xff] %v7987
    %8244 = vst [vmem:[#allocation8 + $0x790] sm:$0xff] %v7988
    %8245 = vst [vmem:[#allocation8 + $0x798] sm:$0xff] %v7989
    %8246 = vst [vmem:[#allocation8 + $0x7a0] sm:$0xff] %v7990
    %8247 = vst [vmem:[#allocation8 + $0x7a8] sm:$0xff] %v7991
    %8248 = vst [vmem:[#allocation8 + $0x7b0] sm:$0xff] %v7992
    %8249 = vst [vmem:[#allocation8 + $0x7b8] sm:$0xff] %v7993
    %8250 = vst [vmem:[#allocation8 + $0x7c0] sm:$0xff] %v7994
    %8251 = vst [vmem:[#allocation8 + $0x7c8] sm:$0xff] %v7995
    %8252 = vst [vmem:[#allocation8 + $0x7d0] sm:$0xff] %v7996
    %8253 = vst [vmem:[#allocation8 + $0x7d8] sm:$0xff] %v7997
    %8254 = vst [vmem:[#allocation8 + $0x7e0] sm:$0xff] %v7998
    %8255 = vst [vmem:[#allocation8 + $0x7e8] sm:$0xff] %v7999
    %8256 = vst [vmem:[#allocation8 + $0x7f0] sm:$0xff] %v8000
    %8257 = vst [vmem:[#allocation8 + $0x7f8] sm:$0xff] %v8001
    // Predicated region
    $region50: #{tpu_custom_call.1} parent=1 // pred_check
      _
    $region51: #{tpu_custom_call.1} parent=1 // pred_check_branch
      %8259 = sbr.rel (0) target = $region53
    $region52: #{tpu_custom_call.1} parent=1 // pred_region
      %8261 = vsyncadd [#allocation4], 0
      %s8262 = sshll.u32 [#allocation8], 4
      %s8263 = int_to_ptr.vmem [resolvable:$true] %s8262
      %s8264 = sshll.u32 %s9, 4
      %s8265 = int_to_ptr.hbm [resolvable:$true] %s8264
      %8270 = dma.vmem_to_hbm [thread:$0]  %s8263, 32768, %s8265, [#allocation4], 1024, 1024, 64
    $region53: #{tpu_custom_call.1} parent=1 // pred_fallthru
      _
    // Predicated region
    $region54: #{tpu_custom_call.1} parent=1 // pred_check
      _
    $region55: #{tpu_custom_call.1} parent=1 // pred_check_branch
      %8272 = sbr.rel (0) target = $region57
    $region56: #{tpu_custom_call.1} parent=1 // pred_region
      %8274 = dma.done [#allocation4], 32768
    $region57: #{tpu_custom_call.1} parent=1 // pred_fallthru
      _
    %8275 = vsyncpa [#allocation3], 1
    %8276 = vsyncpa [#allocation6], 1
    %8277 = vsyncpa [#allocation4], 1

</llo_original>
